<compile_context>
chip_gen: v7x
topology: tpu7x:2x2x1
jax: 0.10.0
libtpu: 0.0.40
codegen_flags: <defaults>
</compile_context>

<pallas_src>
import inspect

import jax
import jax.numpy as jnp
from jax.experimental import pallas as pl
from jax.experimental.pallas import tpu as pltpu


try:
    _HAS_BUFFERED = (hasattr(pl, "Buffered") and
                     "pipeline_mode" in inspect.signature(pl.BlockSpec).parameters)
except (TypeError, ValueError):  # pragma: no cover - very old/new API
    _HAS_BUFFERED = False


# ---------------------------------------------------------------------------
# Fused kernel: Btile images per grid step; encoder + classifier in one body.
# ---------------------------------------------------------------------------
def _fused_kernel(x_ref, wse1_ref, wse2_ref, wc1_ref, wc2_ref,
                  wfc1_ref, wfc2_ref, bias_ref, bfc1_ref, spa_ref,
                  out_ref, pooled_ref):
    BT, HW, C = x_ref.shape
    Cr = wse1_ref.shape[1]
    c_mid = wc1_ref.shape[1]
    OC = wfc2_ref.shape[1]

    inv_hw = 1.0 / HW
    inv_c = 1.0 / C

    # ---- small per-layer biases unpacked from one padded slab (static slices) ----
    b_se1 = bias_ref[0:1, :Cr]
    b_se2 = bias_ref[1:2, :C]
    b_c1 = bias_ref[2:3, :c_mid]
    b_c2 = bias_ref[3:4, :C]
    b_fc2 = bias_ref[4:5, :OC]

    # spatial-attention scalars from SMEM
    spa0 = spa_ref[0]
    spa1 = spa_ref[1]
    spa2 = spa_ref[2]

    # ---- encoder: static unroll over the batch tile (per-image 2-D math) ----
    for b in range(BT):
        x = x_ref[b].astype(jnp.float32)                         # (HW, C)

        # spectral (channel) squeeze-excite attention (f32, tiny matmuls)
        s = jnp.sum(x, axis=0, keepdims=True) * inv_hw           # (1, C)
        a = jnp.maximum(
            jnp.dot(s, wse1_ref[...], preferred_element_type=jnp.float32) + b_se1,
            0.0)
        a = jax.nn.sigmoid(
            jnp.dot(a, wse2_ref[...], preferred_element_type=jnp.float32) + b_se2)
        x = x * a                                                # (HW, C)

        # spatial attention from channel-mean / channel-max maps
        m = jnp.sum(x, axis=1, keepdims=True) * inv_c            # (HW, 1)
        mx = jnp.max(x, axis=1, keepdims=True)                   # (HW, 1)
        sa = jax.nn.sigmoid(spa0 * m + spa1 * mx + spa2)
        x = x * sa

        # residual pointwise (1x1) conv block: bf16 MXU operands, f32 accumulation
        h = jnp.maximum(
            jnp.dot(x.astype(jnp.bfloat16), wc1_ref[...],
                    preferred_element_type=jnp.float32) + b_c1, 0.0)
        y = jnp.dot(h.astype(jnp.bfloat16), wc2_ref[...],
                    preferred_element_type=jnp.float32) + b_c2
        x = jnp.maximum(x + y, 0.0)

        # global average pool -> one embedding-input row per image (stays in VMEM)
        pooled_ref[b:b + 1, :] = jnp.sum(x, axis=0, keepdims=True) * inv_hw

    pooled = pooled_ref[...]                                     # (BT, C) f32

    # ---- classifier MLP (w_proj folded into fc1): M = BT on the MXU ----
    hc = jnp.maximum(
        jnp.dot(pooled.astype(jnp.bfloat16), wfc1_ref[...],
                preferred_element_type=jnp.float32) + bfc1_ref[...], 0.0)    # (BT, MID)
    out_ref[...] = (jnp.dot(hc.astype(jnp.bfloat16), wfc2_ref[...],
                            preferred_element_type=jnp.float32) + b_fc2)     # (BT, OC)


def model_forward(x_nchw, pk, btile=None):
    """x_nchw: (B, C, H, W) f32; pk: packed params (see pack_params)."""
    B, C, H, W = x_nchw.shape
    HW = H * W
    if btile is None:
        btile = max(1, min(B, 8))
    grid_b = -(-B // btile)                 # ceil-div
    Bp = grid_b * btile
    OC = pk["w_fc2"].shape[1]

    # glue: NCHW -> (B, H*W, C) so spectral bands land on the lane dim; bf16 input
    x = jnp.transpose(x_nchw, (0, 2, 3, 1)).reshape(B, HW, C).astype(jnp.bfloat16)
    if Bp != B:
        x = jnp.pad(x, ((0, Bp - B), (0, 0), (0, 0)))

    def const_spec(arr):
        # constant-weight input: fetched once; single-buffer if the API allows it
        nd = arr.ndim
        kwargs = {"pipeline_mode": pl.Buffered(1)} if _HAS_BUFFERED else {}
        return pl.BlockSpec(arr.shape, lambda b: (0,) * nd, **kwargs)

    out = pl.pallas_call(
        _fused_kernel,
        out_shape=jax.ShapeDtypeStruct((grid_b, btile, OC), jnp.float32),
        grid_spec=pltpu.PrefetchScalarGridSpec(
            num_scalar_prefetch=0,
            grid=(grid_b,),
            in_specs=[
                pl.BlockSpec((btile, HW, C), lambda b: (b, 0, 0)),   # x batch tile
                const_spec(pk["w_se1"]),
                const_spec(pk["w_se2"]),
                const_spec(pk["w_c1"]),
                const_spec(pk["w_c2"]),
                const_spec(pk["w_fc1"]),
                const_spec(pk["w_fc2"]),
                const_spec(pk["bias_slab"]),
                const_spec(pk["b_fc1"]),
                pl.BlockSpec(memory_space=pltpu.MemorySpace.SMEM),   # spatial-attn scalars
            ],
            out_specs=pl.BlockSpec((None, btile, OC), lambda b: (b, 0, 0)),
            scratch_shapes=[pltpu.VMEM((btile, C), jnp.float32)],    # pooled embeddings
        ),
        compiler_params=pltpu.CompilerParams(
            dimension_semantics=("parallel",),
            vmem_limit_bytes=48 * 1024 * 1024),
    )(x, pk["w_se1"], pk["w_se2"], pk["w_c1"], pk["w_c2"],
      pk["w_fc1"], pk["w_fc2"], pk["bias_slab"], pk["b_fc1"], pk["spa"])

    return out.reshape(Bp, OC)[:B]


# ---------------------------------------------------------------------------
# Deterministic parameter construction (synthetic weights, no checkpoint).
# ---------------------------------------------------------------------------
def init_params(key, C=138, E=24, OC=8, MID=4096, reduction=8, c_mid=64):
    ks = jax.random.split(key, 8)
    Cr = max(C // reduction, 1)

    def dense(k, fi, fo):
        return jax.random.normal(k, (fi, fo), jnp.float32) / jnp.sqrt(fi)

    return dict(
        w_se1=dense(ks[0], C, Cr), b_se1=jnp.zeros((1, Cr), jnp.float32),
        w_se2=dense(ks[1], Cr, C), b_se2=jnp.zeros((1, C), jnp.float32),
        spa=jnp.array([0.7, 0.3, 0.05], jnp.float32),
        w_c1=dense(ks[2], C, c_mid), b_c1=jnp.zeros((1, c_mid), jnp.float32),
        w_c2=dense(ks[3], c_mid, C), b_c2=jnp.zeros((1, C), jnp.float32),
        w_proj=dense(ks[4], C, E), b_proj=jnp.full((1, E), 0.02, jnp.float32),
        w_fc1=dense(ks[5], E, MID), b_fc1=jnp.full((1, MID), 0.01, jnp.float32),
        w_fc2=dense(ks[6], MID, OC),
        b_fc2=(jnp.arange(OC, dtype=jnp.float32).reshape(1, OC) * 0.01),
    )


def pack_params(p):
    """Pack biases into one slab, fold w_proj into w_fc1, cast MXU weights to bf16."""
    hi = jax.lax.Precision.HIGHEST
    C = p["w_se2"].shape[1]
    Cr = p["w_se1"].shape[1]
    c_mid = p["w_c1"].shape[1]
    OC = p["w_fc2"].shape[1]
    Wmax = max(C, Cr, c_mid, OC)

    def row(v):
        v = v.reshape(1, -1).astype(jnp.float32)
        return jnp.pad(v, ((0, 0), (0, Wmax - v.shape[1])))

    slab = jnp.concatenate([
        row(p["b_se1"]), row(p["b_se2"]), row(p["b_c1"]),
        row(p["b_c2"]), row(p["b_fc2"]),
        jnp.zeros((3, Wmax), jnp.float32),
    ], axis=0)                                                   # (8, Wmax)

    # fold encoder projection into fc1 (no nonlinearity in between): exact rewrite
    w_fc1_folded = jnp.dot(p["w_proj"], p["w_fc1"], precision=hi)        # (C, MID)
    b_fc1_folded = jnp.dot(p["b_proj"], p["w_fc1"], precision=hi) + p["b_fc1"]

    bf16 = jnp.bfloat16
    return dict(
        w_se1=p["w_se1"].astype(jnp.float32),
        w_se2=p["w_se2"].astype(jnp.float32),
        w_c1=p["w_c1"].astype(bf16), w_c2=p["w_c2"].astype(bf16),
        w_fc1=w_fc1_folded.astype(bf16),
        b_fc1=b_fc1_folded.astype(jnp.float32),
        w_fc2=p["w_fc2"].astype(bf16),
        bias_slab=slab, spa=p["spa"].astype(jnp.float32),
    )


# ---------------------------------------------------------------------------
# Pure-JAX reference (original unfolded semantics, f32 HIGHEST precision).
# ---------------------------------------------------------------------------
def reference_forward(x_nchw, p):
    hi = jax.lax.Precision.HIGHEST
    B, C, H, W = x_nchw.shape
    x = jnp.transpose(x_nchw, (0, 2, 3, 1)).reshape(B, H * W, C)
    s = jnp.mean(x, axis=1)
    a = jnp.maximum(jnp.dot(s, p["w_se1"], precision=hi) + p["b_se1"], 0.0)
    a = jax.nn.sigmoid(jnp.dot(a, p["w_se2"], precision=hi) + p["b_se2"])
    x = x * a[:, None, :]
    m = jnp.mean(x, axis=2, keepdims=True)
    mx = jnp.max(x, axis=2, keepdims=True)
    sa = jax.nn.sigmoid(p["spa"][0] * m + p["spa"][1] * mx + p["spa"][2])
    x = x * sa
    h = jnp.maximum(
        jnp.einsum('bpc,cd->bpd', x, p["w_c1"], precision=hi) + p["b_c1"], 0.0)
    y = jnp.einsum('bpd,dc->bpc', h, p["w_c2"], precision=hi) + p["b_c2"]
    x = jnp.maximum(x + y, 0.0)
    emb = jnp.dot(jnp.mean(x, axis=1), p["w_proj"], precision=hi) + p["b_proj"]
    hc = jnp.maximum(jnp.dot(emb, p["w_fc1"], precision=hi) + p["b_fc1"], 0.0)
    return jnp.dot(hc, p["w_fc2"], precision=hi) + p["b_fc2"]


if __name__ == "__main__":
    key = jax.random.PRNGKey(0)
    kx, kp = jax.random.split(key)
    # default in_shape=(138, 17, 17); small batch with btile=2 -> 2 parallel grid steps
    B, C, H, W = 4, 138, 17, 17
    x = jax.random.normal(kx, (B, C, H, W), jnp.float32)
    params = init_params(kp, C=C, E=24, OC=8, MID=4096)
    packed = pack_params(params)

    fwd = jax.jit(lambda xx: model_forward(xx, packed, btile=2))
    out = jax.block_until_ready(fwd(x))

    assert out.shape == (B, 8)
    assert bool(jnp.all(jnp.isfinite(out)))
    ref = reference_forward(x, params)
    max_err = float(jnp.max(jnp.abs(out - ref)))
    # bf16 MXU operands with f32 accumulation vs. f32-HIGHEST reference
    assert jnp.allclose(out, ref, rtol=2e-2, atol=2e-2), f"max_err={max_err}"
    print("KERNEL_OK")
</pallas_src>

<mosaic_0001>
module attributes {stable_mosaic.version = 11 : i64} {
  func.func @_fused_kernel(%arg0: i32, %arg1: memref<2x289x138xbf16, #tpu.memory_space<vmem>>, %arg2: memref<138x17xf32, #tpu.memory_space<vmem>>, %arg3: memref<17x138xf32, #tpu.memory_space<vmem>>, %arg4: memref<138x64xbf16, #tpu.memory_space<vmem>>, %arg5: memref<64x138xbf16, #tpu.memory_space<vmem>>, %arg6: memref<138x4096xbf16, #tpu.memory_space<vmem>>, %arg7: memref<4096x8xbf16, #tpu.memory_space<vmem>>, %arg8: memref<8x138xf32, #tpu.memory_space<vmem>>, %arg9: memref<1x4096xf32, #tpu.memory_space<vmem>>, %arg10: memref<3xf32, #tpu.memory_space<smem>>, %arg11: memref<1x2x8xf32, #tpu.memory_space<vmem>>, %arg12: memref<2x138xf32, #tpu.memory_space<vmem>>) attributes {dimension_semantics = [#tpu.dimension_semantics<parallel>], iteration_bounds = array<i64: 2>, scalar_prefetch = 0 : i64, scratch_operands = 1 : i64, tpu.core_type = #tpu.core_type<tc>, window_params = [{transform_indices = @transform_0, window_bounds = array<i64: 2, 289, 138>}, {pipeline_mode = #tpu.pipeline_mode<synchronous>, transform_indices = @transform_1, window_bounds = array<i64: 138, 17>}, {pipeline_mode = #tpu.pipeline_mode<synchronous>, transform_indices = @transform_2, window_bounds = array<i64: 17, 138>}, {pipeline_mode = #tpu.pipeline_mode<synchronous>, transform_indices = @transform_3, window_bounds = array<i64: 138, 64>}, {pipeline_mode = #tpu.pipeline_mode<synchronous>, transform_indices = @transform_4, window_bounds = array<i64: 64, 138>}, {pipeline_mode = #tpu.pipeline_mode<synchronous>, transform_indices = @transform_5, window_bounds = array<i64: 138, 4096>}, {pipeline_mode = #tpu.pipeline_mode<synchronous>, transform_indices = @transform_6, window_bounds = array<i64: 4096, 8>}, {pipeline_mode = #tpu.pipeline_mode<synchronous>, transform_indices = @transform_7, window_bounds = array<i64: 8, 138>}, {pipeline_mode = #tpu.pipeline_mode<synchronous>, transform_indices = @transform_8, window_bounds = array<i64: 1, 4096>}, {transform_indices = @transform_9, window_bounds = array<i64: 3>}, {transform_indices = @transform_10, window_bounds = array<i64: 1, 2, 8>}]} {
    %c0 = arith.constant 0 : index
    %c0_0 = arith.constant 0 : index
    %0 = vector.load %arg8[%c0, %c0_0] : memref<8x138xf32, #tpu.memory_space<vmem>>, vector<1x17xf32>
    %c1 = arith.constant 1 : index
    %c0_1 = arith.constant 0 : index
    %1 = vector.load %arg8[%c1, %c0_1] : memref<8x138xf32, #tpu.memory_space<vmem>>, vector<1x138xf32>
    %c2 = arith.constant 2 : index
    %c0_2 = arith.constant 0 : index
    %2 = vector.load %arg8[%c2, %c0_2] : memref<8x138xf32, #tpu.memory_space<vmem>>, vector<1x64xf32>
    %c3 = arith.constant 3 : index
    %c0_3 = arith.constant 0 : index
    %3 = vector.load %arg8[%c3, %c0_3] : memref<8x138xf32, #tpu.memory_space<vmem>>, vector<1x138xf32>
    %c4 = arith.constant 4 : index
    %c0_4 = arith.constant 0 : index
    %4 = vector.load %arg8[%c4, %c0_4] : memref<8x138xf32, #tpu.memory_space<vmem>>, vector<1x8xf32>
    %c0_5 = arith.constant 0 : index
    %5 = memref.load %arg10[%c0_5] : memref<3xf32, #tpu.memory_space<smem>>
    %c1_6 = arith.constant 1 : index
    %6 = memref.load %arg10[%c1_6] : memref<3xf32, #tpu.memory_space<smem>>
    %c2_7 = arith.constant 2 : index
    %7 = memref.load %arg10[%c2_7] : memref<3xf32, #tpu.memory_space<smem>>
    %c0_8 = arith.constant 0 : index
    %c0_9 = arith.constant 0 : index
    %c0_10 = arith.constant 0 : index
    %8 = vector.load %arg1[%c0_8, %c0_9, %c0_10] : memref<2x289x138xbf16, #tpu.memory_space<vmem>>, vector<1x289x138xbf16>
    %9 = vector.shape_cast %8 : vector<1x289x138xbf16> to vector<289x138xbf16>
    %10 = arith.extf %9 : vector<289x138xbf16> to vector<289x138xf32>
    %cst = arith.constant dense<0.000000e+00> : vector<138xf32>
    %11 = vector.multi_reduction <add>, %10, %cst [0] : vector<289x138xf32> to vector<138xf32>
    %12 = vector.shape_cast %11 : vector<138xf32> to vector<1x138xf32>
    %cst_11 = arith.constant 0.00346020772 : f32
    %13 = vector.broadcast %cst_11 : f32 to vector<1x138xf32>
    %14 = arith.mulf %12, %13 : vector<1x138xf32>
    %c0_12 = arith.constant 0 : index
    %c0_13 = arith.constant 0 : index
    %15 = vector.load %arg2[%c0_12, %c0_13] : memref<138x17xf32, #tpu.memory_space<vmem>>, vector<138x17xf32>
    %cst_14 = arith.constant dense<0.000000e+00> : vector<1x17xf32>
    %16 = tpu.matmul %14, %15, %cst_14 {dimension_numbers = #tpu.dot_dimension_numbers<[1], [0], [0], [1], [0, 0, 1, 1], [], []>} : vector<1x138xf32>, vector<138x17xf32>, vector<1x17xf32> -> vector<1x17xf32>
    %17 = arith.addf %16, %0 : vector<1x17xf32>
    %cst_15 = arith.constant 0.000000e+00 : f32
    %18 = vector.broadcast %cst_15 : f32 to vector<1x17xf32>
    %19 = arith.maximumf %17, %18 : vector<1x17xf32>
    %c0_16 = arith.constant 0 : index
    %c0_17 = arith.constant 0 : index
    %20 = vector.load %arg3[%c0_16, %c0_17] : memref<17x138xf32, #tpu.memory_space<vmem>>, vector<17x138xf32>
    %cst_18 = arith.constant dense<0.000000e+00> : vector<1x138xf32>
    %21 = tpu.matmul %19, %20, %cst_18 {dimension_numbers = #tpu.dot_dimension_numbers<[1], [0], [0], [1], [0, 0, 1, 1], [], []>} : vector<1x17xf32>, vector<17x138xf32>, vector<1x138xf32> -> vector<1x138xf32>
    %22 = arith.addf %21, %1 : vector<1x138xf32>
    %23 = arith.negf %22 : vector<1x138xf32>
    %24 = math.exp %23 : vector<1x138xf32>
    %cst_19 = arith.constant 1.000000e+00 : f32
    %25 = vector.broadcast %cst_19 : f32 to vector<1x138xf32>
    %26 = arith.addf %25, %24 : vector<1x138xf32>
    %27 = arith.divf %25, %26 : vector<1x138xf32>
    %28 = vector.broadcast %27 : vector<1x138xf32> to vector<289x138xf32>
    %29 = arith.mulf %10, %28 : vector<289x138xf32>
    %cst_20 = arith.constant dense<0.000000e+00> : vector<289xf32>
    %30 = vector.multi_reduction <add>, %29, %cst_20 [1] : vector<289x138xf32> to vector<289xf32>
    %31 = vector.shape_cast %30 : vector<289xf32> to vector<289x1xf32>
    %cst_21 = arith.constant 0.00724637694 : f32
    %32 = vector.broadcast %cst_21 : f32 to vector<289x1xf32>
    %33 = arith.mulf %31, %32 : vector<289x1xf32>
    %cst_22 = arith.constant dense<0xFF800000> : vector<289xf32>
    %34 = vector.multi_reduction <maximumf>, %29, %cst_22 [1] : vector<289x138xf32> to vector<289xf32>
    %35 = vector.shape_cast %34 : vector<289xf32> to vector<289x1xf32>
    %36 = vector.broadcast %5 : f32 to vector<289x1xf32>
    %37 = arith.mulf %36, %33 : vector<289x1xf32>
    %38 = vector.broadcast %6 : f32 to vector<289x1xf32>
    %39 = arith.mulf %38, %35 : vector<289x1xf32>
    %40 = arith.addf %37, %39 : vector<289x1xf32>
    %41 = vector.broadcast %7 : f32 to vector<289x1xf32>
    %42 = arith.addf %40, %41 : vector<289x1xf32>
    %43 = arith.negf %42 : vector<289x1xf32>
    %44 = math.exp %43 : vector<289x1xf32>
    %cst_23 = arith.constant 1.000000e+00 : f32
    %45 = vector.broadcast %cst_23 : f32 to vector<289x1xf32>
    %46 = arith.addf %45, %44 : vector<289x1xf32>
    %47 = arith.divf %45, %46 : vector<289x1xf32>
    %48 = vector.broadcast %47 : vector<289x1xf32> to vector<289x138xf32>
    %49 = arith.mulf %29, %48 : vector<289x138xf32>
    %50 = arith.truncf %49 : vector<289x138xf32> to vector<289x138xbf16>
    %c0_24 = arith.constant 0 : index
    %c0_25 = arith.constant 0 : index
    %51 = vector.load %arg4[%c0_24, %c0_25] : memref<138x64xbf16, #tpu.memory_space<vmem>>, vector<138x64xbf16>
    %cst_26 = arith.constant dense<0.000000e+00> : vector<289x64xf32>
    %52 = tpu.matmul %50, %51, %cst_26 {dimension_numbers = #tpu.dot_dimension_numbers<[1], [0], [0], [1], [0, 0, 1, 1], [], []>} : vector<289x138xbf16>, vector<138x64xbf16>, vector<289x64xf32> -> vector<289x64xf32>
    %53 = vector.broadcast %2 : vector<1x64xf32> to vector<289x64xf32>
    %54 = arith.addf %52, %53 : vector<289x64xf32>
    %cst_27 = arith.constant 0.000000e+00 : f32
    %55 = vector.broadcast %cst_27 : f32 to vector<289x64xf32>
    %56 = arith.maximumf %54, %55 : vector<289x64xf32>
    %57 = arith.truncf %56 : vector<289x64xf32> to vector<289x64xbf16>
    %c0_28 = arith.constant 0 : index
    %c0_29 = arith.constant 0 : index
    %58 = vector.load %arg5[%c0_28, %c0_29] : memref<64x138xbf16, #tpu.memory_space<vmem>>, vector<64x138xbf16>
    %cst_30 = arith.constant dense<0.000000e+00> : vector<289x138xf32>
    %59 = tpu.matmul %57, %58, %cst_30 {dimension_numbers = #tpu.dot_dimension_numbers<[1], [0], [0], [1], [0, 0, 1, 1], [], []>} : vector<289x64xbf16>, vector<64x138xbf16>, vector<289x138xf32> -> vector<289x138xf32>
    %60 = vector.broadcast %3 : vector<1x138xf32> to vector<289x138xf32>
    %61 = arith.addf %59, %60 : vector<289x138xf32>
    %62 = arith.addf %49, %61 : vector<289x138xf32>
    %cst_31 = arith.constant 0.000000e+00 : f32
    %63 = vector.broadcast %cst_31 : f32 to vector<289x138xf32>
    %64 = arith.maximumf %62, %63 : vector<289x138xf32>
    %cst_32 = arith.constant dense<0.000000e+00> : vector<138xf32>
    %65 = vector.multi_reduction <add>, %64, %cst_32 [0] : vector<289x138xf32> to vector<138xf32>
    %66 = vector.shape_cast %65 : vector<138xf32> to vector<1x138xf32>
    %cst_33 = arith.constant 0.00346020772 : f32
    %67 = vector.broadcast %cst_33 : f32 to vector<1x138xf32>
    %68 = arith.mulf %66, %67 : vector<1x138xf32>
    %c0_34 = arith.constant 0 : index
    %c0_35 = arith.constant 0 : index
    %69 = vector.load %arg12[%c0_34, %c0_35] : memref<2x138xf32, #tpu.memory_space<vmem>>, vector<1x138xf32>
    tpu.vector_store %arg12[%c0_34, %c0_35], %68 {strides = array<i32>} : memref<2x138xf32, #tpu.memory_space<vmem>>, vector<1x138xf32>,
    %c1_36 = arith.constant 1 : index
    %c0_37 = arith.constant 0 : index
    %c0_38 = arith.constant 0 : index
    %70 = vector.load %arg1[%c1_36, %c0_37, %c0_38] : memref<2x289x138xbf16, #tpu.memory_space<vmem>>, vector<1x289x138xbf16>
    %71 = vector.shape_cast %70 : vector<1x289x138xbf16> to vector<289x138xbf16>
    %72 = arith.extf %71 : vector<289x138xbf16> to vector<289x138xf32>
    %cst_39 = arith.constant dense<0.000000e+00> : vector<138xf32>
    %73 = vector.multi_reduction <add>, %72, %cst_39 [0] : vector<289x138xf32> to vector<138xf32>
    %74 = vector.shape_cast %73 : vector<138xf32> to vector<1x138xf32>
    %cst_40 = arith.constant 0.00346020772 : f32
    %75 = vector.broadcast %cst_40 : f32 to vector<1x138xf32>
    %76 = arith.mulf %74, %75 : vector<1x138xf32>
    %c0_41 = arith.constant 0 : index
    %c0_42 = arith.constant 0 : index
    %77 = vector.load %arg2[%c0_41, %c0_42] : memref<138x17xf32, #tpu.memory_space<vmem>>, vector<138x17xf32>
    %cst_43 = arith.constant dense<0.000000e+00> : vector<1x17xf32>
    %78 = tpu.matmul %76, %77, %cst_43 {dimension_numbers = #tpu.dot_dimension_numbers<[1], [0], [0], [1], [0, 0, 1, 1], [], []>} : vector<1x138xf32>, vector<138x17xf32>, vector<1x17xf32> -> vector<1x17xf32>
    %79 = arith.addf %78, %0 : vector<1x17xf32>
    %cst_44 = arith.constant 0.000000e+00 : f32
    %80 = vector.broadcast %cst_44 : f32 to vector<1x17xf32>
    %81 = arith.maximumf %79, %80 : vector<1x17xf32>
    %c0_45 = arith.constant 0 : index
    %c0_46 = arith.constant 0 : index
    %82 = vector.load %arg3[%c0_45, %c0_46] : memref<17x138xf32, #tpu.memory_space<vmem>>, vector<17x138xf32>
    %cst_47 = arith.constant dense<0.000000e+00> : vector<1x138xf32>
    %83 = tpu.matmul %81, %82, %cst_47 {dimension_numbers = #tpu.dot_dimension_numbers<[1], [0], [0], [1], [0, 0, 1, 1], [], []>} : vector<1x17xf32>, vector<17x138xf32>, vector<1x138xf32> -> vector<1x138xf32>
    %84 = arith.addf %83, %1 : vector<1x138xf32>
    %85 = arith.negf %84 : vector<1x138xf32>
    %86 = math.exp %85 : vector<1x138xf32>
    %cst_48 = arith.constant 1.000000e+00 : f32
    %87 = vector.broadcast %cst_48 : f32 to vector<1x138xf32>
    %88 = arith.addf %87, %86 : vector<1x138xf32>
    %89 = arith.divf %87, %88 : vector<1x138xf32>
    %90 = vector.broadcast %89 : vector<1x138xf32> to vector<289x138xf32>
    %91 = arith.mulf %72, %90 : vector<289x138xf32>
    %cst_49 = arith.constant dense<0.000000e+00> : vector<289xf32>
    %92 = vector.multi_reduction <add>, %91, %cst_49 [1] : vector<289x138xf32> to vector<289xf32>
    %93 = vector.shape_cast %92 : vector<289xf32> to vector<289x1xf32>
    %cst_50 = arith.constant 0.00724637694 : f32
    %94 = vector.broadcast %cst_50 : f32 to vector<289x1xf32>
    %95 = arith.mulf %93, %94 : vector<289x1xf32>
    %cst_51 = arith.constant dense<0xFF800000> : vector<289xf32>
    %96 = vector.multi_reduction <maximumf>, %91, %cst_51 [1] : vector<289x138xf32> to vector<289xf32>
    %97 = vector.shape_cast %96 : vector<289xf32> to vector<289x1xf32>
    %98 = vector.broadcast %5 : f32 to vector<289x1xf32>
    %99 = arith.mulf %98, %95 : vector<289x1xf32>
    %100 = vector.broadcast %6 : f32 to vector<289x1xf32>
    %101 = arith.mulf %100, %97 : vector<289x1xf32>
    %102 = arith.addf %99, %101 : vector<289x1xf32>
    %103 = vector.broadcast %7 : f32 to vector<289x1xf32>
    %104 = arith.addf %102, %103 : vector<289x1xf32>
    %105 = arith.negf %104 : vector<289x1xf32>
    %106 = math.exp %105 : vector<289x1xf32>
    %cst_52 = arith.constant 1.000000e+00 : f32
    %107 = vector.broadcast %cst_52 : f32 to vector<289x1xf32>
    %108 = arith.addf %107, %106 : vector<289x1xf32>
    %109 = arith.divf %107, %108 : vector<289x1xf32>
    %110 = vector.broadcast %109 : vector<289x1xf32> to vector<289x138xf32>
    %111 = arith.mulf %91, %110 : vector<289x138xf32>
    %112 = arith.truncf %111 : vector<289x138xf32> to vector<289x138xbf16>
    %c0_53 = arith.constant 0 : index
    %c0_54 = arith.constant 0 : index
    %113 = vector.load %arg4[%c0_53, %c0_54] : memref<138x64xbf16, #tpu.memory_space<vmem>>, vector<138x64xbf16>
    %cst_55 = arith.constant dense<0.000000e+00> : vector<289x64xf32>
    %114 = tpu.matmul %112, %113, %cst_55 {dimension_numbers = #tpu.dot_dimension_numbers<[1], [0], [0], [1], [0, 0, 1, 1], [], []>} : vector<289x138xbf16>, vector<138x64xbf16>, vector<289x64xf32> -> vector<289x64xf32>
    %115 = vector.broadcast %2 : vector<1x64xf32> to vector<289x64xf32>
    %116 = arith.addf %114, %115 : vector<289x64xf32>
    %cst_56 = arith.constant 0.000000e+00 : f32
    %117 = vector.broadcast %cst_56 : f32 to vector<289x64xf32>
    %118 = arith.maximumf %116, %117 : vector<289x64xf32>
    %119 = arith.truncf %118 : vector<289x64xf32> to vector<289x64xbf16>
    %c0_57 = arith.constant 0 : index
    %c0_58 = arith.constant 0 : index
    %120 = vector.load %arg5[%c0_57, %c0_58] : memref<64x138xbf16, #tpu.memory_space<vmem>>, vector<64x138xbf16>
    %cst_59 = arith.constant dense<0.000000e+00> : vector<289x138xf32>
    %121 = tpu.matmul %119, %120, %cst_59 {dimension_numbers = #tpu.dot_dimension_numbers<[1], [0], [0], [1], [0, 0, 1, 1], [], []>} : vector<289x64xbf16>, vector<64x138xbf16>, vector<289x138xf32> -> vector<289x138xf32>
    %122 = vector.broadcast %3 : vector<1x138xf32> to vector<289x138xf32>
    %123 = arith.addf %121, %122 : vector<289x138xf32>
    %124 = arith.addf %111, %123 : vector<289x138xf32>
    %cst_60 = arith.constant 0.000000e+00 : f32
    %125 = vector.broadcast %cst_60 : f32 to vector<289x138xf32>
    %126 = arith.maximumf %124, %125 : vector<289x138xf32>
    %cst_61 = arith.constant dense<0.000000e+00> : vector<138xf32>
    %127 = vector.multi_reduction <add>, %126, %cst_61 [0] : vector<289x138xf32> to vector<138xf32>
    %128 = vector.shape_cast %127 : vector<138xf32> to vector<1x138xf32>
    %cst_62 = arith.constant 0.00346020772 : f32
    %129 = vector.broadcast %cst_62 : f32 to vector<1x138xf32>
    %130 = arith.mulf %128, %129 : vector<1x138xf32>
    %c1_63 = arith.constant 1 : index
    %c0_64 = arith.constant 0 : index
    %131 = vector.load %arg12[%c1_63, %c0_64] : memref<2x138xf32, #tpu.memory_space<vmem>>, vector<1x138xf32>
    tpu.vector_store %arg12[%c1_63, %c0_64], %130 {strides = array<i32>} : memref<2x138xf32, #tpu.memory_space<vmem>>, vector<1x138xf32>,
    %c0_65 = arith.constant 0 : index
    %c0_66 = arith.constant 0 : index
    %132 = vector.load %arg12[%c0_65, %c0_66] : memref<2x138xf32, #tpu.memory_space<vmem>>, vector<2x138xf32>
    %133 = arith.truncf %132 : vector<2x138xf32> to vector<2x138xbf16>
    %c0_67 = arith.constant 0 : index
    %c0_68 = arith.constant 0 : index
    %134 = vector.load %arg6[%c0_67, %c0_68] : memref<138x4096xbf16, #tpu.memory_space<vmem>>, vector<138x4096xbf16>
    %cst_69 = arith.constant dense<0.000000e+00> : vector<2x4096xf32>
    %135 = tpu.matmul %133, %134, %cst_69 {dimension_numbers = #tpu.dot_dimension_numbers<[1], [0], [0], [1], [0, 0, 1, 1], [], []>} : vector<2x138xbf16>, vector<138x4096xbf16>, vector<2x4096xf32> -> vector<2x4096xf32>
    %c0_70 = arith.constant 0 : index
    %c0_71 = arith.constant 0 : index
    %136 = vector.load %arg9[%c0_70, %c0_71] : memref<1x4096xf32, #tpu.memory_space<vmem>>, vector<1x4096xf32>
    %137 = vector.broadcast %136 : vector<1x4096xf32> to vector<2x4096xf32>
    %138 = arith.addf %135, %137 : vector<2x4096xf32>
    %cst_72 = arith.constant 0.000000e+00 : f32
    %139 = vector.broadcast %cst_72 : f32 to vector<2x4096xf32>
    %140 = arith.maximumf %138, %139 : vector<2x4096xf32>
    %141 = arith.truncf %140 : vector<2x4096xf32> to vector<2x4096xbf16>
    %c0_73 = arith.constant 0 : index
    %c0_74 = arith.constant 0 : index
    %142 = vector.load %arg7[%c0_73, %c0_74] : memref<4096x8xbf16, #tpu.memory_space<vmem>>, vector<4096x8xbf16>
    %cst_75 = arith.constant dense<0.000000e+00> : vector<2x8xf32>
    %143 = tpu.matmul %141, %142, %cst_75 {dimension_numbers = #tpu.dot_dimension_numbers<[1], [0], [0], [1], [0, 0, 1, 1], [], []>} : vector<2x4096xbf16>, vector<4096x8xbf16>, vector<2x8xf32> -> vector<2x8xf32>
    %144 = vector.broadcast %4 : vector<1x8xf32> to vector<2x8xf32>
    %145 = arith.addf %143, %144 : vector<2x8xf32>
    %c0_76 = arith.constant 0 : index
    %c0_77 = arith.constant 0 : index
    %c0_78 = arith.constant 0 : index
    %146 = vector.load %arg11[%c0_76, %c0_77, %c0_78] : memref<1x2x8xf32, #tpu.memory_space<vmem>>, vector<1x2x8xf32>
    %147 = vector.shape_cast %146 : vector<1x2x8xf32> to vector<2x8xf32>
    %148 = vector.shape_cast %145 : vector<2x8xf32> to vector<1x2x8xf32>
    tpu.vector_store %arg11[%c0_76, %c0_77, %c0_78], %148 {strides = array<i32>} : memref<1x2x8xf32, #tpu.memory_space<vmem>>, vector<1x2x8xf32>,
    return
  }
  func.func @transform_0(%arg0: i32) -> (i32, i32, i32) {
    %c0_i32 = arith.constant 0 : i32
    %c0_i32_0 = arith.constant 0 : i32
    %c0_i32_1 = arith.constant 0 : i32
    return %arg0, %c0_i32, %c0_i32_0 : i32, i32, i32
  }
  func.func @transform_1(%arg0: i32) -> (i32, i32) {
    %c0_i32 = arith.constant 0 : i32
    %c0_i32_0 = arith.constant 0 : i32
    %c0_i32_1 = arith.constant 0 : i32
    return %c0_i32, %c0_i32_0 : i32, i32
  }
  func.func @transform_2(%arg0: i32) -> (i32, i32) {
    %c0_i32 = arith.constant 0 : i32
    %c0_i32_0 = arith.constant 0 : i32
    %c0_i32_1 = arith.constant 0 : i32
    return %c0_i32, %c0_i32_0 : i32, i32
  }
  func.func @transform_3(%arg0: i32) -> (i32, i32) {
    %c0_i32 = arith.constant 0 : i32
    %c0_i32_0 = arith.constant 0 : i32
    %c0_i32_1 = arith.constant 0 : i32
    return %c0_i32, %c0_i32_0 : i32, i32
  }
  func.func @transform_4(%arg0: i32) -> (i32, i32) {
    %c0_i32 = arith.constant 0 : i32
    %c0_i32_0 = arith.constant 0 : i32
    %c0_i32_1 = arith.constant 0 : i32
    return %c0_i32, %c0_i32_0 : i32, i32
  }
  func.func @transform_5(%arg0: i32) -> (i32, i32) {
    %c0_i32 = arith.constant 0 : i32
    %c0_i32_0 = arith.constant 0 : i32
    %c0_i32_1 = arith.constant 0 : i32
    return %c0_i32, %c0_i32_0 : i32, i32
  }
  func.func @transform_6(%arg0: i32) -> (i32, i32) {
    %c0_i32 = arith.constant 0 : i32
    %c0_i32_0 = arith.constant 0 : i32
    %c0_i32_1 = arith.constant 0 : i32
    return %c0_i32, %c0_i32_0 : i32, i32
  }
  func.func @transform_7(%arg0: i32) -> (i32, i32) {
    %c0_i32 = arith.constant 0 : i32
    %c0_i32_0 = arith.constant 0 : i32
    %c0_i32_1 = arith.constant 0 : i32
    return %c0_i32, %c0_i32_0 : i32, i32
  }
  func.func @transform_8(%arg0: i32) -> (i32, i32) {
    %c0_i32 = arith.constant 0 : i32
    %c0_i32_0 = arith.constant 0 : i32
    %c0_i32_1 = arith.constant 0 : i32
    return %c0_i32, %c0_i32_0 : i32, i32
  }
  func.func @transform_9(%arg0: i32) -> i32 {
    %c0_i32 = arith.constant 0 : i32
    %c0_i32_0 = arith.constant 0 : i32
    return %c0_i32 : i32
  }
  func.func @transform_10(%arg0: i32) -> (i32, i32, i32) {
    %c0_i32 = arith.constant 0 : i32
    %c0_i32_0 = arith.constant 0 : i32
    %c0_i32_1 = arith.constant 0 : i32
    return %arg0, %c0_i32, %c0_i32_0 : i32, i32, i32
  }
}

</mosaic_0001>

<llo_original>
// kernel: _lambda_.1
$region0: #{_lambda_.1}
  #allocation0 [shape = 'u32[]', space=smem, size = 0x4, offset = 0x4, fixed_abs, tag = 'smem constant byte address 0x4 - core index']
  #allocation1 [shape = 'u32[144,128]{1,0:T(1,128)}', space=vmem, size = 0x12000, scoped, tag = 'internal scratch']
  #allocation2 [shape = 'f32[2,138]{1,0:T(2,128)}', space=vmem, size = 0x800, scoped, tag = 'scratch operand']
  %s0 = inlined_call_operand.vmem [shape: bf16[4,289,138], index: 0, kind: input, shape index: {}]
  %s1 = inlined_call_operand.vmem [shape: f32[138,17], index: 1, kind: input, shape index: {}]
  %s2 = inlined_call_operand.vmem [shape: f32[17,138], index: 2, kind: input, shape index: {}]
  %s3 = inlined_call_operand.vmem [shape: bf16[138,64], index: 3, kind: input, shape index: {}]
  %s4 = inlined_call_operand.vmem [shape: bf16[64,138], index: 4, kind: input, shape index: {}]
  %s5 = inlined_call_operand.vmem [shape: bf16[138,4096], index: 5, kind: input, shape index: {}]
  %s6 = inlined_call_operand.vmem [shape: bf16[4096,8], index: 6, kind: input, shape index: {}]
  %s7 = inlined_call_operand.vmem [shape: f32[8,138], index: 7, kind: input, shape index: {}]
  %s8 = inlined_call_operand.vmem [shape: f32[1,4096], index: 8, kind: input, shape index: {}]
  %s9 = inlined_call_operand.vmem [shape: f32[3], index: 9, kind: input, shape index: {}]
  %s10 = inlined_call_operand.hbm [shape: f32[2,2,8], index: 10, kind: output, shape index: {}]
  %s11 = sld [smem:[#allocation0]]
  $region77: #{_lambda_.1} parent=0
    _
  %s13 = ssub.s32 1, %s11
  %s14 = scalar_select 0, %s13, %s11
  $region1: #{_lambda_.1} parent=0
    #allocation3 [shape = 'u8[512]{0}', space=smem, size = 0x200, scoped, tag = 'input window, operand 9, single buffered']
    #allocation4 [shape = 's32[2]{0}', space=sflag, size = 0x8, scoped, tag = 'scoped memory for _lambda_.1']
    #allocation5 [shape = 's32[2]{0}', space=sflag, size = 0x8, scoped, tag = 'scoped memory for _lambda_.1']
    #allocation6 [shape = 'u8[2048]{0}', space=vmem, size = 0x800, scoped, tag = 'output window, operand 0']
    %15 = vsyncpa [#allocation5], 0
    %16 = vsyncpa [#allocation4], 0
    %s17 = scalar_lea.sflag [#allocation4], 1
    %18 = vsyncpa %s17, 0
    loop: start=0, step=1, limit=4
    $region2: #{_lambda_.1} parent=1 // loop_pre_header
      _
    $region3: #{_lambda_.1} parent=1 // loop_header
      %s20 = sphi 0, %s24
      %p21 = scmp.ge.s32.totalorder %s20, 4
      %s30 = sphi 0, %s32
      %s33 = sphi 0, %s30
      %s34 = sphi 0, %s33
      %s50 = sphi 0, %s34
      %s54 = sphi 0, %s54
      %s56 = sphi 0, %s54
      %s57 = sphi 0, %s56
      %s71 = sphi 0, %s57
      %s75 = sphi 0, %s75
      %s77 = sphi 0, %s75
      %s78 = sphi 0, %s77
      %s92 = sphi 0, %s78
      %s96 = sphi 0, %s96
      %s98 = sphi 0, %s96
      %s99 = sphi 0, %s98
      %s113 = sphi 0, %s99
      %s117 = sphi 0, %s117
      %s119 = sphi 0, %s117
      %s120 = sphi 0, %s119
      %s134 = sphi 0, %s120
      %s138 = sphi 0, %s138
      %s140 = sphi 0, %s138
      %s141 = sphi 0, %s140
      %s155 = sphi 0, %s141
      %s159 = sphi 0, %s159
      %s161 = sphi 0, %s159
      %s162 = sphi 0, %s161
      %s176 = sphi 0, %s162
      %s180 = sphi 0, %s180
      %s182 = sphi 0, %s180
      %s183 = sphi 0, %s182
      %s197 = sphi 0, %s183
      %s201 = sphi 0, %s201
      %s203 = sphi 0, %s201
      %s204 = sphi 0, %s203
      %s218 = sphi 0, %s204
      %s222 = sphi 0, %s222
      %s224 = sphi 0, %s222
      %s225 = sphi 0, %s224
      %s239 = sphi 0, %s225
      %s245 = sphi 0, %s247
      %s248 = sphi 0, %s245
      %s249 = sphi 0, %s248
      %s265 = sphi 0, %s249
    $region4: #{_lambda_.1} parent=1 // loop_header_branch
      %23 = sbr.rel (%p21) target = $region8
    $region5: #{_lambda_.1} parent=1 // loop_body
      %s25 = ssub.s32 %s20, 1
      %s26 = ssub.s32 %s20, 2
      %s27 = sadd.s32 %s20, 1
      %s28 = ssub.s32 %s20, %s27
      %p29 = scmp.eq.s32.totalorder %s28, 0
      %s31 = sadd.s32 %s30, 1
      %s32 = scalar_select %p29, %s30, %s31
      %p35 = pneg %p29
      %p36 = scmp.eq.s32.totalorder %s20, 1
      %p37 = por %p35, %p36
      %p38 = scmp.ne.s32.totalorder %s30, %s33
      %p39 = scmp.eq.s32.totalorder %s20, 0
      %p40 = por %p38, %p39
      %p41 = scmp.ne.s32.totalorder %s30, %s33
      %p42 = scmp.eq.s32.totalorder %s25, 1
      %p43 = por %p41, %p42
      %p44 = scmp.ne.s32.totalorder %s33, %s34
      %p45 = scmp.eq.s32.totalorder %s25, 0
      %p46 = por %p44, %p45
      %p47 = scmp.ne.s32.totalorder %s33, %s34
      %p48 = scmp.eq.s32.totalorder %s26, 1
      %p49 = por %p47, %p48
      %p51 = scmp.ne.s32.totalorder %s34, %s50
      %p52 = scmp.eq.s32.totalorder %s26, 0
      %p53 = por %p51, %p52
      %s55 = sadd.s32 %s54, 1
      %p58 = scmp.eq.s32.totalorder %s20, 1
      %p59 = scmp.ne.s32.totalorder %s54, %s56
      %p60 = scmp.eq.s32.totalorder %s20, 0
      %p61 = por %p59, %p60
      %p62 = scmp.ne.s32.totalorder %s54, %s56
      %p63 = scmp.eq.s32.totalorder %s25, 1
      %p64 = por %p62, %p63
      %p65 = scmp.ne.s32.totalorder %s56, %s57
      %p66 = scmp.eq.s32.totalorder %s25, 0
      %p67 = por %p65, %p66
      %p68 = scmp.ne.s32.totalorder %s56, %s57
      %p69 = scmp.eq.s32.totalorder %s26, 1
      %p70 = por %p68, %p69
      %p72 = scmp.ne.s32.totalorder %s57, %s71
      %p73 = scmp.eq.s32.totalorder %s26, 0
      %p74 = por %p72, %p73
      %s76 = sadd.s32 %s75, 1
      %p79 = scmp.eq.s32.totalorder %s20, 1
      %p80 = scmp.ne.s32.totalorder %s75, %s77
      %p81 = scmp.eq.s32.totalorder %s20, 0
      %p82 = por %p80, %p81
      %p83 = scmp.ne.s32.totalorder %s75, %s77
      %p84 = scmp.eq.s32.totalorder %s25, 1
      %p85 = por %p83, %p84
      %p86 = scmp.ne.s32.totalorder %s77, %s78
      %p87 = scmp.eq.s32.totalorder %s25, 0
      %p88 = por %p86, %p87
      %p89 = scmp.ne.s32.totalorder %s77, %s78
      %p90 = scmp.eq.s32.totalorder %s26, 1
      %p91 = por %p89, %p90
      %p93 = scmp.ne.s32.totalorder %s78, %s92
      %p94 = scmp.eq.s32.totalorder %s26, 0
      %p95 = por %p93, %p94
      %s97 = sadd.s32 %s96, 1
      %p100 = scmp.eq.s32.totalorder %s20, 1
      %p101 = scmp.ne.s32.totalorder %s96, %s98
      %p102 = scmp.eq.s32.totalorder %s20, 0
      %p103 = por %p101, %p102
      %p104 = scmp.ne.s32.totalorder %s96, %s98
      %p105 = scmp.eq.s32.totalorder %s25, 1
      %p106 = por %p104, %p105
      %p107 = scmp.ne.s32.totalorder %s98, %s99
      %p108 = scmp.eq.s32.totalorder %s25, 0
      %p109 = por %p107, %p108
      %p110 = scmp.ne.s32.totalorder %s98, %s99
      %p111 = scmp.eq.s32.totalorder %s26, 1
      %p112 = por %p110, %p111
      %p114 = scmp.ne.s32.totalorder %s99, %s113
      %p115 = scmp.eq.s32.totalorder %s26, 0
      %p116 = por %p114, %p115
      %s118 = sadd.s32 %s117, 1
      %p121 = scmp.eq.s32.totalorder %s20, 1
      %p122 = scmp.ne.s32.totalorder %s117, %s119
      %p123 = scmp.eq.s32.totalorder %s20, 0
      %p124 = por %p122, %p123
      %p125 = scmp.ne.s32.totalorder %s117, %s119
      %p126 = scmp.eq.s32.totalorder %s25, 1
      %p127 = por %p125, %p126
      %p128 = scmp.ne.s32.totalorder %s119, %s120
      %p129 = scmp.eq.s32.totalorder %s25, 0
      %p130 = por %p128, %p129
      %p131 = scmp.ne.s32.totalorder %s119, %s120
      %p132 = scmp.eq.s32.totalorder %s26, 1
      %p133 = por %p131, %p132
      %p135 = scmp.ne.s32.totalorder %s120, %s134
      %p136 = scmp.eq.s32.totalorder %s26, 0
      %p137 = por %p135, %p136
      %s139 = sadd.s32 %s138, 1
      %p142 = scmp.eq.s32.totalorder %s20, 1
      %p143 = scmp.ne.s32.totalorder %s138, %s140
      %p144 = scmp.eq.s32.totalorder %s20, 0
      %p145 = por %p143, %p144
      %p146 = scmp.ne.s32.totalorder %s138, %s140
      %p147 = scmp.eq.s32.totalorder %s25, 1
      %p148 = por %p146, %p147
      %p149 = scmp.ne.s32.totalorder %s140, %s141
      %p150 = scmp.eq.s32.totalorder %s25, 0
      %p151 = por %p149, %p150
      %p152 = scmp.ne.s32.totalorder %s140, %s141
      %p153 = scmp.eq.s32.totalorder %s26, 1
      %p154 = por %p152, %p153
      %p156 = scmp.ne.s32.totalorder %s141, %s155
      %p157 = scmp.eq.s32.totalorder %s26, 0
      %p158 = por %p156, %p157
      %s160 = sadd.s32 %s159, 1
      %p163 = scmp.eq.s32.totalorder %s20, 1
      %p164 = scmp.ne.s32.totalorder %s159, %s161
      %p165 = scmp.eq.s32.totalorder %s20, 0
      %p166 = por %p164, %p165
      %p167 = scmp.ne.s32.totalorder %s159, %s161
      %p168 = scmp.eq.s32.totalorder %s25, 1
      %p169 = por %p167, %p168
      %p170 = scmp.ne.s32.totalorder %s161, %s162
      %p171 = scmp.eq.s32.totalorder %s25, 0
      %p172 = por %p170, %p171
      %p173 = scmp.ne.s32.totalorder %s161, %s162
      %p174 = scmp.eq.s32.totalorder %s26, 1
      %p175 = por %p173, %p174
      %p177 = scmp.ne.s32.totalorder %s162, %s176
      %p178 = scmp.eq.s32.totalorder %s26, 0
      %p179 = por %p177, %p178
      %s181 = sadd.s32 %s180, 1
      %p184 = scmp.eq.s32.totalorder %s20, 1
      %p185 = scmp.ne.s32.totalorder %s180, %s182
      %p186 = scmp.eq.s32.totalorder %s20, 0
      %p187 = por %p185, %p186
      %p188 = scmp.ne.s32.totalorder %s180, %s182
      %p189 = scmp.eq.s32.totalorder %s25, 1
      %p190 = por %p188, %p189
      %p191 = scmp.ne.s32.totalorder %s182, %s183
      %p192 = scmp.eq.s32.totalorder %s25, 0
      %p193 = por %p191, %p192
      %p194 = scmp.ne.s32.totalorder %s182, %s183
      %p195 = scmp.eq.s32.totalorder %s26, 1
      %p196 = por %p194, %p195
      %p198 = scmp.ne.s32.totalorder %s183, %s197
      %p199 = scmp.eq.s32.totalorder %s26, 0
      %p200 = por %p198, %p199
      %s202 = sadd.s32 %s201, 1
      %p205 = scmp.eq.s32.totalorder %s20, 1
      %p206 = scmp.ne.s32.totalorder %s201, %s203
      %p207 = scmp.eq.s32.totalorder %s20, 0
      %p208 = por %p206, %p207
      %p209 = scmp.ne.s32.totalorder %s201, %s203
      %p210 = scmp.eq.s32.totalorder %s25, 1
      %p211 = por %p209, %p210
      %p212 = scmp.ne.s32.totalorder %s203, %s204
      %p213 = scmp.eq.s32.totalorder %s25, 0
      %p214 = por %p212, %p213
      %p215 = scmp.ne.s32.totalorder %s203, %s204
      %p216 = scmp.eq.s32.totalorder %s26, 1
      %p217 = por %p215, %p216
      %p219 = scmp.ne.s32.totalorder %s204, %s218
      %p220 = scmp.eq.s32.totalorder %s26, 0
      %p221 = por %p219, %p220
      %s223 = sadd.s32 %s222, 1
      %p226 = scmp.eq.s32.totalorder %s20, 1
      %p227 = scmp.ne.s32.totalorder %s222, %s224
      %p228 = scmp.eq.s32.totalorder %s20, 0
      %p229 = por %p227, %p228
      %p230 = scmp.ne.s32.totalorder %s222, %s224
      %p231 = scmp.eq.s32.totalorder %s25, 1
      %p232 = por %p230, %p231
      %p233 = scmp.ne.s32.totalorder %s224, %s225
      %p234 = scmp.eq.s32.totalorder %s25, 0
      %p235 = por %p233, %p234
      %p236 = scmp.ne.s32.totalorder %s224, %s225
      %p237 = scmp.eq.s32.totalorder %s26, 1
      %p238 = por %p236, %p237
      %p240 = scmp.ne.s32.totalorder %s225, %s239
      %p241 = scmp.eq.s32.totalorder %s26, 0
      %p242 = por %p240, %p241
      %s243 = ssub.s32 %s20, %s27
      %p244 = scmp.eq.s32.totalorder %s243, 0
      %s246 = sadd.s32 %s245, 1
      %s247 = scalar_select %p244, %s245, %s246
      %p250 = pneg %p244
      %p251 = scmp.eq.s32.totalorder %s20, 1
      %p252 = por %p250, %p251
      %p253 = scmp.ne.s32.totalorder %s245, %s248
      %p254 = scmp.eq.s32.totalorder %s20, 0
      %p255 = por %p253, %p254
      %p256 = scmp.ne.s32.totalorder %s245, %s248
      %p257 = scmp.eq.s32.totalorder %s25, 1
      %p258 = por %p256, %p257
      %p259 = scmp.ne.s32.totalorder %s248, %s249
      %p260 = scmp.eq.s32.totalorder %s25, 0
      %p261 = por %p259, %p260
      %p262 = scmp.ne.s32.totalorder %s248, %s249
      %p263 = scmp.eq.s32.totalorder %s26, 1
      %p264 = por %p262, %p263
      %p266 = scmp.ne.s32.totalorder %s249, %s265
      %p267 = scmp.eq.s32.totalorder %s26, 0
      %p268 = por %p266, %p267
      %p269 = scmp.le.s32.totalorder 1, %s20
      %p270 = scmp.lt.s32.totalorder %s20, 3
      %p271 = pnand %p269, %p270
      %p272 = pneg %p271
      // Predicated region
      $region9: #{_lambda_.1} parent=5 // pred_check
        _
      $region10: #{_lambda_.1} parent=5 // pred_check_branch
        %274 = sbr.rel (%p271) target = $region12
      $region11: #{_lambda_.1} parent=5 // pred_region
        %s275 = ssub.s32 %s20, 1
        // Predicated region
        $region13: #{_lambda_.1} parent=11 // pred_check
          %p276 = pneg %p67
        $region14: #{_lambda_.1} parent=11 // pred_check_branch
          %278 = sbr.rel (%p276) target = $region16
        $region15: #{_lambda_.1} parent=11 // pred_region
          _
        $region16: #{_lambda_.1} parent=11 // pred_fallthru
          _
        // Predicated region
        $region17: #{_lambda_.1} parent=11 // pred_check
          %p279 = pneg %p88
        $region18: #{_lambda_.1} parent=11 // pred_check_branch
          %281 = sbr.rel (%p279) target = $region20
        $region19: #{_lambda_.1} parent=11 // pred_region
          _
        $region20: #{_lambda_.1} parent=11 // pred_fallthru
          _
        // Predicated region
        $region21: #{_lambda_.1} parent=11 // pred_check
          %p282 = pneg %p109
        $region22: #{_lambda_.1} parent=11 // pred_check_branch
          %284 = sbr.rel (%p282) target = $region24
        $region23: #{_lambda_.1} parent=11 // pred_region
          _
        $region24: #{_lambda_.1} parent=11 // pred_fallthru
          _
        // Predicated region
        $region25: #{_lambda_.1} parent=11 // pred_check
          %p285 = pneg %p130
        $region26: #{_lambda_.1} parent=11 // pred_check_branch
          %287 = sbr.rel (%p285) target = $region28
        $region27: #{_lambda_.1} parent=11 // pred_region
          _
        $region28: #{_lambda_.1} parent=11 // pred_fallthru
          _
        // Predicated region
        $region29: #{_lambda_.1} parent=11 // pred_check
          %p288 = pneg %p151
        $region30: #{_lambda_.1} parent=11 // pred_check_branch
          %290 = sbr.rel (%p288) target = $region32
        $region31: #{_lambda_.1} parent=11 // pred_region
          _
        $region32: #{_lambda_.1} parent=11 // pred_fallthru
          _
        // Predicated region
        $region33: #{_lambda_.1} parent=11 // pred_check
          %p291 = pneg %p172
        $region34: #{_lambda_.1} parent=11 // pred_check_branch
          %293 = sbr.rel (%p291) target = $region36
        $region35: #{_lambda_.1} parent=11 // pred_region
          _
        $region36: #{_lambda_.1} parent=11 // pred_fallthru
          _
        // Predicated region
        $region37: #{_lambda_.1} parent=11 // pred_check
          %p294 = pneg %p193
        $region38: #{_lambda_.1} parent=11 // pred_check_branch
          %296 = sbr.rel (%p294) target = $region40
        $region39: #{_lambda_.1} parent=11 // pred_region
          _
        $region40: #{_lambda_.1} parent=11 // pred_fallthru
          _
        // Predicated region
        $region41: #{_lambda_.1} parent=11 // pred_check
          %p297 = pneg %p214
        $region42: #{_lambda_.1} parent=11 // pred_check_branch
          %299 = sbr.rel (%p297) target = $region44
        $region43: #{_lambda_.1} parent=11 // pred_region
          _
        $region44: #{_lambda_.1} parent=11 // pred_fallthru
          _
        // Predicated region
        $region45: #{_lambda_.1} parent=11 // pred_check
          %p300 = pneg %p235
        $region46: #{_lambda_.1} parent=11 // pred_check_branch
          %302 = sbr.rel (%p300) target = $region48
        $region47: #{_lambda_.1} parent=11 // pred_region
          %s304 = ssub.s32 16, 16
          %305 = vsyncadd [#allocation5], %s304
          %s307 = sshll.u32 %s9, 4
          %s308 = int_to_ptr.vmem [resolvable:$true] %s307
          %310 = dma.vmem_to_smem %s308, 16, [#allocation3], [#allocation5]
        $region48: #{_lambda_.1} parent=11 // pred_fallthru
          _
      $region12: #{_lambda_.1} parent=5 // pred_fallthru
        _
      %p311 = scmp.lt.s32.totalorder %s20, 2
      // Predicated region
      $region49: #{_lambda_.1} parent=5 // pred_check
        %p312 = pneg %p311
      $region50: #{_lambda_.1} parent=5 // pred_check_branch
        %314 = sbr.rel (%p312) target = $region52
      $region51: #{_lambda_.1} parent=5 // pred_region
        // Predicated region
        $region53: #{_lambda_.1} parent=51 // pred_check
          %p315 = pneg %p40
        $region54: #{_lambda_.1} parent=51 // pred_check_branch
          %317 = sbr.rel (%p315) target = $region56
        $region55: #{_lambda_.1} parent=51 // pred_region
          %s318 = smul.u32 2, %s20
          %p319 = scmp.lt.s32.totalorder %s318, 3
          %s320 = scalar_select %p319, %s318, 3
          %s321 = smul.addr %s320, 74
          %s322 = smul.addr %s321, 4
          %s323 = scalar_lea.vmem %s0, %s322
          %s324 = smul.u32 2, %s20
        $region56: #{_lambda_.1} parent=51 // pred_fallthru
          _
      $region52: #{_lambda_.1} parent=5 // pred_fallthru
        _
      %p325 = scmp.le.s32.totalorder 1, %s20
      %p326 = scmp.lt.s32.totalorder %s20, 3
      %p327 = pnand %p325, %p326
      %p328 = pneg %p327
      // Predicated region
      $region57: #{_lambda_.1} parent=5 // pred_check
        _
      $region58: #{_lambda_.1} parent=5 // pred_check_branch
        %330 = sbr.rel (%p327) target = $region60
      $region59: #{_lambda_.1} parent=5 // pred_region
        %s331 = ssub.s32 %s20, 1
        // Predicated region
        $region61: #{_lambda_.1} parent=59 // pred_check
          %p332 = pneg %p235
        $region62: #{_lambda_.1} parent=59 // pred_check_branch
          %334 = sbr.rel (%p332) target = $region64
        $region63: #{_lambda_.1} parent=59 // pred_region
          %335 = dma.done [#allocation5], 16
        $region64: #{_lambda_.1} parent=59 // pred_fallthru
          _
        %336 = sfence
        %s337 = smul.u32 2, %s25
        %p338 = scmp.lt.s32.totalorder %s337, 3
        %s339 = scalar_select %p338, %s337, 3
        %s340 = smul.addr %s339, 74
        %s341 = smul.addr %s340, 4
        %s342 = scalar_lea.vmem %s0, %s341
        %p343 = pneg %p46
        %p344 = pneg %p43
        %p345 = pneg %p67
        %p346 = pneg %p64
        %p347 = pneg %p88
        %p348 = pneg %p85
        %p349 = pneg %p109
        %p350 = pneg %p106
        %p351 = pneg %p130
        %p352 = pneg %p127
        %p353 = pneg %p151
        %p354 = pneg %p148
        %p355 = pneg %p172
        %p356 = pneg %p169
        %p357 = pneg %p193
        %p358 = pneg %p190
        %p359 = pneg %p214
        %p360 = pneg %p211
        %p361 = pneg %p235
        %p362 = pneg %p232
        %p363 = pneg %p261
        %p364 = pneg %p258
        %s365 = sand.u32 %s248, 1
        %s366 = scalar_lea.sflag [#allocation4], %s365
        %s367 = sand.u32 %s248, 1
        %s368 = smul.addr %s367, 2
        %s369 = scalar_lea.vmem [#allocation6], %s368
        %s370 = smul.u32 2, %s25
        %p371 = scmp.lt.s32.totalorder %s370, 3
        %s372 = scalar_select %p371, %s370, 3
        %s373 = smul.addr %s372, 74
        %s374 = smul.addr %s373, 4
        %s375 = scalar_lea.vmem %s0, %s374
        %s376 = smul.u32 2, %s25
        %v378 = vld [vmem:[%s7] ss:$0 sm:$0xff]
        %s379 = scalar_lea.vmem %s7, 1
        %v380 = vld [vmem:[%s379] ss:$8 sm:$0x3]
        %v381 = vld [vmem:[%s7 + $0x2] ss:$0 sm:$0xff]
        %s382 = scalar_lea.vmem %s7, 3
        %v383 = vld [vmem:[%s382] ss:$8 sm:$0x3]
        %v384 = vld [vmem:[%s7 + $0x4] ss:$0 sm:$0xff]
        %s385 = sld [smem:[#allocation3]]
        %s386 = sld [smem:[#allocation3 + $0x1]]
        %s387 = sld [smem:[#allocation3 + $0x2]]
        %v388 = vld [vmem:[%s375] sm:$0xff]
        %v389 = vld [vmem:[%s375 + $0x8] sm:$0xff]
        %v390 = vld [vmem:[%s375 + $0x10] sm:$0xff]
        %v391 = vld [vmem:[%s375 + $0x18] sm:$0xff]
        %v392 = vld [vmem:[%s375 + $0x20] sm:$0xff]
        %v393 = vld [vmem:[%s375 + $0x28] sm:$0xff]
        %v394 = vld [vmem:[%s375 + $0x30] sm:$0xff]
        %v395 = vld [vmem:[%s375 + $0x38] sm:$0xff]
        %v396 = vld [vmem:[%s375 + $0x40] sm:$0xff]
        %v397 = vld [vmem:[%s375 + $0x48] sm:$0xff]
        %v398 = vld [vmem:[%s375 + $0x50] sm:$0xff]
        %v399 = vld [vmem:[%s375 + $0x58] sm:$0xff]
        %v400 = vld [vmem:[%s375 + $0x60] sm:$0xff]
        %v401 = vld [vmem:[%s375 + $0x68] sm:$0xff]
        %v402 = vld [vmem:[%s375 + $0x70] sm:$0xff]
        %v403 = vld [vmem:[%s375 + $0x78] sm:$0xff]
        %v404 = vld [vmem:[%s375 + $0x80] sm:$0xff]
        %v405 = vld [vmem:[%s375 + $0x88] sm:$0xff]
        %v406 = vld [vmem:[%s375 + $0x90] sm:$0xff]
        %v407 = vld [vmem:[%s375 + $0x98] sm:$0xff]
        %v408 = vld [vmem:[%s375 + $0xa0] sm:$0xff]
        %v409 = vld [vmem:[%s375 + $0xa8] sm:$0xff]
        %v410 = vld [vmem:[%s375 + $0xb0] sm:$0xff]
        %v411 = vld [vmem:[%s375 + $0xb8] sm:$0xff]
        %v412 = vld [vmem:[%s375 + $0xc0] sm:$0xff]
        %v413 = vld [vmem:[%s375 + $0xc8] sm:$0xff]
        %v414 = vld [vmem:[%s375 + $0xd0] sm:$0xff]
        %v415 = vld [vmem:[%s375 + $0xd8] sm:$0xff]
        %v416 = vld [vmem:[%s375 + $0xe0] sm:$0xff]
        %v417 = vld [vmem:[%s375 + $0xe8] sm:$0xff]
        %v418 = vld [vmem:[%s375 + $0xf0] sm:$0xff]
        %v419 = vld [vmem:[%s375 + $0xf8] sm:$0xff]
        %v420 = vld [vmem:[%s375 + $0x100] sm:$0xff]
        %v421 = vld [vmem:[%s375 + $0x108] sm:$0xff]
        %v422 = vld [vmem:[%s375 + $0x110] sm:$0xff]
        %v423 = vld [vmem:[%s375 + $0x118] sm:$0xff]
        %v424 = vld [vmem:[%s375 + $0x120] sm:$0x11]
        %v425 = vunpack.c.l.bf16 %v388
        %v426 = vunpack.c.h.bf16 %v388
        %v427 = vunpack.c.l.bf16 %v389
        %v428 = vunpack.c.h.bf16 %v389
        %v429 = vunpack.c.l.bf16 %v390
        %v430 = vunpack.c.h.bf16 %v390
        %v431 = vunpack.c.l.bf16 %v391
        %v432 = vunpack.c.h.bf16 %v391
        %v433 = vunpack.c.l.bf16 %v392
        %v434 = vunpack.c.h.bf16 %v392
        %v435 = vunpack.c.l.bf16 %v393
        %v436 = vunpack.c.h.bf16 %v393
        %v437 = vunpack.c.l.bf16 %v394
        %v438 = vunpack.c.h.bf16 %v394
        %v439 = vunpack.c.l.bf16 %v395
        %v440 = vunpack.c.h.bf16 %v395
        %v441 = vunpack.c.l.bf16 %v396
        %v442 = vunpack.c.h.bf16 %v396
        %v443 = vunpack.c.l.bf16 %v397
        %v444 = vunpack.c.h.bf16 %v397
        %v445 = vunpack.c.l.bf16 %v398
        %v446 = vunpack.c.h.bf16 %v398
        %v447 = vunpack.c.l.bf16 %v399
        %v448 = vunpack.c.h.bf16 %v399
        %v449 = vunpack.c.l.bf16 %v400
        %v450 = vunpack.c.h.bf16 %v400
        %v451 = vunpack.c.l.bf16 %v401
        %v452 = vunpack.c.h.bf16 %v401
        %v453 = vunpack.c.l.bf16 %v402
        %v454 = vunpack.c.h.bf16 %v402
        %v455 = vunpack.c.l.bf16 %v403
        %v456 = vunpack.c.h.bf16 %v403
        %v457 = vunpack.c.l.bf16 %v404
        %v458 = vunpack.c.h.bf16 %v404
        %v459 = vunpack.c.l.bf16 %v405
        %v460 = vunpack.c.h.bf16 %v405
        %v461 = vunpack.c.l.bf16 %v406
        %v462 = vunpack.c.h.bf16 %v406
        %v463 = vunpack.c.l.bf16 %v407
        %v464 = vunpack.c.h.bf16 %v407
        %v465 = vunpack.c.l.bf16 %v408
        %v466 = vunpack.c.h.bf16 %v408
        %v467 = vunpack.c.l.bf16 %v409
        %v468 = vunpack.c.h.bf16 %v409
        %v469 = vunpack.c.l.bf16 %v410
        %v470 = vunpack.c.h.bf16 %v410
        %v471 = vunpack.c.l.bf16 %v411
        %v472 = vunpack.c.h.bf16 %v411
        %v473 = vunpack.c.l.bf16 %v412
        %v474 = vunpack.c.h.bf16 %v412
        %v475 = vunpack.c.l.bf16 %v413
        %v476 = vunpack.c.h.bf16 %v413
        %v477 = vunpack.c.l.bf16 %v414
        %v478 = vunpack.c.h.bf16 %v414
        %v479 = vunpack.c.l.bf16 %v415
        %v480 = vunpack.c.h.bf16 %v415
        %v481 = vunpack.c.l.bf16 %v416
        %v482 = vunpack.c.h.bf16 %v416
        %v483 = vunpack.c.l.bf16 %v417
        %v484 = vunpack.c.h.bf16 %v417
        %v485 = vunpack.c.l.bf16 %v418
        %v486 = vunpack.c.h.bf16 %v418
        %v487 = vunpack.c.l.bf16 %v419
        %v488 = vunpack.c.h.bf16 %v419
        %v489 = vunpack.c.l.bf16 %v420
        %v490 = vunpack.c.h.bf16 %v420
        %v491 = vunpack.c.l.bf16 %v421
        %v492 = vunpack.c.h.bf16 %v421
        %v493 = vunpack.c.l.bf16 %v422
        %v494 = vunpack.c.h.bf16 %v422
        %v495 = vunpack.c.l.bf16 %v423
        %v496 = vunpack.c.h.bf16 %v423
        %v497 = vunpack.c.l.bf16 %v424
        %v498 = vunpack.c.h.bf16 %v424
        %v499 = vadd.f32 %v425, %v427
        %v500 = vadd.f32 %v499, %v429
        %v501 = vadd.f32 %v500, %v431
        %v502 = vadd.f32 %v501, %v433
        %v503 = vadd.f32 %v502, %v435
        %v504 = vadd.f32 %v503, %v437
        %v505 = vadd.f32 %v504, %v439
        %v506 = vadd.f32 %v505, %v441
        %v507 = vadd.f32 %v506, %v443
        %v508 = vadd.f32 %v507, %v445
        %v509 = vadd.f32 %v508, %v447
        %v510 = vadd.f32 %v509, %v449
        %v511 = vadd.f32 %v510, %v451
        %v512 = vadd.f32 %v511, %v453
        %v513 = vadd.f32 %v512, %v455
        %v514 = vadd.f32 %v513, %v457
        %v515 = vadd.f32 %v514, %v459
        %v516 = vadd.f32 %v515, %v461
        %v517 = vadd.f32 %v516, %v463
        %v518 = vadd.f32 %v517, %v465
        %v519 = vadd.f32 %v518, %v467
        %v520 = vadd.f32 %v519, %v469
        %v521 = vadd.f32 %v520, %v471
        %v522 = vadd.f32 %v521, %v473
        %v523 = vadd.f32 %v522, %v475
        %v524 = vadd.f32 %v523, %v477
        %v525 = vadd.f32 %v524, %v479
        %v526 = vadd.f32 %v525, %v481
        %v527 = vadd.f32 %v526, %v483
        %v528 = vadd.f32 %v527, %v485
        %v529 = vadd.f32 %v528, %v487
        %v530 = vadd.f32 %v529, %v489
        %v531 = vadd.f32 %v530, %v491
        %v532 = vadd.f32 %v531, %v493
        %v533 = vadd.f32 %v532, %v495
        %vm534 = vcmask 1040384
        %v535 = vsel %vm534, %v497, 0.0
        %v536 = vadd.f32 %v533, %v535
        %v537 = vrot.slane %v536, 4
        %v538 = vadd.f32 %v536, %v537
        %v539 = vrot.slane %v538, 2
        %v540 = vadd.f32 %v538, %v539
        %v541 = vrot.slane %v540, 1
        %v542 = vadd.f32 %v540, %v541
        %vm543 = vcmask 80896
        %v544 = vsel %vm543, %v426, 0.0
        %v545 = vsel %vm543, %v428, 0.0
        %v546 = vadd.f32 %v544, %v545
        %v547 = vsel %vm543, %v430, 0.0
        %v548 = vadd.f32 %v546, %v547
        %v549 = vsel %vm543, %v432, 0.0
        %v550 = vadd.f32 %v548, %v549
        %v551 = vsel %vm543, %v434, 0.0
        %v552 = vadd.f32 %v550, %v551
        %v553 = vsel %vm543, %v436, 0.0
        %v554 = vadd.f32 %v552, %v553
        %v555 = vsel %vm543, %v438, 0.0
        %v556 = vadd.f32 %v554, %v555
        %v557 = vsel %vm543, %v440, 0.0
        %v558 = vadd.f32 %v556, %v557
        %v559 = vsel %vm543, %v442, 0.0
        %v560 = vadd.f32 %v558, %v559
        %v561 = vsel %vm543, %v444, 0.0
        %v562 = vadd.f32 %v560, %v561
        %v563 = vsel %vm543, %v446, 0.0
        %v564 = vadd.f32 %v562, %v563
        %v565 = vsel %vm543, %v448, 0.0
        %v566 = vadd.f32 %v564, %v565
        %v567 = vsel %vm543, %v450, 0.0
        %v568 = vadd.f32 %v566, %v567
        %v569 = vsel %vm543, %v452, 0.0
        %v570 = vadd.f32 %v568, %v569
        %v571 = vsel %vm543, %v454, 0.0
        %v572 = vadd.f32 %v570, %v571
        %v573 = vsel %vm543, %v456, 0.0
        %v574 = vadd.f32 %v572, %v573
        %v575 = vsel %vm543, %v458, 0.0
        %v576 = vadd.f32 %v574, %v575
        %v577 = vsel %vm543, %v460, 0.0
        %v578 = vadd.f32 %v576, %v577
        %v579 = vsel %vm543, %v462, 0.0
        %v580 = vadd.f32 %v578, %v579
        %v581 = vsel %vm543, %v464, 0.0
        %v582 = vadd.f32 %v580, %v581
        %v583 = vsel %vm543, %v466, 0.0
        %v584 = vadd.f32 %v582, %v583
        %v585 = vsel %vm543, %v468, 0.0
        %v586 = vadd.f32 %v584, %v585
        %v587 = vsel %vm543, %v470, 0.0
        %v588 = vadd.f32 %v586, %v587
        %v589 = vsel %vm543, %v472, 0.0
        %v590 = vadd.f32 %v588, %v589
        %v591 = vsel %vm543, %v474, 0.0
        %v592 = vadd.f32 %v590, %v591
        %v593 = vsel %vm543, %v476, 0.0
        %v594 = vadd.f32 %v592, %v593
        %v595 = vsel %vm543, %v478, 0.0
        %v596 = vadd.f32 %v594, %v595
        %v597 = vsel %vm543, %v480, 0.0
        %v598 = vadd.f32 %v596, %v597
        %v599 = vsel %vm543, %v482, 0.0
        %v600 = vadd.f32 %v598, %v599
        %v601 = vsel %vm543, %v484, 0.0
        %v602 = vadd.f32 %v600, %v601
        %v603 = vsel %vm543, %v486, 0.0
        %v604 = vadd.f32 %v602, %v603
        %v605 = vsel %vm543, %v488, 0.0
        %v606 = vadd.f32 %v604, %v605
        %v607 = vsel %vm543, %v490, 0.0
        %v608 = vadd.f32 %v606, %v607
        %v609 = vsel %vm543, %v492, 0.0
        %v610 = vadd.f32 %v608, %v609
        %v611 = vsel %vm543, %v494, 0.0
        %v612 = vadd.f32 %v610, %v611
        %v613 = vsel %vm543, %v496, 0.0
        %v614 = vadd.f32 %v612, %v613
        %vm615 = vcmask 73728
        %v616 = vsel %vm615, %v498, 0.0
        %v617 = vadd.f32 %v614, %v616
        %v618 = vrot.slane %v617, 4
        %v619 = vadd.f32 %v617, %v618
        %v620 = vrot.slane %v619, 2
        %v621 = vadd.f32 %v619, %v620
        %v622 = vrot.slane %v621, 1
        %v623 = vadd.f32 %v621, %v622
        %v624 = vmul.f32 %v542, 0.0034602077
        %v625 = vmul.f32 %v623, 0.0034602077
        %v626 = vld [vmem:[%s1] sm:$0xff]
        %v627 = vld [vmem:[%s1 + $0x8] sm:$0xff]
        %v628 = vld [vmem:[%s1 + $0x10] sm:$0xff]
        %v629 = vld [vmem:[%s1 + $0x18] sm:$0xff]
        %v630 = vld [vmem:[%s1 + $0x20] sm:$0xff]
        %v631 = vld [vmem:[%s1 + $0x28] sm:$0xff]
        %v632 = vld [vmem:[%s1 + $0x30] sm:$0xff]
        %v633 = vld [vmem:[%s1 + $0x38] sm:$0xff]
        %v634 = vld [vmem:[%s1 + $0x40] sm:$0xff]
        %v635 = vld [vmem:[%s1 + $0x48] sm:$0xff]
        %v636 = vld [vmem:[%s1 + $0x50] sm:$0xff]
        %v637 = vld [vmem:[%s1 + $0x58] sm:$0xff]
        %v638 = vld [vmem:[%s1 + $0x60] sm:$0xff]
        %v639 = vld [vmem:[%s1 + $0x68] sm:$0xff]
        %v640 = vld [vmem:[%s1 + $0x70] sm:$0xff]
        %v641 = vld [vmem:[%s1 + $0x78] sm:$0xff]
        %v642 = vld [vmem:[%s1 + $0x80] sm:$0xff]
        %v643 = vld [vmem:[%s1 + $0x88] sm:$0x3]
        %v645 = vsel %vm543, %v625, 0
        %vm647 = vcmask 1041408
        %v649 = vsel %vm647, %v643, 0
        %651 = vmatprep.subr.mxu0 0.0
        %652 = vmatpush1.msra.mxu0 %v626
        %653 = vmatprep.subr.mxu0 0.0
        %654 = vmatpush1.msra.mxu0 %v627
        %655 = vmatprep.subr.mxu0 0.0
        %656 = vmatpush1.msra.mxu0 %v628
        %657 = vmatprep.subr.mxu0 0.0
        %658 = vmatpush1.msra.mxu0 %v629
        %659 = vmatprep.subr.mxu0 0.0
        %660 = vmatpush1.msra.mxu0 %v630
        %661 = vmatprep.subr.mxu0 0.0
        %662 = vmatpush1.msra.mxu0 %v631
        %663 = vmatprep.subr.mxu0 0.0
        %664 = vmatpush1.msra.mxu0 %v632
        %665 = vmatprep.subr.mxu0 0.0
        %666 = vmatpush1.msra.mxu0 %v633
        %667 = vmatprep.subr.mxu0 0.0
        %668 = vmatpush1.msra.mxu0 %v634
        %669 = vmatprep.subr.mxu0 0.0
        %670 = vmatpush1.msra.mxu0 %v635
        %671 = vmatprep.subr.mxu0 0.0
        %672 = vmatpush1.msra.mxu0 %v636
        %673 = vmatprep.subr.mxu0 0.0
        %674 = vmatpush1.msra.mxu0 %v637
        %675 = vmatprep.subr.mxu0 0.0
        %676 = vmatpush1.msra.mxu0 %v638
        %677 = vmatprep.subr.mxu0 0.0
        %678 = vmatpush1.msra.mxu0 %v639
        %679 = vmatprep.subr.mxu0 0.0
        %680 = vmatpush1.msra.mxu0 %v640
        %681 = vmatprep.subr.mxu0 0.0
        %682 = vmatpush1.msra.mxu0 %v641
        %683 = vmatprep.subr.mxu0 0.0
        %684 = vmatpush1.msra.mxu0 %v642
        %685 = vmatprep.subr.mxu0 0.0
        %686 = vmatpush1.msra.mxu0 %v649
        %687 = vmatprep.subr.mxu0 0.0
        %688 = vmatpush1.msra.mxu0 0.0
        %689 = vmatprep.subr.mxu0 0.0
        %690 = vmatpush1.msra.mxu0 0.0
        %691 = vmatprep.subr.mxu0 0.0
        %692 = vmatpush1.msra.mxu0 0.0
        %693 = vmatprep.subr.mxu0 0.0
        %694 = vmatpush1.msra.mxu0 0.0
        %695 = vmatprep.subr.mxu0 0.0
        %696 = vmatpush1.msra.mxu0 0.0
        %697 = vmatprep.subr.mxu0 0.0
        %698 = vmatpush1.msra.mxu0 0.0
        %699 = vmatprep.subr.mxu0 0.0
        %700 = vmatpush1.msra.mxu0 0.0
        %701 = vmatprep.subr.mxu0 0.0
        %702 = vmatpush1.msra.mxu0 0.0
        %703 = vmatprep.subr.mxu0 0.0
        %704 = vmatpush1.msra.mxu0 0.0
        %705 = vmatprep.subr.mxu0 0.0
        %706 = vmatpush1.msra.mxu0 0.0
        %707 = vmatprep.subr.mxu0 0.0
        %708 = vmatpush1.msra.mxu0 0.0
        %709 = vmatprep.subr.mxu0 0.0
        %710 = vmatpush1.msra.mxu0 0.0
        %711 = vmatprep.subr.mxu0 0.0
        %712 = vmatpush1.msra.mxu0 0.0
        %713 = vmatprep.subr.mxu0 0.0
        %714 = vmatpush1.msra.mxu0 0.0
        %715 = vmatprep.mubr.f32.mxu0 %v645
        %716 = vmatmul.mubr.f32.gmra.mrb[0].mxu0 %v624
        %v717 = vpop.f32.mrb[0].mxu0
        %v718 = vadd.f32 %v378, %v717
        %v719 = vpop.f32.mrb[0].mxu0
        %720 = vdwg.mxu0
        %v721 = vmax.f32 %v718, 0.0
        %v722 = vld [vmem:[%s2] sm:$0xff]
        %v723 = vld [vmem:[%s2 + $0x8] sm:$0xff]
        %v724 = vld [vmem:[%s2 + $0x10] sm:$0xff]
        %v725 = vld [vmem:[%s2 + $0x18] sm:$0xff]
        %v726 = vld [vmem:[%s2 + $0x20] sm:$0x1]
        %v727 = vld [vmem:[%s2 + $0x28] sm:$0x1]
        %v729 = vlaneseq
        %v730 = vshrl.u32 %v729, 7
        %v731 = vsub.s32 0, %v730
        %v732 = vrot.slane %v380, %v731
        %v733 = vlaneseq
        %v734 = vshrl.u32 %v733, 7
        %v735 = vsub.s32 1, %v734
        %v736 = vrot.slane %v380, %v735
        %vm739 = vcmask 138240
        %v741 = vsel %vm739, %v721, 0
        %v744 = vsel %vm534, %v726, 0
        %v747 = vsel %vm534, %v727, 0
        %749 = vmatprep.subr.mxu0 %v723
        %750 = vmatpush1.msra.mxu0 %v722
        %751 = vmatprep.subr.mxu0 %v725
        %752 = vmatpush1.msra.mxu0 %v724
        %753 = vmatprep.subr.mxu0 %v747
        %754 = vmatpush1.msra.mxu0 %v744
        %755 = vmatprep.subr.mxu0 0.0
        %756 = vmatpush1.msra.mxu0 0.0
        %757 = vmatprep.subr.mxu0 0.0
        %758 = vmatpush1.msra.mxu0 0.0
        %759 = vmatprep.subr.mxu0 0.0
        %760 = vmatpush1.msra.mxu0 0.0
        %761 = vmatprep.subr.mxu0 0.0
        %762 = vmatpush1.msra.mxu0 0.0
        %763 = vmatprep.subr.mxu0 0.0
        %764 = vmatpush1.msra.mxu0 0.0
        %765 = vmatprep.subr.mxu0 0.0
        %766 = vmatpush1.msra.mxu0 0.0
        %767 = vmatprep.subr.mxu0 0.0
        %768 = vmatpush1.msra.mxu0 0.0
        %769 = vmatprep.subr.mxu0 0.0
        %770 = vmatpush1.msra.mxu0 0.0
        %771 = vmatprep.subr.mxu0 0.0
        %772 = vmatpush1.msra.mxu0 0.0
        %773 = vmatprep.subr.mxu0 0.0
        %774 = vmatpush1.msra.mxu0 0.0
        %775 = vmatprep.subr.mxu0 0.0
        %776 = vmatpush1.msra.mxu0 0.0
        %777 = vmatprep.subr.mxu0 0.0
        %778 = vmatpush1.msra.mxu0 0.0
        %779 = vmatprep.subr.mxu0 0.0
        %780 = vmatpush1.msra.mxu0 0.0
        %781 = vmatprep.subr.mxu0 0.0
        %782 = vmatpush1.msra.mxu0 0.0
        %783 = vmatprep.subr.mxu0 0.0
        %784 = vmatpush1.msra.mxu0 0.0
        %785 = vmatprep.subr.mxu0 0.0
        %786 = vmatpush1.msra.mxu0 0.0
        %787 = vmatprep.subr.mxu0 0.0
        %788 = vmatpush1.msra.mxu0 0.0
        %789 = vmatprep.subr.mxu0 0.0
        %790 = vmatpush1.msra.mxu0 0.0
        %791 = vmatprep.subr.mxu0 0.0
        %792 = vmatpush1.msra.mxu0 0.0
        %793 = vmatprep.subr.mxu0 0.0
        %794 = vmatpush1.msra.mxu0 0.0
        %795 = vmatprep.subr.mxu0 0.0
        %796 = vmatpush1.msra.mxu0 0.0
        %797 = vmatprep.subr.mxu0 0.0
        %798 = vmatpush1.msra.mxu0 0.0
        %799 = vmatprep.subr.mxu0 0.0
        %800 = vmatpush1.msra.mxu0 0.0
        %801 = vmatprep.subr.mxu0 0.0
        %802 = vmatpush1.msra.mxu0 0.0
        %803 = vmatprep.subr.mxu0 0.0
        %804 = vmatpush1.msra.mxu0 0.0
        %805 = vmatprep.subr.mxu0 0.0
        %806 = vmatpush1.msra.mxu0 0.0
        %807 = vmatprep.subr.mxu0 0.0
        %808 = vmatpush1.msra.mxu0 0.0
        %809 = vmatprep.subr.mxu0 0.0
        %810 = vmatpush1.msra.mxu0 0.0
        %811 = vmatprep.subr.mxu0 0.0
        %812 = vmatpush1.msra.mxu0 0.0
        %813 = vmatprep.mubr.f32.mxu0 0.0
        %814 = vmatmul.mubr.f32.gmra.mrb[0].mxu0 %v741
        %v815 = vpop.f32.mrb[0].mxu0
        %v816 = vadd.f32 %v732, %v815
        %v817 = vpop.f32.mrb[0].mxu0
        %v818 = vadd.f32 %v736, %v817
        %819 = vdwg.mxu0
        %v820 = vxor.u32 %v816, 2147483648
        %v821 = vxor.u32 %v818, 2147483648
        %v822 = vmul.f32 %v820, 1.442695
        %v823 = vpow.pop %v822
        %v824 = vmul.f32 %v821, 1.442695
        %v825 = vpow.pop %v824
        %v826 = vadd.f32 %v823, 1.0
        %v827 = vadd.f32 %v825, 1.0
        %v828 = vrcp.pop %v826
        %v829 = vmul.f32 1.0, %v828
        %v830 = vrcp.pop %v827
        %v831 = vmul.f32 1.0, %v830
        %v832 = vlaneseq
        %v833 = vshrl.u32 %v832, 7
        %v834 = vsub.s32 0, %v833
        %v835 = vrot.slane %v829, %v834
        %v836 = vlaneseq
        %v837 = vshrl.u32 %v836, 7
        %v838 = vsub.s32 0, %v837
        %v839 = vrot.slane %v831, %v838
        %v840 = vmul.f32 %v425, %v835
        %v841 = vmul.f32 %v426, %v839
        %v842 = vmul.f32 %v427, %v835
        %v843 = vmul.f32 %v428, %v839
        %v844 = vmul.f32 %v429, %v835
        %v845 = vmul.f32 %v430, %v839
        %v846 = vmul.f32 %v431, %v835
        %v847 = vmul.f32 %v432, %v839
        %v848 = vmul.f32 %v433, %v835
        %v849 = vmul.f32 %v434, %v839
        %v850 = vmul.f32 %v435, %v835
        %v851 = vmul.f32 %v436, %v839
        %v852 = vmul.f32 %v437, %v835
        %v853 = vmul.f32 %v438, %v839
        %v854 = vmul.f32 %v439, %v835
        %v855 = vmul.f32 %v440, %v839
        %v856 = vmul.f32 %v441, %v835
        %v857 = vmul.f32 %v442, %v839
        %v858 = vmul.f32 %v443, %v835
        %v859 = vmul.f32 %v444, %v839
        %v860 = vmul.f32 %v445, %v835
        %v861 = vmul.f32 %v446, %v839
        %v862 = vmul.f32 %v447, %v835
        %v863 = vmul.f32 %v448, %v839
        %v864 = vmul.f32 %v449, %v835
        %v865 = vmul.f32 %v450, %v839
        %v866 = vmul.f32 %v451, %v835
        %v867 = vmul.f32 %v452, %v839
        %v868 = vmul.f32 %v453, %v835
        %v869 = vmul.f32 %v454, %v839
        %v870 = vmul.f32 %v455, %v835
        %v871 = vmul.f32 %v456, %v839
        %v872 = vmul.f32 %v457, %v835
        %v873 = vmul.f32 %v458, %v839
        %v874 = vmul.f32 %v459, %v835
        %v875 = vmul.f32 %v460, %v839
        %v876 = vmul.f32 %v461, %v835
        %v877 = vmul.f32 %v462, %v839
        %v878 = vmul.f32 %v463, %v835
        %v879 = vmul.f32 %v464, %v839
        %v880 = vmul.f32 %v465, %v835
        %v881 = vmul.f32 %v466, %v839
        %v882 = vmul.f32 %v467, %v835
        %v883 = vmul.f32 %v468, %v839
        %v884 = vmul.f32 %v469, %v835
        %v885 = vmul.f32 %v470, %v839
        %v886 = vmul.f32 %v471, %v835
        %v887 = vmul.f32 %v472, %v839
        %v888 = vmul.f32 %v473, %v835
        %v889 = vmul.f32 %v474, %v839
        %v890 = vmul.f32 %v475, %v835
        %v891 = vmul.f32 %v476, %v839
        %v892 = vmul.f32 %v477, %v835
        %v893 = vmul.f32 %v478, %v839
        %v894 = vmul.f32 %v479, %v835
        %v895 = vmul.f32 %v480, %v839
        %v896 = vmul.f32 %v481, %v835
        %v897 = vmul.f32 %v482, %v839
        %v898 = vmul.f32 %v483, %v835
        %v899 = vmul.f32 %v484, %v839
        %v900 = vmul.f32 %v485, %v835
        %v901 = vmul.f32 %v486, %v839
        %v902 = vmul.f32 %v487, %v835
        %v903 = vmul.f32 %v488, %v839
        %v904 = vmul.f32 %v489, %v835
        %v905 = vmul.f32 %v490, %v839
        %v906 = vmul.f32 %v491, %v835
        %v907 = vmul.f32 %v492, %v839
        %v908 = vmul.f32 %v493, %v835
        %v909 = vmul.f32 %v494, %v839
        %v910 = vmul.f32 %v495, %v835
        %v911 = vmul.f32 %v496, %v839
        %v912 = vmul.f32 %v497, %v835
        %v913 = vmul.f32 %v498, %v839
        %v914 = vsel %vm543, %v841, 0.0
        %v915 = vadd.f32 %v840, %v914
        %916 = vadd.xlane.f32.xlu0 %v915
        %v917 = vpop.xlane.xlu0 %916
        %v918 = vsel %vm543, %v843, 0.0
        %v919 = vadd.f32 %v842, %v918
        %920 = vadd.xlane.f32.xlu0 %v919
        %v921 = vpop.xlane.xlu0 %920
        %v922 = vsel %vm543, %v845, 0.0
        %v923 = vadd.f32 %v844, %v922
        %924 = vadd.xlane.f32.xlu0 %v923
        %v925 = vpop.xlane.xlu0 %924
        %v926 = vsel %vm543, %v847, 0.0
        %v927 = vadd.f32 %v846, %v926
        %928 = vadd.xlane.f32.xlu0 %v927
        %v929 = vpop.xlane.xlu0 %928
        %v930 = vsel %vm543, %v849, 0.0
        %v931 = vadd.f32 %v848, %v930
        %932 = vadd.xlane.f32.xlu0 %v931
        %v933 = vpop.xlane.xlu0 %932
        %v934 = vsel %vm543, %v851, 0.0
        %v935 = vadd.f32 %v850, %v934
        %936 = vadd.xlane.f32.xlu0 %v935
        %v937 = vpop.xlane.xlu0 %936
        %v938 = vsel %vm543, %v853, 0.0
        %v939 = vadd.f32 %v852, %v938
        %940 = vadd.xlane.f32.xlu0 %v939
        %v941 = vpop.xlane.xlu0 %940
        %v942 = vsel %vm543, %v855, 0.0
        %v943 = vadd.f32 %v854, %v942
        %944 = vadd.xlane.f32.xlu0 %v943
        %v945 = vpop.xlane.xlu0 %944
        %v946 = vsel %vm543, %v857, 0.0
        %v947 = vadd.f32 %v856, %v946
        %948 = vadd.xlane.f32.xlu0 %v947
        %v949 = vpop.xlane.xlu0 %948
        %v950 = vsel %vm543, %v859, 0.0
        %v951 = vadd.f32 %v858, %v950
        %952 = vadd.xlane.f32.xlu0 %v951
        %v953 = vpop.xlane.xlu0 %952
        %v954 = vsel %vm543, %v861, 0.0
        %v955 = vadd.f32 %v860, %v954
        %956 = vadd.xlane.f32.xlu0 %v955
        %v957 = vpop.xlane.xlu0 %956
        %v958 = vsel %vm543, %v863, 0.0
        %v959 = vadd.f32 %v862, %v958
        %960 = vadd.xlane.f32.xlu0 %v959
        %v961 = vpop.xlane.xlu0 %960
        %v962 = vsel %vm543, %v865, 0.0
        %v963 = vadd.f32 %v864, %v962
        %964 = vadd.xlane.f32.xlu0 %v963
        %v965 = vpop.xlane.xlu0 %964
        %v966 = vsel %vm543, %v867, 0.0
        %v967 = vadd.f32 %v866, %v966
        %968 = vadd.xlane.f32.xlu0 %v967
        %v969 = vpop.xlane.xlu0 %968
        %v970 = vsel %vm543, %v869, 0.0
        %v971 = vadd.f32 %v868, %v970
        %972 = vadd.xlane.f32.xlu0 %v971
        %v973 = vpop.xlane.xlu0 %972
        %v974 = vsel %vm543, %v871, 0.0
        %v975 = vadd.f32 %v870, %v974
        %976 = vadd.xlane.f32.xlu0 %v975
        %v977 = vpop.xlane.xlu0 %976
        %v978 = vsel %vm543, %v873, 0.0
        %v979 = vadd.f32 %v872, %v978
        %980 = vadd.xlane.f32.xlu0 %v979
        %v981 = vpop.xlane.xlu0 %980
        %v982 = vsel %vm543, %v875, 0.0
        %v983 = vadd.f32 %v874, %v982
        %984 = vadd.xlane.f32.xlu0 %v983
        %v985 = vpop.xlane.xlu0 %984
        %v986 = vsel %vm543, %v877, 0.0
        %v987 = vadd.f32 %v876, %v986
        %988 = vadd.xlane.f32.xlu0 %v987
        %v989 = vpop.xlane.xlu0 %988
        %v990 = vsel %vm543, %v879, 0.0
        %v991 = vadd.f32 %v878, %v990
        %992 = vadd.xlane.f32.xlu0 %v991
        %v993 = vpop.xlane.xlu0 %992
        %v994 = vsel %vm543, %v881, 0.0
        %v995 = vadd.f32 %v880, %v994
        %996 = vadd.xlane.f32.xlu0 %v995
        %v997 = vpop.xlane.xlu0 %996
        %v998 = vsel %vm543, %v883, 0.0
        %v999 = vadd.f32 %v882, %v998
        %1000 = vadd.xlane.f32.xlu0 %v999
        %v1001 = vpop.xlane.xlu0 %1000
        %v1002 = vsel %vm543, %v885, 0.0
        %v1003 = vadd.f32 %v884, %v1002
        %1004 = vadd.xlane.f32.xlu0 %v1003
        %v1005 = vpop.xlane.xlu0 %1004
        %v1006 = vsel %vm543, %v887, 0.0
        %v1007 = vadd.f32 %v886, %v1006
        %1008 = vadd.xlane.f32.xlu0 %v1007
        %v1009 = vpop.xlane.xlu0 %1008
        %v1010 = vsel %vm543, %v889, 0.0
        %v1011 = vadd.f32 %v888, %v1010
        %1012 = vadd.xlane.f32.xlu0 %v1011
        %v1013 = vpop.xlane.xlu0 %1012
        %v1014 = vsel %vm543, %v891, 0.0
        %v1015 = vadd.f32 %v890, %v1014
        %1016 = vadd.xlane.f32.xlu0 %v1015
        %v1017 = vpop.xlane.xlu0 %1016
        %v1018 = vsel %vm543, %v893, 0.0
        %v1019 = vadd.f32 %v892, %v1018
        %1020 = vadd.xlane.f32.xlu0 %v1019
        %v1021 = vpop.xlane.xlu0 %1020
        %v1022 = vsel %vm543, %v895, 0.0
        %v1023 = vadd.f32 %v894, %v1022
        %1024 = vadd.xlane.f32.xlu0 %v1023
        %v1025 = vpop.xlane.xlu0 %1024
        %v1026 = vsel %vm543, %v897, 0.0
        %v1027 = vadd.f32 %v896, %v1026
        %1028 = vadd.xlane.f32.xlu0 %v1027
        %v1029 = vpop.xlane.xlu0 %1028
        %v1030 = vsel %vm543, %v899, 0.0
        %v1031 = vadd.f32 %v898, %v1030
        %1032 = vadd.xlane.f32.xlu0 %v1031
        %v1033 = vpop.xlane.xlu0 %1032
        %v1034 = vsel %vm543, %v901, 0.0
        %v1035 = vadd.f32 %v900, %v1034
        %1036 = vadd.xlane.f32.xlu0 %v1035
        %v1037 = vpop.xlane.xlu0 %1036
        %v1038 = vsel %vm543, %v903, 0.0
        %v1039 = vadd.f32 %v902, %v1038
        %1040 = vadd.xlane.f32.xlu0 %v1039
        %v1041 = vpop.xlane.xlu0 %1040
        %v1042 = vsel %vm543, %v905, 0.0
        %v1043 = vadd.f32 %v904, %v1042
        %1044 = vadd.xlane.f32.xlu0 %v1043
        %v1045 = vpop.xlane.xlu0 %1044
        %v1046 = vsel %vm543, %v907, 0.0
        %v1047 = vadd.f32 %v906, %v1046
        %1048 = vadd.xlane.f32.xlu0 %v1047
        %v1049 = vpop.xlane.xlu0 %1048
        %v1050 = vsel %vm543, %v909, 0.0
        %v1051 = vadd.f32 %v908, %v1050
        %1052 = vadd.xlane.f32.xlu0 %v1051
        %v1053 = vpop.xlane.xlu0 %1052
        %v1054 = vsel %vm543, %v911, 0.0
        %v1055 = vadd.f32 %v910, %v1054
        %1056 = vadd.xlane.f32.xlu0 %v1055
        %v1057 = vpop.xlane.xlu0 %1056
        %v1058 = vsel %vm534, %v912, 0.0
        %v1059 = vsel %vm615, %v913, 0.0
        %v1060 = vadd.f32 %v1058, %v1059
        %1061 = vadd.xlane.f32.xlu0 %v1060
        %v1062 = vpop.xlane.xlu0 %1061
        %v1063 = vmul.f32 %v917, 0.007246377
        %v1064 = vmul.f32 %v921, 0.007246377
        %v1065 = vmul.f32 %v925, 0.007246377
        %v1066 = vmul.f32 %v929, 0.007246377
        %v1067 = vmul.f32 %v933, 0.007246377
        %v1068 = vmul.f32 %v937, 0.007246377
        %v1069 = vmul.f32 %v941, 0.007246377
        %v1070 = vmul.f32 %v945, 0.007246377
        %v1071 = vmul.f32 %v949, 0.007246377
        %v1072 = vmul.f32 %v953, 0.007246377
        %v1073 = vmul.f32 %v957, 0.007246377
        %v1074 = vmul.f32 %v961, 0.007246377
        %v1075 = vmul.f32 %v965, 0.007246377
        %v1076 = vmul.f32 %v969, 0.007246377
        %v1077 = vmul.f32 %v973, 0.007246377
        %v1078 = vmul.f32 %v977, 0.007246377
        %v1079 = vmul.f32 %v981, 0.007246377
        %v1080 = vmul.f32 %v985, 0.007246377
        %v1081 = vmul.f32 %v989, 0.007246377
        %v1082 = vmul.f32 %v993, 0.007246377
        %v1083 = vmul.f32 %v997, 0.007246377
        %v1084 = vmul.f32 %v1001, 0.007246377
        %v1085 = vmul.f32 %v1005, 0.007246377
        %v1086 = vmul.f32 %v1009, 0.007246377
        %v1087 = vmul.f32 %v1013, 0.007246377
        %v1088 = vmul.f32 %v1017, 0.007246377
        %v1089 = vmul.f32 %v1021, 0.007246377
        %v1090 = vmul.f32 %v1025, 0.007246377
        %v1091 = vmul.f32 %v1029, 0.007246377
        %v1092 = vmul.f32 %v1033, 0.007246377
        %v1093 = vmul.f32 %v1037, 0.007246377
        %v1094 = vmul.f32 %v1041, 0.007246377
        %v1095 = vmul.f32 %v1045, 0.007246377
        %v1096 = vmul.f32 %v1049, 0.007246377
        %v1097 = vmul.f32 %v1053, 0.007246377
        %v1098 = vmul.f32 %v1057, 0.007246377
        %v1099 = vmul.f32 %v1062, 0.007246377
        %v1100 = vsel %vm543, %v841, -inf
        %v1101 = vmax.f32 %v840, %v1100
        %1102 = vmax.xlane.f32.xlu0 %v1101
        %v1103 = vpop.xlane.xlu0 %1102
        %v1104 = vsel %vm543, %v843, -inf
        %v1105 = vmax.f32 %v842, %v1104
        %1106 = vmax.xlane.f32.xlu0 %v1105
        %v1107 = vpop.xlane.xlu0 %1106
        %v1108 = vsel %vm543, %v845, -inf
        %v1109 = vmax.f32 %v844, %v1108
        %1110 = vmax.xlane.f32.xlu0 %v1109
        %v1111 = vpop.xlane.xlu0 %1110
        %v1112 = vsel %vm543, %v847, -inf
        %v1113 = vmax.f32 %v846, %v1112
        %1114 = vmax.xlane.f32.xlu0 %v1113
        %v1115 = vpop.xlane.xlu0 %1114
        %v1116 = vsel %vm543, %v849, -inf
        %v1117 = vmax.f32 %v848, %v1116
        %1118 = vmax.xlane.f32.xlu0 %v1117
        %v1119 = vpop.xlane.xlu0 %1118
        %v1120 = vsel %vm543, %v851, -inf
        %v1121 = vmax.f32 %v850, %v1120
        %1122 = vmax.xlane.f32.xlu0 %v1121
        %v1123 = vpop.xlane.xlu0 %1122
        %v1124 = vsel %vm543, %v853, -inf
        %v1125 = vmax.f32 %v852, %v1124
        %1126 = vmax.xlane.f32.xlu0 %v1125
        %v1127 = vpop.xlane.xlu0 %1126
        %v1128 = vsel %vm543, %v855, -inf
        %v1129 = vmax.f32 %v854, %v1128
        %1130 = vmax.xlane.f32.xlu0 %v1129
        %v1131 = vpop.xlane.xlu0 %1130
        %v1132 = vsel %vm543, %v857, -inf
        %v1133 = vmax.f32 %v856, %v1132
        %1134 = vmax.xlane.f32.xlu0 %v1133
        %v1135 = vpop.xlane.xlu0 %1134
        %v1136 = vsel %vm543, %v859, -inf
        %v1137 = vmax.f32 %v858, %v1136
        %1138 = vmax.xlane.f32.xlu0 %v1137
        %v1139 = vpop.xlane.xlu0 %1138
        %v1140 = vsel %vm543, %v861, -inf
        %v1141 = vmax.f32 %v860, %v1140
        %1142 = vmax.xlane.f32.xlu0 %v1141
        %v1143 = vpop.xlane.xlu0 %1142
        %v1144 = vsel %vm543, %v863, -inf
        %v1145 = vmax.f32 %v862, %v1144
        %1146 = vmax.xlane.f32.xlu0 %v1145
        %v1147 = vpop.xlane.xlu0 %1146
        %v1148 = vsel %vm543, %v865, -inf
        %v1149 = vmax.f32 %v864, %v1148
        %1150 = vmax.xlane.f32.xlu0 %v1149
        %v1151 = vpop.xlane.xlu0 %1150
        %v1152 = vsel %vm543, %v867, -inf
        %v1153 = vmax.f32 %v866, %v1152
        %1154 = vmax.xlane.f32.xlu0 %v1153
        %v1155 = vpop.xlane.xlu0 %1154
        %v1156 = vsel %vm543, %v869, -inf
        %v1157 = vmax.f32 %v868, %v1156
        %1158 = vmax.xlane.f32.xlu0 %v1157
        %v1159 = vpop.xlane.xlu0 %1158
        %v1160 = vsel %vm543, %v871, -inf
        %v1161 = vmax.f32 %v870, %v1160
        %1162 = vmax.xlane.f32.xlu0 %v1161
        %v1163 = vpop.xlane.xlu0 %1162
        %v1164 = vsel %vm543, %v873, -inf
        %v1165 = vmax.f32 %v872, %v1164
        %1166 = vmax.xlane.f32.xlu0 %v1165
        %v1167 = vpop.xlane.xlu0 %1166
        %v1168 = vsel %vm543, %v875, -inf
        %v1169 = vmax.f32 %v874, %v1168
        %1170 = vmax.xlane.f32.xlu0 %v1169
        %v1171 = vpop.xlane.xlu0 %1170
        %v1172 = vsel %vm543, %v877, -inf
        %v1173 = vmax.f32 %v876, %v1172
        %1174 = vmax.xlane.f32.xlu0 %v1173
        %v1175 = vpop.xlane.xlu0 %1174
        %v1176 = vsel %vm543, %v879, -inf
        %v1177 = vmax.f32 %v878, %v1176
        %1178 = vmax.xlane.f32.xlu0 %v1177
        %v1179 = vpop.xlane.xlu0 %1178
        %v1180 = vsel %vm543, %v881, -inf
        %v1181 = vmax.f32 %v880, %v1180
        %1182 = vmax.xlane.f32.xlu0 %v1181
        %v1183 = vpop.xlane.xlu0 %1182
        %v1184 = vsel %vm543, %v883, -inf
        %v1185 = vmax.f32 %v882, %v1184
        %1186 = vmax.xlane.f32.xlu0 %v1185
        %v1187 = vpop.xlane.xlu0 %1186
        %v1188 = vsel %vm543, %v885, -inf
        %v1189 = vmax.f32 %v884, %v1188
        %1190 = vmax.xlane.f32.xlu0 %v1189
        %v1191 = vpop.xlane.xlu0 %1190
        %v1192 = vsel %vm543, %v887, -inf
        %v1193 = vmax.f32 %v886, %v1192
        %1194 = vmax.xlane.f32.xlu0 %v1193
        %v1195 = vpop.xlane.xlu0 %1194
        %v1196 = vsel %vm543, %v889, -inf
        %v1197 = vmax.f32 %v888, %v1196
        %1198 = vmax.xlane.f32.xlu0 %v1197
        %v1199 = vpop.xlane.xlu0 %1198
        %v1200 = vsel %vm543, %v891, -inf
        %v1201 = vmax.f32 %v890, %v1200
        %1202 = vmax.xlane.f32.xlu0 %v1201
        %v1203 = vpop.xlane.xlu0 %1202
        %v1204 = vsel %vm543, %v893, -inf
        %v1205 = vmax.f32 %v892, %v1204
        %1206 = vmax.xlane.f32.xlu0 %v1205
        %v1207 = vpop.xlane.xlu0 %1206
        %v1208 = vsel %vm543, %v895, -inf
        %v1209 = vmax.f32 %v894, %v1208
        %1210 = vmax.xlane.f32.xlu0 %v1209
        %v1211 = vpop.xlane.xlu0 %1210
        %v1212 = vsel %vm543, %v897, -inf
        %v1213 = vmax.f32 %v896, %v1212
        %1214 = vmax.xlane.f32.xlu0 %v1213
        %v1215 = vpop.xlane.xlu0 %1214
        %v1216 = vsel %vm543, %v899, -inf
        %v1217 = vmax.f32 %v898, %v1216
        %1218 = vmax.xlane.f32.xlu0 %v1217
        %v1219 = vpop.xlane.xlu0 %1218
        %v1220 = vsel %vm543, %v901, -inf
        %v1221 = vmax.f32 %v900, %v1220
        %1222 = vmax.xlane.f32.xlu0 %v1221
        %v1223 = vpop.xlane.xlu0 %1222
        %v1224 = vsel %vm543, %v903, -inf
        %v1225 = vmax.f32 %v902, %v1224
        %1226 = vmax.xlane.f32.xlu0 %v1225
        %v1227 = vpop.xlane.xlu0 %1226
        %v1228 = vsel %vm543, %v905, -inf
        %v1229 = vmax.f32 %v904, %v1228
        %1230 = vmax.xlane.f32.xlu0 %v1229
        %v1231 = vpop.xlane.xlu0 %1230
        %v1232 = vsel %vm543, %v907, -inf
        %v1233 = vmax.f32 %v906, %v1232
        %1234 = vmax.xlane.f32.xlu0 %v1233
        %v1235 = vpop.xlane.xlu0 %1234
        %v1236 = vsel %vm543, %v909, -inf
        %v1237 = vmax.f32 %v908, %v1236
        %1238 = vmax.xlane.f32.xlu0 %v1237
        %v1239 = vpop.xlane.xlu0 %1238
        %v1240 = vsel %vm543, %v911, -inf
        %v1241 = vmax.f32 %v910, %v1240
        %1242 = vmax.xlane.f32.xlu0 %v1241
        %v1243 = vpop.xlane.xlu0 %1242
        %v1244 = vsel %vm534, %v912, -inf
        %v1245 = vsel %vm615, %v913, -inf
        %v1246 = vmax.f32 %v1244, %v1245
        %1247 = vmax.xlane.f32.xlu0 %v1246
        %v1248 = vpop.xlane.xlu0 %1247
        %v1249 = vstv %s385
        %v1250 = vmul.f32 %v1249, %v1063
        %v1251 = vmul.f32 %v1249, %v1064
        %v1252 = vmul.f32 %v1249, %v1065
        %v1253 = vmul.f32 %v1249, %v1066
        %v1254 = vmul.f32 %v1249, %v1067
        %v1255 = vmul.f32 %v1249, %v1068
        %v1256 = vmul.f32 %v1249, %v1069
        %v1257 = vmul.f32 %v1249, %v1070
        %v1258 = vmul.f32 %v1249, %v1071
        %v1259 = vmul.f32 %v1249, %v1072
        %v1260 = vmul.f32 %v1249, %v1073
        %v1261 = vmul.f32 %v1249, %v1074
        %v1262 = vmul.f32 %v1249, %v1075
        %v1263 = vmul.f32 %v1249, %v1076
        %v1264 = vmul.f32 %v1249, %v1077
        %v1265 = vmul.f32 %v1249, %v1078
        %v1266 = vmul.f32 %v1249, %v1079
        %v1267 = vmul.f32 %v1249, %v1080
        %v1268 = vmul.f32 %v1249, %v1081
        %v1269 = vmul.f32 %v1249, %v1082
        %v1270 = vmul.f32 %v1249, %v1083
        %v1271 = vmul.f32 %v1249, %v1084
        %v1272 = vmul.f32 %v1249, %v1085
        %v1273 = vmul.f32 %v1249, %v1086
        %v1274 = vmul.f32 %v1249, %v1087
        %v1275 = vmul.f32 %v1249, %v1088
        %v1276 = vmul.f32 %v1249, %v1089
        %v1277 = vmul.f32 %v1249, %v1090
        %v1278 = vmul.f32 %v1249, %v1091
        %v1279 = vmul.f32 %v1249, %v1092
        %v1280 = vmul.f32 %v1249, %v1093
        %v1281 = vmul.f32 %v1249, %v1094
        %v1282 = vmul.f32 %v1249, %v1095
        %v1283 = vmul.f32 %v1249, %v1096
        %v1284 = vmul.f32 %v1249, %v1097
        %v1285 = vmul.f32 %v1249, %v1098
        %v1286 = vmul.f32 %v1249, %v1099
        %v1287 = vstv %s386
        %v1288 = vmul.f32 %v1287, %v1103
        %v1289 = vmul.f32 %v1287, %v1107
        %v1290 = vmul.f32 %v1287, %v1111
        %v1291 = vmul.f32 %v1287, %v1115
        %v1292 = vmul.f32 %v1287, %v1119
        %v1293 = vmul.f32 %v1287, %v1123
        %v1294 = vmul.f32 %v1287, %v1127
        %v1295 = vmul.f32 %v1287, %v1131
        %v1296 = vmul.f32 %v1287, %v1135
        %v1297 = vmul.f32 %v1287, %v1139
        %v1298 = vmul.f32 %v1287, %v1143
        %v1299 = vmul.f32 %v1287, %v1147
        %v1300 = vmul.f32 %v1287, %v1151
        %v1301 = vmul.f32 %v1287, %v1155
        %v1302 = vmul.f32 %v1287, %v1159
        %v1303 = vmul.f32 %v1287, %v1163
        %v1304 = vmul.f32 %v1287, %v1167
        %v1305 = vmul.f32 %v1287, %v1171
        %v1306 = vmul.f32 %v1287, %v1175
        %v1307 = vmul.f32 %v1287, %v1179
        %v1308 = vmul.f32 %v1287, %v1183
        %v1309 = vmul.f32 %v1287, %v1187
        %v1310 = vmul.f32 %v1287, %v1191
        %v1311 = vmul.f32 %v1287, %v1195
        %v1312 = vmul.f32 %v1287, %v1199
        %v1313 = vmul.f32 %v1287, %v1203
        %v1314 = vmul.f32 %v1287, %v1207
        %v1315 = vmul.f32 %v1287, %v1211
        %v1316 = vmul.f32 %v1287, %v1215
        %v1317 = vmul.f32 %v1287, %v1219
        %v1318 = vmul.f32 %v1287, %v1223
        %v1319 = vmul.f32 %v1287, %v1227
        %v1320 = vmul.f32 %v1287, %v1231
        %v1321 = vmul.f32 %v1287, %v1235
        %v1322 = vmul.f32 %v1287, %v1239
        %v1323 = vmul.f32 %v1287, %v1243
        %v1324 = vmul.f32 %v1287, %v1248
        %v1325 = vadd.f32 %v1250, %v1288
        %v1326 = vadd.f32 %v1251, %v1289
        %v1327 = vadd.f32 %v1252, %v1290
        %v1328 = vadd.f32 %v1253, %v1291
        %v1329 = vadd.f32 %v1254, %v1292
        %v1330 = vadd.f32 %v1255, %v1293
        %v1331 = vadd.f32 %v1256, %v1294
        %v1332 = vadd.f32 %v1257, %v1295
        %v1333 = vadd.f32 %v1258, %v1296
        %v1334 = vadd.f32 %v1259, %v1297
        %v1335 = vadd.f32 %v1260, %v1298
        %v1336 = vadd.f32 %v1261, %v1299
        %v1337 = vadd.f32 %v1262, %v1300
        %v1338 = vadd.f32 %v1263, %v1301
        %v1339 = vadd.f32 %v1264, %v1302
        %v1340 = vadd.f32 %v1265, %v1303
        %v1341 = vadd.f32 %v1266, %v1304
        %v1342 = vadd.f32 %v1267, %v1305
        %v1343 = vadd.f32 %v1268, %v1306
        %v1344 = vadd.f32 %v1269, %v1307
        %v1345 = vadd.f32 %v1270, %v1308
        %v1346 = vadd.f32 %v1271, %v1309
        %v1347 = vadd.f32 %v1272, %v1310
        %v1348 = vadd.f32 %v1273, %v1311
        %v1349 = vadd.f32 %v1274, %v1312
        %v1350 = vadd.f32 %v1275, %v1313
        %v1351 = vadd.f32 %v1276, %v1314
        %v1352 = vadd.f32 %v1277, %v1315
        %v1353 = vadd.f32 %v1278, %v1316
        %v1354 = vadd.f32 %v1279, %v1317
        %v1355 = vadd.f32 %v1280, %v1318
        %v1356 = vadd.f32 %v1281, %v1319
        %v1357 = vadd.f32 %v1282, %v1320
        %v1358 = vadd.f32 %v1283, %v1321
        %v1359 = vadd.f32 %v1284, %v1322
        %v1360 = vadd.f32 %v1285, %v1323
        %v1361 = vadd.f32 %v1286, %v1324
        %v1362 = vstv %s387
        %v1363 = vadd.f32 %v1325, %v1362
        %v1364 = vadd.f32 %v1326, %v1362
        %v1365 = vadd.f32 %v1327, %v1362
        %v1366 = vadd.f32 %v1328, %v1362
        %v1367 = vadd.f32 %v1329, %v1362
        %v1368 = vadd.f32 %v1330, %v1362
        %v1369 = vadd.f32 %v1331, %v1362
        %v1370 = vadd.f32 %v1332, %v1362
        %v1371 = vadd.f32 %v1333, %v1362
        %v1372 = vadd.f32 %v1334, %v1362
        %v1373 = vadd.f32 %v1335, %v1362
        %v1374 = vadd.f32 %v1336, %v1362
        %v1375 = vadd.f32 %v1337, %v1362
        %v1376 = vadd.f32 %v1338, %v1362
        %v1377 = vadd.f32 %v1339, %v1362
        %v1378 = vadd.f32 %v1340, %v1362
        %v1379 = vadd.f32 %v1341, %v1362
        %v1380 = vadd.f32 %v1342, %v1362
        %v1381 = vadd.f32 %v1343, %v1362
        %v1382 = vadd.f32 %v1344, %v1362
        %v1383 = vadd.f32 %v1345, %v1362
        %v1384 = vadd.f32 %v1346, %v1362
        %v1385 = vadd.f32 %v1347, %v1362
        %v1386 = vadd.f32 %v1348, %v1362
        %v1387 = vadd.f32 %v1349, %v1362
        %v1388 = vadd.f32 %v1350, %v1362
        %v1389 = vadd.f32 %v1351, %v1362
        %v1390 = vadd.f32 %v1352, %v1362
        %v1391 = vadd.f32 %v1353, %v1362
        %v1392 = vadd.f32 %v1354, %v1362
        %v1393 = vadd.f32 %v1355, %v1362
        %v1394 = vadd.f32 %v1356, %v1362
        %v1395 = vadd.f32 %v1357, %v1362
        %v1396 = vadd.f32 %v1358, %v1362
        %v1397 = vadd.f32 %v1359, %v1362
        %v1398 = vadd.f32 %v1360, %v1362
        %v1399 = vadd.f32 %v1361, %v1362
        %v1400 = vxor.u32 %v1363, 2147483648
        %v1401 = vxor.u32 %v1364, 2147483648
        %v1402 = vxor.u32 %v1365, 2147483648
        %v1403 = vxor.u32 %v1366, 2147483648
        %v1404 = vxor.u32 %v1367, 2147483648
        %v1405 = vxor.u32 %v1368, 2147483648
        %v1406 = vxor.u32 %v1369, 2147483648
        %v1407 = vxor.u32 %v1370, 2147483648
        %v1408 = vxor.u32 %v1371, 2147483648
        %v1409 = vxor.u32 %v1372, 2147483648
        %v1410 = vxor.u32 %v1373, 2147483648
        %v1411 = vxor.u32 %v1374, 2147483648
        %v1412 = vxor.u32 %v1375, 2147483648
        %v1413 = vxor.u32 %v1376, 2147483648
        %v1414 = vxor.u32 %v1377, 2147483648
        %v1415 = vxor.u32 %v1378, 2147483648
        %v1416 = vxor.u32 %v1379, 2147483648
        %v1417 = vxor.u32 %v1380, 2147483648
        %v1418 = vxor.u32 %v1381, 2147483648
        %v1419 = vxor.u32 %v1382, 2147483648
        %v1420 = vxor.u32 %v1383, 2147483648
        %v1421 = vxor.u32 %v1384, 2147483648
        %v1422 = vxor.u32 %v1385, 2147483648
        %v1423 = vxor.u32 %v1386, 2147483648
        %v1424 = vxor.u32 %v1387, 2147483648
        %v1425 = vxor.u32 %v1388, 2147483648
        %v1426 = vxor.u32 %v1389, 2147483648
        %v1427 = vxor.u32 %v1390, 2147483648
        %v1428 = vxor.u32 %v1391, 2147483648
        %v1429 = vxor.u32 %v1392, 2147483648
        %v1430 = vxor.u32 %v1393, 2147483648
        %v1431 = vxor.u32 %v1394, 2147483648
        %v1432 = vxor.u32 %v1395, 2147483648
        %v1433 = vxor.u32 %v1396, 2147483648
        %v1434 = vxor.u32 %v1397, 2147483648
        %v1435 = vxor.u32 %v1398, 2147483648
        %v1436 = vxor.u32 %v1399, 2147483648
        %v1437 = vmul.f32 %v1400, 1.442695
        %v1438 = vpow.pop %v1437
        %v1439 = vmul.f32 %v1401, 1.442695
        %v1440 = vpow.pop %v1439
        %v1441 = vmul.f32 %v1402, 1.442695
        %v1442 = vpow.pop %v1441
        %v1443 = vmul.f32 %v1403, 1.442695
        %v1444 = vpow.pop %v1443
        %v1445 = vmul.f32 %v1404, 1.442695
        %v1446 = vpow.pop %v1445
        %v1447 = vmul.f32 %v1405, 1.442695
        %v1448 = vpow.pop %v1447
        %v1449 = vmul.f32 %v1406, 1.442695
        %v1450 = vpow.pop %v1449
        %v1451 = vmul.f32 %v1407, 1.442695
        %v1452 = vpow.pop %v1451
        %v1453 = vmul.f32 %v1408, 1.442695
        %v1454 = vpow.pop %v1453
        %v1455 = vmul.f32 %v1409, 1.442695
        %v1456 = vpow.pop %v1455
        %v1457 = vmul.f32 %v1410, 1.442695
        %v1458 = vpow.pop %v1457
        %v1459 = vmul.f32 %v1411, 1.442695
        %v1460 = vpow.pop %v1459
        %v1461 = vmul.f32 %v1412, 1.442695
        %v1462 = vpow.pop %v1461
        %v1463 = vmul.f32 %v1413, 1.442695
        %v1464 = vpow.pop %v1463
        %v1465 = vmul.f32 %v1414, 1.442695
        %v1466 = vpow.pop %v1465
        %v1467 = vmul.f32 %v1415, 1.442695
        %v1468 = vpow.pop %v1467
        %v1469 = vmul.f32 %v1416, 1.442695
        %v1470 = vpow.pop %v1469
        %v1471 = vmul.f32 %v1417, 1.442695
        %v1472 = vpow.pop %v1471
        %v1473 = vmul.f32 %v1418, 1.442695
        %v1474 = vpow.pop %v1473
        %v1475 = vmul.f32 %v1419, 1.442695
        %v1476 = vpow.pop %v1475
        %v1477 = vmul.f32 %v1420, 1.442695
        %v1478 = vpow.pop %v1477
        %v1479 = vmul.f32 %v1421, 1.442695
        %v1480 = vpow.pop %v1479
        %v1481 = vmul.f32 %v1422, 1.442695
        %v1482 = vpow.pop %v1481
        %v1483 = vmul.f32 %v1423, 1.442695
        %v1484 = vpow.pop %v1483
        %v1485 = vmul.f32 %v1424, 1.442695
        %v1486 = vpow.pop %v1485
        %v1487 = vmul.f32 %v1425, 1.442695
        %v1488 = vpow.pop %v1487
        %v1489 = vmul.f32 %v1426, 1.442695
        %v1490 = vpow.pop %v1489
        %v1491 = vmul.f32 %v1427, 1.442695
        %v1492 = vpow.pop %v1491
        %v1493 = vmul.f32 %v1428, 1.442695
        %v1494 = vpow.pop %v1493
        %v1495 = vmul.f32 %v1429, 1.442695
        %v1496 = vpow.pop %v1495
        %v1497 = vmul.f32 %v1430, 1.442695
        %v1498 = vpow.pop %v1497
        %v1499 = vmul.f32 %v1431, 1.442695
        %v1500 = vpow.pop %v1499
        %v1501 = vmul.f32 %v1432, 1.442695
        %v1502 = vpow.pop %v1501
        %v1503 = vmul.f32 %v1433, 1.442695
        %v1504 = vpow.pop %v1503
        %v1505 = vmul.f32 %v1434, 1.442695
        %v1506 = vpow.pop %v1505
        %v1507 = vmul.f32 %v1435, 1.442695
        %v1508 = vpow.pop %v1507
        %v1509 = vmul.f32 %v1436, 1.442695
        %v1510 = vpow.pop %v1509
        %v1511 = vadd.f32 %v1438, 1.0
        %v1512 = vadd.f32 %v1440, 1.0
        %v1513 = vadd.f32 %v1442, 1.0
        %v1514 = vadd.f32 %v1444, 1.0
        %v1515 = vadd.f32 %v1446, 1.0
        %v1516 = vadd.f32 %v1448, 1.0
        %v1517 = vadd.f32 %v1450, 1.0
        %v1518 = vadd.f32 %v1452, 1.0
        %v1519 = vadd.f32 %v1454, 1.0
        %v1520 = vadd.f32 %v1456, 1.0
        %v1521 = vadd.f32 %v1458, 1.0
        %v1522 = vadd.f32 %v1460, 1.0
        %v1523 = vadd.f32 %v1462, 1.0
        %v1524 = vadd.f32 %v1464, 1.0
        %v1525 = vadd.f32 %v1466, 1.0
        %v1526 = vadd.f32 %v1468, 1.0
        %v1527 = vadd.f32 %v1470, 1.0
        %v1528 = vadd.f32 %v1472, 1.0
        %v1529 = vadd.f32 %v1474, 1.0
        %v1530 = vadd.f32 %v1476, 1.0
        %v1531 = vadd.f32 %v1478, 1.0
        %v1532 = vadd.f32 %v1480, 1.0
        %v1533 = vadd.f32 %v1482, 1.0
        %v1534 = vadd.f32 %v1484, 1.0
        %v1535 = vadd.f32 %v1486, 1.0
        %v1536 = vadd.f32 %v1488, 1.0
        %v1537 = vadd.f32 %v1490, 1.0
        %v1538 = vadd.f32 %v1492, 1.0
        %v1539 = vadd.f32 %v1494, 1.0
        %v1540 = vadd.f32 %v1496, 1.0
        %v1541 = vadd.f32 %v1498, 1.0
        %v1542 = vadd.f32 %v1500, 1.0
        %v1543 = vadd.f32 %v1502, 1.0
        %v1544 = vadd.f32 %v1504, 1.0
        %v1545 = vadd.f32 %v1506, 1.0
        %v1546 = vadd.f32 %v1508, 1.0
        %v1547 = vadd.f32 %v1510, 1.0
        %v1548 = vrcp.pop %v1511
        %v1549 = vmul.f32 1.0, %v1548
        %v1550 = vrcp.pop %v1512
        %v1551 = vmul.f32 1.0, %v1550
        %v1552 = vrcp.pop %v1513
        %v1553 = vmul.f32 1.0, %v1552
        %v1554 = vrcp.pop %v1514
        %v1555 = vmul.f32 1.0, %v1554
        %v1556 = vrcp.pop %v1515
        %v1557 = vmul.f32 1.0, %v1556
        %v1558 = vrcp.pop %v1516
        %v1559 = vmul.f32 1.0, %v1558
        %v1560 = vrcp.pop %v1517
        %v1561 = vmul.f32 1.0, %v1560
        %v1562 = vrcp.pop %v1518
        %v1563 = vmul.f32 1.0, %v1562
        %v1564 = vrcp.pop %v1519
        %v1565 = vmul.f32 1.0, %v1564
        %v1566 = vrcp.pop %v1520
        %v1567 = vmul.f32 1.0, %v1566
        %v1568 = vrcp.pop %v1521
        %v1569 = vmul.f32 1.0, %v1568
        %v1570 = vrcp.pop %v1522
        %v1571 = vmul.f32 1.0, %v1570
        %v1572 = vrcp.pop %v1523
        %v1573 = vmul.f32 1.0, %v1572
        %v1574 = vrcp.pop %v1524
        %v1575 = vmul.f32 1.0, %v1574
        %v1576 = vrcp.pop %v1525
        %v1577 = vmul.f32 1.0, %v1576
        %v1578 = vrcp.pop %v1526
        %v1579 = vmul.f32 1.0, %v1578
        %v1580 = vrcp.pop %v1527
        %v1581 = vmul.f32 1.0, %v1580
        %v1582 = vrcp.pop %v1528
        %v1583 = vmul.f32 1.0, %v1582
        %v1584 = vrcp.pop %v1529
        %v1585 = vmul.f32 1.0, %v1584
        %v1586 = vrcp.pop %v1530
        %v1587 = vmul.f32 1.0, %v1586
        %v1588 = vrcp.pop %v1531
        %v1589 = vmul.f32 1.0, %v1588
        %v1590 = vrcp.pop %v1532
        %v1591 = vmul.f32 1.0, %v1590
        %v1592 = vrcp.pop %v1533
        %v1593 = vmul.f32 1.0, %v1592
        %v1594 = vrcp.pop %v1534
        %v1595 = vmul.f32 1.0, %v1594
        %v1596 = vrcp.pop %v1535
        %v1597 = vmul.f32 1.0, %v1596
        %v1598 = vrcp.pop %v1536
        %v1599 = vmul.f32 1.0, %v1598
        %v1600 = vrcp.pop %v1537
        %v1601 = vmul.f32 1.0, %v1600
        %v1602 = vrcp.pop %v1538
        %v1603 = vmul.f32 1.0, %v1602
        %v1604 = vrcp.pop %v1539
        %v1605 = vmul.f32 1.0, %v1604
        %v1606 = vrcp.pop %v1540
        %v1607 = vmul.f32 1.0, %v1606
        %v1608 = vrcp.pop %v1541
        %v1609 = vmul.f32 1.0, %v1608
        %v1610 = vrcp.pop %v1542
        %v1611 = vmul.f32 1.0, %v1610
        %v1612 = vrcp.pop %v1543
        %v1613 = vmul.f32 1.0, %v1612
        %v1614 = vrcp.pop %v1544
        %v1615 = vmul.f32 1.0, %v1614
        %v1616 = vrcp.pop %v1545
        %v1617 = vmul.f32 1.0, %v1616
        %v1618 = vrcp.pop %v1546
        %v1619 = vmul.f32 1.0, %v1618
        %v1620 = vrcp.pop %v1547
        %v1621 = vmul.f32 1.0, %v1620
        %v1622 = vmul.f32 %v840, %v1549
        %v1623 = vmul.f32 %v841, %v1549
        %v1624 = vmul.f32 %v842, %v1551
        %v1625 = vmul.f32 %v843, %v1551
        %v1626 = vmul.f32 %v844, %v1553
        %v1627 = vmul.f32 %v845, %v1553
        %v1628 = vmul.f32 %v846, %v1555
        %v1629 = vmul.f32 %v847, %v1555
        %v1630 = vmul.f32 %v848, %v1557
        %v1631 = vmul.f32 %v849, %v1557
        %v1632 = vmul.f32 %v850, %v1559
        %v1633 = vmul.f32 %v851, %v1559
        %v1634 = vmul.f32 %v852, %v1561
        %v1635 = vmul.f32 %v853, %v1561
        %v1636 = vmul.f32 %v854, %v1563
        %v1637 = vmul.f32 %v855, %v1563
        %v1638 = vmul.f32 %v856, %v1565
        %v1639 = vmul.f32 %v857, %v1565
        %v1640 = vmul.f32 %v858, %v1567
        %v1641 = vmul.f32 %v859, %v1567
        %v1642 = vmul.f32 %v860, %v1569
        %v1643 = vmul.f32 %v861, %v1569
        %v1644 = vmul.f32 %v862, %v1571
        %v1645 = vmul.f32 %v863, %v1571
        %v1646 = vmul.f32 %v864, %v1573
        %v1647 = vmul.f32 %v865, %v1573
        %v1648 = vmul.f32 %v866, %v1575
        %v1649 = vmul.f32 %v867, %v1575
        %v1650 = vmul.f32 %v868, %v1577
        %v1651 = vmul.f32 %v869, %v1577
        %v1652 = vmul.f32 %v870, %v1579
        %v1653 = vmul.f32 %v871, %v1579
        %v1654 = vmul.f32 %v872, %v1581
        %v1655 = vmul.f32 %v873, %v1581
        %v1656 = vmul.f32 %v874, %v1583
        %v1657 = vmul.f32 %v875, %v1583
        %v1658 = vmul.f32 %v876, %v1585
        %v1659 = vmul.f32 %v877, %v1585
        %v1660 = vmul.f32 %v878, %v1587
        %v1661 = vmul.f32 %v879, %v1587
        %v1662 = vmul.f32 %v880, %v1589
        %v1663 = vmul.f32 %v881, %v1589
        %v1664 = vmul.f32 %v882, %v1591
        %v1665 = vmul.f32 %v883, %v1591
        %v1666 = vmul.f32 %v884, %v1593
        %v1667 = vmul.f32 %v885, %v1593
        %v1668 = vmul.f32 %v886, %v1595
        %v1669 = vmul.f32 %v887, %v1595
        %v1670 = vmul.f32 %v888, %v1597
        %v1671 = vmul.f32 %v889, %v1597
        %v1672 = vmul.f32 %v890, %v1599
        %v1673 = vmul.f32 %v891, %v1599
        %v1674 = vmul.f32 %v892, %v1601
        %v1675 = vmul.f32 %v893, %v1601
        %v1676 = vmul.f32 %v894, %v1603
        %v1677 = vmul.f32 %v895, %v1603
        %v1678 = vmul.f32 %v896, %v1605
        %v1679 = vmul.f32 %v897, %v1605
        %v1680 = vmul.f32 %v898, %v1607
        %v1681 = vmul.f32 %v899, %v1607
        %v1682 = vmul.f32 %v900, %v1609
        %v1683 = vmul.f32 %v901, %v1609
        %v1684 = vmul.f32 %v902, %v1611
        %v1685 = vmul.f32 %v903, %v1611
        %v1686 = vmul.f32 %v904, %v1613
        %v1687 = vmul.f32 %v905, %v1613
        %v1688 = vmul.f32 %v906, %v1615
        %v1689 = vmul.f32 %v907, %v1615
        %v1690 = vmul.f32 %v908, %v1617
        %v1691 = vmul.f32 %v909, %v1617
        %v1692 = vmul.f32 %v910, %v1619
        %v1693 = vmul.f32 %v911, %v1619
        %v1694 = vmul.f32 %v912, %v1621
        %v1695 = vmul.f32 %v913, %v1621
        %v1696 = vpack.c.bf16 %v1624, %v1622
        %v1697 = vpack.c.bf16 %v1625, %v1623
        %v1698 = vpack.c.bf16 %v1628, %v1626
        %v1699 = vpack.c.bf16 %v1629, %v1627
        %v1700 = vpack.c.bf16 %v1632, %v1630
        %v1701 = vpack.c.bf16 %v1633, %v1631
        %v1702 = vpack.c.bf16 %v1636, %v1634
        %v1703 = vpack.c.bf16 %v1637, %v1635
        %v1704 = vpack.c.bf16 %v1640, %v1638
        %v1705 = vpack.c.bf16 %v1641, %v1639
        %v1706 = vpack.c.bf16 %v1644, %v1642
        %v1707 = vpack.c.bf16 %v1645, %v1643
        %v1708 = vpack.c.bf16 %v1648, %v1646
        %v1709 = vpack.c.bf16 %v1649, %v1647
        %v1710 = vpack.c.bf16 %v1652, %v1650
        %v1711 = vpack.c.bf16 %v1653, %v1651
        %v1712 = vpack.c.bf16 %v1656, %v1654
        %v1713 = vpack.c.bf16 %v1657, %v1655
        %v1714 = vpack.c.bf16 %v1660, %v1658
        %v1715 = vpack.c.bf16 %v1661, %v1659
        %v1716 = vpack.c.bf16 %v1664, %v1662
        %v1717 = vpack.c.bf16 %v1665, %v1663
        %v1718 = vpack.c.bf16 %v1668, %v1666
        %v1719 = vpack.c.bf16 %v1669, %v1667
        %v1720 = vpack.c.bf16 %v1672, %v1670
        %v1721 = vpack.c.bf16 %v1673, %v1671
        %v1722 = vpack.c.bf16 %v1676, %v1674
        %v1723 = vpack.c.bf16 %v1677, %v1675
        %v1724 = vpack.c.bf16 %v1680, %v1678
        %v1725 = vpack.c.bf16 %v1681, %v1679
        %v1726 = vpack.c.bf16 %v1684, %v1682
        %v1727 = vpack.c.bf16 %v1685, %v1683
        %v1728 = vpack.c.bf16 %v1688, %v1686
        %v1729 = vpack.c.bf16 %v1689, %v1687
        %v1730 = vpack.c.bf16 %v1692, %v1690
        %v1731 = vpack.c.bf16 %v1693, %v1691
        %v1732 = vpack.c.bf16 %v1694, %v1694
        %v1733 = vpack.c.bf16 %v1695, %v1695
        %v1734 = vld [vmem:[%s3] sm:$0xf]
        %v1735 = vld [vmem:[%s3 + $0x4] sm:$0xf]
        %v1736 = vld [vmem:[%s3 + $0x8] sm:$0xf]
        %v1737 = vld [vmem:[%s3 + $0xc] sm:$0xf]
        %v1738 = vld [vmem:[%s3 + $0x10] sm:$0xf]
        %v1739 = vld [vmem:[%s3 + $0x14] sm:$0xf]
        %v1740 = vld [vmem:[%s3 + $0x18] sm:$0xf]
        %v1741 = vld [vmem:[%s3 + $0x1c] sm:$0xf]
        %v1742 = vld [vmem:[%s3 + $0x20] sm:$0xf]
        %v1743 = vld [vmem:[%s3 + $0x24] sm:$0xf]
        %v1744 = vld [vmem:[%s3 + $0x28] sm:$0xf]
        %v1745 = vld [vmem:[%s3 + $0x2c] sm:$0xf]
        %v1746 = vld [vmem:[%s3 + $0x30] sm:$0xf]
        %v1747 = vld [vmem:[%s3 + $0x34] sm:$0xf]
        %v1748 = vld [vmem:[%s3 + $0x38] sm:$0xf]
        %v1749 = vld [vmem:[%s3 + $0x3c] sm:$0xf]
        %v1750 = vld [vmem:[%s3 + $0x40] sm:$0xf]
        %v1751 = vld [vmem:[%s3 + $0x44] sm:$0x1]
        %v1770 = vunpack.c.l.b16 %v1734
        %v1771 = vunpack.c.l.b16 %v1735
        %v1772 = vunpack.c.l.b16 %v1736
        %v1773 = vunpack.c.l.b16 %v1737
        %v1774 = vunpack.c.l.b16 %v1738
        %v1775 = vunpack.c.l.b16 %v1739
        %v1776 = vunpack.c.l.b16 %v1740
        %v1777 = vunpack.c.l.b16 %v1741
        %v1778 = vunpack.c.l.b16 %v1742
        %v1779 = vunpack.c.l.b16 %v1743
        %v1780 = vunpack.c.l.b16 %v1744
        %v1781 = vunpack.c.l.b16 %v1745
        %v1782 = vunpack.c.l.b16 %v1746
        %v1783 = vunpack.c.l.b16 %v1747
        %v1784 = vunpack.c.l.b16 %v1748
        %v1785 = vunpack.c.l.b16 %v1749
        %v1786 = vunpack.c.l.b16 %v1750
        %v1787 = vunpack.c.l.b16 %v1751
        %v1788 = vpack.c.b16 %v1771, %v1770
        %v1789 = vpack.c.b16 %v1773, %v1772
        %v1790 = vpack.c.b16 %v1775, %v1774
        %v1791 = vpack.c.b16 %v1777, %v1776
        %v1792 = vpack.c.b16 %v1779, %v1778
        %v1793 = vpack.c.b16 %v1781, %v1780
        %v1794 = vpack.c.b16 %v1783, %v1782
        %v1795 = vpack.c.b16 %v1785, %v1784
        %v1796 = vpack.c.b16 %v1787, %v1786
        %v1806 = vsel %vm543, %v1697, 0
        %v1809 = vsel %vm543, %v1699, 0
        %v1812 = vsel %vm543, %v1701, 0
        %v1815 = vsel %vm543, %v1703, 0
        %v1818 = vsel %vm543, %v1705, 0
        %v1821 = vsel %vm543, %v1707, 0
        %v1824 = vsel %vm543, %v1709, 0
        %v1827 = vsel %vm543, %v1711, 0
        %v1830 = vsel %vm543, %v1713, 0
        %v1833 = vsel %vm543, %v1715, 0
        %v1836 = vsel %vm543, %v1717, 0
        %v1839 = vsel %vm543, %v1719, 0
        %v1842 = vsel %vm543, %v1721, 0
        %v1845 = vsel %vm543, %v1723, 0
        %v1848 = vsel %vm543, %v1725, 0
        %v1851 = vsel %vm543, %v1727, 0
        %v1854 = vsel %vm543, %v1729, 0
        %v1857 = vsel %vm543, %v1731, 0
        %v1860 = vsel %vm543, %v1733, 0
        %vm1862 = vcmask 1044480
        %v1864 = vsel %vm1862, %v1796, 0
        %1866 = vmatprep.subr.bf16.mxu0 0
        %1867 = vmatpush1.bf16.msra.mxu0 %v1788
        %1868 = vmatprep.subr.bf16.mxu0 0
        %1869 = vmatpush1.bf16.msra.mxu0 %v1789
        %1870 = vmatprep.subr.bf16.mxu0 0
        %1871 = vmatpush1.bf16.msra.mxu0 %v1790
        %1872 = vmatprep.subr.bf16.mxu0 0
        %1873 = vmatpush1.bf16.msra.mxu0 %v1791
        %1874 = vmatprep.subr.bf16.mxu0 0
        %1875 = vmatpush1.bf16.msra.mxu0 %v1792
        %1876 = vmatprep.subr.bf16.mxu0 0
        %1877 = vmatpush1.bf16.msra.mxu0 %v1793
        %1878 = vmatprep.subr.bf16.mxu0 0
        %1879 = vmatpush1.bf16.msra.mxu0 %v1794
        %1880 = vmatprep.subr.bf16.mxu0 0
        %1881 = vmatpush1.bf16.msra.mxu0 %v1795
        %1882 = vmatprep.subr.bf16.mxu0 0
        %1883 = vmatpush1.bf16.msra.mxu0 %v1864
        %1884 = vmatprep.subr.bf16.mxu0 0
        %1885 = vmatpush1.bf16.msra.mxu0 0
        %1886 = vmatprep.subr.bf16.mxu0 0
        %1887 = vmatpush1.bf16.msra.mxu0 0
        %1888 = vmatprep.subr.bf16.mxu0 0
        %1889 = vmatpush1.bf16.msra.mxu0 0
        %1890 = vmatprep.subr.bf16.mxu0 0
        %1891 = vmatpush1.bf16.msra.mxu0 0
        %1892 = vmatprep.subr.bf16.mxu0 0
        %1893 = vmatpush1.bf16.msra.mxu0 0
        %1894 = vmatprep.subr.bf16.mxu0 0
        %1895 = vmatpush1.bf16.msra.mxu0 0
        %1896 = vmatprep.subr.bf16.mxu0 0
        %1897 = vmatpush1.bf16.msra.mxu0 0
        %1898 = vmatprep.mubr.bf16.mxu0 %v1806
        %1899 = vmatmul.mubr.bf16.gmra.mrb[0].mxu0 %v1696
        %v1900 = vpop.f32.mrb[0].mxu0
        %v1901 = vadd.f32 %v381, %v1900
        %v1902 = vpop.f32.mrb[0].mxu0
        %v1903 = vpop.f32.mrb[0].mxu0
        %v1904 = vadd.f32 %v381, %v1903
        %v1905 = vpop.f32.mrb[0].mxu0
        %1906 = vmatprep.mubr.bf16.mxu0 %v1809
        %1907 = vmatmul.mubr.bf16.gmra.mrb[0].mxu0 %v1698
        %v1908 = vpop.f32.mrb[0].mxu0
        %v1909 = vadd.f32 %v381, %v1908
        %v1910 = vpop.f32.mrb[0].mxu0
        %v1911 = vpop.f32.mrb[0].mxu0
        %v1912 = vadd.f32 %v381, %v1911
        %v1913 = vpop.f32.mrb[0].mxu0
        %1914 = vmatprep.mubr.bf16.mxu0 %v1812
        %1915 = vmatmul.mubr.bf16.gmra.mrb[0].mxu0 %v1700
        %v1916 = vpop.f32.mrb[0].mxu0
        %v1917 = vadd.f32 %v381, %v1916
        %v1918 = vpop.f32.mrb[0].mxu0
        %v1919 = vpop.f32.mrb[0].mxu0
        %v1920 = vadd.f32 %v381, %v1919
        %v1921 = vpop.f32.mrb[0].mxu0
        %1922 = vmatprep.mubr.bf16.mxu0 %v1815
        %1923 = vmatmul.mubr.bf16.gmra.mrb[0].mxu0 %v1702
        %v1924 = vpop.f32.mrb[0].mxu0
        %v1925 = vadd.f32 %v381, %v1924
        %v1926 = vpop.f32.mrb[0].mxu0
        %v1927 = vpop.f32.mrb[0].mxu0
        %v1928 = vadd.f32 %v381, %v1927
        %v1929 = vpop.f32.mrb[0].mxu0
        %1930 = vmatprep.mubr.bf16.mxu0 %v1818
        %1931 = vmatmul.mubr.bf16.gmra.mrb[0].mxu0 %v1704
        %v1932 = vpop.f32.mrb[0].mxu0
        %v1933 = vadd.f32 %v381, %v1932
        %v1934 = vpop.f32.mrb[0].mxu0
        %v1935 = vpop.f32.mrb[0].mxu0
        %v1936 = vadd.f32 %v381, %v1935
        %v1937 = vpop.f32.mrb[0].mxu0
        %1938 = vmatprep.mubr.bf16.mxu0 %v1821
        %1939 = vmatmul.mubr.bf16.gmra.mrb[0].mxu0 %v1706
        %v1940 = vpop.f32.mrb[0].mxu0
        %v1941 = vadd.f32 %v381, %v1940
        %v1942 = vpop.f32.mrb[0].mxu0
        %v1943 = vpop.f32.mrb[0].mxu0
        %v1944 = vadd.f32 %v381, %v1943
        %v1945 = vpop.f32.mrb[0].mxu0
        %1946 = vmatprep.mubr.bf16.mxu0 %v1824
        %1947 = vmatmul.mubr.bf16.gmra.mrb[0].mxu0 %v1708
        %v1948 = vpop.f32.mrb[0].mxu0
        %v1949 = vadd.f32 %v381, %v1948
        %v1950 = vpop.f32.mrb[0].mxu0
        %v1951 = vpop.f32.mrb[0].mxu0
        %v1952 = vadd.f32 %v381, %v1951
        %v1953 = vpop.f32.mrb[0].mxu0
        %1954 = vmatprep.mubr.bf16.mxu0 %v1827
        %1955 = vmatmul.mubr.bf16.gmra.mrb[0].mxu0 %v1710
        %v1956 = vpop.f32.mrb[0].mxu0
        %v1957 = vadd.f32 %v381, %v1956
        %v1958 = vpop.f32.mrb[0].mxu0
        %v1959 = vpop.f32.mrb[0].mxu0
        %v1960 = vadd.f32 %v381, %v1959
        %v1961 = vpop.f32.mrb[0].mxu0
        %1962 = vmatprep.mubr.bf16.mxu0 %v1830
        %1963 = vmatmul.mubr.bf16.gmra.mrb[0].mxu0 %v1712
        %v1964 = vpop.f32.mrb[0].mxu0
        %v1965 = vadd.f32 %v381, %v1964
        %v1966 = vpop.f32.mrb[0].mxu0
        %v1967 = vpop.f32.mrb[0].mxu0
        %v1968 = vadd.f32 %v381, %v1967
        %v1969 = vpop.f32.mrb[0].mxu0
        %1970 = vmatprep.mubr.bf16.mxu0 %v1833
        %1971 = vmatmul.mubr.bf16.gmra.mrb[0].mxu0 %v1714
        %v1972 = vpop.f32.mrb[0].mxu0
        %v1973 = vadd.f32 %v381, %v1972
        %v1974 = vpop.f32.mrb[0].mxu0
        %v1975 = vpop.f32.mrb[0].mxu0
        %v1976 = vadd.f32 %v381, %v1975
        %v1977 = vpop.f32.mrb[0].mxu0
        %1978 = vmatprep.mubr.bf16.mxu0 %v1836
        %1979 = vmatmul.mubr.bf16.gmra.mrb[0].mxu0 %v1716
        %v1980 = vpop.f32.mrb[0].mxu0
        %v1981 = vadd.f32 %v381, %v1980
        %v1982 = vpop.f32.mrb[0].mxu0
        %v1983 = vpop.f32.mrb[0].mxu0
        %v1984 = vadd.f32 %v381, %v1983
        %v1985 = vpop.f32.mrb[0].mxu0
        %1986 = vmatprep.mubr.bf16.mxu0 %v1839
        %1987 = vmatmul.mubr.bf16.gmra.mrb[0].mxu0 %v1718
        %v1988 = vpop.f32.mrb[0].mxu0
        %v1989 = vadd.f32 %v381, %v1988
        %v1990 = vpop.f32.mrb[0].mxu0
        %v1991 = vpop.f32.mrb[0].mxu0
        %v1992 = vadd.f32 %v381, %v1991
        %v1993 = vpop.f32.mrb[0].mxu0
        %1994 = vmatprep.mubr.bf16.mxu0 %v1842
        %1995 = vmatmul.mubr.bf16.gmra.mrb[0].mxu0 %v1720
        %v1996 = vpop.f32.mrb[0].mxu0
        %v1997 = vadd.f32 %v381, %v1996
        %v1998 = vpop.f32.mrb[0].mxu0
        %v1999 = vpop.f32.mrb[0].mxu0
        %v2000 = vadd.f32 %v381, %v1999
        %v2001 = vpop.f32.mrb[0].mxu0
        %2002 = vmatprep.mubr.bf16.mxu0 %v1845
        %2003 = vmatmul.mubr.bf16.gmra.mrb[0].mxu0 %v1722
        %v2004 = vpop.f32.mrb[0].mxu0
        %v2005 = vadd.f32 %v381, %v2004
        %v2006 = vpop.f32.mrb[0].mxu0
        %v2007 = vpop.f32.mrb[0].mxu0
        %v2008 = vadd.f32 %v381, %v2007
        %v2009 = vpop.f32.mrb[0].mxu0
        %2010 = vmatprep.mubr.bf16.mxu0 %v1848
        %2011 = vmatmul.mubr.bf16.gmra.mrb[0].mxu0 %v1724
        %v2012 = vpop.f32.mrb[0].mxu0
        %v2013 = vadd.f32 %v381, %v2012
        %v2014 = vpop.f32.mrb[0].mxu0
        %v2015 = vpop.f32.mrb[0].mxu0
        %v2016 = vadd.f32 %v381, %v2015
        %v2017 = vpop.f32.mrb[0].mxu0
        %2018 = vmatprep.mubr.bf16.mxu0 %v1851
        %2019 = vmatmul.mubr.bf16.gmra.mrb[0].mxu0 %v1726
        %v2020 = vpop.f32.mrb[0].mxu0
        %v2021 = vadd.f32 %v381, %v2020
        %v2022 = vpop.f32.mrb[0].mxu0
        %v2023 = vpop.f32.mrb[0].mxu0
        %v2024 = vadd.f32 %v381, %v2023
        %v2025 = vpop.f32.mrb[0].mxu0
        %2026 = vmatprep.mubr.bf16.mxu0 %v1854
        %2027 = vmatmul.mubr.bf16.gmra.mrb[0].mxu0 %v1728
        %v2028 = vpop.f32.mrb[0].mxu0
        %v2029 = vadd.f32 %v381, %v2028
        %v2030 = vpop.f32.mrb[0].mxu0
        %v2031 = vpop.f32.mrb[0].mxu0
        %v2032 = vadd.f32 %v381, %v2031
        %v2033 = vpop.f32.mrb[0].mxu0
        %2034 = vmatprep.mubr.bf16.mxu0 %v1857
        %2035 = vmatmul.mubr.bf16.gmra.mrb[0].mxu0 %v1730
        %v2036 = vpop.f32.mrb[0].mxu0
        %v2037 = vadd.f32 %v381, %v2036
        %v2038 = vpop.f32.mrb[0].mxu0
        %v2039 = vpop.f32.mrb[0].mxu0
        %v2040 = vadd.f32 %v381, %v2039
        %v2041 = vpop.f32.mrb[0].mxu0
        %2042 = vmatprep.mubr.bf16.mxu0 %v1860
        %2043 = vmatmul.mubr.bf16.gmra.mrb[0].mxu0 %v1732
        %v2044 = vpop.f32.mrb[0].mxu0
        %v2045 = vadd.f32 %v381, %v2044
        %v2046 = vpop.f32.mrb[0].mxu0
        %v2047 = vpop.f32.mrb[0].mxu0
        %v2048 = vpop.f32.mrb[0].mxu0
        %2049 = vdwg.mxu0
        %v2050 = vmax.f32 %v1901, 0.0
        %v2051 = vmax.f32 %v1904, 0.0
        %v2052 = vmax.f32 %v1909, 0.0
        %v2053 = vmax.f32 %v1912, 0.0
        %v2054 = vmax.f32 %v1917, 0.0
        %v2055 = vmax.f32 %v1920, 0.0
        %v2056 = vmax.f32 %v1925, 0.0
        %v2057 = vmax.f32 %v1928, 0.0
        %v2058 = vmax.f32 %v1933, 0.0
        %v2059 = vmax.f32 %v1936, 0.0
        %v2060 = vmax.f32 %v1941, 0.0
        %v2061 = vmax.f32 %v1944, 0.0
        %v2062 = vmax.f32 %v1949, 0.0
        %v2063 = vmax.f32 %v1952, 0.0
        %v2064 = vmax.f32 %v1957, 0.0
        %v2065 = vmax.f32 %v1960, 0.0
        %v2066 = vmax.f32 %v1965, 0.0
        %v2067 = vmax.f32 %v1968, 0.0
        %v2068 = vmax.f32 %v1973, 0.0
        %v2069 = vmax.f32 %v1976, 0.0
        %v2070 = vmax.f32 %v1981, 0.0
        %v2071 = vmax.f32 %v1984, 0.0
        %v2072 = vmax.f32 %v1989, 0.0
        %v2073 = vmax.f32 %v1992, 0.0
        %v2074 = vmax.f32 %v1997, 0.0
        %v2075 = vmax.f32 %v2000, 0.0
        %v2076 = vmax.f32 %v2005, 0.0
        %v2077 = vmax.f32 %v2008, 0.0
        %v2078 = vmax.f32 %v2013, 0.0
        %v2079 = vmax.f32 %v2016, 0.0
        %v2080 = vmax.f32 %v2021, 0.0
        %v2081 = vmax.f32 %v2024, 0.0
        %v2082 = vmax.f32 %v2029, 0.0
        %v2083 = vmax.f32 %v2032, 0.0
        %v2084 = vmax.f32 %v2037, 0.0
        %v2085 = vmax.f32 %v2040, 0.0
        %v2086 = vmax.f32 %v2045, 0.0
        %v2087 = vpack.c.bf16 %v2051, %v2050
        %v2088 = vpack.c.bf16 %v2053, %v2052
        %v2089 = vpack.c.bf16 %v2055, %v2054
        %v2090 = vpack.c.bf16 %v2057, %v2056
        %v2091 = vpack.c.bf16 %v2059, %v2058
        %v2092 = vpack.c.bf16 %v2061, %v2060
        %v2093 = vpack.c.bf16 %v2063, %v2062
        %v2094 = vpack.c.bf16 %v2065, %v2064
        %v2095 = vpack.c.bf16 %v2067, %v2066
        %v2096 = vpack.c.bf16 %v2069, %v2068
        %v2097 = vpack.c.bf16 %v2071, %v2070
        %v2098 = vpack.c.bf16 %v2073, %v2072
        %v2099 = vpack.c.bf16 %v2075, %v2074
        %v2100 = vpack.c.bf16 %v2077, %v2076
        %v2101 = vpack.c.bf16 %v2079, %v2078
        %v2102 = vpack.c.bf16 %v2081, %v2080
        %v2103 = vpack.c.bf16 %v2083, %v2082
        %v2104 = vpack.c.bf16 %v2085, %v2084
        %v2105 = vpack.c.bf16 %v2086, %v2086
        %v2106 = vld [vmem:[%s4] sm:$0xff]
        %v2107 = vld [vmem:[%s4 + $0x8] sm:$0xff]
        %v2108 = vld [vmem:[%s4 + $0x10] sm:$0xff]
        %v2109 = vld [vmem:[%s4 + $0x18] sm:$0xff]
        %v2110 = vld [vmem:[%s4 + $0x20] sm:$0xff]
        %v2111 = vld [vmem:[%s4 + $0x28] sm:$0xff]
        %v2112 = vld [vmem:[%s4 + $0x30] sm:$0xff]
        %v2113 = vld [vmem:[%s4 + $0x38] sm:$0xff]
        %v2115 = vlaneseq
        %v2116 = vshrl.u32 %v2115, 7
        %v2117 = vsub.s32 0, %v2116
        %v2118 = vrot.slane %v383, %v2117
        %v2119 = vlaneseq
        %v2120 = vshrl.u32 %v2119, 7
        %v2121 = vsub.s32 1, %v2120
        %v2122 = vrot.slane %v383, %v2121
        %v2133 = vunpack.c.l.b16 %v2106
        %v2134 = vunpack.c.h.b16 %v2106
        %v2135 = vunpack.c.l.b16 %v2107
        %v2136 = vunpack.c.h.b16 %v2107
        %v2137 = vunpack.c.l.b16 %v2108
        %v2138 = vunpack.c.h.b16 %v2108
        %v2139 = vunpack.c.l.b16 %v2109
        %v2140 = vunpack.c.h.b16 %v2109
        %v2141 = vunpack.c.l.b16 %v2110
        %v2142 = vunpack.c.h.b16 %v2110
        %v2143 = vunpack.c.l.b16 %v2111
        %v2144 = vunpack.c.h.b16 %v2111
        %v2145 = vunpack.c.l.b16 %v2112
        %v2146 = vunpack.c.h.b16 %v2112
        %v2147 = vunpack.c.l.b16 %v2113
        %v2148 = vunpack.c.h.b16 %v2113
        %v2149 = vpack.c.b16 %v2135, %v2133
        %v2150 = vpack.c.b16 %v2136, %v2134
        %v2151 = vpack.c.b16 %v2139, %v2137
        %v2152 = vpack.c.b16 %v2140, %v2138
        %v2153 = vpack.c.b16 %v2143, %v2141
        %v2154 = vpack.c.b16 %v2144, %v2142
        %v2155 = vpack.c.b16 %v2147, %v2145
        %v2156 = vpack.c.b16 %v2148, %v2146
        %vm2165 = vcmask 523264
        %v2167 = vsel %vm2165, %v2087, 0
        %v2170 = vsel %vm2165, %v2088, 0
        %v2173 = vsel %vm2165, %v2089, 0
        %v2176 = vsel %vm2165, %v2090, 0
        %v2179 = vsel %vm2165, %v2091, 0
        %v2182 = vsel %vm2165, %v2092, 0
        %v2185 = vsel %vm2165, %v2093, 0
        %v2188 = vsel %vm2165, %v2094, 0
        %v2191 = vsel %vm2165, %v2095, 0
        %v2194 = vsel %vm2165, %v2096, 0
        %v2197 = vsel %vm2165, %v2097, 0
        %v2200 = vsel %vm2165, %v2098, 0
        %v2203 = vsel %vm2165, %v2099, 0
        %v2206 = vsel %vm2165, %v2100, 0
        %v2209 = vsel %vm2165, %v2101, 0
        %v2212 = vsel %vm2165, %v2102, 0
        %v2215 = vsel %vm2165, %v2103, 0
        %v2218 = vsel %vm2165, %v2104, 0
        %v2221 = vsel %vm2165, %v2105, 0
        %2223 = vmatprep.subr.bf16.mxu0 %v2150
        %2224 = vmatpush1.bf16.msra.mxu0 %v2149
        %2225 = vmatprep.subr.bf16.mxu0 %v2152
        %2226 = vmatpush1.bf16.msra.mxu0 %v2151
        %2227 = vmatprep.subr.bf16.mxu0 %v2154
        %2228 = vmatpush1.bf16.msra.mxu0 %v2153
        %2229 = vmatprep.subr.bf16.mxu0 %v2156
        %2230 = vmatpush1.bf16.msra.mxu0 %v2155
        %2231 = vmatprep.subr.bf16.mxu0 0
        %2232 = vmatpush1.bf16.msra.mxu0 0
        %2233 = vmatprep.subr.bf16.mxu0 0
        %2234 = vmatpush1.bf16.msra.mxu0 0
        %2235 = vmatprep.subr.bf16.mxu0 0
        %2236 = vmatpush1.bf16.msra.mxu0 0
        %2237 = vmatprep.subr.bf16.mxu0 0
        %2238 = vmatpush1.bf16.msra.mxu0 0
        %2239 = vmatprep.subr.bf16.mxu0 0
        %2240 = vmatpush1.bf16.msra.mxu0 0
        %2241 = vmatprep.subr.bf16.mxu0 0
        %2242 = vmatpush1.bf16.msra.mxu0 0
        %2243 = vmatprep.subr.bf16.mxu0 0
        %2244 = vmatpush1.bf16.msra.mxu0 0
        %2245 = vmatprep.subr.bf16.mxu0 0
        %2246 = vmatpush1.bf16.msra.mxu0 0
        %2247 = vmatprep.subr.bf16.mxu0 0
        %2248 = vmatpush1.bf16.msra.mxu0 0
        %2249 = vmatprep.subr.bf16.mxu0 0
        %2250 = vmatpush1.bf16.msra.mxu0 0
        %2251 = vmatprep.subr.bf16.mxu0 0
        %2252 = vmatpush1.bf16.msra.mxu0 0
        %2253 = vmatprep.subr.bf16.mxu0 0
        %2254 = vmatpush1.bf16.msra.mxu0 0
        %2255 = vmatprep.mubr.bf16.mxu0 0
        %2256 = vmatmul.mubr.bf16.gmra.mrb[0].mxu0 %v2167
        %v2257 = vpop.f32.mrb[0].mxu0
        %v2258 = vadd.f32 %v2118, %v2257
        %v2259 = vpop.f32.mrb[0].mxu0
        %v2260 = vadd.f32 %v2122, %v2259
        %v2261 = vpop.f32.mrb[0].mxu0
        %v2262 = vadd.f32 %v2118, %v2261
        %v2263 = vpop.f32.mrb[0].mxu0
        %v2264 = vadd.f32 %v2122, %v2263
        %2265 = vmatprep.mubr.bf16.mxu0 0
        %2266 = vmatmul.mubr.bf16.gmra.mrb[0].mxu0 %v2170
        %v2267 = vpop.f32.mrb[0].mxu0
        %v2268 = vadd.f32 %v2118, %v2267
        %v2269 = vpop.f32.mrb[0].mxu0
        %v2270 = vadd.f32 %v2122, %v2269
        %v2271 = vpop.f32.mrb[0].mxu0
        %v2272 = vadd.f32 %v2118, %v2271
        %v2273 = vpop.f32.mrb[0].mxu0
        %v2274 = vadd.f32 %v2122, %v2273
        %2275 = vmatprep.mubr.bf16.mxu0 0
        %2276 = vmatmul.mubr.bf16.gmra.mrb[0].mxu0 %v2173
        %v2277 = vpop.f32.mrb[0].mxu0
        %v2278 = vadd.f32 %v2118, %v2277
        %v2279 = vpop.f32.mrb[0].mxu0
        %v2280 = vadd.f32 %v2122, %v2279
        %v2281 = vpop.f32.mrb[0].mxu0
        %v2282 = vadd.f32 %v2118, %v2281
        %v2283 = vpop.f32.mrb[0].mxu0
        %v2284 = vadd.f32 %v2122, %v2283
        %2285 = vmatprep.mubr.bf16.mxu0 0
        %2286 = vmatmul.mubr.bf16.gmra.mrb[0].mxu0 %v2176
        %v2287 = vpop.f32.mrb[0].mxu0
        %v2288 = vadd.f32 %v2118, %v2287
        %v2289 = vpop.f32.mrb[0].mxu0
        %v2290 = vadd.f32 %v2122, %v2289
        %v2291 = vpop.f32.mrb[0].mxu0
        %v2292 = vadd.f32 %v2118, %v2291
        %v2293 = vpop.f32.mrb[0].mxu0
        %v2294 = vadd.f32 %v2122, %v2293
        %2295 = vmatprep.mubr.bf16.mxu0 0
        %2296 = vmatmul.mubr.bf16.gmra.mrb[0].mxu0 %v2179
        %v2297 = vpop.f32.mrb[0].mxu0
        %v2298 = vadd.f32 %v2118, %v2297
        %v2299 = vpop.f32.mrb[0].mxu0
        %v2300 = vadd.f32 %v2122, %v2299
        %v2301 = vpop.f32.mrb[0].mxu0
        %v2302 = vadd.f32 %v2118, %v2301
        %v2303 = vpop.f32.mrb[0].mxu0
        %v2304 = vadd.f32 %v2122, %v2303
        %2305 = vmatprep.mubr.bf16.mxu0 0
        %2306 = vmatmul.mubr.bf16.gmra.mrb[0].mxu0 %v2182
        %v2307 = vpop.f32.mrb[0].mxu0
        %v2308 = vadd.f32 %v2118, %v2307
        %v2309 = vpop.f32.mrb[0].mxu0
        %v2310 = vadd.f32 %v2122, %v2309
        %v2311 = vpop.f32.mrb[0].mxu0
        %v2312 = vadd.f32 %v2118, %v2311
        %v2313 = vpop.f32.mrb[0].mxu0
        %v2314 = vadd.f32 %v2122, %v2313
        %2315 = vmatprep.mubr.bf16.mxu0 0
        %2316 = vmatmul.mubr.bf16.gmra.mrb[0].mxu0 %v2185
        %v2317 = vpop.f32.mrb[0].mxu0
        %v2318 = vadd.f32 %v2118, %v2317
        %v2319 = vpop.f32.mrb[0].mxu0
        %v2320 = vadd.f32 %v2122, %v2319
        %v2321 = vpop.f32.mrb[0].mxu0
        %v2322 = vadd.f32 %v2118, %v2321
        %v2323 = vpop.f32.mrb[0].mxu0
        %v2324 = vadd.f32 %v2122, %v2323
        %2325 = vmatprep.mubr.bf16.mxu0 0
        %2326 = vmatmul.mubr.bf16.gmra.mrb[0].mxu0 %v2188
        %v2327 = vpop.f32.mrb[0].mxu0
        %v2328 = vadd.f32 %v2118, %v2327
        %v2329 = vpop.f32.mrb[0].mxu0
        %v2330 = vadd.f32 %v2122, %v2329
        %v2331 = vpop.f32.mrb[0].mxu0
        %v2332 = vadd.f32 %v2118, %v2331
        %v2333 = vpop.f32.mrb[0].mxu0
        %v2334 = vadd.f32 %v2122, %v2333
        %2335 = vmatprep.mubr.bf16.mxu0 0
        %2336 = vmatmul.mubr.bf16.gmra.mrb[0].mxu0 %v2191
        %v2337 = vpop.f32.mrb[0].mxu0
        %v2338 = vadd.f32 %v2118, %v2337
        %v2339 = vpop.f32.mrb[0].mxu0
        %v2340 = vadd.f32 %v2122, %v2339
        %v2341 = vpop.f32.mrb[0].mxu0
        %v2342 = vadd.f32 %v2118, %v2341
        %v2343 = vpop.f32.mrb[0].mxu0
        %v2344 = vadd.f32 %v2122, %v2343
        %2345 = vmatprep.mubr.bf16.mxu0 0
        %2346 = vmatmul.mubr.bf16.gmra.mrb[0].mxu0 %v2194
        %v2347 = vpop.f32.mrb[0].mxu0
        %v2348 = vadd.f32 %v2118, %v2347
        %v2349 = vpop.f32.mrb[0].mxu0
        %v2350 = vadd.f32 %v2122, %v2349
        %v2351 = vpop.f32.mrb[0].mxu0
        %v2352 = vadd.f32 %v2118, %v2351
        %v2353 = vpop.f32.mrb[0].mxu0
        %v2354 = vadd.f32 %v2122, %v2353
        %2355 = vmatprep.mubr.bf16.mxu0 0
        %2356 = vmatmul.mubr.bf16.gmra.mrb[0].mxu0 %v2197
        %v2357 = vpop.f32.mrb[0].mxu0
        %v2358 = vadd.f32 %v2118, %v2357
        %v2359 = vpop.f32.mrb[0].mxu0
        %v2360 = vadd.f32 %v2122, %v2359
        %v2361 = vpop.f32.mrb[0].mxu0
        %v2362 = vadd.f32 %v2118, %v2361
        %v2363 = vpop.f32.mrb[0].mxu0
        %v2364 = vadd.f32 %v2122, %v2363
        %2365 = vmatprep.mubr.bf16.mxu0 0
        %2366 = vmatmul.mubr.bf16.gmra.mrb[0].mxu0 %v2200
        %v2367 = vpop.f32.mrb[0].mxu0
        %v2368 = vadd.f32 %v2118, %v2367
        %v2369 = vpop.f32.mrb[0].mxu0
        %v2370 = vadd.f32 %v2122, %v2369
        %v2371 = vpop.f32.mrb[0].mxu0
        %v2372 = vadd.f32 %v2118, %v2371
        %v2373 = vpop.f32.mrb[0].mxu0
        %v2374 = vadd.f32 %v2122, %v2373
        %2375 = vmatprep.mubr.bf16.mxu0 0
        %2376 = vmatmul.mubr.bf16.gmra.mrb[0].mxu0 %v2203
        %v2377 = vpop.f32.mrb[0].mxu0
        %v2378 = vadd.f32 %v2118, %v2377
        %v2379 = vpop.f32.mrb[0].mxu0
        %v2380 = vadd.f32 %v2122, %v2379
        %v2381 = vpop.f32.mrb[0].mxu0
        %v2382 = vadd.f32 %v2118, %v2381
        %v2383 = vpop.f32.mrb[0].mxu0
        %v2384 = vadd.f32 %v2122, %v2383
        %2385 = vmatprep.mubr.bf16.mxu0 0
        %2386 = vmatmul.mubr.bf16.gmra.mrb[0].mxu0 %v2206
        %v2387 = vpop.f32.mrb[0].mxu0
        %v2388 = vadd.f32 %v2118, %v2387
        %v2389 = vpop.f32.mrb[0].mxu0
        %v2390 = vadd.f32 %v2122, %v2389
        %v2391 = vpop.f32.mrb[0].mxu0
        %v2392 = vadd.f32 %v2118, %v2391
        %v2393 = vpop.f32.mrb[0].mxu0
        %v2394 = vadd.f32 %v2122, %v2393
        %2395 = vmatprep.mubr.bf16.mxu0 0
        %2396 = vmatmul.mubr.bf16.gmra.mrb[0].mxu0 %v2209
        %v2397 = vpop.f32.mrb[0].mxu0
        %v2398 = vadd.f32 %v2118, %v2397
        %v2399 = vpop.f32.mrb[0].mxu0
        %v2400 = vadd.f32 %v2122, %v2399
        %v2401 = vpop.f32.mrb[0].mxu0
        %v2402 = vadd.f32 %v2118, %v2401
        %v2403 = vpop.f32.mrb[0].mxu0
        %v2404 = vadd.f32 %v2122, %v2403
        %2405 = vmatprep.mubr.bf16.mxu0 0
        %2406 = vmatmul.mubr.bf16.gmra.mrb[0].mxu0 %v2212
        %v2407 = vpop.f32.mrb[0].mxu0
        %v2408 = vadd.f32 %v2118, %v2407
        %v2409 = vpop.f32.mrb[0].mxu0
        %v2410 = vadd.f32 %v2122, %v2409
        %v2411 = vpop.f32.mrb[0].mxu0
        %v2412 = vadd.f32 %v2118, %v2411
        %v2413 = vpop.f32.mrb[0].mxu0
        %v2414 = vadd.f32 %v2122, %v2413
        %2415 = vmatprep.mubr.bf16.mxu0 0
        %2416 = vmatmul.mubr.bf16.gmra.mrb[0].mxu0 %v2215
        %v2417 = vpop.f32.mrb[0].mxu0
        %v2418 = vadd.f32 %v2118, %v2417
        %v2419 = vpop.f32.mrb[0].mxu0
        %v2420 = vadd.f32 %v2122, %v2419
        %v2421 = vpop.f32.mrb[0].mxu0
        %v2422 = vadd.f32 %v2118, %v2421
        %v2423 = vpop.f32.mrb[0].mxu0
        %v2424 = vadd.f32 %v2122, %v2423
        %2425 = vmatprep.mubr.bf16.mxu0 0
        %2426 = vmatmul.mubr.bf16.gmra.mrb[0].mxu0 %v2218
        %v2427 = vpop.f32.mrb[0].mxu0
        %v2428 = vadd.f32 %v2118, %v2427
        %v2429 = vpop.f32.mrb[0].mxu0
        %v2430 = vadd.f32 %v2122, %v2429
        %v2431 = vpop.f32.mrb[0].mxu0
        %v2432 = vadd.f32 %v2118, %v2431
        %v2433 = vpop.f32.mrb[0].mxu0
        %v2434 = vadd.f32 %v2122, %v2433
        %2435 = vmatprep.mubr.bf16.mxu0 0
        %2436 = vmatmul.mubr.bf16.gmra.mrb[0].mxu0 %v2221
        %v2437 = vpop.f32.mrb[0].mxu0
        %v2438 = vadd.f32 %v2118, %v2437
        %v2439 = vpop.f32.mrb[0].mxu0
        %v2440 = vadd.f32 %v2122, %v2439
        %v2441 = vpop.f32.mrb[0].mxu0
        %v2442 = vpop.f32.mrb[0].mxu0
        %2443 = vdwg.mxu0
        %v2444 = vadd.f32 %v1622, %v2258
        %v2445 = vadd.f32 %v1623, %v2260
        %v2446 = vadd.f32 %v1624, %v2262
        %v2447 = vadd.f32 %v1625, %v2264
        %v2448 = vadd.f32 %v1626, %v2268
        %v2449 = vadd.f32 %v1627, %v2270
        %v2450 = vadd.f32 %v1628, %v2272
        %v2451 = vadd.f32 %v1629, %v2274
        %v2452 = vadd.f32 %v1630, %v2278
        %v2453 = vadd.f32 %v1631, %v2280
        %v2454 = vadd.f32 %v1632, %v2282
        %v2455 = vadd.f32 %v1633, %v2284
        %v2456 = vadd.f32 %v1634, %v2288
        %v2457 = vadd.f32 %v1635, %v2290
        %v2458 = vadd.f32 %v1636, %v2292
        %v2459 = vadd.f32 %v1637, %v2294
        %v2460 = vadd.f32 %v1638, %v2298
        %v2461 = vadd.f32 %v1639, %v2300
        %v2462 = vadd.f32 %v1640, %v2302
        %v2463 = vadd.f32 %v1641, %v2304
        %v2464 = vadd.f32 %v1642, %v2308
        %v2465 = vadd.f32 %v1643, %v2310
        %v2466 = vadd.f32 %v1644, %v2312
        %v2467 = vadd.f32 %v1645, %v2314
        %v2468 = vadd.f32 %v1646, %v2318
        %v2469 = vadd.f32 %v1647, %v2320
        %v2470 = vadd.f32 %v1648, %v2322
        %v2471 = vadd.f32 %v1649, %v2324
        %v2472 = vadd.f32 %v1650, %v2328
        %v2473 = vadd.f32 %v1651, %v2330
        %v2474 = vadd.f32 %v1652, %v2332
        %v2475 = vadd.f32 %v1653, %v2334
        %v2476 = vadd.f32 %v1654, %v2338
        %v2477 = vadd.f32 %v1655, %v2340
        %v2478 = vadd.f32 %v1656, %v2342
        %v2479 = vadd.f32 %v1657, %v2344
        %v2480 = vadd.f32 %v1658, %v2348
        %v2481 = vadd.f32 %v1659, %v2350
        %v2482 = vadd.f32 %v1660, %v2352
        %v2483 = vadd.f32 %v1661, %v2354
        %v2484 = vadd.f32 %v1662, %v2358
        %v2485 = vadd.f32 %v1663, %v2360
        %v2486 = vadd.f32 %v1664, %v2362
        %v2487 = vadd.f32 %v1665, %v2364
        %v2488 = vadd.f32 %v1666, %v2368
        %v2489 = vadd.f32 %v1667, %v2370
        %v2490 = vadd.f32 %v1668, %v2372
        %v2491 = vadd.f32 %v1669, %v2374
        %v2492 = vadd.f32 %v1670, %v2378
        %v2493 = vadd.f32 %v1671, %v2380
        %v2494 = vadd.f32 %v1672, %v2382
        %v2495 = vadd.f32 %v1673, %v2384
        %v2496 = vadd.f32 %v1674, %v2388
        %v2497 = vadd.f32 %v1675, %v2390
        %v2498 = vadd.f32 %v1676, %v2392
        %v2499 = vadd.f32 %v1677, %v2394
        %v2500 = vadd.f32 %v1678, %v2398
        %v2501 = vadd.f32 %v1679, %v2400
        %v2502 = vadd.f32 %v1680, %v2402
        %v2503 = vadd.f32 %v1681, %v2404
        %v2504 = vadd.f32 %v1682, %v2408
        %v2505 = vadd.f32 %v1683, %v2410
        %v2506 = vadd.f32 %v1684, %v2412
        %v2507 = vadd.f32 %v1685, %v2414
        %v2508 = vadd.f32 %v1686, %v2418
        %v2509 = vadd.f32 %v1687, %v2420
        %v2510 = vadd.f32 %v1688, %v2422
        %v2511 = vadd.f32 %v1689, %v2424
        %v2512 = vadd.f32 %v1690, %v2428
        %v2513 = vadd.f32 %v1691, %v2430
        %v2514 = vadd.f32 %v1692, %v2432
        %v2515 = vadd.f32 %v1693, %v2434
        %v2516 = vadd.f32 %v1694, %v2438
        %v2517 = vadd.f32 %v1695, %v2440
        %v2518 = vmax.f32 %v2444, 0.0
        %v2519 = vmax.f32 %v2445, 0.0
        %v2520 = vmax.f32 %v2446, 0.0
        %v2521 = vmax.f32 %v2447, 0.0
        %v2522 = vmax.f32 %v2448, 0.0
        %v2523 = vmax.f32 %v2449, 0.0
        %v2524 = vmax.f32 %v2450, 0.0
        %v2525 = vmax.f32 %v2451, 0.0
        %v2526 = vmax.f32 %v2452, 0.0
        %v2527 = vmax.f32 %v2453, 0.0
        %v2528 = vmax.f32 %v2454, 0.0
        %v2529 = vmax.f32 %v2455, 0.0
        %v2530 = vmax.f32 %v2456, 0.0
        %v2531 = vmax.f32 %v2457, 0.0
        %v2532 = vmax.f32 %v2458, 0.0
        %v2533 = vmax.f32 %v2459, 0.0
        %v2534 = vmax.f32 %v2460, 0.0
        %v2535 = vmax.f32 %v2461, 0.0
        %v2536 = vmax.f32 %v2462, 0.0
        %v2537 = vmax.f32 %v2463, 0.0
        %v2538 = vmax.f32 %v2464, 0.0
        %v2539 = vmax.f32 %v2465, 0.0
        %v2540 = vmax.f32 %v2466, 0.0
        %v2541 = vmax.f32 %v2467, 0.0
        %v2542 = vmax.f32 %v2468, 0.0
        %v2543 = vmax.f32 %v2469, 0.0
        %v2544 = vmax.f32 %v2470, 0.0
        %v2545 = vmax.f32 %v2471, 0.0
        %v2546 = vmax.f32 %v2472, 0.0
        %v2547 = vmax.f32 %v2473, 0.0
        %v2548 = vmax.f32 %v2474, 0.0
        %v2549 = vmax.f32 %v2475, 0.0
        %v2550 = vmax.f32 %v2476, 0.0
        %v2551 = vmax.f32 %v2477, 0.0
        %v2552 = vmax.f32 %v2478, 0.0
        %v2553 = vmax.f32 %v2479, 0.0
        %v2554 = vmax.f32 %v2480, 0.0
        %v2555 = vmax.f32 %v2481, 0.0
        %v2556 = vmax.f32 %v2482, 0.0
        %v2557 = vmax.f32 %v2483, 0.0
        %v2558 = vmax.f32 %v2484, 0.0
        %v2559 = vmax.f32 %v2485, 0.0
        %v2560 = vmax.f32 %v2486, 0.0
        %v2561 = vmax.f32 %v2487, 0.0
        %v2562 = vmax.f32 %v2488, 0.0
        %v2563 = vmax.f32 %v2489, 0.0
        %v2564 = vmax.f32 %v2490, 0.0
        %v2565 = vmax.f32 %v2491, 0.0
        %v2566 = vmax.f32 %v2492, 0.0
        %v2567 = vmax.f32 %v2493, 0.0
        %v2568 = vmax.f32 %v2494, 0.0
        %v2569 = vmax.f32 %v2495, 0.0
        %v2570 = vmax.f32 %v2496, 0.0
        %v2571 = vmax.f32 %v2497, 0.0
        %v2572 = vmax.f32 %v2498, 0.0
        %v2573 = vmax.f32 %v2499, 0.0
        %v2574 = vmax.f32 %v2500, 0.0
        %v2575 = vmax.f32 %v2501, 0.0
        %v2576 = vmax.f32 %v2502, 0.0
        %v2577 = vmax.f32 %v2503, 0.0
        %v2578 = vmax.f32 %v2504, 0.0
        %v2579 = vmax.f32 %v2505, 0.0
        %v2580 = vmax.f32 %v2506, 0.0
        %v2581 = vmax.f32 %v2507, 0.0
        %v2582 = vmax.f32 %v2508, 0.0
        %v2583 = vmax.f32 %v2509, 0.0
        %v2584 = vmax.f32 %v2510, 0.0
        %v2585 = vmax.f32 %v2511, 0.0
        %v2586 = vmax.f32 %v2512, 0.0
        %v2587 = vmax.f32 %v2513, 0.0
        %v2588 = vmax.f32 %v2514, 0.0
        %v2589 = vmax.f32 %v2515, 0.0
        %v2590 = vmax.f32 %v2516, 0.0
        %v2591 = vmax.f32 %v2517, 0.0
        %v2592 = vadd.f32 %v2518, %v2520
        %v2593 = vadd.f32 %v2592, %v2522
        %v2594 = vadd.f32 %v2593, %v2524
        %v2595 = vadd.f32 %v2594, %v2526
        %v2596 = vadd.f32 %v2595, %v2528
        %v2597 = vadd.f32 %v2596, %v2530
        %v2598 = vadd.f32 %v2597, %v2532
        %v2599 = vadd.f32 %v2598, %v2534
        %v2600 = vadd.f32 %v2599, %v2536
        %v2601 = vadd.f32 %v2600, %v2538
        %v2602 = vadd.f32 %v2601, %v2540
        %v2603 = vadd.f32 %v2602, %v2542
        %v2604 = vadd.f32 %v2603, %v2544
        %v2605 = vadd.f32 %v2604, %v2546
        %v2606 = vadd.f32 %v2605, %v2548
        %v2607 = vadd.f32 %v2606, %v2550
        %v2608 = vadd.f32 %v2607, %v2552
        %v2609 = vadd.f32 %v2608, %v2554
        %v2610 = vadd.f32 %v2609, %v2556
        %v2611 = vadd.f32 %v2610, %v2558
        %v2612 = vadd.f32 %v2611, %v2560
        %v2613 = vadd.f32 %v2612, %v2562
        %v2614 = vadd.f32 %v2613, %v2564
        %v2615 = vadd.f32 %v2614, %v2566
        %v2616 = vadd.f32 %v2615, %v2568
        %v2617 = vadd.f32 %v2616, %v2570
        %v2618 = vadd.f32 %v2617, %v2572
        %v2619 = vadd.f32 %v2618, %v2574
        %v2620 = vadd.f32 %v2619, %v2576
        %v2621 = vadd.f32 %v2620, %v2578
        %v2622 = vadd.f32 %v2621, %v2580
        %v2623 = vadd.f32 %v2622, %v2582
        %v2624 = vadd.f32 %v2623, %v2584
        %v2625 = vadd.f32 %v2624, %v2586
        %v2626 = vadd.f32 %v2625, %v2588
        %v2627 = vsel %vm534, %v2590, 0.0
        %v2628 = vadd.f32 %v2626, %v2627
        %v2629 = vrot.slane %v2628, 4
        %v2630 = vadd.f32 %v2628, %v2629
        %v2631 = vrot.slane %v2630, 2
        %v2632 = vadd.f32 %v2630, %v2631
        %v2633 = vrot.slane %v2632, 1
        %v2634 = vadd.f32 %v2632, %v2633
        %v2635 = vsel %vm543, %v2519, 0.0
        %v2636 = vsel %vm543, %v2521, 0.0
        %v2637 = vadd.f32 %v2635, %v2636
        %v2638 = vsel %vm543, %v2523, 0.0
        %v2639 = vadd.f32 %v2637, %v2638
        %v2640 = vsel %vm543, %v2525, 0.0
        %v2641 = vadd.f32 %v2639, %v2640
        %v2642 = vsel %vm543, %v2527, 0.0
        %v2643 = vadd.f32 %v2641, %v2642
        %v2644 = vsel %vm543, %v2529, 0.0
        %v2645 = vadd.f32 %v2643, %v2644
        %v2646 = vsel %vm543, %v2531, 0.0
        %v2647 = vadd.f32 %v2645, %v2646
        %v2648 = vsel %vm543, %v2533, 0.0
        %v2649 = vadd.f32 %v2647, %v2648
        %v2650 = vsel %vm543, %v2535, 0.0
        %v2651 = vadd.f32 %v2649, %v2650
        %v2652 = vsel %vm543, %v2537, 0.0
        %v2653 = vadd.f32 %v2651, %v2652
        %v2654 = vsel %vm543, %v2539, 0.0
        %v2655 = vadd.f32 %v2653, %v2654
        %v2656 = vsel %vm543, %v2541, 0.0
        %v2657 = vadd.f32 %v2655, %v2656
        %v2658 = vsel %vm543, %v2543, 0.0
        %v2659 = vadd.f32 %v2657, %v2658
        %v2660 = vsel %vm543, %v2545, 0.0
        %v2661 = vadd.f32 %v2659, %v2660
        %v2662 = vsel %vm543, %v2547, 0.0
        %v2663 = vadd.f32 %v2661, %v2662
        %v2664 = vsel %vm543, %v2549, 0.0
        %v2665 = vadd.f32 %v2663, %v2664
        %v2666 = vsel %vm543, %v2551, 0.0
        %v2667 = vadd.f32 %v2665, %v2666
        %v2668 = vsel %vm543, %v2553, 0.0
        %v2669 = vadd.f32 %v2667, %v2668
        %v2670 = vsel %vm543, %v2555, 0.0
        %v2671 = vadd.f32 %v2669, %v2670
        %v2672 = vsel %vm543, %v2557, 0.0
        %v2673 = vadd.f32 %v2671, %v2672
        %v2674 = vsel %vm543, %v2559, 0.0
        %v2675 = vadd.f32 %v2673, %v2674
        %v2676 = vsel %vm543, %v2561, 0.0
        %v2677 = vadd.f32 %v2675, %v2676
        %v2678 = vsel %vm543, %v2563, 0.0
        %v2679 = vadd.f32 %v2677, %v2678
        %v2680 = vsel %vm543, %v2565, 0.0
        %v2681 = vadd.f32 %v2679, %v2680
        %v2682 = vsel %vm543, %v2567, 0.0
        %v2683 = vadd.f32 %v2681, %v2682
        %v2684 = vsel %vm543, %v2569, 0.0
        %v2685 = vadd.f32 %v2683, %v2684
        %v2686 = vsel %vm543, %v2571, 0.0
        %v2687 = vadd.f32 %v2685, %v2686
        %v2688 = vsel %vm543, %v2573, 0.0
        %v2689 = vadd.f32 %v2687, %v2688
        %v2690 = vsel %vm543, %v2575, 0.0
        %v2691 = vadd.f32 %v2689, %v2690
        %v2692 = vsel %vm543, %v2577, 0.0
        %v2693 = vadd.f32 %v2691, %v2692
        %v2694 = vsel %vm543, %v2579, 0.0
        %v2695 = vadd.f32 %v2693, %v2694
        %v2696 = vsel %vm543, %v2581, 0.0
        %v2697 = vadd.f32 %v2695, %v2696
        %v2698 = vsel %vm543, %v2583, 0.0
        %v2699 = vadd.f32 %v2697, %v2698
        %v2700 = vsel %vm543, %v2585, 0.0
        %v2701 = vadd.f32 %v2699, %v2700
        %v2702 = vsel %vm543, %v2587, 0.0
        %v2703 = vadd.f32 %v2701, %v2702
        %v2704 = vsel %vm543, %v2589, 0.0
        %v2705 = vadd.f32 %v2703, %v2704
        %v2706 = vsel %vm615, %v2591, 0.0
        %v2707 = vadd.f32 %v2705, %v2706
        %v2708 = vrot.slane %v2707, 4
        %v2709 = vadd.f32 %v2707, %v2708
        %v2710 = vrot.slane %v2709, 2
        %v2711 = vadd.f32 %v2709, %v2710
        %v2712 = vrot.slane %v2711, 1
        %v2713 = vadd.f32 %v2711, %v2712
        %v2714 = vmul.f32 %v2634, 0.0034602077
        %v2715 = vmul.f32 %v2713, 0.0034602077
        %v2718 = vcombine.low %v2714, %v2715
        %v2720 = vunpack.c.l.s4 1966171168
        %v2721 = vunpack.c.0.s8 %v2720
        %v2722 = vlaneseq
        %v2723 = vshrl.u32 %v2722, 7
        %v2724 = vsub.s32 %v2721, %v2723
        %v2725 = vrot.slane %v2718, %v2724
        %v2727 = vunpack.c.l.s4 1966171168
        %v2728 = vunpack.c.0.s8 %v2727
        %v2729 = vlaneseq
        %v2730 = vshrl.u32 %v2729, 7
        %v2731 = vsub.s32 %v2728, %v2730
        %v2732 = vrot.slane %v2725, %v2731
        %v2734 = vlaneseq
        %vm2735 = vcmp.ge.s32.totalorder %v2734, 0
        %vm2736 = vcmp.lt.s32.totalorder %v2734, 138
        %vm2737 = vmand %vm2735, %vm2736
        %2738 = vst.msk [vmem:[#allocation2] ss:$2 sm:$0x3] %vm2737, %v2732
        %s2739 = scalar_lea.vmem %s375, 296
        %v2740 = vld [vmem:[%s2739] sm:$0xff]
        %v2741 = vld [vmem:[%s2739 + $0x8] sm:$0xff]
        %v2742 = vld [vmem:[%s2739 + $0x10] sm:$0xff]
        %v2743 = vld [vmem:[%s2739 + $0x18] sm:$0xff]
        %v2744 = vld [vmem:[%s2739 + $0x20] sm:$0xff]
        %v2745 = vld [vmem:[%s2739 + $0x28] sm:$0xff]
        %v2746 = vld [vmem:[%s2739 + $0x30] sm:$0xff]
        %v2747 = vld [vmem:[%s2739 + $0x38] sm:$0xff]
        %v2748 = vld [vmem:[%s2739 + $0x40] sm:$0xff]
        %v2749 = vld [vmem:[%s2739 + $0x48] sm:$0xff]
        %v2750 = vld [vmem:[%s2739 + $0x50] sm:$0xff]
        %v2751 = vld [vmem:[%s2739 + $0x58] sm:$0xff]
        %v2752 = vld [vmem:[%s2739 + $0x60] sm:$0xff]
        %v2753 = vld [vmem:[%s2739 + $0x68] sm:$0xff]
        %v2754 = vld [vmem:[%s2739 + $0x70] sm:$0xff]
        %v2755 = vld [vmem:[%s2739 + $0x78] sm:$0xff]
        %v2756 = vld [vmem:[%s2739 + $0x80] sm:$0xff]
        %v2757 = vld [vmem:[%s2739 + $0x88] sm:$0xff]
        %v2758 = vld [vmem:[%s2739 + $0x90] sm:$0xff]
        %v2759 = vld [vmem:[%s2739 + $0x98] sm:$0xff]
        %v2760 = vld [vmem:[%s2739 + $0xa0] sm:$0xff]
        %v2761 = vld [vmem:[%s2739 + $0xa8] sm:$0xff]
        %v2762 = vld [vmem:[%s2739 + $0xb0] sm:$0xff]
        %v2763 = vld [vmem:[%s2739 + $0xb8] sm:$0xff]
        %v2764 = vld [vmem:[%s2739 + $0xc0] sm:$0xff]
        %v2765 = vld [vmem:[%s2739 + $0xc8] sm:$0xff]
        %v2766 = vld [vmem:[%s2739 + $0xd0] sm:$0xff]
        %v2767 = vld [vmem:[%s2739 + $0xd8] sm:$0xff]
        %v2768 = vld [vmem:[%s2739 + $0xe0] sm:$0xff]
        %v2769 = vld [vmem:[%s2739 + $0xe8] sm:$0xff]
        %v2770 = vld [vmem:[%s2739 + $0xf0] sm:$0xff]
        %v2771 = vld [vmem:[%s2739 + $0xf8] sm:$0xff]
        %v2772 = vld [vmem:[%s2739 + $0x100] sm:$0xff]
        %v2773 = vld [vmem:[%s2739 + $0x108] sm:$0xff]
        %v2774 = vld [vmem:[%s2739 + $0x110] sm:$0xff]
        %v2775 = vld [vmem:[%s2739 + $0x118] sm:$0xff]
        %v2776 = vld [vmem:[%s2739 + $0x120] sm:$0x11]
        %v2777 = vunpack.c.l.bf16 %v2740
        %v2778 = vunpack.c.h.bf16 %v2740
        %v2779 = vunpack.c.l.bf16 %v2741
        %v2780 = vunpack.c.h.bf16 %v2741
        %v2781 = vunpack.c.l.bf16 %v2742
        %v2782 = vunpack.c.h.bf16 %v2742
        %v2783 = vunpack.c.l.bf16 %v2743
        %v2784 = vunpack.c.h.bf16 %v2743
        %v2785 = vunpack.c.l.bf16 %v2744
        %v2786 = vunpack.c.h.bf16 %v2744
        %v2787 = vunpack.c.l.bf16 %v2745
        %v2788 = vunpack.c.h.bf16 %v2745
        %v2789 = vunpack.c.l.bf16 %v2746
        %v2790 = vunpack.c.h.bf16 %v2746
        %v2791 = vunpack.c.l.bf16 %v2747
        %v2792 = vunpack.c.h.bf16 %v2747
        %v2793 = vunpack.c.l.bf16 %v2748
        %v2794 = vunpack.c.h.bf16 %v2748
        %v2795 = vunpack.c.l.bf16 %v2749
        %v2796 = vunpack.c.h.bf16 %v2749
        %v2797 = vunpack.c.l.bf16 %v2750
        %v2798 = vunpack.c.h.bf16 %v2750
        %v2799 = vunpack.c.l.bf16 %v2751
        %v2800 = vunpack.c.h.bf16 %v2751
        %v2801 = vunpack.c.l.bf16 %v2752
        %v2802 = vunpack.c.h.bf16 %v2752
        %v2803 = vunpack.c.l.bf16 %v2753
        %v2804 = vunpack.c.h.bf16 %v2753
        %v2805 = vunpack.c.l.bf16 %v2754
        %v2806 = vunpack.c.h.bf16 %v2754
        %v2807 = vunpack.c.l.bf16 %v2755
        %v2808 = vunpack.c.h.bf16 %v2755
        %v2809 = vunpack.c.l.bf16 %v2756
        %v2810 = vunpack.c.h.bf16 %v2756
        %v2811 = vunpack.c.l.bf16 %v2757
        %v2812 = vunpack.c.h.bf16 %v2757
        %v2813 = vunpack.c.l.bf16 %v2758
        %v2814 = vunpack.c.h.bf16 %v2758
        %v2815 = vunpack.c.l.bf16 %v2759
        %v2816 = vunpack.c.h.bf16 %v2759
        %v2817 = vunpack.c.l.bf16 %v2760
        %v2818 = vunpack.c.h.bf16 %v2760
        %v2819 = vunpack.c.l.bf16 %v2761
        %v2820 = vunpack.c.h.bf16 %v2761
        %v2821 = vunpack.c.l.bf16 %v2762
        %v2822 = vunpack.c.h.bf16 %v2762
        %v2823 = vunpack.c.l.bf16 %v2763
        %v2824 = vunpack.c.h.bf16 %v2763
        %v2825 = vunpack.c.l.bf16 %v2764
        %v2826 = vunpack.c.h.bf16 %v2764
        %v2827 = vunpack.c.l.bf16 %v2765
        %v2828 = vunpack.c.h.bf16 %v2765
        %v2829 = vunpack.c.l.bf16 %v2766
        %v2830 = vunpack.c.h.bf16 %v2766
        %v2831 = vunpack.c.l.bf16 %v2767
        %v2832 = vunpack.c.h.bf16 %v2767
        %v2833 = vunpack.c.l.bf16 %v2768
        %v2834 = vunpack.c.h.bf16 %v2768
        %v2835 = vunpack.c.l.bf16 %v2769
        %v2836 = vunpack.c.h.bf16 %v2769
        %v2837 = vunpack.c.l.bf16 %v2770
        %v2838 = vunpack.c.h.bf16 %v2770
        %v2839 = vunpack.c.l.bf16 %v2771
        %v2840 = vunpack.c.h.bf16 %v2771
        %v2841 = vunpack.c.l.bf16 %v2772
        %v2842 = vunpack.c.h.bf16 %v2772
        %v2843 = vunpack.c.l.bf16 %v2773
        %v2844 = vunpack.c.h.bf16 %v2773
        %v2845 = vunpack.c.l.bf16 %v2774
        %v2846 = vunpack.c.h.bf16 %v2774
        %v2847 = vunpack.c.l.bf16 %v2775
        %v2848 = vunpack.c.h.bf16 %v2775
        %v2849 = vunpack.c.l.bf16 %v2776
        %v2850 = vunpack.c.h.bf16 %v2776
        %v2851 = vadd.f32 %v2777, %v2779
        %v2852 = vadd.f32 %v2851, %v2781
        %v2853 = vadd.f32 %v2852, %v2783
        %v2854 = vadd.f32 %v2853, %v2785
        %v2855 = vadd.f32 %v2854, %v2787
        %v2856 = vadd.f32 %v2855, %v2789
        %v2857 = vadd.f32 %v2856, %v2791
        %v2858 = vadd.f32 %v2857, %v2793
        %v2859 = vadd.f32 %v2858, %v2795
        %v2860 = vadd.f32 %v2859, %v2797
        %v2861 = vadd.f32 %v2860, %v2799
        %v2862 = vadd.f32 %v2861, %v2801
        %v2863 = vadd.f32 %v2862, %v2803
        %v2864 = vadd.f32 %v2863, %v2805
        %v2865 = vadd.f32 %v2864, %v2807
        %v2866 = vadd.f32 %v2865, %v2809
        %v2867 = vadd.f32 %v2866, %v2811
        %v2868 = vadd.f32 %v2867, %v2813
        %v2869 = vadd.f32 %v2868, %v2815
        %v2870 = vadd.f32 %v2869, %v2817
        %v2871 = vadd.f32 %v2870, %v2819
        %v2872 = vadd.f32 %v2871, %v2821
        %v2873 = vadd.f32 %v2872, %v2823
        %v2874 = vadd.f32 %v2873, %v2825
        %v2875 = vadd.f32 %v2874, %v2827
        %v2876 = vadd.f32 %v2875, %v2829
        %v2877 = vadd.f32 %v2876, %v2831
        %v2878 = vadd.f32 %v2877, %v2833
        %v2879 = vadd.f32 %v2878, %v2835
        %v2880 = vadd.f32 %v2879, %v2837
        %v2881 = vadd.f32 %v2880, %v2839
        %v2882 = vadd.f32 %v2881, %v2841
        %v2883 = vadd.f32 %v2882, %v2843
        %v2884 = vadd.f32 %v2883, %v2845
        %v2885 = vadd.f32 %v2884, %v2847
        %v2886 = vsel %vm534, %v2849, 0.0
        %v2887 = vadd.f32 %v2885, %v2886
        %v2888 = vrot.slane %v2887, 4
        %v2889 = vadd.f32 %v2887, %v2888
        %v2890 = vrot.slane %v2889, 2
        %v2891 = vadd.f32 %v2889, %v2890
        %v2892 = vrot.slane %v2891, 1
        %v2893 = vadd.f32 %v2891, %v2892
        %v2894 = vsel %vm543, %v2778, 0.0
        %v2895 = vsel %vm543, %v2780, 0.0
        %v2896 = vadd.f32 %v2894, %v2895
        %v2897 = vsel %vm543, %v2782, 0.0
        %v2898 = vadd.f32 %v2896, %v2897
        %v2899 = vsel %vm543, %v2784, 0.0
        %v2900 = vadd.f32 %v2898, %v2899
        %v2901 = vsel %vm543, %v2786, 0.0
        %v2902 = vadd.f32 %v2900, %v2901
        %v2903 = vsel %vm543, %v2788, 0.0
        %v2904 = vadd.f32 %v2902, %v2903
        %v2905 = vsel %vm543, %v2790, 0.0
        %v2906 = vadd.f32 %v2904, %v2905
        %v2907 = vsel %vm543, %v2792, 0.0
        %v2908 = vadd.f32 %v2906, %v2907
        %v2909 = vsel %vm543, %v2794, 0.0
        %v2910 = vadd.f32 %v2908, %v2909
        %v2911 = vsel %vm543, %v2796, 0.0
        %v2912 = vadd.f32 %v2910, %v2911
        %v2913 = vsel %vm543, %v2798, 0.0
        %v2914 = vadd.f32 %v2912, %v2913
        %v2915 = vsel %vm543, %v2800, 0.0
        %v2916 = vadd.f32 %v2914, %v2915
        %v2917 = vsel %vm543, %v2802, 0.0
        %v2918 = vadd.f32 %v2916, %v2917
        %v2919 = vsel %vm543, %v2804, 0.0
        %v2920 = vadd.f32 %v2918, %v2919
        %v2921 = vsel %vm543, %v2806, 0.0
        %v2922 = vadd.f32 %v2920, %v2921
        %v2923 = vsel %vm543, %v2808, 0.0
        %v2924 = vadd.f32 %v2922, %v2923
        %v2925 = vsel %vm543, %v2810, 0.0
        %v2926 = vadd.f32 %v2924, %v2925
        %v2927 = vsel %vm543, %v2812, 0.0
        %v2928 = vadd.f32 %v2926, %v2927
        %v2929 = vsel %vm543, %v2814, 0.0
        %v2930 = vadd.f32 %v2928, %v2929
        %v2931 = vsel %vm543, %v2816, 0.0
        %v2932 = vadd.f32 %v2930, %v2931
        %v2933 = vsel %vm543, %v2818, 0.0
        %v2934 = vadd.f32 %v2932, %v2933
        %v2935 = vsel %vm543, %v2820, 0.0
        %v2936 = vadd.f32 %v2934, %v2935
        %v2937 = vsel %vm543, %v2822, 0.0
        %v2938 = vadd.f32 %v2936, %v2937
        %v2939 = vsel %vm543, %v2824, 0.0
        %v2940 = vadd.f32 %v2938, %v2939
        %v2941 = vsel %vm543, %v2826, 0.0
        %v2942 = vadd.f32 %v2940, %v2941
        %v2943 = vsel %vm543, %v2828, 0.0
        %v2944 = vadd.f32 %v2942, %v2943
        %v2945 = vsel %vm543, %v2830, 0.0
        %v2946 = vadd.f32 %v2944, %v2945
        %v2947 = vsel %vm543, %v2832, 0.0
        %v2948 = vadd.f32 %v2946, %v2947
        %v2949 = vsel %vm543, %v2834, 0.0
        %v2950 = vadd.f32 %v2948, %v2949
        %v2951 = vsel %vm543, %v2836, 0.0
        %v2952 = vadd.f32 %v2950, %v2951
        %v2953 = vsel %vm543, %v2838, 0.0
        %v2954 = vadd.f32 %v2952, %v2953
        %v2955 = vsel %vm543, %v2840, 0.0
        %v2956 = vadd.f32 %v2954, %v2955
        %v2957 = vsel %vm543, %v2842, 0.0
        %v2958 = vadd.f32 %v2956, %v2957
        %v2959 = vsel %vm543, %v2844, 0.0
        %v2960 = vadd.f32 %v2958, %v2959
        %v2961 = vsel %vm543, %v2846, 0.0
        %v2962 = vadd.f32 %v2960, %v2961
        %v2963 = vsel %vm543, %v2848, 0.0
        %v2964 = vadd.f32 %v2962, %v2963
        %v2965 = vsel %vm615, %v2850, 0.0
        %v2966 = vadd.f32 %v2964, %v2965
        %v2967 = vrot.slane %v2966, 4
        %v2968 = vadd.f32 %v2966, %v2967
        %v2969 = vrot.slane %v2968, 2
        %v2970 = vadd.f32 %v2968, %v2969
        %v2971 = vrot.slane %v2970, 1
        %v2972 = vadd.f32 %v2970, %v2971
        %v2973 = vmul.f32 %v2893, 0.0034602077
        %v2974 = vmul.f32 %v2972, 0.0034602077
        %v2975 = vld [vmem:[%s1] sm:$0xff]
        %v2976 = vld [vmem:[%s1 + $0x8] sm:$0xff]
        %v2977 = vld [vmem:[%s1 + $0x10] sm:$0xff]
        %v2978 = vld [vmem:[%s1 + $0x18] sm:$0xff]
        %v2979 = vld [vmem:[%s1 + $0x20] sm:$0xff]
        %v2980 = vld [vmem:[%s1 + $0x28] sm:$0xff]
        %v2981 = vld [vmem:[%s1 + $0x30] sm:$0xff]
        %v2982 = vld [vmem:[%s1 + $0x38] sm:$0xff]
        %v2983 = vld [vmem:[%s1 + $0x40] sm:$0xff]
        %v2984 = vld [vmem:[%s1 + $0x48] sm:$0xff]
        %v2985 = vld [vmem:[%s1 + $0x50] sm:$0xff]
        %v2986 = vld [vmem:[%s1 + $0x58] sm:$0xff]
        %v2987 = vld [vmem:[%s1 + $0x60] sm:$0xff]
        %v2988 = vld [vmem:[%s1 + $0x68] sm:$0xff]
        %v2989 = vld [vmem:[%s1 + $0x70] sm:$0xff]
        %v2990 = vld [vmem:[%s1 + $0x78] sm:$0xff]
        %v2991 = vld [vmem:[%s1 + $0x80] sm:$0xff]
        %v2992 = vld [vmem:[%s1 + $0x88] sm:$0x3]
        %v2994 = vsel %vm543, %v2974, 0
        %v2997 = vsel %vm647, %v2992, 0
        %2999 = vmatprep.subr.mxu0 0.0
        %3000 = vmatpush1.msra.mxu0 %v2975
        %3001 = vmatprep.subr.mxu0 0.0
        %3002 = vmatpush1.msra.mxu0 %v2976
        %3003 = vmatprep.subr.mxu0 0.0
        %3004 = vmatpush1.msra.mxu0 %v2977
        %3005 = vmatprep.subr.mxu0 0.0
        %3006 = vmatpush1.msra.mxu0 %v2978
        %3007 = vmatprep.subr.mxu0 0.0
        %3008 = vmatpush1.msra.mxu0 %v2979
        %3009 = vmatprep.subr.mxu0 0.0
        %3010 = vmatpush1.msra.mxu0 %v2980
        %3011 = vmatprep.subr.mxu0 0.0
        %3012 = vmatpush1.msra.mxu0 %v2981
        %3013 = vmatprep.subr.mxu0 0.0
        %3014 = vmatpush1.msra.mxu0 %v2982
        %3015 = vmatprep.subr.mxu0 0.0
        %3016 = vmatpush1.msra.mxu0 %v2983
        %3017 = vmatprep.subr.mxu0 0.0
        %3018 = vmatpush1.msra.mxu0 %v2984
        %3019 = vmatprep.subr.mxu0 0.0
        %3020 = vmatpush1.msra.mxu0 %v2985
        %3021 = vmatprep.subr.mxu0 0.0
        %3022 = vmatpush1.msra.mxu0 %v2986
        %3023 = vmatprep.subr.mxu0 0.0
        %3024 = vmatpush1.msra.mxu0 %v2987
        %3025 = vmatprep.subr.mxu0 0.0
        %3026 = vmatpush1.msra.mxu0 %v2988
        %3027 = vmatprep.subr.mxu0 0.0
        %3028 = vmatpush1.msra.mxu0 %v2989
        %3029 = vmatprep.subr.mxu0 0.0
        %3030 = vmatpush1.msra.mxu0 %v2990
        %3031 = vmatprep.subr.mxu0 0.0
        %3032 = vmatpush1.msra.mxu0 %v2991
        %3033 = vmatprep.subr.mxu0 0.0
        %3034 = vmatpush1.msra.mxu0 %v2997
        %3035 = vmatprep.subr.mxu0 0.0
        %3036 = vmatpush1.msra.mxu0 0.0
        %3037 = vmatprep.subr.mxu0 0.0
        %3038 = vmatpush1.msra.mxu0 0.0
        %3039 = vmatprep.subr.mxu0 0.0
        %3040 = vmatpush1.msra.mxu0 0.0
        %3041 = vmatprep.subr.mxu0 0.0
        %3042 = vmatpush1.msra.mxu0 0.0
        %3043 = vmatprep.subr.mxu0 0.0
        %3044 = vmatpush1.msra.mxu0 0.0
        %3045 = vmatprep.subr.mxu0 0.0
        %3046 = vmatpush1.msra.mxu0 0.0
        %3047 = vmatprep.subr.mxu0 0.0
        %3048 = vmatpush1.msra.mxu0 0.0
        %3049 = vmatprep.subr.mxu0 0.0
        %3050 = vmatpush1.msra.mxu0 0.0
        %3051 = vmatprep.subr.mxu0 0.0
        %3052 = vmatpush1.msra.mxu0 0.0
        %3053 = vmatprep.subr.mxu0 0.0
        %3054 = vmatpush1.msra.mxu0 0.0
        %3055 = vmatprep.subr.mxu0 0.0
        %3056 = vmatpush1.msra.mxu0 0.0
        %3057 = vmatprep.subr.mxu0 0.0
        %3058 = vmatpush1.msra.mxu0 0.0
        %3059 = vmatprep.subr.mxu0 0.0
        %3060 = vmatpush1.msra.mxu0 0.0
        %3061 = vmatprep.subr.mxu0 0.0
        %3062 = vmatpush1.msra.mxu0 0.0
        %3063 = vmatprep.mubr.f32.mxu0 %v2994
        %3064 = vmatmul.mubr.f32.gmra.mrb[0].mxu0 %v2973
        %v3065 = vpop.f32.mrb[0].mxu0
        %v3066 = vadd.f32 %v378, %v3065
        %v3067 = vpop.f32.mrb[0].mxu0
        %3068 = vdwg.mxu0
        %v3069 = vmax.f32 %v3066, 0.0
        %v3070 = vld [vmem:[%s2] sm:$0xff]
        %v3071 = vld [vmem:[%s2 + $0x8] sm:$0xff]
        %v3072 = vld [vmem:[%s2 + $0x10] sm:$0xff]
        %v3073 = vld [vmem:[%s2 + $0x18] sm:$0xff]
        %v3074 = vld [vmem:[%s2 + $0x20] sm:$0x1]
        %v3075 = vld [vmem:[%s2 + $0x28] sm:$0x1]
        %v3077 = vsel %vm739, %v3069, 0
        %v3080 = vsel %vm534, %v3074, 0
        %v3083 = vsel %vm534, %v3075, 0
        %3085 = vmatprep.subr.mxu0 %v3071
        %3086 = vmatpush1.msra.mxu0 %v3070
        %3087 = vmatprep.subr.mxu0 %v3073
        %3088 = vmatpush1.msra.mxu0 %v3072
        %3089 = vmatprep.subr.mxu0 %v3083
        %3090 = vmatpush1.msra.mxu0 %v3080
        %3091 = vmatprep.subr.mxu0 0.0
        %3092 = vmatpush1.msra.mxu0 0.0
        %3093 = vmatprep.subr.mxu0 0.0
        %3094 = vmatpush1.msra.mxu0 0.0
        %3095 = vmatprep.subr.mxu0 0.0
        %3096 = vmatpush1.msra.mxu0 0.0
        %3097 = vmatprep.subr.mxu0 0.0
        %3098 = vmatpush1.msra.mxu0 0.0
        %3099 = vmatprep.subr.mxu0 0.0
        %3100 = vmatpush1.msra.mxu0 0.0
        %3101 = vmatprep.subr.mxu0 0.0
        %3102 = vmatpush1.msra.mxu0 0.0
        %3103 = vmatprep.subr.mxu0 0.0
        %3104 = vmatpush1.msra.mxu0 0.0
        %3105 = vmatprep.subr.mxu0 0.0
        %3106 = vmatpush1.msra.mxu0 0.0
        %3107 = vmatprep.subr.mxu0 0.0
        %3108 = vmatpush1.msra.mxu0 0.0
        %3109 = vmatprep.subr.mxu0 0.0
        %3110 = vmatpush1.msra.mxu0 0.0
        %3111 = vmatprep.subr.mxu0 0.0
        %3112 = vmatpush1.msra.mxu0 0.0
        %3113 = vmatprep.subr.mxu0 0.0
        %3114 = vmatpush1.msra.mxu0 0.0
        %3115 = vmatprep.subr.mxu0 0.0
        %3116 = vmatpush1.msra.mxu0 0.0
        %3117 = vmatprep.subr.mxu0 0.0
        %3118 = vmatpush1.msra.mxu0 0.0
        %3119 = vmatprep.subr.mxu0 0.0
        %3120 = vmatpush1.msra.mxu0 0.0
        %3121 = vmatprep.subr.mxu0 0.0
        %3122 = vmatpush1.msra.mxu0 0.0
        %3123 = vmatprep.subr.mxu0 0.0
        %3124 = vmatpush1.msra.mxu0 0.0
        %3125 = vmatprep.subr.mxu0 0.0
        %3126 = vmatpush1.msra.mxu0 0.0
        %3127 = vmatprep.subr.mxu0 0.0
        %3128 = vmatpush1.msra.mxu0 0.0
        %3129 = vmatprep.subr.mxu0 0.0
        %3130 = vmatpush1.msra.mxu0 0.0
        %3131 = vmatprep.subr.mxu0 0.0
        %3132 = vmatpush1.msra.mxu0 0.0
        %3133 = vmatprep.subr.mxu0 0.0
        %3134 = vmatpush1.msra.mxu0 0.0
        %3135 = vmatprep.subr.mxu0 0.0
        %3136 = vmatpush1.msra.mxu0 0.0
        %3137 = vmatprep.subr.mxu0 0.0
        %3138 = vmatpush1.msra.mxu0 0.0
        %3139 = vmatprep.subr.mxu0 0.0
        %3140 = vmatpush1.msra.mxu0 0.0
        %3141 = vmatprep.subr.mxu0 0.0
        %3142 = vmatpush1.msra.mxu0 0.0
        %3143 = vmatprep.subr.mxu0 0.0
        %3144 = vmatpush1.msra.mxu0 0.0
        %3145 = vmatprep.subr.mxu0 0.0
        %3146 = vmatpush1.msra.mxu0 0.0
        %3147 = vmatprep.subr.mxu0 0.0
        %3148 = vmatpush1.msra.mxu0 0.0
        %3149 = vmatprep.mubr.f32.mxu0 0.0
        %3150 = vmatmul.mubr.f32.gmra.mrb[0].mxu0 %v3077
        %v3151 = vpop.f32.mrb[0].mxu0
        %v3152 = vadd.f32 %v732, %v3151
        %v3153 = vpop.f32.mrb[0].mxu0
        %v3154 = vadd.f32 %v736, %v3153
        %3155 = vdwg.mxu0
        %v3156 = vxor.u32 %v3152, 2147483648
        %v3157 = vxor.u32 %v3154, 2147483648
        %v3158 = vmul.f32 %v3156, 1.442695
        %v3159 = vpow.pop %v3158
        %v3160 = vmul.f32 %v3157, 1.442695
        %v3161 = vpow.pop %v3160
        %v3162 = vadd.f32 %v3159, 1.0
        %v3163 = vadd.f32 %v3161, 1.0
        %v3164 = vrcp.pop %v3162
        %v3165 = vmul.f32 1.0, %v3164
        %v3166 = vrcp.pop %v3163
        %v3167 = vmul.f32 1.0, %v3166
        %v3168 = vlaneseq
        %v3169 = vshrl.u32 %v3168, 7
        %v3170 = vsub.s32 0, %v3169
        %v3171 = vrot.slane %v3165, %v3170
        %v3172 = vlaneseq
        %v3173 = vshrl.u32 %v3172, 7
        %v3174 = vsub.s32 0, %v3173
        %v3175 = vrot.slane %v3167, %v3174
        %v3176 = vmul.f32 %v2777, %v3171
        %v3177 = vmul.f32 %v2778, %v3175
        %v3178 = vmul.f32 %v2779, %v3171
        %v3179 = vmul.f32 %v2780, %v3175
        %v3180 = vmul.f32 %v2781, %v3171
        %v3181 = vmul.f32 %v2782, %v3175
        %v3182 = vmul.f32 %v2783, %v3171
        %v3183 = vmul.f32 %v2784, %v3175
        %v3184 = vmul.f32 %v2785, %v3171
        %v3185 = vmul.f32 %v2786, %v3175
        %v3186 = vmul.f32 %v2787, %v3171
        %v3187 = vmul.f32 %v2788, %v3175
        %v3188 = vmul.f32 %v2789, %v3171
        %v3189 = vmul.f32 %v2790, %v3175
        %v3190 = vmul.f32 %v2791, %v3171
        %v3191 = vmul.f32 %v2792, %v3175
        %v3192 = vmul.f32 %v2793, %v3171
        %v3193 = vmul.f32 %v2794, %v3175
        %v3194 = vmul.f32 %v2795, %v3171
        %v3195 = vmul.f32 %v2796, %v3175
        %v3196 = vmul.f32 %v2797, %v3171
        %v3197 = vmul.f32 %v2798, %v3175
        %v3198 = vmul.f32 %v2799, %v3171
        %v3199 = vmul.f32 %v2800, %v3175
        %v3200 = vmul.f32 %v2801, %v3171
        %v3201 = vmul.f32 %v2802, %v3175
        %v3202 = vmul.f32 %v2803, %v3171
        %v3203 = vmul.f32 %v2804, %v3175
        %v3204 = vmul.f32 %v2805, %v3171
        %v3205 = vmul.f32 %v2806, %v3175
        %v3206 = vmul.f32 %v2807, %v3171
        %v3207 = vmul.f32 %v2808, %v3175
        %v3208 = vmul.f32 %v2809, %v3171
        %v3209 = vmul.f32 %v2810, %v3175
        %v3210 = vmul.f32 %v2811, %v3171
        %v3211 = vmul.f32 %v2812, %v3175
        %v3212 = vmul.f32 %v2813, %v3171
        %v3213 = vmul.f32 %v2814, %v3175
        %v3214 = vmul.f32 %v2815, %v3171
        %v3215 = vmul.f32 %v2816, %v3175
        %v3216 = vmul.f32 %v2817, %v3171
        %v3217 = vmul.f32 %v2818, %v3175
        %v3218 = vmul.f32 %v2819, %v3171
        %v3219 = vmul.f32 %v2820, %v3175
        %v3220 = vmul.f32 %v2821, %v3171
        %v3221 = vmul.f32 %v2822, %v3175
        %v3222 = vmul.f32 %v2823, %v3171
        %v3223 = vmul.f32 %v2824, %v3175
        %v3224 = vmul.f32 %v2825, %v3171
        %v3225 = vmul.f32 %v2826, %v3175
        %v3226 = vmul.f32 %v2827, %v3171
        %v3227 = vmul.f32 %v2828, %v3175
        %v3228 = vmul.f32 %v2829, %v3171
        %v3229 = vmul.f32 %v2830, %v3175
        %v3230 = vmul.f32 %v2831, %v3171
        %v3231 = vmul.f32 %v2832, %v3175
        %v3232 = vmul.f32 %v2833, %v3171
        %v3233 = vmul.f32 %v2834, %v3175
        %v3234 = vmul.f32 %v2835, %v3171
        %v3235 = vmul.f32 %v2836, %v3175
        %v3236 = vmul.f32 %v2837, %v3171
        %v3237 = vmul.f32 %v2838, %v3175
        %v3238 = vmul.f32 %v2839, %v3171
        %v3239 = vmul.f32 %v2840, %v3175
        %v3240 = vmul.f32 %v2841, %v3171
        %v3241 = vmul.f32 %v2842, %v3175
        %v3242 = vmul.f32 %v2843, %v3171
        %v3243 = vmul.f32 %v2844, %v3175
        %v3244 = vmul.f32 %v2845, %v3171
        %v3245 = vmul.f32 %v2846, %v3175
        %v3246 = vmul.f32 %v2847, %v3171
        %v3247 = vmul.f32 %v2848, %v3175
        %v3248 = vmul.f32 %v2849, %v3171
        %v3249 = vmul.f32 %v2850, %v3175
        %v3250 = vsel %vm543, %v3177, 0.0
        %v3251 = vadd.f32 %v3176, %v3250
        %3252 = vadd.xlane.f32.xlu0 %v3251
        %v3253 = vpop.xlane.xlu0 %3252
        %v3254 = vsel %vm543, %v3179, 0.0
        %v3255 = vadd.f32 %v3178, %v3254
        %3256 = vadd.xlane.f32.xlu0 %v3255
        %v3257 = vpop.xlane.xlu0 %3256
        %v3258 = vsel %vm543, %v3181, 0.0
        %v3259 = vadd.f32 %v3180, %v3258
        %3260 = vadd.xlane.f32.xlu0 %v3259
        %v3261 = vpop.xlane.xlu0 %3260
        %v3262 = vsel %vm543, %v3183, 0.0
        %v3263 = vadd.f32 %v3182, %v3262
        %3264 = vadd.xlane.f32.xlu0 %v3263
        %v3265 = vpop.xlane.xlu0 %3264
        %v3266 = vsel %vm543, %v3185, 0.0
        %v3267 = vadd.f32 %v3184, %v3266
        %3268 = vadd.xlane.f32.xlu0 %v3267
        %v3269 = vpop.xlane.xlu0 %3268
        %v3270 = vsel %vm543, %v3187, 0.0
        %v3271 = vadd.f32 %v3186, %v3270
        %3272 = vadd.xlane.f32.xlu0 %v3271
        %v3273 = vpop.xlane.xlu0 %3272
        %v3274 = vsel %vm543, %v3189, 0.0
        %v3275 = vadd.f32 %v3188, %v3274
        %3276 = vadd.xlane.f32.xlu0 %v3275
        %v3277 = vpop.xlane.xlu0 %3276
        %v3278 = vsel %vm543, %v3191, 0.0
        %v3279 = vadd.f32 %v3190, %v3278
        %3280 = vadd.xlane.f32.xlu0 %v3279
        %v3281 = vpop.xlane.xlu0 %3280
        %v3282 = vsel %vm543, %v3193, 0.0
        %v3283 = vadd.f32 %v3192, %v3282
        %3284 = vadd.xlane.f32.xlu0 %v3283
        %v3285 = vpop.xlane.xlu0 %3284
        %v3286 = vsel %vm543, %v3195, 0.0
        %v3287 = vadd.f32 %v3194, %v3286
        %3288 = vadd.xlane.f32.xlu0 %v3287
        %v3289 = vpop.xlane.xlu0 %3288
        %v3290 = vsel %vm543, %v3197, 0.0
        %v3291 = vadd.f32 %v3196, %v3290
        %3292 = vadd.xlane.f32.xlu0 %v3291
        %v3293 = vpop.xlane.xlu0 %3292
        %v3294 = vsel %vm543, %v3199, 0.0
        %v3295 = vadd.f32 %v3198, %v3294
        %3296 = vadd.xlane.f32.xlu0 %v3295
        %v3297 = vpop.xlane.xlu0 %3296
        %v3298 = vsel %vm543, %v3201, 0.0
        %v3299 = vadd.f32 %v3200, %v3298
        %3300 = vadd.xlane.f32.xlu0 %v3299
        %v3301 = vpop.xlane.xlu0 %3300
        %v3302 = vsel %vm543, %v3203, 0.0
        %v3303 = vadd.f32 %v3202, %v3302
        %3304 = vadd.xlane.f32.xlu0 %v3303
        %v3305 = vpop.xlane.xlu0 %3304
        %v3306 = vsel %vm543, %v3205, 0.0
        %v3307 = vadd.f32 %v3204, %v3306
        %3308 = vadd.xlane.f32.xlu0 %v3307
        %v3309 = vpop.xlane.xlu0 %3308
        %v3310 = vsel %vm543, %v3207, 0.0
        %v3311 = vadd.f32 %v3206, %v3310
        %3312 = vadd.xlane.f32.xlu0 %v3311
        %v3313 = vpop.xlane.xlu0 %3312
        %v3314 = vsel %vm543, %v3209, 0.0
        %v3315 = vadd.f32 %v3208, %v3314
        %3316 = vadd.xlane.f32.xlu0 %v3315
        %v3317 = vpop.xlane.xlu0 %3316
        %v3318 = vsel %vm543, %v3211, 0.0
        %v3319 = vadd.f32 %v3210, %v3318
        %3320 = vadd.xlane.f32.xlu0 %v3319
        %v3321 = vpop.xlane.xlu0 %3320
        %v3322 = vsel %vm543, %v3213, 0.0
        %v3323 = vadd.f32 %v3212, %v3322
        %3324 = vadd.xlane.f32.xlu0 %v3323
        %v3325 = vpop.xlane.xlu0 %3324
        %v3326 = vsel %vm543, %v3215, 0.0
        %v3327 = vadd.f32 %v3214, %v3326
        %3328 = vadd.xlane.f32.xlu0 %v3327
        %v3329 = vpop.xlane.xlu0 %3328
        %v3330 = vsel %vm543, %v3217, 0.0
        %v3331 = vadd.f32 %v3216, %v3330
        %3332 = vadd.xlane.f32.xlu0 %v3331
        %v3333 = vpop.xlane.xlu0 %3332
        %v3334 = vsel %vm543, %v3219, 0.0
        %v3335 = vadd.f32 %v3218, %v3334
        %3336 = vadd.xlane.f32.xlu0 %v3335
        %v3337 = vpop.xlane.xlu0 %3336
        %v3338 = vsel %vm543, %v3221, 0.0
        %v3339 = vadd.f32 %v3220, %v3338
        %3340 = vadd.xlane.f32.xlu0 %v3339
        %v3341 = vpop.xlane.xlu0 %3340
        %v3342 = vsel %vm543, %v3223, 0.0
        %v3343 = vadd.f32 %v3222, %v3342
        %3344 = vadd.xlane.f32.xlu0 %v3343
        %v3345 = vpop.xlane.xlu0 %3344
        %v3346 = vsel %vm543, %v3225, 0.0
        %v3347 = vadd.f32 %v3224, %v3346
        %3348 = vadd.xlane.f32.xlu0 %v3347
        %v3349 = vpop.xlane.xlu0 %3348
        %v3350 = vsel %vm543, %v3227, 0.0
        %v3351 = vadd.f32 %v3226, %v3350
        %3352 = vadd.xlane.f32.xlu0 %v3351
        %v3353 = vpop.xlane.xlu0 %3352
        %v3354 = vsel %vm543, %v3229, 0.0
        %v3355 = vadd.f32 %v3228, %v3354
        %3356 = vadd.xlane.f32.xlu0 %v3355
        %v3357 = vpop.xlane.xlu0 %3356
        %v3358 = vsel %vm543, %v3231, 0.0
        %v3359 = vadd.f32 %v3230, %v3358
        %3360 = vadd.xlane.f32.xlu0 %v3359
        %v3361 = vpop.xlane.xlu0 %3360
        %v3362 = vsel %vm543, %v3233, 0.0
        %v3363 = vadd.f32 %v3232, %v3362
        %3364 = vadd.xlane.f32.xlu0 %v3363
        %v3365 = vpop.xlane.xlu0 %3364
        %v3366 = vsel %vm543, %v3235, 0.0
        %v3367 = vadd.f32 %v3234, %v3366
        %3368 = vadd.xlane.f32.xlu0 %v3367
        %v3369 = vpop.xlane.xlu0 %3368
        %v3370 = vsel %vm543, %v3237, 0.0
        %v3371 = vadd.f32 %v3236, %v3370
        %3372 = vadd.xlane.f32.xlu0 %v3371
        %v3373 = vpop.xlane.xlu0 %3372
        %v3374 = vsel %vm543, %v3239, 0.0
        %v3375 = vadd.f32 %v3238, %v3374
        %3376 = vadd.xlane.f32.xlu0 %v3375
        %v3377 = vpop.xlane.xlu0 %3376
        %v3378 = vsel %vm543, %v3241, 0.0
        %v3379 = vadd.f32 %v3240, %v3378
        %3380 = vadd.xlane.f32.xlu0 %v3379
        %v3381 = vpop.xlane.xlu0 %3380
        %v3382 = vsel %vm543, %v3243, 0.0
        %v3383 = vadd.f32 %v3242, %v3382
        %3384 = vadd.xlane.f32.xlu0 %v3383
        %v3385 = vpop.xlane.xlu0 %3384
        %v3386 = vsel %vm543, %v3245, 0.0
        %v3387 = vadd.f32 %v3244, %v3386
        %3388 = vadd.xlane.f32.xlu0 %v3387
        %v3389 = vpop.xlane.xlu0 %3388
        %v3390 = vsel %vm543, %v3247, 0.0
        %v3391 = vadd.f32 %v3246, %v3390
        %3392 = vadd.xlane.f32.xlu0 %v3391
        %v3393 = vpop.xlane.xlu0 %3392
        %v3394 = vsel %vm534, %v3248, 0.0
        %v3395 = vsel %vm615, %v3249, 0.0
        %v3396 = vadd.f32 %v3394, %v3395
        %3397 = vadd.xlane.f32.xlu0 %v3396
        %v3398 = vpop.xlane.xlu0 %3397
        %v3399 = vmul.f32 %v3253, 0.007246377
        %v3400 = vmul.f32 %v3257, 0.007246377
        %v3401 = vmul.f32 %v3261, 0.007246377
        %v3402 = vmul.f32 %v3265, 0.007246377
        %v3403 = vmul.f32 %v3269, 0.007246377
        %v3404 = vmul.f32 %v3273, 0.007246377
        %v3405 = vmul.f32 %v3277, 0.007246377
        %v3406 = vmul.f32 %v3281, 0.007246377
        %v3407 = vmul.f32 %v3285, 0.007246377
        %v3408 = vmul.f32 %v3289, 0.007246377
        %v3409 = vmul.f32 %v3293, 0.007246377
        %v3410 = vmul.f32 %v3297, 0.007246377
        %v3411 = vmul.f32 %v3301, 0.007246377
        %v3412 = vmul.f32 %v3305, 0.007246377
        %v3413 = vmul.f32 %v3309, 0.007246377
        %v3414 = vmul.f32 %v3313, 0.007246377
        %v3415 = vmul.f32 %v3317, 0.007246377
        %v3416 = vmul.f32 %v3321, 0.007246377
        %v3417 = vmul.f32 %v3325, 0.007246377
        %v3418 = vmul.f32 %v3329, 0.007246377
        %v3419 = vmul.f32 %v3333, 0.007246377
        %v3420 = vmul.f32 %v3337, 0.007246377
        %v3421 = vmul.f32 %v3341, 0.007246377
        %v3422 = vmul.f32 %v3345, 0.007246377
        %v3423 = vmul.f32 %v3349, 0.007246377
        %v3424 = vmul.f32 %v3353, 0.007246377
        %v3425 = vmul.f32 %v3357, 0.007246377
        %v3426 = vmul.f32 %v3361, 0.007246377
        %v3427 = vmul.f32 %v3365, 0.007246377
        %v3428 = vmul.f32 %v3369, 0.007246377
        %v3429 = vmul.f32 %v3373, 0.007246377
        %v3430 = vmul.f32 %v3377, 0.007246377
        %v3431 = vmul.f32 %v3381, 0.007246377
        %v3432 = vmul.f32 %v3385, 0.007246377
        %v3433 = vmul.f32 %v3389, 0.007246377
        %v3434 = vmul.f32 %v3393, 0.007246377
        %v3435 = vmul.f32 %v3398, 0.007246377
        %v3436 = vsel %vm543, %v3177, -inf
        %v3437 = vmax.f32 %v3176, %v3436
        %3438 = vmax.xlane.f32.xlu0 %v3437
        %v3439 = vpop.xlane.xlu0 %3438
        %v3440 = vsel %vm543, %v3179, -inf
        %v3441 = vmax.f32 %v3178, %v3440
        %3442 = vmax.xlane.f32.xlu0 %v3441
        %v3443 = vpop.xlane.xlu0 %3442
        %v3444 = vsel %vm543, %v3181, -inf
        %v3445 = vmax.f32 %v3180, %v3444
        %3446 = vmax.xlane.f32.xlu0 %v3445
        %v3447 = vpop.xlane.xlu0 %3446
        %v3448 = vsel %vm543, %v3183, -inf
        %v3449 = vmax.f32 %v3182, %v3448
        %3450 = vmax.xlane.f32.xlu0 %v3449
        %v3451 = vpop.xlane.xlu0 %3450
        %v3452 = vsel %vm543, %v3185, -inf
        %v3453 = vmax.f32 %v3184, %v3452
        %3454 = vmax.xlane.f32.xlu0 %v3453
        %v3455 = vpop.xlane.xlu0 %3454
        %v3456 = vsel %vm543, %v3187, -inf
        %v3457 = vmax.f32 %v3186, %v3456
        %3458 = vmax.xlane.f32.xlu0 %v3457
        %v3459 = vpop.xlane.xlu0 %3458
        %v3460 = vsel %vm543, %v3189, -inf
        %v3461 = vmax.f32 %v3188, %v3460
        %3462 = vmax.xlane.f32.xlu0 %v3461
        %v3463 = vpop.xlane.xlu0 %3462
        %v3464 = vsel %vm543, %v3191, -inf
        %v3465 = vmax.f32 %v3190, %v3464
        %3466 = vmax.xlane.f32.xlu0 %v3465
        %v3467 = vpop.xlane.xlu0 %3466
        %v3468 = vsel %vm543, %v3193, -inf
        %v3469 = vmax.f32 %v3192, %v3468
        %3470 = vmax.xlane.f32.xlu0 %v3469
        %v3471 = vpop.xlane.xlu0 %3470
        %v3472 = vsel %vm543, %v3195, -inf
        %v3473 = vmax.f32 %v3194, %v3472
        %3474 = vmax.xlane.f32.xlu0 %v3473
        %v3475 = vpop.xlane.xlu0 %3474
        %v3476 = vsel %vm543, %v3197, -inf
        %v3477 = vmax.f32 %v3196, %v3476
        %3478 = vmax.xlane.f32.xlu0 %v3477
        %v3479 = vpop.xlane.xlu0 %3478
        %v3480 = vsel %vm543, %v3199, -inf
        %v3481 = vmax.f32 %v3198, %v3480
        %3482 = vmax.xlane.f32.xlu0 %v3481
        %v3483 = vpop.xlane.xlu0 %3482
        %v3484 = vsel %vm543, %v3201, -inf
        %v3485 = vmax.f32 %v3200, %v3484
        %3486 = vmax.xlane.f32.xlu0 %v3485
        %v3487 = vpop.xlane.xlu0 %3486
        %v3488 = vsel %vm543, %v3203, -inf
        %v3489 = vmax.f32 %v3202, %v3488
        %3490 = vmax.xlane.f32.xlu0 %v3489
        %v3491 = vpop.xlane.xlu0 %3490
        %v3492 = vsel %vm543, %v3205, -inf
        %v3493 = vmax.f32 %v3204, %v3492
        %3494 = vmax.xlane.f32.xlu0 %v3493
        %v3495 = vpop.xlane.xlu0 %3494
        %v3496 = vsel %vm543, %v3207, -inf
        %v3497 = vmax.f32 %v3206, %v3496
        %3498 = vmax.xlane.f32.xlu0 %v3497
        %v3499 = vpop.xlane.xlu0 %3498
        %v3500 = vsel %vm543, %v3209, -inf
        %v3501 = vmax.f32 %v3208, %v3500
        %3502 = vmax.xlane.f32.xlu0 %v3501
        %v3503 = vpop.xlane.xlu0 %3502
        %v3504 = vsel %vm543, %v3211, -inf
        %v3505 = vmax.f32 %v3210, %v3504
        %3506 = vmax.xlane.f32.xlu0 %v3505
        %v3507 = vpop.xlane.xlu0 %3506
        %v3508 = vsel %vm543, %v3213, -inf
        %v3509 = vmax.f32 %v3212, %v3508
        %3510 = vmax.xlane.f32.xlu0 %v3509
        %v3511 = vpop.xlane.xlu0 %3510
        %v3512 = vsel %vm543, %v3215, -inf
        %v3513 = vmax.f32 %v3214, %v3512
        %3514 = vmax.xlane.f32.xlu0 %v3513
        %v3515 = vpop.xlane.xlu0 %3514
        %v3516 = vsel %vm543, %v3217, -inf
        %v3517 = vmax.f32 %v3216, %v3516
        %3518 = vmax.xlane.f32.xlu0 %v3517
        %v3519 = vpop.xlane.xlu0 %3518
        %v3520 = vsel %vm543, %v3219, -inf
        %v3521 = vmax.f32 %v3218, %v3520
        %3522 = vmax.xlane.f32.xlu0 %v3521
        %v3523 = vpop.xlane.xlu0 %3522
        %v3524 = vsel %vm543, %v3221, -inf
        %v3525 = vmax.f32 %v3220, %v3524
        %3526 = vmax.xlane.f32.xlu0 %v3525
        %v3527 = vpop.xlane.xlu0 %3526
        %v3528 = vsel %vm543, %v3223, -inf
        %v3529 = vmax.f32 %v3222, %v3528
        %3530 = vmax.xlane.f32.xlu0 %v3529
        %v3531 = vpop.xlane.xlu0 %3530
        %v3532 = vsel %vm543, %v3225, -inf
        %v3533 = vmax.f32 %v3224, %v3532
        %3534 = vmax.xlane.f32.xlu0 %v3533
        %v3535 = vpop.xlane.xlu0 %3534
        %v3536 = vsel %vm543, %v3227, -inf
        %v3537 = vmax.f32 %v3226, %v3536
        %3538 = vmax.xlane.f32.xlu0 %v3537
        %v3539 = vpop.xlane.xlu0 %3538
        %v3540 = vsel %vm543, %v3229, -inf
        %v3541 = vmax.f32 %v3228, %v3540
        %3542 = vmax.xlane.f32.xlu0 %v3541
        %v3543 = vpop.xlane.xlu0 %3542
        %v3544 = vsel %vm543, %v3231, -inf
        %v3545 = vmax.f32 %v3230, %v3544
        %3546 = vmax.xlane.f32.xlu0 %v3545
        %v3547 = vpop.xlane.xlu0 %3546
        %v3548 = vsel %vm543, %v3233, -inf
        %v3549 = vmax.f32 %v3232, %v3548
        %3550 = vmax.xlane.f32.xlu0 %v3549
        %v3551 = vpop.xlane.xlu0 %3550
        %v3552 = vsel %vm543, %v3235, -inf
        %v3553 = vmax.f32 %v3234, %v3552
        %3554 = vmax.xlane.f32.xlu0 %v3553
        %v3555 = vpop.xlane.xlu0 %3554
        %v3556 = vsel %vm543, %v3237, -inf
        %v3557 = vmax.f32 %v3236, %v3556
        %3558 = vmax.xlane.f32.xlu0 %v3557
        %v3559 = vpop.xlane.xlu0 %3558
        %v3560 = vsel %vm543, %v3239, -inf
        %v3561 = vmax.f32 %v3238, %v3560
        %3562 = vmax.xlane.f32.xlu0 %v3561
        %v3563 = vpop.xlane.xlu0 %3562
        %v3564 = vsel %vm543, %v3241, -inf
        %v3565 = vmax.f32 %v3240, %v3564
        %3566 = vmax.xlane.f32.xlu0 %v3565
        %v3567 = vpop.xlane.xlu0 %3566
        %v3568 = vsel %vm543, %v3243, -inf
        %v3569 = vmax.f32 %v3242, %v3568
        %3570 = vmax.xlane.f32.xlu0 %v3569
        %v3571 = vpop.xlane.xlu0 %3570
        %v3572 = vsel %vm543, %v3245, -inf
        %v3573 = vmax.f32 %v3244, %v3572
        %3574 = vmax.xlane.f32.xlu0 %v3573
        %v3575 = vpop.xlane.xlu0 %3574
        %v3576 = vsel %vm543, %v3247, -inf
        %v3577 = vmax.f32 %v3246, %v3576
        %3578 = vmax.xlane.f32.xlu0 %v3577
        %v3579 = vpop.xlane.xlu0 %3578
        %v3580 = vsel %vm534, %v3248, -inf
        %v3581 = vsel %vm615, %v3249, -inf
        %v3582 = vmax.f32 %v3580, %v3581
        %3583 = vmax.xlane.f32.xlu0 %v3582
        %v3584 = vpop.xlane.xlu0 %3583
        %v3585 = vmul.f32 %v1249, %v3399
        %v3586 = vmul.f32 %v1249, %v3400
        %v3587 = vmul.f32 %v1249, %v3401
        %v3588 = vmul.f32 %v1249, %v3402
        %v3589 = vmul.f32 %v1249, %v3403
        %v3590 = vmul.f32 %v1249, %v3404
        %v3591 = vmul.f32 %v1249, %v3405
        %v3592 = vmul.f32 %v1249, %v3406
        %v3593 = vmul.f32 %v1249, %v3407
        %v3594 = vmul.f32 %v1249, %v3408
        %v3595 = vmul.f32 %v1249, %v3409
        %v3596 = vmul.f32 %v1249, %v3410
        %v3597 = vmul.f32 %v1249, %v3411
        %v3598 = vmul.f32 %v1249, %v3412
        %v3599 = vmul.f32 %v1249, %v3413
        %v3600 = vmul.f32 %v1249, %v3414
        %v3601 = vmul.f32 %v1249, %v3415
        %v3602 = vmul.f32 %v1249, %v3416
        %v3603 = vmul.f32 %v1249, %v3417
        %v3604 = vmul.f32 %v1249, %v3418
        %v3605 = vmul.f32 %v1249, %v3419
        %v3606 = vmul.f32 %v1249, %v3420
        %v3607 = vmul.f32 %v1249, %v3421
        %v3608 = vmul.f32 %v1249, %v3422
        %v3609 = vmul.f32 %v1249, %v3423
        %v3610 = vmul.f32 %v1249, %v3424
        %v3611 = vmul.f32 %v1249, %v3425
        %v3612 = vmul.f32 %v1249, %v3426
        %v3613 = vmul.f32 %v1249, %v3427
        %v3614 = vmul.f32 %v1249, %v3428
        %v3615 = vmul.f32 %v1249, %v3429
        %v3616 = vmul.f32 %v1249, %v3430
        %v3617 = vmul.f32 %v1249, %v3431
        %v3618 = vmul.f32 %v1249, %v3432
        %v3619 = vmul.f32 %v1249, %v3433
        %v3620 = vmul.f32 %v1249, %v3434
        %v3621 = vmul.f32 %v1249, %v3435
        %v3622 = vmul.f32 %v1287, %v3439
        %v3623 = vmul.f32 %v1287, %v3443
        %v3624 = vmul.f32 %v1287, %v3447
        %v3625 = vmul.f32 %v1287, %v3451
        %v3626 = vmul.f32 %v1287, %v3455
        %v3627 = vmul.f32 %v1287, %v3459
        %v3628 = vmul.f32 %v1287, %v3463
        %v3629 = vmul.f32 %v1287, %v3467
        %v3630 = vmul.f32 %v1287, %v3471
        %v3631 = vmul.f32 %v1287, %v3475
        %v3632 = vmul.f32 %v1287, %v3479
        %v3633 = vmul.f32 %v1287, %v3483
        %v3634 = vmul.f32 %v1287, %v3487
        %v3635 = vmul.f32 %v1287, %v3491
        %v3636 = vmul.f32 %v1287, %v3495
        %v3637 = vmul.f32 %v1287, %v3499
        %v3638 = vmul.f32 %v1287, %v3503
        %v3639 = vmul.f32 %v1287, %v3507
        %v3640 = vmul.f32 %v1287, %v3511
        %v3641 = vmul.f32 %v1287, %v3515
        %v3642 = vmul.f32 %v1287, %v3519
        %v3643 = vmul.f32 %v1287, %v3523
        %v3644 = vmul.f32 %v1287, %v3527
        %v3645 = vmul.f32 %v1287, %v3531
        %v3646 = vmul.f32 %v1287, %v3535
        %v3647 = vmul.f32 %v1287, %v3539
        %v3648 = vmul.f32 %v1287, %v3543
        %v3649 = vmul.f32 %v1287, %v3547
        %v3650 = vmul.f32 %v1287, %v3551
        %v3651 = vmul.f32 %v1287, %v3555
        %v3652 = vmul.f32 %v1287, %v3559
        %v3653 = vmul.f32 %v1287, %v3563
        %v3654 = vmul.f32 %v1287, %v3567
        %v3655 = vmul.f32 %v1287, %v3571
        %v3656 = vmul.f32 %v1287, %v3575
        %v3657 = vmul.f32 %v1287, %v3579
        %v3658 = vmul.f32 %v1287, %v3584
        %v3659 = vadd.f32 %v3585, %v3622
        %v3660 = vadd.f32 %v3586, %v3623
        %v3661 = vadd.f32 %v3587, %v3624
        %v3662 = vadd.f32 %v3588, %v3625
        %v3663 = vadd.f32 %v3589, %v3626
        %v3664 = vadd.f32 %v3590, %v3627
        %v3665 = vadd.f32 %v3591, %v3628
        %v3666 = vadd.f32 %v3592, %v3629
        %v3667 = vadd.f32 %v3593, %v3630
        %v3668 = vadd.f32 %v3594, %v3631
        %v3669 = vadd.f32 %v3595, %v3632
        %v3670 = vadd.f32 %v3596, %v3633
        %v3671 = vadd.f32 %v3597, %v3634
        %v3672 = vadd.f32 %v3598, %v3635
        %v3673 = vadd.f32 %v3599, %v3636
        %v3674 = vadd.f32 %v3600, %v3637
        %v3675 = vadd.f32 %v3601, %v3638
        %v3676 = vadd.f32 %v3602, %v3639
        %v3677 = vadd.f32 %v3603, %v3640
        %v3678 = vadd.f32 %v3604, %v3641
        %v3679 = vadd.f32 %v3605, %v3642
        %v3680 = vadd.f32 %v3606, %v3643
        %v3681 = vadd.f32 %v3607, %v3644
        %v3682 = vadd.f32 %v3608, %v3645
        %v3683 = vadd.f32 %v3609, %v3646
        %v3684 = vadd.f32 %v3610, %v3647
        %v3685 = vadd.f32 %v3611, %v3648
        %v3686 = vadd.f32 %v3612, %v3649
        %v3687 = vadd.f32 %v3613, %v3650
        %v3688 = vadd.f32 %v3614, %v3651
        %v3689 = vadd.f32 %v3615, %v3652
        %v3690 = vadd.f32 %v3616, %v3653
        %v3691 = vadd.f32 %v3617, %v3654
        %v3692 = vadd.f32 %v3618, %v3655
        %v3693 = vadd.f32 %v3619, %v3656
        %v3694 = vadd.f32 %v3620, %v3657
        %v3695 = vadd.f32 %v3621, %v3658
        %v3696 = vadd.f32 %v3659, %v1362
        %v3697 = vadd.f32 %v3660, %v1362
        %v3698 = vadd.f32 %v3661, %v1362
        %v3699 = vadd.f32 %v3662, %v1362
        %v3700 = vadd.f32 %v3663, %v1362
        %v3701 = vadd.f32 %v3664, %v1362
        %v3702 = vadd.f32 %v3665, %v1362
        %v3703 = vadd.f32 %v3666, %v1362
        %v3704 = vadd.f32 %v3667, %v1362
        %v3705 = vadd.f32 %v3668, %v1362
        %v3706 = vadd.f32 %v3669, %v1362
        %v3707 = vadd.f32 %v3670, %v1362
        %v3708 = vadd.f32 %v3671, %v1362
        %v3709 = vadd.f32 %v3672, %v1362
        %v3710 = vadd.f32 %v3673, %v1362
        %v3711 = vadd.f32 %v3674, %v1362
        %v3712 = vadd.f32 %v3675, %v1362
        %v3713 = vadd.f32 %v3676, %v1362
        %v3714 = vadd.f32 %v3677, %v1362
        %v3715 = vadd.f32 %v3678, %v1362
        %v3716 = vadd.f32 %v3679, %v1362
        %v3717 = vadd.f32 %v3680, %v1362
        %v3718 = vadd.f32 %v3681, %v1362
        %v3719 = vadd.f32 %v3682, %v1362
        %v3720 = vadd.f32 %v3683, %v1362
        %v3721 = vadd.f32 %v3684, %v1362
        %v3722 = vadd.f32 %v3685, %v1362
        %v3723 = vadd.f32 %v3686, %v1362
        %v3724 = vadd.f32 %v3687, %v1362
        %v3725 = vadd.f32 %v3688, %v1362
        %v3726 = vadd.f32 %v3689, %v1362
        %v3727 = vadd.f32 %v3690, %v1362
        %v3728 = vadd.f32 %v3691, %v1362
        %v3729 = vadd.f32 %v3692, %v1362
        %v3730 = vadd.f32 %v3693, %v1362
        %v3731 = vadd.f32 %v3694, %v1362
        %v3732 = vadd.f32 %v3695, %v1362
        %v3733 = vxor.u32 %v3696, 2147483648
        %v3734 = vxor.u32 %v3697, 2147483648
        %v3735 = vxor.u32 %v3698, 2147483648
        %v3736 = vxor.u32 %v3699, 2147483648
        %v3737 = vxor.u32 %v3700, 2147483648
        %v3738 = vxor.u32 %v3701, 2147483648
        %v3739 = vxor.u32 %v3702, 2147483648
        %v3740 = vxor.u32 %v3703, 2147483648
        %v3741 = vxor.u32 %v3704, 2147483648
        %v3742 = vxor.u32 %v3705, 2147483648
        %v3743 = vxor.u32 %v3706, 2147483648
        %v3744 = vxor.u32 %v3707, 2147483648
        %v3745 = vxor.u32 %v3708, 2147483648
        %v3746 = vxor.u32 %v3709, 2147483648
        %v3747 = vxor.u32 %v3710, 2147483648
        %v3748 = vxor.u32 %v3711, 2147483648
        %v3749 = vxor.u32 %v3712, 2147483648
        %v3750 = vxor.u32 %v3713, 2147483648
        %v3751 = vxor.u32 %v3714, 2147483648
        %v3752 = vxor.u32 %v3715, 2147483648
        %v3753 = vxor.u32 %v3716, 2147483648
        %v3754 = vxor.u32 %v3717, 2147483648
        %v3755 = vxor.u32 %v3718, 2147483648
        %v3756 = vxor.u32 %v3719, 2147483648
        %v3757 = vxor.u32 %v3720, 2147483648
        %v3758 = vxor.u32 %v3721, 2147483648
        %v3759 = vxor.u32 %v3722, 2147483648
        %v3760 = vxor.u32 %v3723, 2147483648
        %v3761 = vxor.u32 %v3724, 2147483648
        %v3762 = vxor.u32 %v3725, 2147483648
        %v3763 = vxor.u32 %v3726, 2147483648
        %v3764 = vxor.u32 %v3727, 2147483648
        %v3765 = vxor.u32 %v3728, 2147483648
        %v3766 = vxor.u32 %v3729, 2147483648
        %v3767 = vxor.u32 %v3730, 2147483648
        %v3768 = vxor.u32 %v3731, 2147483648
        %v3769 = vxor.u32 %v3732, 2147483648
        %v3770 = vmul.f32 %v3733, 1.442695
        %v3771 = vpow.pop %v3770
        %v3772 = vmul.f32 %v3734, 1.442695
        %v3773 = vpow.pop %v3772
        %v3774 = vmul.f32 %v3735, 1.442695
        %v3775 = vpow.pop %v3774
        %v3776 = vmul.f32 %v3736, 1.442695
        %v3777 = vpow.pop %v3776
        %v3778 = vmul.f32 %v3737, 1.442695
        %v3779 = vpow.pop %v3778
        %v3780 = vmul.f32 %v3738, 1.442695
        %v3781 = vpow.pop %v3780
        %v3782 = vmul.f32 %v3739, 1.442695
        %v3783 = vpow.pop %v3782
        %v3784 = vmul.f32 %v3740, 1.442695
        %v3785 = vpow.pop %v3784
        %v3786 = vmul.f32 %v3741, 1.442695
        %v3787 = vpow.pop %v3786
        %v3788 = vmul.f32 %v3742, 1.442695
        %v3789 = vpow.pop %v3788
        %v3790 = vmul.f32 %v3743, 1.442695
        %v3791 = vpow.pop %v3790
        %v3792 = vmul.f32 %v3744, 1.442695
        %v3793 = vpow.pop %v3792
        %v3794 = vmul.f32 %v3745, 1.442695
        %v3795 = vpow.pop %v3794
        %v3796 = vmul.f32 %v3746, 1.442695
        %v3797 = vpow.pop %v3796
        %v3798 = vmul.f32 %v3747, 1.442695
        %v3799 = vpow.pop %v3798
        %v3800 = vmul.f32 %v3748, 1.442695
        %v3801 = vpow.pop %v3800
        %v3802 = vmul.f32 %v3749, 1.442695
        %v3803 = vpow.pop %v3802
        %v3804 = vmul.f32 %v3750, 1.442695
        %v3805 = vpow.pop %v3804
        %v3806 = vmul.f32 %v3751, 1.442695
        %v3807 = vpow.pop %v3806
        %v3808 = vmul.f32 %v3752, 1.442695
        %v3809 = vpow.pop %v3808
        %v3810 = vmul.f32 %v3753, 1.442695
        %v3811 = vpow.pop %v3810
        %v3812 = vmul.f32 %v3754, 1.442695
        %v3813 = vpow.pop %v3812
        %v3814 = vmul.f32 %v3755, 1.442695
        %v3815 = vpow.pop %v3814
        %v3816 = vmul.f32 %v3756, 1.442695
        %v3817 = vpow.pop %v3816
        %v3818 = vmul.f32 %v3757, 1.442695
        %v3819 = vpow.pop %v3818
        %v3820 = vmul.f32 %v3758, 1.442695
        %v3821 = vpow.pop %v3820
        %v3822 = vmul.f32 %v3759, 1.442695
        %v3823 = vpow.pop %v3822
        %v3824 = vmul.f32 %v3760, 1.442695
        %v3825 = vpow.pop %v3824
        %v3826 = vmul.f32 %v3761, 1.442695
        %v3827 = vpow.pop %v3826
        %v3828 = vmul.f32 %v3762, 1.442695
        %v3829 = vpow.pop %v3828
        %v3830 = vmul.f32 %v3763, 1.442695
        %v3831 = vpow.pop %v3830
        %v3832 = vmul.f32 %v3764, 1.442695
        %v3833 = vpow.pop %v3832
        %v3834 = vmul.f32 %v3765, 1.442695
        %v3835 = vpow.pop %v3834
        %v3836 = vmul.f32 %v3766, 1.442695
        %v3837 = vpow.pop %v3836
        %v3838 = vmul.f32 %v3767, 1.442695
        %v3839 = vpow.pop %v3838
        %v3840 = vmul.f32 %v3768, 1.442695
        %v3841 = vpow.pop %v3840
        %v3842 = vmul.f32 %v3769, 1.442695
        %v3843 = vpow.pop %v3842
        %v3844 = vadd.f32 %v3771, 1.0
        %v3845 = vadd.f32 %v3773, 1.0
        %v3846 = vadd.f32 %v3775, 1.0
        %v3847 = vadd.f32 %v3777, 1.0
        %v3848 = vadd.f32 %v3779, 1.0
        %v3849 = vadd.f32 %v3781, 1.0
        %v3850 = vadd.f32 %v3783, 1.0
        %v3851 = vadd.f32 %v3785, 1.0
        %v3852 = vadd.f32 %v3787, 1.0
        %v3853 = vadd.f32 %v3789, 1.0
        %v3854 = vadd.f32 %v3791, 1.0
        %v3855 = vadd.f32 %v3793, 1.0
        %v3856 = vadd.f32 %v3795, 1.0
        %v3857 = vadd.f32 %v3797, 1.0
        %v3858 = vadd.f32 %v3799, 1.0
        %v3859 = vadd.f32 %v3801, 1.0
        %v3860 = vadd.f32 %v3803, 1.0
        %v3861 = vadd.f32 %v3805, 1.0
        %v3862 = vadd.f32 %v3807, 1.0
        %v3863 = vadd.f32 %v3809, 1.0
        %v3864 = vadd.f32 %v3811, 1.0
        %v3865 = vadd.f32 %v3813, 1.0
        %v3866 = vadd.f32 %v3815, 1.0
        %v3867 = vadd.f32 %v3817, 1.0
        %v3868 = vadd.f32 %v3819, 1.0
        %v3869 = vadd.f32 %v3821, 1.0
        %v3870 = vadd.f32 %v3823, 1.0
        %v3871 = vadd.f32 %v3825, 1.0
        %v3872 = vadd.f32 %v3827, 1.0
        %v3873 = vadd.f32 %v3829, 1.0
        %v3874 = vadd.f32 %v3831, 1.0
        %v3875 = vadd.f32 %v3833, 1.0
        %v3876 = vadd.f32 %v3835, 1.0
        %v3877 = vadd.f32 %v3837, 1.0
        %v3878 = vadd.f32 %v3839, 1.0
        %v3879 = vadd.f32 %v3841, 1.0
        %v3880 = vadd.f32 %v3843, 1.0
        %v3881 = vrcp.pop %v3844
        %v3882 = vmul.f32 1.0, %v3881
        %v3883 = vrcp.pop %v3845
        %v3884 = vmul.f32 1.0, %v3883
        %v3885 = vrcp.pop %v3846
        %v3886 = vmul.f32 1.0, %v3885
        %v3887 = vrcp.pop %v3847
        %v3888 = vmul.f32 1.0, %v3887
        %v3889 = vrcp.pop %v3848
        %v3890 = vmul.f32 1.0, %v3889
        %v3891 = vrcp.pop %v3849
        %v3892 = vmul.f32 1.0, %v3891
        %v3893 = vrcp.pop %v3850
        %v3894 = vmul.f32 1.0, %v3893
        %v3895 = vrcp.pop %v3851
        %v3896 = vmul.f32 1.0, %v3895
        %v3897 = vrcp.pop %v3852
        %v3898 = vmul.f32 1.0, %v3897
        %v3899 = vrcp.pop %v3853
        %v3900 = vmul.f32 1.0, %v3899
        %v3901 = vrcp.pop %v3854
        %v3902 = vmul.f32 1.0, %v3901
        %v3903 = vrcp.pop %v3855
        %v3904 = vmul.f32 1.0, %v3903
        %v3905 = vrcp.pop %v3856
        %v3906 = vmul.f32 1.0, %v3905
        %v3907 = vrcp.pop %v3857
        %v3908 = vmul.f32 1.0, %v3907
        %v3909 = vrcp.pop %v3858
        %v3910 = vmul.f32 1.0, %v3909
        %v3911 = vrcp.pop %v3859
        %v3912 = vmul.f32 1.0, %v3911
        %v3913 = vrcp.pop %v3860
        %v3914 = vmul.f32 1.0, %v3913
        %v3915 = vrcp.pop %v3861
        %v3916 = vmul.f32 1.0, %v3915
        %v3917 = vrcp.pop %v3862
        %v3918 = vmul.f32 1.0, %v3917
        %v3919 = vrcp.pop %v3863
        %v3920 = vmul.f32 1.0, %v3919
        %v3921 = vrcp.pop %v3864
        %v3922 = vmul.f32 1.0, %v3921
        %v3923 = vrcp.pop %v3865
        %v3924 = vmul.f32 1.0, %v3923
        %v3925 = vrcp.pop %v3866
        %v3926 = vmul.f32 1.0, %v3925
        %v3927 = vrcp.pop %v3867
        %v3928 = vmul.f32 1.0, %v3927
        %v3929 = vrcp.pop %v3868
        %v3930 = vmul.f32 1.0, %v3929
        %v3931 = vrcp.pop %v3869
        %v3932 = vmul.f32 1.0, %v3931
        %v3933 = vrcp.pop %v3870
        %v3934 = vmul.f32 1.0, %v3933
        %v3935 = vrcp.pop %v3871
        %v3936 = vmul.f32 1.0, %v3935
        %v3937 = vrcp.pop %v3872
        %v3938 = vmul.f32 1.0, %v3937
        %v3939 = vrcp.pop %v3873
        %v3940 = vmul.f32 1.0, %v3939
        %v3941 = vrcp.pop %v3874
        %v3942 = vmul.f32 1.0, %v3941
        %v3943 = vrcp.pop %v3875
        %v3944 = vmul.f32 1.0, %v3943
        %v3945 = vrcp.pop %v3876
        %v3946 = vmul.f32 1.0, %v3945
        %v3947 = vrcp.pop %v3877
        %v3948 = vmul.f32 1.0, %v3947
        %v3949 = vrcp.pop %v3878
        %v3950 = vmul.f32 1.0, %v3949
        %v3951 = vrcp.pop %v3879
        %v3952 = vmul.f32 1.0, %v3951
        %v3953 = vrcp.pop %v3880
        %v3954 = vmul.f32 1.0, %v3953
        %v3955 = vmul.f32 %v3176, %v3882
        %v3956 = vmul.f32 %v3177, %v3882
        %v3957 = vmul.f32 %v3178, %v3884
        %v3958 = vmul.f32 %v3179, %v3884
        %v3959 = vmul.f32 %v3180, %v3886
        %v3960 = vmul.f32 %v3181, %v3886
        %v3961 = vmul.f32 %v3182, %v3888
        %v3962 = vmul.f32 %v3183, %v3888
        %v3963 = vmul.f32 %v3184, %v3890
        %v3964 = vmul.f32 %v3185, %v3890
        %v3965 = vmul.f32 %v3186, %v3892
        %v3966 = vmul.f32 %v3187, %v3892
        %v3967 = vmul.f32 %v3188, %v3894
        %v3968 = vmul.f32 %v3189, %v3894
        %v3969 = vmul.f32 %v3190, %v3896
        %v3970 = vmul.f32 %v3191, %v3896
        %v3971 = vmul.f32 %v3192, %v3898
        %v3972 = vmul.f32 %v3193, %v3898
        %v3973 = vmul.f32 %v3194, %v3900
        %v3974 = vmul.f32 %v3195, %v3900
        %v3975 = vmul.f32 %v3196, %v3902
        %v3976 = vmul.f32 %v3197, %v3902
        %v3977 = vmul.f32 %v3198, %v3904
        %v3978 = vmul.f32 %v3199, %v3904
        %v3979 = vmul.f32 %v3200, %v3906
        %v3980 = vmul.f32 %v3201, %v3906
        %v3981 = vmul.f32 %v3202, %v3908
        %v3982 = vmul.f32 %v3203, %v3908
        %v3983 = vmul.f32 %v3204, %v3910
        %v3984 = vmul.f32 %v3205, %v3910
        %v3985 = vmul.f32 %v3206, %v3912
        %v3986 = vmul.f32 %v3207, %v3912
        %v3987 = vmul.f32 %v3208, %v3914
        %v3988 = vmul.f32 %v3209, %v3914
        %v3989 = vmul.f32 %v3210, %v3916
        %v3990 = vmul.f32 %v3211, %v3916
        %v3991 = vmul.f32 %v3212, %v3918
        %v3992 = vmul.f32 %v3213, %v3918
        %v3993 = vmul.f32 %v3214, %v3920
        %v3994 = vmul.f32 %v3215, %v3920
        %v3995 = vmul.f32 %v3216, %v3922
        %v3996 = vmul.f32 %v3217, %v3922
        %v3997 = vmul.f32 %v3218, %v3924
        %v3998 = vmul.f32 %v3219, %v3924
        %v3999 = vmul.f32 %v3220, %v3926
        %v4000 = vmul.f32 %v3221, %v3926
        %v4001 = vmul.f32 %v3222, %v3928
        %v4002 = vmul.f32 %v3223, %v3928
        %v4003 = vmul.f32 %v3224, %v3930
        %v4004 = vmul.f32 %v3225, %v3930
        %v4005 = vmul.f32 %v3226, %v3932
        %v4006 = vmul.f32 %v3227, %v3932
        %v4007 = vmul.f32 %v3228, %v3934
        %v4008 = vmul.f32 %v3229, %v3934
        %v4009 = vmul.f32 %v3230, %v3936
        %v4010 = vmul.f32 %v3231, %v3936
        %v4011 = vmul.f32 %v3232, %v3938
        %v4012 = vmul.f32 %v3233, %v3938
        %v4013 = vmul.f32 %v3234, %v3940
        %v4014 = vmul.f32 %v3235, %v3940
        %v4015 = vmul.f32 %v3236, %v3942
        %v4016 = vmul.f32 %v3237, %v3942
        %v4017 = vmul.f32 %v3238, %v3944
        %v4018 = vmul.f32 %v3239, %v3944
        %v4019 = vmul.f32 %v3240, %v3946
        %v4020 = vmul.f32 %v3241, %v3946
        %v4021 = vmul.f32 %v3242, %v3948
        %v4022 = vmul.f32 %v3243, %v3948
        %v4023 = vmul.f32 %v3244, %v3950
        %v4024 = vmul.f32 %v3245, %v3950
        %v4025 = vmul.f32 %v3246, %v3952
        %v4026 = vmul.f32 %v3247, %v3952
        %v4027 = vmul.f32 %v3248, %v3954
        %v4028 = vmul.f32 %v3249, %v3954
        %v4029 = vpack.c.bf16 %v3957, %v3955
        %v4030 = vpack.c.bf16 %v3958, %v3956
        %v4031 = vpack.c.bf16 %v3961, %v3959
        %v4032 = vpack.c.bf16 %v3962, %v3960
        %v4033 = vpack.c.bf16 %v3965, %v3963
        %v4034 = vpack.c.bf16 %v3966, %v3964
        %v4035 = vpack.c.bf16 %v3969, %v3967
        %v4036 = vpack.c.bf16 %v3970, %v3968
        %v4037 = vpack.c.bf16 %v3973, %v3971
        %v4038 = vpack.c.bf16 %v3974, %v3972
        %v4039 = vpack.c.bf16 %v3977, %v3975
        %v4040 = vpack.c.bf16 %v3978, %v3976
        %v4041 = vpack.c.bf16 %v3981, %v3979
        %v4042 = vpack.c.bf16 %v3982, %v3980
        %v4043 = vpack.c.bf16 %v3985, %v3983
        %v4044 = vpack.c.bf16 %v3986, %v3984
        %v4045 = vpack.c.bf16 %v3989, %v3987
        %v4046 = vpack.c.bf16 %v3990, %v3988
        %v4047 = vpack.c.bf16 %v3993, %v3991
        %v4048 = vpack.c.bf16 %v3994, %v3992
        %v4049 = vpack.c.bf16 %v3997, %v3995
        %v4050 = vpack.c.bf16 %v3998, %v3996
        %v4051 = vpack.c.bf16 %v4001, %v3999
        %v4052 = vpack.c.bf16 %v4002, %v4000
        %v4053 = vpack.c.bf16 %v4005, %v4003
        %v4054 = vpack.c.bf16 %v4006, %v4004
        %v4055 = vpack.c.bf16 %v4009, %v4007
        %v4056 = vpack.c.bf16 %v4010, %v4008
        %v4057 = vpack.c.bf16 %v4013, %v4011
        %v4058 = vpack.c.bf16 %v4014, %v4012
        %v4059 = vpack.c.bf16 %v4017, %v4015
        %v4060 = vpack.c.bf16 %v4018, %v4016
        %v4061 = vpack.c.bf16 %v4021, %v4019
        %v4062 = vpack.c.bf16 %v4022, %v4020
        %v4063 = vpack.c.bf16 %v4025, %v4023
        %v4064 = vpack.c.bf16 %v4026, %v4024
        %v4065 = vpack.c.bf16 %v4027, %v4027
        %v4066 = vpack.c.bf16 %v4028, %v4028
        %v4067 = vld [vmem:[%s3] sm:$0xf]
        %v4068 = vld [vmem:[%s3 + $0x4] sm:$0xf]
        %v4069 = vld [vmem:[%s3 + $0x8] sm:$0xf]
        %v4070 = vld [vmem:[%s3 + $0xc] sm:$0xf]
        %v4071 = vld [vmem:[%s3 + $0x10] sm:$0xf]
        %v4072 = vld [vmem:[%s3 + $0x14] sm:$0xf]
        %v4073 = vld [vmem:[%s3 + $0x18] sm:$0xf]
        %v4074 = vld [vmem:[%s3 + $0x1c] sm:$0xf]
        %v4075 = vld [vmem:[%s3 + $0x20] sm:$0xf]
        %v4076 = vld [vmem:[%s3 + $0x24] sm:$0xf]
        %v4077 = vld [vmem:[%s3 + $0x28] sm:$0xf]
        %v4078 = vld [vmem:[%s3 + $0x2c] sm:$0xf]
        %v4079 = vld [vmem:[%s3 + $0x30] sm:$0xf]
        %v4080 = vld [vmem:[%s3 + $0x34] sm:$0xf]
        %v4081 = vld [vmem:[%s3 + $0x38] sm:$0xf]
        %v4082 = vld [vmem:[%s3 + $0x3c] sm:$0xf]
        %v4083 = vld [vmem:[%s3 + $0x40] sm:$0xf]
        %v4084 = vld [vmem:[%s3 + $0x44] sm:$0x1]
        %v4103 = vunpack.c.l.b16 %v4067
        %v4104 = vunpack.c.l.b16 %v4068
        %v4105 = vunpack.c.l.b16 %v4069
        %v4106 = vunpack.c.l.b16 %v4070
        %v4107 = vunpack.c.l.b16 %v4071
        %v4108 = vunpack.c.l.b16 %v4072
        %v4109 = vunpack.c.l.b16 %v4073
        %v4110 = vunpack.c.l.b16 %v4074
        %v4111 = vunpack.c.l.b16 %v4075
        %v4112 = vunpack.c.l.b16 %v4076
        %v4113 = vunpack.c.l.b16 %v4077
        %v4114 = vunpack.c.l.b16 %v4078
        %v4115 = vunpack.c.l.b16 %v4079
        %v4116 = vunpack.c.l.b16 %v4080
        %v4117 = vunpack.c.l.b16 %v4081
        %v4118 = vunpack.c.l.b16 %v4082
        %v4119 = vunpack.c.l.b16 %v4083
        %v4120 = vunpack.c.l.b16 %v4084
        %v4121 = vpack.c.b16 %v4104, %v4103
        %v4122 = vpack.c.b16 %v4106, %v4105
        %v4123 = vpack.c.b16 %v4108, %v4107
        %v4124 = vpack.c.b16 %v4110, %v4109
        %v4125 = vpack.c.b16 %v4112, %v4111
        %v4126 = vpack.c.b16 %v4114, %v4113
        %v4127 = vpack.c.b16 %v4116, %v4115
        %v4128 = vpack.c.b16 %v4118, %v4117
        %v4129 = vpack.c.b16 %v4120, %v4119
        %v4139 = vsel %vm543, %v4030, 0
        %v4142 = vsel %vm543, %v4032, 0
        %v4145 = vsel %vm543, %v4034, 0
        %v4148 = vsel %vm543, %v4036, 0
        %v4151 = vsel %vm543, %v4038, 0
        %v4154 = vsel %vm543, %v4040, 0
        %v4157 = vsel %vm543, %v4042, 0
        %v4160 = vsel %vm543, %v4044, 0
        %v4163 = vsel %vm543, %v4046, 0
        %v4166 = vsel %vm543, %v4048, 0
        %v4169 = vsel %vm543, %v4050, 0
        %v4172 = vsel %vm543, %v4052, 0
        %v4175 = vsel %vm543, %v4054, 0
        %v4178 = vsel %vm543, %v4056, 0
        %v4181 = vsel %vm543, %v4058, 0
        %v4184 = vsel %vm543, %v4060, 0
        %v4187 = vsel %vm543, %v4062, 0
        %v4190 = vsel %vm543, %v4064, 0
        %v4193 = vsel %vm543, %v4066, 0
        %v4196 = vsel %vm1862, %v4129, 0
        %4198 = vmatprep.subr.bf16.mxu0 0
        %4199 = vmatpush1.bf16.msra.mxu0 %v4121
        %4200 = vmatprep.subr.bf16.mxu0 0
        %4201 = vmatpush1.bf16.msra.mxu0 %v4122
        %4202 = vmatprep.subr.bf16.mxu0 0
        %4203 = vmatpush1.bf16.msra.mxu0 %v4123
        %4204 = vmatprep.subr.bf16.mxu0 0
        %4205 = vmatpush1.bf16.msra.mxu0 %v4124
        %4206 = vmatprep.subr.bf16.mxu0 0
        %4207 = vmatpush1.bf16.msra.mxu0 %v4125
        %4208 = vmatprep.subr.bf16.mxu0 0
        %4209 = vmatpush1.bf16.msra.mxu0 %v4126
        %4210 = vmatprep.subr.bf16.mxu0 0
        %4211 = vmatpush1.bf16.msra.mxu0 %v4127
        %4212 = vmatprep.subr.bf16.mxu0 0
        %4213 = vmatpush1.bf16.msra.mxu0 %v4128
        %4214 = vmatprep.subr.bf16.mxu0 0
        %4215 = vmatpush1.bf16.msra.mxu0 %v4196
        %4216 = vmatprep.subr.bf16.mxu0 0
        %4217 = vmatpush1.bf16.msra.mxu0 0
        %4218 = vmatprep.subr.bf16.mxu0 0
        %4219 = vmatpush1.bf16.msra.mxu0 0
        %4220 = vmatprep.subr.bf16.mxu0 0
        %4221 = vmatpush1.bf16.msra.mxu0 0
        %4222 = vmatprep.subr.bf16.mxu0 0
        %4223 = vmatpush1.bf16.msra.mxu0 0
        %4224 = vmatprep.subr.bf16.mxu0 0
        %4225 = vmatpush1.bf16.msra.mxu0 0
        %4226 = vmatprep.subr.bf16.mxu0 0
        %4227 = vmatpush1.bf16.msra.mxu0 0
        %4228 = vmatprep.subr.bf16.mxu0 0
        %4229 = vmatpush1.bf16.msra.mxu0 0
        %4230 = vmatprep.mubr.bf16.mxu0 %v4139
        %4231 = vmatmul.mubr.bf16.gmra.mrb[0].mxu0 %v4029
        %v4232 = vpop.f32.mrb[0].mxu0
        %v4233 = vadd.f32 %v381, %v4232
        %v4234 = vpop.f32.mrb[0].mxu0
        %v4235 = vpop.f32.mrb[0].mxu0
        %v4236 = vadd.f32 %v381, %v4235
        %v4237 = vpop.f32.mrb[0].mxu0
        %4238 = vmatprep.mubr.bf16.mxu0 %v4142
        %4239 = vmatmul.mubr.bf16.gmra.mrb[0].mxu0 %v4031
        %v4240 = vpop.f32.mrb[0].mxu0
        %v4241 = vadd.f32 %v381, %v4240
        %v4242 = vpop.f32.mrb[0].mxu0
        %v4243 = vpop.f32.mrb[0].mxu0
        %v4244 = vadd.f32 %v381, %v4243
        %v4245 = vpop.f32.mrb[0].mxu0
        %4246 = vmatprep.mubr.bf16.mxu0 %v4145
        %4247 = vmatmul.mubr.bf16.gmra.mrb[0].mxu0 %v4033
        %v4248 = vpop.f32.mrb[0].mxu0
        %v4249 = vadd.f32 %v381, %v4248
        %v4250 = vpop.f32.mrb[0].mxu0
        %v4251 = vpop.f32.mrb[0].mxu0
        %v4252 = vadd.f32 %v381, %v4251
        %v4253 = vpop.f32.mrb[0].mxu0
        %4254 = vmatprep.mubr.bf16.mxu0 %v4148
        %4255 = vmatmul.mubr.bf16.gmra.mrb[0].mxu0 %v4035
        %v4256 = vpop.f32.mrb[0].mxu0
        %v4257 = vadd.f32 %v381, %v4256
        %v4258 = vpop.f32.mrb[0].mxu0
        %v4259 = vpop.f32.mrb[0].mxu0
        %v4260 = vadd.f32 %v381, %v4259
        %v4261 = vpop.f32.mrb[0].mxu0
        %4262 = vmatprep.mubr.bf16.mxu0 %v4151
        %4263 = vmatmul.mubr.bf16.gmra.mrb[0].mxu0 %v4037
        %v4264 = vpop.f32.mrb[0].mxu0
        %v4265 = vadd.f32 %v381, %v4264
        %v4266 = vpop.f32.mrb[0].mxu0
        %v4267 = vpop.f32.mrb[0].mxu0
        %v4268 = vadd.f32 %v381, %v4267
        %v4269 = vpop.f32.mrb[0].mxu0
        %4270 = vmatprep.mubr.bf16.mxu0 %v4154
        %4271 = vmatmul.mubr.bf16.gmra.mrb[0].mxu0 %v4039
        %v4272 = vpop.f32.mrb[0].mxu0
        %v4273 = vadd.f32 %v381, %v4272
        %v4274 = vpop.f32.mrb[0].mxu0
        %v4275 = vpop.f32.mrb[0].mxu0
        %v4276 = vadd.f32 %v381, %v4275
        %v4277 = vpop.f32.mrb[0].mxu0
        %4278 = vmatprep.mubr.bf16.mxu0 %v4157
        %4279 = vmatmul.mubr.bf16.gmra.mrb[0].mxu0 %v4041
        %v4280 = vpop.f32.mrb[0].mxu0
        %v4281 = vadd.f32 %v381, %v4280
        %v4282 = vpop.f32.mrb[0].mxu0
        %v4283 = vpop.f32.mrb[0].mxu0
        %v4284 = vadd.f32 %v381, %v4283
        %v4285 = vpop.f32.mrb[0].mxu0
        %4286 = vmatprep.mubr.bf16.mxu0 %v4160
        %4287 = vmatmul.mubr.bf16.gmra.mrb[0].mxu0 %v4043
        %v4288 = vpop.f32.mrb[0].mxu0
        %v4289 = vadd.f32 %v381, %v4288
        %v4290 = vpop.f32.mrb[0].mxu0
        %v4291 = vpop.f32.mrb[0].mxu0
        %v4292 = vadd.f32 %v381, %v4291
        %v4293 = vpop.f32.mrb[0].mxu0
        %4294 = vmatprep.mubr.bf16.mxu0 %v4163
        %4295 = vmatmul.mubr.bf16.gmra.mrb[0].mxu0 %v4045
        %v4296 = vpop.f32.mrb[0].mxu0
        %v4297 = vadd.f32 %v381, %v4296
        %v4298 = vpop.f32.mrb[0].mxu0
        %v4299 = vpop.f32.mrb[0].mxu0
        %v4300 = vadd.f32 %v381, %v4299
        %v4301 = vpop.f32.mrb[0].mxu0
        %4302 = vmatprep.mubr.bf16.mxu0 %v4166
        %4303 = vmatmul.mubr.bf16.gmra.mrb[0].mxu0 %v4047
        %v4304 = vpop.f32.mrb[0].mxu0
        %v4305 = vadd.f32 %v381, %v4304
        %v4306 = vpop.f32.mrb[0].mxu0
        %v4307 = vpop.f32.mrb[0].mxu0
        %v4308 = vadd.f32 %v381, %v4307
        %v4309 = vpop.f32.mrb[0].mxu0
        %4310 = vmatprep.mubr.bf16.mxu0 %v4169
        %4311 = vmatmul.mubr.bf16.gmra.mrb[0].mxu0 %v4049
        %v4312 = vpop.f32.mrb[0].mxu0
        %v4313 = vadd.f32 %v381, %v4312
        %v4314 = vpop.f32.mrb[0].mxu0
        %v4315 = vpop.f32.mrb[0].mxu0
        %v4316 = vadd.f32 %v381, %v4315
        %v4317 = vpop.f32.mrb[0].mxu0
        %4318 = vmatprep.mubr.bf16.mxu0 %v4172
        %4319 = vmatmul.mubr.bf16.gmra.mrb[0].mxu0 %v4051
        %v4320 = vpop.f32.mrb[0].mxu0
        %v4321 = vadd.f32 %v381, %v4320
        %v4322 = vpop.f32.mrb[0].mxu0
        %v4323 = vpop.f32.mrb[0].mxu0
        %v4324 = vadd.f32 %v381, %v4323
        %v4325 = vpop.f32.mrb[0].mxu0
        %4326 = vmatprep.mubr.bf16.mxu0 %v4175
        %4327 = vmatmul.mubr.bf16.gmra.mrb[0].mxu0 %v4053
        %v4328 = vpop.f32.mrb[0].mxu0
        %v4329 = vadd.f32 %v381, %v4328
        %v4330 = vpop.f32.mrb[0].mxu0
        %v4331 = vpop.f32.mrb[0].mxu0
        %v4332 = vadd.f32 %v381, %v4331
        %v4333 = vpop.f32.mrb[0].mxu0
        %4334 = vmatprep.mubr.bf16.mxu0 %v4178
        %4335 = vmatmul.mubr.bf16.gmra.mrb[0].mxu0 %v4055
        %v4336 = vpop.f32.mrb[0].mxu0
        %v4337 = vadd.f32 %v381, %v4336
        %v4338 = vpop.f32.mrb[0].mxu0
        %v4339 = vpop.f32.mrb[0].mxu0
        %v4340 = vadd.f32 %v381, %v4339
        %v4341 = vpop.f32.mrb[0].mxu0
        %4342 = vmatprep.mubr.bf16.mxu0 %v4181
        %4343 = vmatmul.mubr.bf16.gmra.mrb[0].mxu0 %v4057
        %v4344 = vpop.f32.mrb[0].mxu0
        %v4345 = vadd.f32 %v381, %v4344
        %v4346 = vpop.f32.mrb[0].mxu0
        %v4347 = vpop.f32.mrb[0].mxu0
        %v4348 = vadd.f32 %v381, %v4347
        %v4349 = vpop.f32.mrb[0].mxu0
        %4350 = vmatprep.mubr.bf16.mxu0 %v4184
        %4351 = vmatmul.mubr.bf16.gmra.mrb[0].mxu0 %v4059
        %v4352 = vpop.f32.mrb[0].mxu0
        %v4353 = vadd.f32 %v381, %v4352
        %v4354 = vpop.f32.mrb[0].mxu0
        %v4355 = vpop.f32.mrb[0].mxu0
        %v4356 = vadd.f32 %v381, %v4355
        %v4357 = vpop.f32.mrb[0].mxu0
        %4358 = vmatprep.mubr.bf16.mxu0 %v4187
        %4359 = vmatmul.mubr.bf16.gmra.mrb[0].mxu0 %v4061
        %v4360 = vpop.f32.mrb[0].mxu0
        %v4361 = vadd.f32 %v381, %v4360
        %v4362 = vpop.f32.mrb[0].mxu0
        %v4363 = vpop.f32.mrb[0].mxu0
        %v4364 = vadd.f32 %v381, %v4363
        %v4365 = vpop.f32.mrb[0].mxu0
        %4366 = vmatprep.mubr.bf16.mxu0 %v4190
        %4367 = vmatmul.mubr.bf16.gmra.mrb[0].mxu0 %v4063
        %v4368 = vpop.f32.mrb[0].mxu0
        %v4369 = vadd.f32 %v381, %v4368
        %v4370 = vpop.f32.mrb[0].mxu0
        %v4371 = vpop.f32.mrb[0].mxu0
        %v4372 = vadd.f32 %v381, %v4371
        %v4373 = vpop.f32.mrb[0].mxu0
        %4374 = vmatprep.mubr.bf16.mxu0 %v4193
        %4375 = vmatmul.mubr.bf16.gmra.mrb[0].mxu0 %v4065
        %v4376 = vpop.f32.mrb[0].mxu0
        %v4377 = vadd.f32 %v381, %v4376
        %v4378 = vpop.f32.mrb[0].mxu0
        %v4379 = vpop.f32.mrb[0].mxu0
        %v4380 = vpop.f32.mrb[0].mxu0
        %4381 = vdwg.mxu0
        %v4382 = vmax.f32 %v4233, 0.0
        %v4383 = vmax.f32 %v4236, 0.0
        %v4384 = vmax.f32 %v4241, 0.0
        %v4385 = vmax.f32 %v4244, 0.0
        %v4386 = vmax.f32 %v4249, 0.0
        %v4387 = vmax.f32 %v4252, 0.0
        %v4388 = vmax.f32 %v4257, 0.0
        %v4389 = vmax.f32 %v4260, 0.0
        %v4390 = vmax.f32 %v4265, 0.0
        %v4391 = vmax.f32 %v4268, 0.0
        %v4392 = vmax.f32 %v4273, 0.0
        %v4393 = vmax.f32 %v4276, 0.0
        %v4394 = vmax.f32 %v4281, 0.0
        %v4395 = vmax.f32 %v4284, 0.0
        %v4396 = vmax.f32 %v4289, 0.0
        %v4397 = vmax.f32 %v4292, 0.0
        %v4398 = vmax.f32 %v4297, 0.0
        %v4399 = vmax.f32 %v4300, 0.0
        %v4400 = vmax.f32 %v4305, 0.0
        %v4401 = vmax.f32 %v4308, 0.0
        %v4402 = vmax.f32 %v4313, 0.0
        %v4403 = vmax.f32 %v4316, 0.0
        %v4404 = vmax.f32 %v4321, 0.0
        %v4405 = vmax.f32 %v4324, 0.0
        %v4406 = vmax.f32 %v4329, 0.0
        %v4407 = vmax.f32 %v4332, 0.0
        %v4408 = vmax.f32 %v4337, 0.0
        %v4409 = vmax.f32 %v4340, 0.0
        %v4410 = vmax.f32 %v4345, 0.0
        %v4411 = vmax.f32 %v4348, 0.0
        %v4412 = vmax.f32 %v4353, 0.0
        %v4413 = vmax.f32 %v4356, 0.0
        %v4414 = vmax.f32 %v4361, 0.0
        %v4415 = vmax.f32 %v4364, 0.0
        %v4416 = vmax.f32 %v4369, 0.0
        %v4417 = vmax.f32 %v4372, 0.0
        %v4418 = vmax.f32 %v4377, 0.0
        %v4419 = vpack.c.bf16 %v4383, %v4382
        %v4420 = vpack.c.bf16 %v4385, %v4384
        %v4421 = vpack.c.bf16 %v4387, %v4386
        %v4422 = vpack.c.bf16 %v4389, %v4388
        %v4423 = vpack.c.bf16 %v4391, %v4390
        %v4424 = vpack.c.bf16 %v4393, %v4392
        %v4425 = vpack.c.bf16 %v4395, %v4394
        %v4426 = vpack.c.bf16 %v4397, %v4396
        %v4427 = vpack.c.bf16 %v4399, %v4398
        %v4428 = vpack.c.bf16 %v4401, %v4400
        %v4429 = vpack.c.bf16 %v4403, %v4402
        %v4430 = vpack.c.bf16 %v4405, %v4404
        %v4431 = vpack.c.bf16 %v4407, %v4406
        %v4432 = vpack.c.bf16 %v4409, %v4408
        %v4433 = vpack.c.bf16 %v4411, %v4410
        %v4434 = vpack.c.bf16 %v4413, %v4412
        %v4435 = vpack.c.bf16 %v4415, %v4414
        %v4436 = vpack.c.bf16 %v4417, %v4416
        %v4437 = vpack.c.bf16 %v4418, %v4418
        %v4438 = vld [vmem:[%s4] sm:$0xff]
        %v4439 = vld [vmem:[%s4 + $0x8] sm:$0xff]
        %v4440 = vld [vmem:[%s4 + $0x10] sm:$0xff]
        %v4441 = vld [vmem:[%s4 + $0x18] sm:$0xff]
        %v4442 = vld [vmem:[%s4 + $0x20] sm:$0xff]
        %v4443 = vld [vmem:[%s4 + $0x28] sm:$0xff]
        %v4444 = vld [vmem:[%s4 + $0x30] sm:$0xff]
        %v4445 = vld [vmem:[%s4 + $0x38] sm:$0xff]
        %v4454 = vunpack.c.l.b16 %v4438
        %v4455 = vunpack.c.h.b16 %v4438
        %v4456 = vunpack.c.l.b16 %v4439
        %v4457 = vunpack.c.h.b16 %v4439
        %v4458 = vunpack.c.l.b16 %v4440
        %v4459 = vunpack.c.h.b16 %v4440
        %v4460 = vunpack.c.l.b16 %v4441
        %v4461 = vunpack.c.h.b16 %v4441
        %v4462 = vunpack.c.l.b16 %v4442
        %v4463 = vunpack.c.h.b16 %v4442
        %v4464 = vunpack.c.l.b16 %v4443
        %v4465 = vunpack.c.h.b16 %v4443
        %v4466 = vunpack.c.l.b16 %v4444
        %v4467 = vunpack.c.h.b16 %v4444
        %v4468 = vunpack.c.l.b16 %v4445
        %v4469 = vunpack.c.h.b16 %v4445
        %v4470 = vpack.c.b16 %v4456, %v4454
        %v4471 = vpack.c.b16 %v4457, %v4455
        %v4472 = vpack.c.b16 %v4460, %v4458
        %v4473 = vpack.c.b16 %v4461, %v4459
        %v4474 = vpack.c.b16 %v4464, %v4462
        %v4475 = vpack.c.b16 %v4465, %v4463
        %v4476 = vpack.c.b16 %v4468, %v4466
        %v4477 = vpack.c.b16 %v4469, %v4467
        %v4487 = vsel %vm2165, %v4419, 0
        %v4490 = vsel %vm2165, %v4420, 0
        %v4493 = vsel %vm2165, %v4421, 0
        %v4496 = vsel %vm2165, %v4422, 0
        %v4499 = vsel %vm2165, %v4423, 0
        %v4502 = vsel %vm2165, %v4424, 0
        %v4505 = vsel %vm2165, %v4425, 0
        %v4508 = vsel %vm2165, %v4426, 0
        %v4511 = vsel %vm2165, %v4427, 0
        %v4514 = vsel %vm2165, %v4428, 0
        %v4517 = vsel %vm2165, %v4429, 0
        %v4520 = vsel %vm2165, %v4430, 0
        %v4523 = vsel %vm2165, %v4431, 0
        %v4526 = vsel %vm2165, %v4432, 0
        %v4529 = vsel %vm2165, %v4433, 0
        %v4532 = vsel %vm2165, %v4434, 0
        %v4535 = vsel %vm2165, %v4435, 0
        %v4538 = vsel %vm2165, %v4436, 0
        %v4541 = vsel %vm2165, %v4437, 0
        %4543 = vmatprep.subr.bf16.mxu0 %v4471
        %4544 = vmatpush1.bf16.msra.mxu0 %v4470
        %4545 = vmatprep.subr.bf16.mxu0 %v4473
        %4546 = vmatpush1.bf16.msra.mxu0 %v4472
        %4547 = vmatprep.subr.bf16.mxu0 %v4475
        %4548 = vmatpush1.bf16.msra.mxu0 %v4474
        %4549 = vmatprep.subr.bf16.mxu0 %v4477
        %4550 = vmatpush1.bf16.msra.mxu0 %v4476
        %4551 = vmatprep.subr.bf16.mxu0 0
        %4552 = vmatpush1.bf16.msra.mxu0 0
        %4553 = vmatprep.subr.bf16.mxu0 0
        %4554 = vmatpush1.bf16.msra.mxu0 0
        %4555 = vmatprep.subr.bf16.mxu0 0
        %4556 = vmatpush1.bf16.msra.mxu0 0
        %4557 = vmatprep.subr.bf16.mxu0 0
        %4558 = vmatpush1.bf16.msra.mxu0 0
        %4559 = vmatprep.subr.bf16.mxu0 0
        %4560 = vmatpush1.bf16.msra.mxu0 0
        %4561 = vmatprep.subr.bf16.mxu0 0
        %4562 = vmatpush1.bf16.msra.mxu0 0
        %4563 = vmatprep.subr.bf16.mxu0 0
        %4564 = vmatpush1.bf16.msra.mxu0 0
        %4565 = vmatprep.subr.bf16.mxu0 0
        %4566 = vmatpush1.bf16.msra.mxu0 0
        %4567 = vmatprep.subr.bf16.mxu0 0
        %4568 = vmatpush1.bf16.msra.mxu0 0
        %4569 = vmatprep.subr.bf16.mxu0 0
        %4570 = vmatpush1.bf16.msra.mxu0 0
        %4571 = vmatprep.subr.bf16.mxu0 0
        %4572 = vmatpush1.bf16.msra.mxu0 0
        %4573 = vmatprep.subr.bf16.mxu0 0
        %4574 = vmatpush1.bf16.msra.mxu0 0
        %4575 = vmatprep.mubr.bf16.mxu0 0
        %4576 = vmatmul.mubr.bf16.gmra.mrb[0].mxu0 %v4487
        %v4577 = vpop.f32.mrb[0].mxu0
        %v4578 = vadd.f32 %v2118, %v4577
        %v4579 = vpop.f32.mrb[0].mxu0
        %v4580 = vadd.f32 %v2122, %v4579
        %v4581 = vpop.f32.mrb[0].mxu0
        %v4582 = vadd.f32 %v2118, %v4581
        %v4583 = vpop.f32.mrb[0].mxu0
        %v4584 = vadd.f32 %v2122, %v4583
        %4585 = vmatprep.mubr.bf16.mxu0 0
        %4586 = vmatmul.mubr.bf16.gmra.mrb[0].mxu0 %v4490
        %v4587 = vpop.f32.mrb[0].mxu0
        %v4588 = vadd.f32 %v2118, %v4587
        %v4589 = vpop.f32.mrb[0].mxu0
        %v4590 = vadd.f32 %v2122, %v4589
        %v4591 = vpop.f32.mrb[0].mxu0
        %v4592 = vadd.f32 %v2118, %v4591
        %v4593 = vpop.f32.mrb[0].mxu0
        %v4594 = vadd.f32 %v2122, %v4593
        %4595 = vmatprep.mubr.bf16.mxu0 0
        %4596 = vmatmul.mubr.bf16.gmra.mrb[0].mxu0 %v4493
        %v4597 = vpop.f32.mrb[0].mxu0
        %v4598 = vadd.f32 %v2118, %v4597
        %v4599 = vpop.f32.mrb[0].mxu0
        %v4600 = vadd.f32 %v2122, %v4599
        %v4601 = vpop.f32.mrb[0].mxu0
        %v4602 = vadd.f32 %v2118, %v4601
        %v4603 = vpop.f32.mrb[0].mxu0
        %v4604 = vadd.f32 %v2122, %v4603
        %4605 = vmatprep.mubr.bf16.mxu0 0
        %4606 = vmatmul.mubr.bf16.gmra.mrb[0].mxu0 %v4496
        %v4607 = vpop.f32.mrb[0].mxu0
        %v4608 = vadd.f32 %v2118, %v4607
        %v4609 = vpop.f32.mrb[0].mxu0
        %v4610 = vadd.f32 %v2122, %v4609
        %v4611 = vpop.f32.mrb[0].mxu0
        %v4612 = vadd.f32 %v2118, %v4611
        %v4613 = vpop.f32.mrb[0].mxu0
        %v4614 = vadd.f32 %v2122, %v4613
        %4615 = vmatprep.mubr.bf16.mxu0 0
        %4616 = vmatmul.mubr.bf16.gmra.mrb[0].mxu0 %v4499
        %v4617 = vpop.f32.mrb[0].mxu0
        %v4618 = vadd.f32 %v2118, %v4617
        %v4619 = vpop.f32.mrb[0].mxu0
        %v4620 = vadd.f32 %v2122, %v4619
        %v4621 = vpop.f32.mrb[0].mxu0
        %v4622 = vadd.f32 %v2118, %v4621
        %v4623 = vpop.f32.mrb[0].mxu0
        %v4624 = vadd.f32 %v2122, %v4623
        %4625 = vmatprep.mubr.bf16.mxu0 0
        %4626 = vmatmul.mubr.bf16.gmra.mrb[0].mxu0 %v4502
        %v4627 = vpop.f32.mrb[0].mxu0
        %v4628 = vadd.f32 %v2118, %v4627
        %v4629 = vpop.f32.mrb[0].mxu0
        %v4630 = vadd.f32 %v2122, %v4629
        %v4631 = vpop.f32.mrb[0].mxu0
        %v4632 = vadd.f32 %v2118, %v4631
        %v4633 = vpop.f32.mrb[0].mxu0
        %v4634 = vadd.f32 %v2122, %v4633
        %4635 = vmatprep.mubr.bf16.mxu0 0
        %4636 = vmatmul.mubr.bf16.gmra.mrb[0].mxu0 %v4505
        %v4637 = vpop.f32.mrb[0].mxu0
        %v4638 = vadd.f32 %v2118, %v4637
        %v4639 = vpop.f32.mrb[0].mxu0
        %v4640 = vadd.f32 %v2122, %v4639
        %v4641 = vpop.f32.mrb[0].mxu0
        %v4642 = vadd.f32 %v2118, %v4641
        %v4643 = vpop.f32.mrb[0].mxu0
        %v4644 = vadd.f32 %v2122, %v4643
        %4645 = vmatprep.mubr.bf16.mxu0 0
        %4646 = vmatmul.mubr.bf16.gmra.mrb[0].mxu0 %v4508
        %v4647 = vpop.f32.mrb[0].mxu0
        %v4648 = vadd.f32 %v2118, %v4647
        %v4649 = vpop.f32.mrb[0].mxu0
        %v4650 = vadd.f32 %v2122, %v4649
        %v4651 = vpop.f32.mrb[0].mxu0
        %v4652 = vadd.f32 %v2118, %v4651
        %v4653 = vpop.f32.mrb[0].mxu0
        %v4654 = vadd.f32 %v2122, %v4653
        %4655 = vmatprep.mubr.bf16.mxu0 0
        %4656 = vmatmul.mubr.bf16.gmra.mrb[0].mxu0 %v4511
        %v4657 = vpop.f32.mrb[0].mxu0
        %v4658 = vadd.f32 %v2118, %v4657
        %v4659 = vpop.f32.mrb[0].mxu0
        %v4660 = vadd.f32 %v2122, %v4659
        %v4661 = vpop.f32.mrb[0].mxu0
        %v4662 = vadd.f32 %v2118, %v4661
        %v4663 = vpop.f32.mrb[0].mxu0
        %v4664 = vadd.f32 %v2122, %v4663
        %4665 = vmatprep.mubr.bf16.mxu0 0
        %4666 = vmatmul.mubr.bf16.gmra.mrb[0].mxu0 %v4514
        %v4667 = vpop.f32.mrb[0].mxu0
        %v4668 = vadd.f32 %v2118, %v4667
        %v4669 = vpop.f32.mrb[0].mxu0
        %v4670 = vadd.f32 %v2122, %v4669
        %v4671 = vpop.f32.mrb[0].mxu0
        %v4672 = vadd.f32 %v2118, %v4671
        %v4673 = vpop.f32.mrb[0].mxu0
        %v4674 = vadd.f32 %v2122, %v4673
        %4675 = vmatprep.mubr.bf16.mxu0 0
        %4676 = vmatmul.mubr.bf16.gmra.mrb[0].mxu0 %v4517
        %v4677 = vpop.f32.mrb[0].mxu0
        %v4678 = vadd.f32 %v2118, %v4677
        %v4679 = vpop.f32.mrb[0].mxu0
        %v4680 = vadd.f32 %v2122, %v4679
        %v4681 = vpop.f32.mrb[0].mxu0
        %v4682 = vadd.f32 %v2118, %v4681
        %v4683 = vpop.f32.mrb[0].mxu0
        %v4684 = vadd.f32 %v2122, %v4683
        %4685 = vmatprep.mubr.bf16.mxu0 0
        %4686 = vmatmul.mubr.bf16.gmra.mrb[0].mxu0 %v4520
        %v4687 = vpop.f32.mrb[0].mxu0
        %v4688 = vadd.f32 %v2118, %v4687
        %v4689 = vpop.f32.mrb[0].mxu0
        %v4690 = vadd.f32 %v2122, %v4689
        %v4691 = vpop.f32.mrb[0].mxu0
        %v4692 = vadd.f32 %v2118, %v4691
        %v4693 = vpop.f32.mrb[0].mxu0
        %v4694 = vadd.f32 %v2122, %v4693
        %4695 = vmatprep.mubr.bf16.mxu0 0
        %4696 = vmatmul.mubr.bf16.gmra.mrb[0].mxu0 %v4523
        %v4697 = vpop.f32.mrb[0].mxu0
        %v4698 = vadd.f32 %v2118, %v4697
        %v4699 = vpop.f32.mrb[0].mxu0
        %v4700 = vadd.f32 %v2122, %v4699
        %v4701 = vpop.f32.mrb[0].mxu0
        %v4702 = vadd.f32 %v2118, %v4701
        %v4703 = vpop.f32.mrb[0].mxu0
        %v4704 = vadd.f32 %v2122, %v4703
        %4705 = vmatprep.mubr.bf16.mxu0 0
        %4706 = vmatmul.mubr.bf16.gmra.mrb[0].mxu0 %v4526
        %v4707 = vpop.f32.mrb[0].mxu0
        %v4708 = vadd.f32 %v2118, %v4707
        %v4709 = vpop.f32.mrb[0].mxu0
        %v4710 = vadd.f32 %v2122, %v4709
        %v4711 = vpop.f32.mrb[0].mxu0
        %v4712 = vadd.f32 %v2118, %v4711
        %v4713 = vpop.f32.mrb[0].mxu0
        %v4714 = vadd.f32 %v2122, %v4713
        %4715 = vmatprep.mubr.bf16.mxu0 0
        %4716 = vmatmul.mubr.bf16.gmra.mrb[0].mxu0 %v4529
        %v4717 = vpop.f32.mrb[0].mxu0
        %v4718 = vadd.f32 %v2118, %v4717
        %v4719 = vpop.f32.mrb[0].mxu0
        %v4720 = vadd.f32 %v2122, %v4719
        %v4721 = vpop.f32.mrb[0].mxu0
        %v4722 = vadd.f32 %v2118, %v4721
        %v4723 = vpop.f32.mrb[0].mxu0
        %v4724 = vadd.f32 %v2122, %v4723
        %4725 = vmatprep.mubr.bf16.mxu0 0
        %4726 = vmatmul.mubr.bf16.gmra.mrb[0].mxu0 %v4532
        %v4727 = vpop.f32.mrb[0].mxu0
        %v4728 = vadd.f32 %v2118, %v4727
        %v4729 = vpop.f32.mrb[0].mxu0
        %v4730 = vadd.f32 %v2122, %v4729
        %v4731 = vpop.f32.mrb[0].mxu0
        %v4732 = vadd.f32 %v2118, %v4731
        %v4733 = vpop.f32.mrb[0].mxu0
        %v4734 = vadd.f32 %v2122, %v4733
        %4735 = vmatprep.mubr.bf16.mxu0 0
        %4736 = vmatmul.mubr.bf16.gmra.mrb[0].mxu0 %v4535
        %v4737 = vpop.f32.mrb[0].mxu0
        %v4738 = vadd.f32 %v2118, %v4737
        %v4739 = vpop.f32.mrb[0].mxu0
        %v4740 = vadd.f32 %v2122, %v4739
        %v4741 = vpop.f32.mrb[0].mxu0
        %v4742 = vadd.f32 %v2118, %v4741
        %v4743 = vpop.f32.mrb[0].mxu0
        %v4744 = vadd.f32 %v2122, %v4743
        %4745 = vmatprep.mubr.bf16.mxu0 0
        %4746 = vmatmul.mubr.bf16.gmra.mrb[0].mxu0 %v4538
        %v4747 = vpop.f32.mrb[0].mxu0
        %v4748 = vadd.f32 %v2118, %v4747
        %v4749 = vpop.f32.mrb[0].mxu0
        %v4750 = vadd.f32 %v2122, %v4749
        %v4751 = vpop.f32.mrb[0].mxu0
        %v4752 = vadd.f32 %v2118, %v4751
        %v4753 = vpop.f32.mrb[0].mxu0
        %v4754 = vadd.f32 %v2122, %v4753
        %4755 = vmatprep.mubr.bf16.mxu0 0
        %4756 = vmatmul.mubr.bf16.gmra.mrb[0].mxu0 %v4541
        %v4757 = vpop.f32.mrb[0].mxu0
        %v4758 = vadd.f32 %v2118, %v4757
        %v4759 = vpop.f32.mrb[0].mxu0
        %v4760 = vadd.f32 %v2122, %v4759
        %v4761 = vpop.f32.mrb[0].mxu0
        %v4762 = vpop.f32.mrb[0].mxu0
        %4763 = vdwg.mxu0
        %v4764 = vadd.f32 %v3955, %v4578
        %v4765 = vadd.f32 %v3956, %v4580
        %v4766 = vadd.f32 %v3957, %v4582
        %v4767 = vadd.f32 %v3958, %v4584
        %v4768 = vadd.f32 %v3959, %v4588
        %v4769 = vadd.f32 %v3960, %v4590
        %v4770 = vadd.f32 %v3961, %v4592
        %v4771 = vadd.f32 %v3962, %v4594
        %v4772 = vadd.f32 %v3963, %v4598
        %v4773 = vadd.f32 %v3964, %v4600
        %v4774 = vadd.f32 %v3965, %v4602
        %v4775 = vadd.f32 %v3966, %v4604
        %v4776 = vadd.f32 %v3967, %v4608
        %v4777 = vadd.f32 %v3968, %v4610
        %v4778 = vadd.f32 %v3969, %v4612
        %v4779 = vadd.f32 %v3970, %v4614
        %v4780 = vadd.f32 %v3971, %v4618
        %v4781 = vadd.f32 %v3972, %v4620
        %v4782 = vadd.f32 %v3973, %v4622
        %v4783 = vadd.f32 %v3974, %v4624
        %v4784 = vadd.f32 %v3975, %v4628
        %v4785 = vadd.f32 %v3976, %v4630
        %v4786 = vadd.f32 %v3977, %v4632
        %v4787 = vadd.f32 %v3978, %v4634
        %v4788 = vadd.f32 %v3979, %v4638
        %v4789 = vadd.f32 %v3980, %v4640
        %v4790 = vadd.f32 %v3981, %v4642
        %v4791 = vadd.f32 %v3982, %v4644
        %v4792 = vadd.f32 %v3983, %v4648
        %v4793 = vadd.f32 %v3984, %v4650
        %v4794 = vadd.f32 %v3985, %v4652
        %v4795 = vadd.f32 %v3986, %v4654
        %v4796 = vadd.f32 %v3987, %v4658
        %v4797 = vadd.f32 %v3988, %v4660
        %v4798 = vadd.f32 %v3989, %v4662
        %v4799 = vadd.f32 %v3990, %v4664
        %v4800 = vadd.f32 %v3991, %v4668
        %v4801 = vadd.f32 %v3992, %v4670
        %v4802 = vadd.f32 %v3993, %v4672
        %v4803 = vadd.f32 %v3994, %v4674
        %v4804 = vadd.f32 %v3995, %v4678
        %v4805 = vadd.f32 %v3996, %v4680
        %v4806 = vadd.f32 %v3997, %v4682
        %v4807 = vadd.f32 %v3998, %v4684
        %v4808 = vadd.f32 %v3999, %v4688
        %v4809 = vadd.f32 %v4000, %v4690
        %v4810 = vadd.f32 %v4001, %v4692
        %v4811 = vadd.f32 %v4002, %v4694
        %v4812 = vadd.f32 %v4003, %v4698
        %v4813 = vadd.f32 %v4004, %v4700
        %v4814 = vadd.f32 %v4005, %v4702
        %v4815 = vadd.f32 %v4006, %v4704
        %v4816 = vadd.f32 %v4007, %v4708
        %v4817 = vadd.f32 %v4008, %v4710
        %v4818 = vadd.f32 %v4009, %v4712
        %v4819 = vadd.f32 %v4010, %v4714
        %v4820 = vadd.f32 %v4011, %v4718
        %v4821 = vadd.f32 %v4012, %v4720
        %v4822 = vadd.f32 %v4013, %v4722
        %v4823 = vadd.f32 %v4014, %v4724
        %v4824 = vadd.f32 %v4015, %v4728
        %v4825 = vadd.f32 %v4016, %v4730
        %v4826 = vadd.f32 %v4017, %v4732
        %v4827 = vadd.f32 %v4018, %v4734
        %v4828 = vadd.f32 %v4019, %v4738
        %v4829 = vadd.f32 %v4020, %v4740
        %v4830 = vadd.f32 %v4021, %v4742
        %v4831 = vadd.f32 %v4022, %v4744
        %v4832 = vadd.f32 %v4023, %v4748
        %v4833 = vadd.f32 %v4024, %v4750
        %v4834 = vadd.f32 %v4025, %v4752
        %v4835 = vadd.f32 %v4026, %v4754
        %v4836 = vadd.f32 %v4027, %v4758
        %v4837 = vadd.f32 %v4028, %v4760
        %v4838 = vmax.f32 %v4764, 0.0
        %v4839 = vmax.f32 %v4765, 0.0
        %v4840 = vmax.f32 %v4766, 0.0
        %v4841 = vmax.f32 %v4767, 0.0
        %v4842 = vmax.f32 %v4768, 0.0
        %v4843 = vmax.f32 %v4769, 0.0
        %v4844 = vmax.f32 %v4770, 0.0
        %v4845 = vmax.f32 %v4771, 0.0
        %v4846 = vmax.f32 %v4772, 0.0
        %v4847 = vmax.f32 %v4773, 0.0
        %v4848 = vmax.f32 %v4774, 0.0
        %v4849 = vmax.f32 %v4775, 0.0
        %v4850 = vmax.f32 %v4776, 0.0
        %v4851 = vmax.f32 %v4777, 0.0
        %v4852 = vmax.f32 %v4778, 0.0
        %v4853 = vmax.f32 %v4779, 0.0
        %v4854 = vmax.f32 %v4780, 0.0
        %v4855 = vmax.f32 %v4781, 0.0
        %v4856 = vmax.f32 %v4782, 0.0
        %v4857 = vmax.f32 %v4783, 0.0
        %v4858 = vmax.f32 %v4784, 0.0
        %v4859 = vmax.f32 %v4785, 0.0
        %v4860 = vmax.f32 %v4786, 0.0
        %v4861 = vmax.f32 %v4787, 0.0
        %v4862 = vmax.f32 %v4788, 0.0
        %v4863 = vmax.f32 %v4789, 0.0
        %v4864 = vmax.f32 %v4790, 0.0
        %v4865 = vmax.f32 %v4791, 0.0
        %v4866 = vmax.f32 %v4792, 0.0
        %v4867 = vmax.f32 %v4793, 0.0
        %v4868 = vmax.f32 %v4794, 0.0
        %v4869 = vmax.f32 %v4795, 0.0
        %v4870 = vmax.f32 %v4796, 0.0
        %v4871 = vmax.f32 %v4797, 0.0
        %v4872 = vmax.f32 %v4798, 0.0
        %v4873 = vmax.f32 %v4799, 0.0
        %v4874 = vmax.f32 %v4800, 0.0
        %v4875 = vmax.f32 %v4801, 0.0
        %v4876 = vmax.f32 %v4802, 0.0
        %v4877 = vmax.f32 %v4803, 0.0
        %v4878 = vmax.f32 %v4804, 0.0
        %v4879 = vmax.f32 %v4805, 0.0
        %v4880 = vmax.f32 %v4806, 0.0
        %v4881 = vmax.f32 %v4807, 0.0
        %v4882 = vmax.f32 %v4808, 0.0
        %v4883 = vmax.f32 %v4809, 0.0
        %v4884 = vmax.f32 %v4810, 0.0
        %v4885 = vmax.f32 %v4811, 0.0
        %v4886 = vmax.f32 %v4812, 0.0
        %v4887 = vmax.f32 %v4813, 0.0
        %v4888 = vmax.f32 %v4814, 0.0
        %v4889 = vmax.f32 %v4815, 0.0
        %v4890 = vmax.f32 %v4816, 0.0
        %v4891 = vmax.f32 %v4817, 0.0
        %v4892 = vmax.f32 %v4818, 0.0
        %v4893 = vmax.f32 %v4819, 0.0
        %v4894 = vmax.f32 %v4820, 0.0
        %v4895 = vmax.f32 %v4821, 0.0
        %v4896 = vmax.f32 %v4822, 0.0
        %v4897 = vmax.f32 %v4823, 0.0
        %v4898 = vmax.f32 %v4824, 0.0
        %v4899 = vmax.f32 %v4825, 0.0
        %v4900 = vmax.f32 %v4826, 0.0
        %v4901 = vmax.f32 %v4827, 0.0
        %v4902 = vmax.f32 %v4828, 0.0
        %v4903 = vmax.f32 %v4829, 0.0
        %v4904 = vmax.f32 %v4830, 0.0
        %v4905 = vmax.f32 %v4831, 0.0
        %v4906 = vmax.f32 %v4832, 0.0
        %v4907 = vmax.f32 %v4833, 0.0
        %v4908 = vmax.f32 %v4834, 0.0
        %v4909 = vmax.f32 %v4835, 0.0
        %v4910 = vmax.f32 %v4836, 0.0
        %v4911 = vmax.f32 %v4837, 0.0
        %v4912 = vadd.f32 %v4838, %v4840
        %v4913 = vadd.f32 %v4912, %v4842
        %v4914 = vadd.f32 %v4913, %v4844
        %v4915 = vadd.f32 %v4914, %v4846
        %v4916 = vadd.f32 %v4915, %v4848
        %v4917 = vadd.f32 %v4916, %v4850
        %v4918 = vadd.f32 %v4917, %v4852
        %v4919 = vadd.f32 %v4918, %v4854
        %v4920 = vadd.f32 %v4919, %v4856
        %v4921 = vadd.f32 %v4920, %v4858
        %v4922 = vadd.f32 %v4921, %v4860
        %v4923 = vadd.f32 %v4922, %v4862
        %v4924 = vadd.f32 %v4923, %v4864
        %v4925 = vadd.f32 %v4924, %v4866
        %v4926 = vadd.f32 %v4925, %v4868
        %v4927 = vadd.f32 %v4926, %v4870
        %v4928 = vadd.f32 %v4927, %v4872
        %v4929 = vadd.f32 %v4928, %v4874
        %v4930 = vadd.f32 %v4929, %v4876
        %v4931 = vadd.f32 %v4930, %v4878
        %v4932 = vadd.f32 %v4931, %v4880
        %v4933 = vadd.f32 %v4932, %v4882
        %v4934 = vadd.f32 %v4933, %v4884
        %v4935 = vadd.f32 %v4934, %v4886
        %v4936 = vadd.f32 %v4935, %v4888
        %v4937 = vadd.f32 %v4936, %v4890
        %v4938 = vadd.f32 %v4937, %v4892
        %v4939 = vadd.f32 %v4938, %v4894
        %v4940 = vadd.f32 %v4939, %v4896
        %v4941 = vadd.f32 %v4940, %v4898
        %v4942 = vadd.f32 %v4941, %v4900
        %v4943 = vadd.f32 %v4942, %v4902
        %v4944 = vadd.f32 %v4943, %v4904
        %v4945 = vadd.f32 %v4944, %v4906
        %v4946 = vadd.f32 %v4945, %v4908
        %v4947 = vsel %vm534, %v4910, 0.0
        %v4948 = vadd.f32 %v4946, %v4947
        %v4949 = vrot.slane %v4948, 4
        %v4950 = vadd.f32 %v4948, %v4949
        %v4951 = vrot.slane %v4950, 2
        %v4952 = vadd.f32 %v4950, %v4951
        %v4953 = vrot.slane %v4952, 1
        %v4954 = vadd.f32 %v4952, %v4953
        %v4955 = vsel %vm543, %v4839, 0.0
        %v4956 = vsel %vm543, %v4841, 0.0
        %v4957 = vadd.f32 %v4955, %v4956
        %v4958 = vsel %vm543, %v4843, 0.0
        %v4959 = vadd.f32 %v4957, %v4958
        %v4960 = vsel %vm543, %v4845, 0.0
        %v4961 = vadd.f32 %v4959, %v4960
        %v4962 = vsel %vm543, %v4847, 0.0
        %v4963 = vadd.f32 %v4961, %v4962
        %v4964 = vsel %vm543, %v4849, 0.0
        %v4965 = vadd.f32 %v4963, %v4964
        %v4966 = vsel %vm543, %v4851, 0.0
        %v4967 = vadd.f32 %v4965, %v4966
        %v4968 = vsel %vm543, %v4853, 0.0
        %v4969 = vadd.f32 %v4967, %v4968
        %v4970 = vsel %vm543, %v4855, 0.0
        %v4971 = vadd.f32 %v4969, %v4970
        %v4972 = vsel %vm543, %v4857, 0.0
        %v4973 = vadd.f32 %v4971, %v4972
        %v4974 = vsel %vm543, %v4859, 0.0
        %v4975 = vadd.f32 %v4973, %v4974
        %v4976 = vsel %vm543, %v4861, 0.0
        %v4977 = vadd.f32 %v4975, %v4976
        %v4978 = vsel %vm543, %v4863, 0.0
        %v4979 = vadd.f32 %v4977, %v4978
        %v4980 = vsel %vm543, %v4865, 0.0
        %v4981 = vadd.f32 %v4979, %v4980
        %v4982 = vsel %vm543, %v4867, 0.0
        %v4983 = vadd.f32 %v4981, %v4982
        %v4984 = vsel %vm543, %v4869, 0.0
        %v4985 = vadd.f32 %v4983, %v4984
        %v4986 = vsel %vm543, %v4871, 0.0
        %v4987 = vadd.f32 %v4985, %v4986
        %v4988 = vsel %vm543, %v4873, 0.0
        %v4989 = vadd.f32 %v4987, %v4988
        %v4990 = vsel %vm543, %v4875, 0.0
        %v4991 = vadd.f32 %v4989, %v4990
        %v4992 = vsel %vm543, %v4877, 0.0
        %v4993 = vadd.f32 %v4991, %v4992
        %v4994 = vsel %vm543, %v4879, 0.0
        %v4995 = vadd.f32 %v4993, %v4994
        %v4996 = vsel %vm543, %v4881, 0.0
        %v4997 = vadd.f32 %v4995, %v4996
        %v4998 = vsel %vm543, %v4883, 0.0
        %v4999 = vadd.f32 %v4997, %v4998
        %v5000 = vsel %vm543, %v4885, 0.0
        %v5001 = vadd.f32 %v4999, %v5000
        %v5002 = vsel %vm543, %v4887, 0.0
        %v5003 = vadd.f32 %v5001, %v5002
        %v5004 = vsel %vm543, %v4889, 0.0
        %v5005 = vadd.f32 %v5003, %v5004
        %v5006 = vsel %vm543, %v4891, 0.0
        %v5007 = vadd.f32 %v5005, %v5006
        %v5008 = vsel %vm543, %v4893, 0.0
        %v5009 = vadd.f32 %v5007, %v5008
        %v5010 = vsel %vm543, %v4895, 0.0
        %v5011 = vadd.f32 %v5009, %v5010
        %v5012 = vsel %vm543, %v4897, 0.0
        %v5013 = vadd.f32 %v5011, %v5012
        %v5014 = vsel %vm543, %v4899, 0.0
        %v5015 = vadd.f32 %v5013, %v5014
        %v5016 = vsel %vm543, %v4901, 0.0
        %v5017 = vadd.f32 %v5015, %v5016
        %v5018 = vsel %vm543, %v4903, 0.0
        %v5019 = vadd.f32 %v5017, %v5018
        %v5020 = vsel %vm543, %v4905, 0.0
        %v5021 = vadd.f32 %v5019, %v5020
        %v5022 = vsel %vm543, %v4907, 0.0
        %v5023 = vadd.f32 %v5021, %v5022
        %v5024 = vsel %vm543, %v4909, 0.0
        %v5025 = vadd.f32 %v5023, %v5024
        %v5026 = vsel %vm615, %v4911, 0.0
        %v5027 = vadd.f32 %v5025, %v5026
        %v5028 = vrot.slane %v5027, 4
        %v5029 = vadd.f32 %v5027, %v5028
        %v5030 = vrot.slane %v5029, 2
        %v5031 = vadd.f32 %v5029, %v5030
        %v5032 = vrot.slane %v5031, 1
        %v5033 = vadd.f32 %v5031, %v5032
        %v5034 = vmul.f32 %v4954, 0.0034602077
        %v5035 = vmul.f32 %v5033, 0.0034602077
        %v5038 = vcombine.low %v5034, %v5035
        %v5040 = vunpack.c.l.s4 1966171168
        %v5041 = vunpack.c.0.s8 %v5040
        %v5042 = vlaneseq
        %v5043 = vshrl.u32 %v5042, 7
        %v5044 = vsub.s32 %v5041, %v5043
        %v5045 = vrot.slane %v5038, %v5044
        %v5047 = vunpack.c.l.s4 1966171168
        %v5048 = vunpack.c.0.s8 %v5047
        %v5049 = vlaneseq
        %v5050 = vshrl.u32 %v5049, 7
        %v5051 = vsub.s32 %v5048, %v5050
        %v5052 = vrot.slane %v5045, %v5051
        %s5054 = scalar_lea.vmem [#allocation2], 1
        %5055 = vst.msk [vmem:[%s5054] ss:$2 sm:$0x3] %vm2737, %v5052
        %v5056 = vld [vmem:[#allocation2] sm:$0xf]
        %v5059 = vunpack.c.l.s4 1983009808
        %v5060 = vunpack.c.0.s8 %v5059
        %v5061 = vlaneseq
        %v5062 = vshrl.u32 %v5061, 7
        %v5063 = vsub.s32 %v5060, %v5062
        %v5064 = vrot.slane %v5056, %v5063
        %v5065 = vcombine.high %v5064, %v5064
        %v5068 = vpack.c.bf16 %v5064, %v5064
        %v5069 = vpack.c.bf16 %v5065, %v5065
        %v5070 = vld [vmem:[%s5] sm:$0xff]
        %v5071 = vld [vmem:[%s5 + $0x8] sm:$0xff]
        %v5072 = vld [vmem:[%s5 + $0x10] sm:$0xff]
        %v5073 = vld [vmem:[%s5 + $0x18] sm:$0xff]
        %v5074 = vld [vmem:[%s5 + $0x20] sm:$0xff]
        %v5075 = vld [vmem:[%s5 + $0x28] sm:$0xff]
        %v5076 = vld [vmem:[%s5 + $0x30] sm:$0xff]
        %v5077 = vld [vmem:[%s5 + $0x38] sm:$0xff]
        %v5078 = vld [vmem:[%s5 + $0x40] sm:$0xff]
        %v5079 = vld [vmem:[%s5 + $0x48] sm:$0xff]
        %v5080 = vld [vmem:[%s5 + $0x50] sm:$0xff]
        %v5081 = vld [vmem:[%s5 + $0x58] sm:$0xff]
        %v5082 = vld [vmem:[%s5 + $0x60] sm:$0xff]
        %v5083 = vld [vmem:[%s5 + $0x68] sm:$0xff]
        %v5084 = vld [vmem:[%s5 + $0x70] sm:$0xff]
        %v5085 = vld [vmem:[%s5 + $0x78] sm:$0xff]
        %v5086 = vld [vmem:[%s5 + $0x80] sm:$0xff]
        %v5087 = vld [vmem:[%s5 + $0x88] sm:$0xff]
        %v5088 = vld [vmem:[%s5 + $0x90] sm:$0xff]
        %v5089 = vld [vmem:[%s5 + $0x98] sm:$0xff]
        %v5090 = vld [vmem:[%s5 + $0xa0] sm:$0xff]
        %v5091 = vld [vmem:[%s5 + $0xa8] sm:$0xff]
        %v5092 = vld [vmem:[%s5 + $0xb0] sm:$0xff]
        %v5093 = vld [vmem:[%s5 + $0xb8] sm:$0xff]
        %v5094 = vld [vmem:[%s5 + $0xc0] sm:$0xff]
        %v5095 = vld [vmem:[%s5 + $0xc8] sm:$0xff]
        %v5096 = vld [vmem:[%s5 + $0xd0] sm:$0xff]
        %v5097 = vld [vmem:[%s5 + $0xd8] sm:$0xff]
        %v5098 = vld [vmem:[%s5 + $0xe0] sm:$0xff]
        %v5099 = vld [vmem:[%s5 + $0xe8] sm:$0xff]
        %v5100 = vld [vmem:[%s5 + $0xf0] sm:$0xff]
        %v5101 = vld [vmem:[%s5 + $0xf8] sm:$0xff]
        %v5102 = vld [vmem:[%s5 + $0x100] sm:$0xff]
        %v5103 = vld [vmem:[%s5 + $0x108] sm:$0xff]
        %v5104 = vld [vmem:[%s5 + $0x110] sm:$0xff]
        %v5105 = vld [vmem:[%s5 + $0x118] sm:$0xff]
        %v5106 = vld [vmem:[%s5 + $0x120] sm:$0xff]
        %v5107 = vld [vmem:[%s5 + $0x128] sm:$0xff]
        %v5108 = vld [vmem:[%s5 + $0x130] sm:$0xff]
        %v5109 = vld [vmem:[%s5 + $0x138] sm:$0xff]
        %v5110 = vld [vmem:[%s5 + $0x140] sm:$0xff]
        %v5111 = vld [vmem:[%s5 + $0x148] sm:$0xff]
        %v5112 = vld [vmem:[%s5 + $0x150] sm:$0xff]
        %v5113 = vld [vmem:[%s5 + $0x158] sm:$0xff]
        %v5114 = vld [vmem:[%s5 + $0x160] sm:$0xff]
        %v5115 = vld [vmem:[%s5 + $0x168] sm:$0xff]
        %v5116 = vld [vmem:[%s5 + $0x170] sm:$0xff]
        %v5117 = vld [vmem:[%s5 + $0x178] sm:$0xff]
        %v5118 = vld [vmem:[%s5 + $0x180] sm:$0xff]
        %v5119 = vld [vmem:[%s5 + $0x188] sm:$0xff]
        %v5120 = vld [vmem:[%s5 + $0x190] sm:$0xff]
        %v5121 = vld [vmem:[%s5 + $0x198] sm:$0xff]
        %v5122 = vld [vmem:[%s5 + $0x1a0] sm:$0xff]
        %v5123 = vld [vmem:[%s5 + $0x1a8] sm:$0xff]
        %v5124 = vld [vmem:[%s5 + $0x1b0] sm:$0xff]
        %v5125 = vld [vmem:[%s5 + $0x1b8] sm:$0xff]
        %v5126 = vld [vmem:[%s5 + $0x1c0] sm:$0xff]
        %v5127 = vld [vmem:[%s5 + $0x1c8] sm:$0xff]
        %v5128 = vld [vmem:[%s5 + $0x1d0] sm:$0xff]
        %v5129 = vld [vmem:[%s5 + $0x1d8] sm:$0xff]
        %v5130 = vld [vmem:[%s5 + $0x1e0] sm:$0xff]
        %v5131 = vld [vmem:[%s5 + $0x1e8] sm:$0xff]
        %v5132 = vld [vmem:[%s5 + $0x1f0] sm:$0xff]
        %v5133 = vld [vmem:[%s5 + $0x1f8] sm:$0xff]
        %v5134 = vld [vmem:[%s5 + $0x200] sm:$0xff]
        %v5135 = vld [vmem:[%s5 + $0x208] sm:$0xff]
        %v5136 = vld [vmem:[%s5 + $0x210] sm:$0xff]
        %v5137 = vld [vmem:[%s5 + $0x218] sm:$0xff]
        %v5138 = vld [vmem:[%s5 + $0x220] sm:$0xff]
        %v5139 = vld [vmem:[%s5 + $0x228] sm:$0xff]
        %v5140 = vld [vmem:[%s5 + $0x230] sm:$0xff]
        %v5141 = vld [vmem:[%s5 + $0x238] sm:$0xff]
        %v5142 = vld [vmem:[%s5 + $0x240] sm:$0xff]
        %v5143 = vld [vmem:[%s5 + $0x248] sm:$0xff]
        %v5144 = vld [vmem:[%s5 + $0x250] sm:$0xff]
        %v5145 = vld [vmem:[%s5 + $0x258] sm:$0xff]
        %v5146 = vld [vmem:[%s5 + $0x260] sm:$0xff]
        %v5147 = vld [vmem:[%s5 + $0x268] sm:$0xff]
        %v5148 = vld [vmem:[%s5 + $0x270] sm:$0xff]
        %v5149 = vld [vmem:[%s5 + $0x278] sm:$0xff]
        %v5150 = vld [vmem:[%s5 + $0x280] sm:$0xff]
        %v5151 = vld [vmem:[%s5 + $0x288] sm:$0xff]
        %v5152 = vld [vmem:[%s5 + $0x290] sm:$0xff]
        %v5153 = vld [vmem:[%s5 + $0x298] sm:$0xff]
        %v5154 = vld [vmem:[%s5 + $0x2a0] sm:$0xff]
        %v5155 = vld [vmem:[%s5 + $0x2a8] sm:$0xff]
        %v5156 = vld [vmem:[%s5 + $0x2b0] sm:$0xff]
        %v5157 = vld [vmem:[%s5 + $0x2b8] sm:$0xff]
        %v5158 = vld [vmem:[%s5 + $0x2c0] sm:$0xff]
        %v5159 = vld [vmem:[%s5 + $0x2c8] sm:$0xff]
        %v5160 = vld [vmem:[%s5 + $0x2d0] sm:$0xff]
        %v5161 = vld [vmem:[%s5 + $0x2d8] sm:$0xff]
        %v5162 = vld [vmem:[%s5 + $0x2e0] sm:$0xff]
        %v5163 = vld [vmem:[%s5 + $0x2e8] sm:$0xff]
        %v5164 = vld [vmem:[%s5 + $0x2f0] sm:$0xff]
        %v5165 = vld [vmem:[%s5 + $0x2f8] sm:$0xff]
        %v5166 = vld [vmem:[%s5 + $0x300] sm:$0xff]
        %v5167 = vld [vmem:[%s5 + $0x308] sm:$0xff]
        %v5168 = vld [vmem:[%s5 + $0x310] sm:$0xff]
        %v5169 = vld [vmem:[%s5 + $0x318] sm:$0xff]
        %v5170 = vld [vmem:[%s5 + $0x320] sm:$0xff]
        %v5171 = vld [vmem:[%s5 + $0x328] sm:$0xff]
        %v5172 = vld [vmem:[%s5 + $0x330] sm:$0xff]
        %v5173 = vld [vmem:[%s5 + $0x338] sm:$0xff]
        %v5174 = vld [vmem:[%s5 + $0x340] sm:$0xff]
        %v5175 = vld [vmem:[%s5 + $0x348] sm:$0xff]
        %v5176 = vld [vmem:[%s5 + $0x350] sm:$0xff]
        %v5177 = vld [vmem:[%s5 + $0x358] sm:$0xff]
        %v5178 = vld [vmem:[%s5 + $0x360] sm:$0xff]
        %v5179 = vld [vmem:[%s5 + $0x368] sm:$0xff]
        %v5180 = vld [vmem:[%s5 + $0x370] sm:$0xff]
        %v5181 = vld [vmem:[%s5 + $0x378] sm:$0xff]
        %v5182 = vld [vmem:[%s5 + $0x380] sm:$0xff]
        %v5183 = vld [vmem:[%s5 + $0x388] sm:$0xff]
        %v5184 = vld [vmem:[%s5 + $0x390] sm:$0xff]
        %v5185 = vld [vmem:[%s5 + $0x398] sm:$0xff]
        %v5186 = vld [vmem:[%s5 + $0x3a0] sm:$0xff]
        %v5187 = vld [vmem:[%s5 + $0x3a8] sm:$0xff]
        %v5188 = vld [vmem:[%s5 + $0x3b0] sm:$0xff]
        %v5189 = vld [vmem:[%s5 + $0x3b8] sm:$0xff]
        %v5190 = vld [vmem:[%s5 + $0x3c0] sm:$0xff]
        %v5191 = vld [vmem:[%s5 + $0x3c8] sm:$0xff]
        %v5192 = vld [vmem:[%s5 + $0x3d0] sm:$0xff]
        %v5193 = vld [vmem:[%s5 + $0x3d8] sm:$0xff]
        %v5194 = vld [vmem:[%s5 + $0x3e0] sm:$0xff]
        %v5195 = vld [vmem:[%s5 + $0x3e8] sm:$0xff]
        %v5196 = vld [vmem:[%s5 + $0x3f0] sm:$0xff]
        %v5197 = vld [vmem:[%s5 + $0x3f8] sm:$0xff]
        %v5198 = vld [vmem:[%s5 + $0x400] sm:$0xff]
        %v5199 = vld [vmem:[%s5 + $0x408] sm:$0xff]
        %v5200 = vld [vmem:[%s5 + $0x410] sm:$0xff]
        %v5201 = vld [vmem:[%s5 + $0x418] sm:$0xff]
        %v5202 = vld [vmem:[%s5 + $0x420] sm:$0xff]
        %v5203 = vld [vmem:[%s5 + $0x428] sm:$0xff]
        %v5204 = vld [vmem:[%s5 + $0x430] sm:$0xff]
        %v5205 = vld [vmem:[%s5 + $0x438] sm:$0xff]
        %v5206 = vld [vmem:[%s5 + $0x440] sm:$0xff]
        %v5207 = vld [vmem:[%s5 + $0x448] sm:$0xff]
        %v5208 = vld [vmem:[%s5 + $0x450] sm:$0xff]
        %v5209 = vld [vmem:[%s5 + $0x458] sm:$0xff]
        %v5210 = vld [vmem:[%s5 + $0x460] sm:$0xff]
        %v5211 = vld [vmem:[%s5 + $0x468] sm:$0xff]
        %v5212 = vld [vmem:[%s5 + $0x470] sm:$0xff]
        %v5213 = vld [vmem:[%s5 + $0x478] sm:$0xff]
        %v5214 = vld [vmem:[%s5 + $0x480] sm:$0xff]
        %v5215 = vld [vmem:[%s5 + $0x488] sm:$0xff]
        %v5216 = vld [vmem:[%s5 + $0x490] sm:$0xff]
        %v5217 = vld [vmem:[%s5 + $0x498] sm:$0xff]
        %v5218 = vld [vmem:[%s5 + $0x4a0] sm:$0xff]
        %v5219 = vld [vmem:[%s5 + $0x4a8] sm:$0xff]
        %v5220 = vld [vmem:[%s5 + $0x4b0] sm:$0xff]
        %v5221 = vld [vmem:[%s5 + $0x4b8] sm:$0xff]
        %v5222 = vld [vmem:[%s5 + $0x4c0] sm:$0xff]
        %v5223 = vld [vmem:[%s5 + $0x4c8] sm:$0xff]
        %v5224 = vld [vmem:[%s5 + $0x4d0] sm:$0xff]
        %v5225 = vld [vmem:[%s5 + $0x4d8] sm:$0xff]
        %v5226 = vld [vmem:[%s5 + $0x4e0] sm:$0xff]
        %v5227 = vld [vmem:[%s5 + $0x4e8] sm:$0xff]
        %v5228 = vld [vmem:[%s5 + $0x4f0] sm:$0xff]
        %v5229 = vld [vmem:[%s5 + $0x4f8] sm:$0xff]
        %v5230 = vld [vmem:[%s5 + $0x500] sm:$0xff]
        %v5231 = vld [vmem:[%s5 + $0x508] sm:$0xff]
        %v5232 = vld [vmem:[%s5 + $0x510] sm:$0xff]
        %v5233 = vld [vmem:[%s5 + $0x518] sm:$0xff]
        %v5234 = vld [vmem:[%s5 + $0x520] sm:$0xff]
        %v5235 = vld [vmem:[%s5 + $0x528] sm:$0xff]
        %v5236 = vld [vmem:[%s5 + $0x530] sm:$0xff]
        %v5237 = vld [vmem:[%s5 + $0x538] sm:$0xff]
        %v5238 = vld [vmem:[%s5 + $0x540] sm:$0xff]
        %v5239 = vld [vmem:[%s5 + $0x548] sm:$0xff]
        %v5240 = vld [vmem:[%s5 + $0x550] sm:$0xff]
        %v5241 = vld [vmem:[%s5 + $0x558] sm:$0xff]
        %v5242 = vld [vmem:[%s5 + $0x560] sm:$0xff]
        %v5243 = vld [vmem:[%s5 + $0x568] sm:$0xff]
        %v5244 = vld [vmem:[%s5 + $0x570] sm:$0xff]
        %v5245 = vld [vmem:[%s5 + $0x578] sm:$0xff]
        %v5246 = vld [vmem:[%s5 + $0x580] sm:$0xff]
        %v5247 = vld [vmem:[%s5 + $0x588] sm:$0xff]
        %v5248 = vld [vmem:[%s5 + $0x590] sm:$0xff]
        %v5249 = vld [vmem:[%s5 + $0x598] sm:$0xff]
        %v5250 = vld [vmem:[%s5 + $0x5a0] sm:$0xff]
        %v5251 = vld [vmem:[%s5 + $0x5a8] sm:$0xff]
        %v5252 = vld [vmem:[%s5 + $0x5b0] sm:$0xff]
        %v5253 = vld [vmem:[%s5 + $0x5b8] sm:$0xff]
        %v5254 = vld [vmem:[%s5 + $0x5c0] sm:$0xff]
        %v5255 = vld [vmem:[%s5 + $0x5c8] sm:$0xff]
        %v5256 = vld [vmem:[%s5 + $0x5d0] sm:$0xff]
        %v5257 = vld [vmem:[%s5 + $0x5d8] sm:$0xff]
        %v5258 = vld [vmem:[%s5 + $0x5e0] sm:$0xff]
        %v5259 = vld [vmem:[%s5 + $0x5e8] sm:$0xff]
        %v5260 = vld [vmem:[%s5 + $0x5f0] sm:$0xff]
        %v5261 = vld [vmem:[%s5 + $0x5f8] sm:$0xff]
        %v5262 = vld [vmem:[%s5 + $0x600] sm:$0xff]
        %v5263 = vld [vmem:[%s5 + $0x608] sm:$0xff]
        %v5264 = vld [vmem:[%s5 + $0x610] sm:$0xff]
        %v5265 = vld [vmem:[%s5 + $0x618] sm:$0xff]
        %v5266 = vld [vmem:[%s5 + $0x620] sm:$0xff]
        %v5267 = vld [vmem:[%s5 + $0x628] sm:$0xff]
        %v5268 = vld [vmem:[%s5 + $0x630] sm:$0xff]
        %v5269 = vld [vmem:[%s5 + $0x638] sm:$0xff]
        %v5270 = vld [vmem:[%s5 + $0x640] sm:$0xff]
        %v5271 = vld [vmem:[%s5 + $0x648] sm:$0xff]
        %v5272 = vld [vmem:[%s5 + $0x650] sm:$0xff]
        %v5273 = vld [vmem:[%s5 + $0x658] sm:$0xff]
        %v5274 = vld [vmem:[%s5 + $0x660] sm:$0xff]
        %v5275 = vld [vmem:[%s5 + $0x668] sm:$0xff]
        %v5276 = vld [vmem:[%s5 + $0x670] sm:$0xff]
        %v5277 = vld [vmem:[%s5 + $0x678] sm:$0xff]
        %v5278 = vld [vmem:[%s5 + $0x680] sm:$0xff]
        %v5279 = vld [vmem:[%s5 + $0x688] sm:$0xff]
        %v5280 = vld [vmem:[%s5 + $0x690] sm:$0xff]
        %v5281 = vld [vmem:[%s5 + $0x698] sm:$0xff]
        %v5282 = vld [vmem:[%s5 + $0x6a0] sm:$0xff]
        %v5283 = vld [vmem:[%s5 + $0x6a8] sm:$0xff]
        %v5284 = vld [vmem:[%s5 + $0x6b0] sm:$0xff]
        %v5285 = vld [vmem:[%s5 + $0x6b8] sm:$0xff]
        %v5286 = vld [vmem:[%s5 + $0x6c0] sm:$0xff]
        %v5287 = vld [vmem:[%s5 + $0x6c8] sm:$0xff]
        %v5288 = vld [vmem:[%s5 + $0x6d0] sm:$0xff]
        %v5289 = vld [vmem:[%s5 + $0x6d8] sm:$0xff]
        %v5290 = vld [vmem:[%s5 + $0x6e0] sm:$0xff]
        %v5291 = vld [vmem:[%s5 + $0x6e8] sm:$0xff]
        %v5292 = vld [vmem:[%s5 + $0x6f0] sm:$0xff]
        %v5293 = vld [vmem:[%s5 + $0x6f8] sm:$0xff]
        %v5294 = vld [vmem:[%s5 + $0x700] sm:$0xff]
        %v5295 = vld [vmem:[%s5 + $0x708] sm:$0xff]
        %v5296 = vld [vmem:[%s5 + $0x710] sm:$0xff]
        %v5297 = vld [vmem:[%s5 + $0x718] sm:$0xff]
        %v5298 = vld [vmem:[%s5 + $0x720] sm:$0xff]
        %v5299 = vld [vmem:[%s5 + $0x728] sm:$0xff]
        %v5300 = vld [vmem:[%s5 + $0x730] sm:$0xff]
        %v5301 = vld [vmem:[%s5 + $0x738] sm:$0xff]
        %v5302 = vld [vmem:[%s5 + $0x740] sm:$0xff]
        %v5303 = vld [vmem:[%s5 + $0x748] sm:$0xff]
        %v5304 = vld [vmem:[%s5 + $0x750] sm:$0xff]
        %v5305 = vld [vmem:[%s5 + $0x758] sm:$0xff]
        %v5306 = vld [vmem:[%s5 + $0x760] sm:$0xff]
        %v5307 = vld [vmem:[%s5 + $0x768] sm:$0xff]
        %v5308 = vld [vmem:[%s5 + $0x770] sm:$0xff]
        %v5309 = vld [vmem:[%s5 + $0x778] sm:$0xff]
        %v5310 = vld [vmem:[%s5 + $0x780] sm:$0xff]
        %v5311 = vld [vmem:[%s5 + $0x788] sm:$0xff]
        %v5312 = vld [vmem:[%s5 + $0x790] sm:$0xff]
        %v5313 = vld [vmem:[%s5 + $0x798] sm:$0xff]
        %v5314 = vld [vmem:[%s5 + $0x7a0] sm:$0xff]
        %v5315 = vld [vmem:[%s5 + $0x7a8] sm:$0xff]
        %v5316 = vld [vmem:[%s5 + $0x7b0] sm:$0xff]
        %v5317 = vld [vmem:[%s5 + $0x7b8] sm:$0xff]
        %v5318 = vld [vmem:[%s5 + $0x7c0] sm:$0xff]
        %v5319 = vld [vmem:[%s5 + $0x7c8] sm:$0xff]
        %v5320 = vld [vmem:[%s5 + $0x7d0] sm:$0xff]
        %v5321 = vld [vmem:[%s5 + $0x7d8] sm:$0xff]
        %v5322 = vld [vmem:[%s5 + $0x7e0] sm:$0xff]
        %v5323 = vld [vmem:[%s5 + $0x7e8] sm:$0xff]
        %v5324 = vld [vmem:[%s5 + $0x7f0] sm:$0xff]
        %v5325 = vld [vmem:[%s5 + $0x7f8] sm:$0xff]
        %v5326 = vld [vmem:[%s5 + $0x800] sm:$0xff]
        %v5327 = vld [vmem:[%s5 + $0x808] sm:$0xff]
        %v5328 = vld [vmem:[%s5 + $0x810] sm:$0xff]
        %v5329 = vld [vmem:[%s5 + $0x818] sm:$0xff]
        %v5330 = vld [vmem:[%s5 + $0x820] sm:$0xff]
        %v5331 = vld [vmem:[%s5 + $0x828] sm:$0xff]
        %v5332 = vld [vmem:[%s5 + $0x830] sm:$0xff]
        %v5333 = vld [vmem:[%s5 + $0x838] sm:$0xff]
        %v5334 = vld [vmem:[%s5 + $0x840] sm:$0xff]
        %v5335 = vld [vmem:[%s5 + $0x848] sm:$0xff]
        %v5336 = vld [vmem:[%s5 + $0x850] sm:$0xff]
        %v5337 = vld [vmem:[%s5 + $0x858] sm:$0xff]
        %v5338 = vld [vmem:[%s5 + $0x860] sm:$0xff]
        %v5339 = vld [vmem:[%s5 + $0x868] sm:$0xff]
        %v5340 = vld [vmem:[%s5 + $0x870] sm:$0xff]
        %v5341 = vld [vmem:[%s5 + $0x878] sm:$0xff]
        %v5342 = vld [vmem:[%s5 + $0x880] sm:$0x11]
        %v5343 = vld [vmem:[%s5 + $0x888] sm:$0x11]
        %v5344 = vld [vmem:[%s5 + $0x890] sm:$0x11]
        %v5345 = vld [vmem:[%s5 + $0x898] sm:$0x11]
        %v5346 = vld [vmem:[%s5 + $0x8a0] sm:$0x11]
        %v5347 = vld [vmem:[%s5 + $0x8a8] sm:$0x11]
        %v5348 = vld [vmem:[%s5 + $0x8b0] sm:$0x11]
        %v5349 = vld [vmem:[%s5 + $0x8b8] sm:$0x11]
        %v5350 = vld [vmem:[%s5 + $0x8c0] sm:$0x11]
        %v5351 = vld [vmem:[%s5 + $0x8c8] sm:$0x11]
        %v5352 = vld [vmem:[%s5 + $0x8d0] sm:$0x11]
        %v5353 = vld [vmem:[%s5 + $0x8d8] sm:$0x11]
        %v5354 = vld [vmem:[%s5 + $0x8e0] sm:$0x11]
        %v5355 = vld [vmem:[%s5 + $0x8e8] sm:$0x11]
        %v5356 = vld [vmem:[%s5 + $0x8f0] sm:$0x11]
        %v5357 = vld [vmem:[%s5 + $0x8f8] sm:$0x11]
        %v5358 = vld [vmem:[%s8] sm:$0xff]
        %v5359 = vld [vmem:[%s8 + $0x8] sm:$0xff]
        %v5360 = vld [vmem:[%s8 + $0x10] sm:$0xff]
        %v5361 = vld [vmem:[%s8 + $0x18] sm:$0xff]
        %v5366 = vlaneseq
        %v5367 = vshrl.u32 %v5366, 7
        %v5368 = vsub.s32 0, %v5367
        %v5369 = vrot.slane %v5358, %v5368
        %v5370 = vlaneseq
        %v5371 = vshrl.u32 %v5370, 7
        %v5372 = vsub.s32 1, %v5371
        %v5373 = vrot.slane %v5358, %v5372
        %v5374 = vlaneseq
        %v5375 = vshrl.u32 %v5374, 7
        %v5376 = vsub.s32 2, %v5375
        %v5377 = vrot.slane %v5358, %v5376
        %v5378 = vlaneseq
        %v5379 = vshrl.u32 %v5378, 7
        %v5380 = vsub.s32 3, %v5379
        %v5381 = vrot.slane %v5358, %v5380
        %v5382 = vlaneseq
        %v5383 = vshrl.u32 %v5382, 7
        %v5384 = vsub.s32 4, %v5383
        %v5385 = vrot.slane %v5358, %v5384
        %v5386 = vlaneseq
        %v5387 = vshrl.u32 %v5386, 7
        %v5388 = vsub.s32 5, %v5387
        %v5389 = vrot.slane %v5358, %v5388
        %v5390 = vlaneseq
        %v5391 = vshrl.u32 %v5390, 7
        %v5392 = vsub.s32 6, %v5391
        %v5393 = vrot.slane %v5358, %v5392
        %v5394 = vlaneseq
        %v5395 = vshrl.u32 %v5394, 7
        %v5396 = vsub.s32 7, %v5395
        %v5397 = vrot.slane %v5358, %v5396
        %v5398 = vlaneseq
        %v5399 = vshrl.u32 %v5398, 7
        %v5400 = vsub.s32 0, %v5399
        %v5401 = vrot.slane %v5359, %v5400
        %v5402 = vlaneseq
        %v5403 = vshrl.u32 %v5402, 7
        %v5404 = vsub.s32 1, %v5403
        %v5405 = vrot.slane %v5359, %v5404
        %v5406 = vlaneseq
        %v5407 = vshrl.u32 %v5406, 7
        %v5408 = vsub.s32 2, %v5407
        %v5409 = vrot.slane %v5359, %v5408
        %v5410 = vlaneseq
        %v5411 = vshrl.u32 %v5410, 7
        %v5412 = vsub.s32 3, %v5411
        %v5413 = vrot.slane %v5359, %v5412
        %v5414 = vlaneseq
        %v5415 = vshrl.u32 %v5414, 7
        %v5416 = vsub.s32 4, %v5415
        %v5417 = vrot.slane %v5359, %v5416
        %v5418 = vlaneseq
        %v5419 = vshrl.u32 %v5418, 7
        %v5420 = vsub.s32 5, %v5419
        %v5421 = vrot.slane %v5359, %v5420
        %v5422 = vlaneseq
        %v5423 = vshrl.u32 %v5422, 7
        %v5424 = vsub.s32 6, %v5423
        %v5425 = vrot.slane %v5359, %v5424
        %v5426 = vlaneseq
        %v5427 = vshrl.u32 %v5426, 7
        %v5428 = vsub.s32 7, %v5427
        %v5429 = vrot.slane %v5359, %v5428
        %v5430 = vlaneseq
        %v5431 = vshrl.u32 %v5430, 7
        %v5432 = vsub.s32 0, %v5431
        %v5433 = vrot.slane %v5360, %v5432
        %v5434 = vlaneseq
        %v5435 = vshrl.u32 %v5434, 7
        %v5436 = vsub.s32 1, %v5435
        %v5437 = vrot.slane %v5360, %v5436
        %v5438 = vlaneseq
        %v5439 = vshrl.u32 %v5438, 7
        %v5440 = vsub.s32 2, %v5439
        %v5441 = vrot.slane %v5360, %v5440
        %v5442 = vlaneseq
        %v5443 = vshrl.u32 %v5442, 7
        %v5444 = vsub.s32 3, %v5443
        %v5445 = vrot.slane %v5360, %v5444
        %v5446 = vlaneseq
        %v5447 = vshrl.u32 %v5446, 7
        %v5448 = vsub.s32 4, %v5447
        %v5449 = vrot.slane %v5360, %v5448
        %v5450 = vlaneseq
        %v5451 = vshrl.u32 %v5450, 7
        %v5452 = vsub.s32 5, %v5451
        %v5453 = vrot.slane %v5360, %v5452
        %v5454 = vlaneseq
        %v5455 = vshrl.u32 %v5454, 7
        %v5456 = vsub.s32 6, %v5455
        %v5457 = vrot.slane %v5360, %v5456
        %v5458 = vlaneseq
        %v5459 = vshrl.u32 %v5458, 7
        %v5460 = vsub.s32 7, %v5459
        %v5461 = vrot.slane %v5360, %v5460
        %v5462 = vlaneseq
        %v5463 = vshrl.u32 %v5462, 7
        %v5464 = vsub.s32 0, %v5463
        %v5465 = vrot.slane %v5361, %v5464
        %v5466 = vlaneseq
        %v5467 = vshrl.u32 %v5466, 7
        %v5468 = vsub.s32 1, %v5467
        %v5469 = vrot.slane %v5361, %v5468
        %v5470 = vlaneseq
        %v5471 = vshrl.u32 %v5470, 7
        %v5472 = vsub.s32 2, %v5471
        %v5473 = vrot.slane %v5361, %v5472
        %v5474 = vlaneseq
        %v5475 = vshrl.u32 %v5474, 7
        %v5476 = vsub.s32 3, %v5475
        %v5477 = vrot.slane %v5361, %v5476
        %v5478 = vlaneseq
        %v5479 = vshrl.u32 %v5478, 7
        %v5480 = vsub.s32 4, %v5479
        %v5481 = vrot.slane %v5361, %v5480
        %v5482 = vlaneseq
        %v5483 = vshrl.u32 %v5482, 7
        %v5484 = vsub.s32 5, %v5483
        %v5485 = vrot.slane %v5361, %v5484
        %v5486 = vlaneseq
        %v5487 = vshrl.u32 %v5486, 7
        %v5488 = vsub.s32 6, %v5487
        %v5489 = vrot.slane %v5361, %v5488
        %v5490 = vlaneseq
        %v5491 = vshrl.u32 %v5490, 7
        %v5492 = vsub.s32 7, %v5491
        %v5493 = vrot.slane %v5361, %v5492
        %v5814 = vunpack.c.l.b16 %v5070
        %v5815 = vunpack.c.h.b16 %v5070
        %v5816 = vunpack.c.l.b16 %v5071
        %v5817 = vunpack.c.h.b16 %v5071
        %v5818 = vunpack.c.l.b16 %v5072
        %v5819 = vunpack.c.h.b16 %v5072
        %v5820 = vunpack.c.l.b16 %v5073
        %v5821 = vunpack.c.h.b16 %v5073
        %v5822 = vunpack.c.l.b16 %v5074
        %v5823 = vunpack.c.h.b16 %v5074
        %v5824 = vunpack.c.l.b16 %v5075
        %v5825 = vunpack.c.h.b16 %v5075
        %v5826 = vunpack.c.l.b16 %v5076
        %v5827 = vunpack.c.h.b16 %v5076
        %v5828 = vunpack.c.l.b16 %v5077
        %v5829 = vunpack.c.h.b16 %v5077
        %v5830 = vunpack.c.l.b16 %v5078
        %v5831 = vunpack.c.h.b16 %v5078
        %v5832 = vunpack.c.l.b16 %v5079
        %v5833 = vunpack.c.h.b16 %v5079
        %v5834 = vunpack.c.l.b16 %v5080
        %v5835 = vunpack.c.h.b16 %v5080
        %v5836 = vunpack.c.l.b16 %v5081
        %v5837 = vunpack.c.h.b16 %v5081
        %v5838 = vunpack.c.l.b16 %v5082
        %v5839 = vunpack.c.h.b16 %v5082
        %v5840 = vunpack.c.l.b16 %v5083
        %v5841 = vunpack.c.h.b16 %v5083
        %v5842 = vunpack.c.l.b16 %v5084
        %v5843 = vunpack.c.h.b16 %v5084
        %v5844 = vunpack.c.l.b16 %v5085
        %v5845 = vunpack.c.h.b16 %v5085
        %v5846 = vunpack.c.l.b16 %v5086
        %v5847 = vunpack.c.h.b16 %v5086
        %v5848 = vunpack.c.l.b16 %v5087
        %v5849 = vunpack.c.h.b16 %v5087
        %v5850 = vunpack.c.l.b16 %v5088
        %v5851 = vunpack.c.h.b16 %v5088
        %v5852 = vunpack.c.l.b16 %v5089
        %v5853 = vunpack.c.h.b16 %v5089
        %v5854 = vunpack.c.l.b16 %v5090
        %v5855 = vunpack.c.h.b16 %v5090
        %v5856 = vunpack.c.l.b16 %v5091
        %v5857 = vunpack.c.h.b16 %v5091
        %v5858 = vunpack.c.l.b16 %v5092
        %v5859 = vunpack.c.h.b16 %v5092
        %v5860 = vunpack.c.l.b16 %v5093
        %v5861 = vunpack.c.h.b16 %v5093
        %v5862 = vunpack.c.l.b16 %v5094
        %v5863 = vunpack.c.h.b16 %v5094
        %v5864 = vunpack.c.l.b16 %v5095
        %v5865 = vunpack.c.h.b16 %v5095
        %v5866 = vunpack.c.l.b16 %v5096
        %v5867 = vunpack.c.h.b16 %v5096
        %v5868 = vunpack.c.l.b16 %v5097
        %v5869 = vunpack.c.h.b16 %v5097
        %v5870 = vunpack.c.l.b16 %v5098
        %v5871 = vunpack.c.h.b16 %v5098
        %v5872 = vunpack.c.l.b16 %v5099
        %v5873 = vunpack.c.h.b16 %v5099
        %v5874 = vunpack.c.l.b16 %v5100
        %v5875 = vunpack.c.h.b16 %v5100
        %v5876 = vunpack.c.l.b16 %v5101
        %v5877 = vunpack.c.h.b16 %v5101
        %v5878 = vunpack.c.l.b16 %v5102
        %v5879 = vunpack.c.h.b16 %v5102
        %v5880 = vunpack.c.l.b16 %v5103
        %v5881 = vunpack.c.h.b16 %v5103
        %v5882 = vunpack.c.l.b16 %v5104
        %v5883 = vunpack.c.h.b16 %v5104
        %v5884 = vunpack.c.l.b16 %v5105
        %v5885 = vunpack.c.h.b16 %v5105
        %v5886 = vunpack.c.l.b16 %v5106
        %v5887 = vunpack.c.h.b16 %v5106
        %v5888 = vunpack.c.l.b16 %v5107
        %v5889 = vunpack.c.h.b16 %v5107
        %v5890 = vunpack.c.l.b16 %v5108
        %v5891 = vunpack.c.h.b16 %v5108
        %v5892 = vunpack.c.l.b16 %v5109
        %v5893 = vunpack.c.h.b16 %v5109
        %v5894 = vunpack.c.l.b16 %v5110
        %v5895 = vunpack.c.h.b16 %v5110
        %v5896 = vunpack.c.l.b16 %v5111
        %v5897 = vunpack.c.h.b16 %v5111
        %v5898 = vunpack.c.l.b16 %v5112
        %v5899 = vunpack.c.h.b16 %v5112
        %v5900 = vunpack.c.l.b16 %v5113
        %v5901 = vunpack.c.h.b16 %v5113
        %v5902 = vunpack.c.l.b16 %v5114
        %v5903 = vunpack.c.h.b16 %v5114
        %v5904 = vunpack.c.l.b16 %v5115
        %v5905 = vunpack.c.h.b16 %v5115
        %v5906 = vunpack.c.l.b16 %v5116
        %v5907 = vunpack.c.h.b16 %v5116
        %v5908 = vunpack.c.l.b16 %v5117
        %v5909 = vunpack.c.h.b16 %v5117
        %v5910 = vunpack.c.l.b16 %v5118
        %v5911 = vunpack.c.h.b16 %v5118
        %v5912 = vunpack.c.l.b16 %v5119
        %v5913 = vunpack.c.h.b16 %v5119
        %v5914 = vunpack.c.l.b16 %v5120
        %v5915 = vunpack.c.h.b16 %v5120
        %v5916 = vunpack.c.l.b16 %v5121
        %v5917 = vunpack.c.h.b16 %v5121
        %v5918 = vunpack.c.l.b16 %v5122
        %v5919 = vunpack.c.h.b16 %v5122
        %v5920 = vunpack.c.l.b16 %v5123
        %v5921 = vunpack.c.h.b16 %v5123
        %v5922 = vunpack.c.l.b16 %v5124
        %v5923 = vunpack.c.h.b16 %v5124
        %v5924 = vunpack.c.l.b16 %v5125
        %v5925 = vunpack.c.h.b16 %v5125
        %v5926 = vunpack.c.l.b16 %v5126
        %v5927 = vunpack.c.h.b16 %v5126
        %v5928 = vunpack.c.l.b16 %v5127
        %v5929 = vunpack.c.h.b16 %v5127
        %v5930 = vunpack.c.l.b16 %v5128
        %v5931 = vunpack.c.h.b16 %v5128
        %v5932 = vunpack.c.l.b16 %v5129
        %v5933 = vunpack.c.h.b16 %v5129
        %v5934 = vunpack.c.l.b16 %v5130
        %v5935 = vunpack.c.h.b16 %v5130
        %v5936 = vunpack.c.l.b16 %v5131
        %v5937 = vunpack.c.h.b16 %v5131
        %v5938 = vunpack.c.l.b16 %v5132
        %v5939 = vunpack.c.h.b16 %v5132
        %v5940 = vunpack.c.l.b16 %v5133
        %v5941 = vunpack.c.h.b16 %v5133
        %v5942 = vunpack.c.l.b16 %v5134
        %v5943 = vunpack.c.h.b16 %v5134
        %v5944 = vunpack.c.l.b16 %v5135
        %v5945 = vunpack.c.h.b16 %v5135
        %v5946 = vunpack.c.l.b16 %v5136
        %v5947 = vunpack.c.h.b16 %v5136
        %v5948 = vunpack.c.l.b16 %v5137
        %v5949 = vunpack.c.h.b16 %v5137
        %v5950 = vunpack.c.l.b16 %v5138
        %v5951 = vunpack.c.h.b16 %v5138
        %v5952 = vunpack.c.l.b16 %v5139
        %v5953 = vunpack.c.h.b16 %v5139
        %v5954 = vunpack.c.l.b16 %v5140
        %v5955 = vunpack.c.h.b16 %v5140
        %v5956 = vunpack.c.l.b16 %v5141
        %v5957 = vunpack.c.h.b16 %v5141
        %v5958 = vunpack.c.l.b16 %v5142
        %v5959 = vunpack.c.h.b16 %v5142
        %v5960 = vunpack.c.l.b16 %v5143
        %v5961 = vunpack.c.h.b16 %v5143
        %v5962 = vunpack.c.l.b16 %v5144
        %v5963 = vunpack.c.h.b16 %v5144
        %v5964 = vunpack.c.l.b16 %v5145
        %v5965 = vunpack.c.h.b16 %v5145
        %v5966 = vunpack.c.l.b16 %v5146
        %v5967 = vunpack.c.h.b16 %v5146
        %v5968 = vunpack.c.l.b16 %v5147
        %v5969 = vunpack.c.h.b16 %v5147
        %v5970 = vunpack.c.l.b16 %v5148
        %v5971 = vunpack.c.h.b16 %v5148
        %v5972 = vunpack.c.l.b16 %v5149
        %v5973 = vunpack.c.h.b16 %v5149
        %v5974 = vunpack.c.l.b16 %v5150
        %v5975 = vunpack.c.h.b16 %v5150
        %v5976 = vunpack.c.l.b16 %v5151
        %v5977 = vunpack.c.h.b16 %v5151
        %v5978 = vunpack.c.l.b16 %v5152
        %v5979 = vunpack.c.h.b16 %v5152
        %v5980 = vunpack.c.l.b16 %v5153
        %v5981 = vunpack.c.h.b16 %v5153
        %v5982 = vunpack.c.l.b16 %v5154
        %v5983 = vunpack.c.h.b16 %v5154
        %v5984 = vunpack.c.l.b16 %v5155
        %v5985 = vunpack.c.h.b16 %v5155
        %v5986 = vunpack.c.l.b16 %v5156
        %v5987 = vunpack.c.h.b16 %v5156
        %v5988 = vunpack.c.l.b16 %v5157
        %v5989 = vunpack.c.h.b16 %v5157
        %v5990 = vunpack.c.l.b16 %v5158
        %v5991 = vunpack.c.h.b16 %v5158
        %v5992 = vunpack.c.l.b16 %v5159
        %v5993 = vunpack.c.h.b16 %v5159
        %v5994 = vunpack.c.l.b16 %v5160
        %v5995 = vunpack.c.h.b16 %v5160
        %v5996 = vunpack.c.l.b16 %v5161
        %v5997 = vunpack.c.h.b16 %v5161
        %v5998 = vunpack.c.l.b16 %v5162
        %v5999 = vunpack.c.h.b16 %v5162
        %v6000 = vunpack.c.l.b16 %v5163
        %v6001 = vunpack.c.h.b16 %v5163
        %v6002 = vunpack.c.l.b16 %v5164
        %v6003 = vunpack.c.h.b16 %v5164
        %v6004 = vunpack.c.l.b16 %v5165
        %v6005 = vunpack.c.h.b16 %v5165
        %v6006 = vunpack.c.l.b16 %v5166
        %v6007 = vunpack.c.h.b16 %v5166
        %v6008 = vunpack.c.l.b16 %v5167
        %v6009 = vunpack.c.h.b16 %v5167
        %v6010 = vunpack.c.l.b16 %v5168
        %v6011 = vunpack.c.h.b16 %v5168
        %v6012 = vunpack.c.l.b16 %v5169
        %v6013 = vunpack.c.h.b16 %v5169
        %v6014 = vunpack.c.l.b16 %v5170
        %v6015 = vunpack.c.h.b16 %v5170
        %v6016 = vunpack.c.l.b16 %v5171
        %v6017 = vunpack.c.h.b16 %v5171
        %v6018 = vunpack.c.l.b16 %v5172
        %v6019 = vunpack.c.h.b16 %v5172
        %v6020 = vunpack.c.l.b16 %v5173
        %v6021 = vunpack.c.h.b16 %v5173
        %v6022 = vunpack.c.l.b16 %v5174
        %v6023 = vunpack.c.h.b16 %v5174
        %v6024 = vunpack.c.l.b16 %v5175
        %v6025 = vunpack.c.h.b16 %v5175
        %v6026 = vunpack.c.l.b16 %v5176
        %v6027 = vunpack.c.h.b16 %v5176
        %v6028 = vunpack.c.l.b16 %v5177
        %v6029 = vunpack.c.h.b16 %v5177
        %v6030 = vunpack.c.l.b16 %v5178
        %v6031 = vunpack.c.h.b16 %v5178
        %v6032 = vunpack.c.l.b16 %v5179
        %v6033 = vunpack.c.h.b16 %v5179
        %v6034 = vunpack.c.l.b16 %v5180
        %v6035 = vunpack.c.h.b16 %v5180
        %v6036 = vunpack.c.l.b16 %v5181
        %v6037 = vunpack.c.h.b16 %v5181
        %v6038 = vunpack.c.l.b16 %v5182
        %v6039 = vunpack.c.h.b16 %v5182
        %v6040 = vunpack.c.l.b16 %v5183
        %v6041 = vunpack.c.h.b16 %v5183
        %v6042 = vunpack.c.l.b16 %v5184
        %v6043 = vunpack.c.h.b16 %v5184
        %v6044 = vunpack.c.l.b16 %v5185
        %v6045 = vunpack.c.h.b16 %v5185
        %v6046 = vunpack.c.l.b16 %v5186
        %v6047 = vunpack.c.h.b16 %v5186
        %v6048 = vunpack.c.l.b16 %v5187
        %v6049 = vunpack.c.h.b16 %v5187
        %v6050 = vunpack.c.l.b16 %v5188
        %v6051 = vunpack.c.h.b16 %v5188
        %v6052 = vunpack.c.l.b16 %v5189
        %v6053 = vunpack.c.h.b16 %v5189
        %v6054 = vunpack.c.l.b16 %v5190
        %v6055 = vunpack.c.h.b16 %v5190
        %v6056 = vunpack.c.l.b16 %v5191
        %v6057 = vunpack.c.h.b16 %v5191
        %v6058 = vunpack.c.l.b16 %v5192
        %v6059 = vunpack.c.h.b16 %v5192
        %v6060 = vunpack.c.l.b16 %v5193
        %v6061 = vunpack.c.h.b16 %v5193
        %v6062 = vunpack.c.l.b16 %v5194
        %v6063 = vunpack.c.h.b16 %v5194
        %v6064 = vunpack.c.l.b16 %v5195
        %v6065 = vunpack.c.h.b16 %v5195
        %v6066 = vunpack.c.l.b16 %v5196
        %v6067 = vunpack.c.h.b16 %v5196
        %v6068 = vunpack.c.l.b16 %v5197
        %v6069 = vunpack.c.h.b16 %v5197
        %v6070 = vunpack.c.l.b16 %v5198
        %v6071 = vunpack.c.h.b16 %v5198
        %v6072 = vunpack.c.l.b16 %v5199
        %v6073 = vunpack.c.h.b16 %v5199
        %v6074 = vunpack.c.l.b16 %v5200
        %v6075 = vunpack.c.h.b16 %v5200
        %v6076 = vunpack.c.l.b16 %v5201
        %v6077 = vunpack.c.h.b16 %v5201
        %v6078 = vunpack.c.l.b16 %v5202
        %v6079 = vunpack.c.h.b16 %v5202
        %v6080 = vunpack.c.l.b16 %v5203
        %v6081 = vunpack.c.h.b16 %v5203
        %v6082 = vunpack.c.l.b16 %v5204
        %v6083 = vunpack.c.h.b16 %v5204
        %v6084 = vunpack.c.l.b16 %v5205
        %v6085 = vunpack.c.h.b16 %v5205
        %v6086 = vunpack.c.l.b16 %v5206
        %v6087 = vunpack.c.h.b16 %v5206
        %v6088 = vunpack.c.l.b16 %v5207
        %v6089 = vunpack.c.h.b16 %v5207
        %v6090 = vunpack.c.l.b16 %v5208
        %v6091 = vunpack.c.h.b16 %v5208
        %v6092 = vunpack.c.l.b16 %v5209
        %v6093 = vunpack.c.h.b16 %v5209
        %v6094 = vunpack.c.l.b16 %v5210
        %v6095 = vunpack.c.h.b16 %v5210
        %v6096 = vunpack.c.l.b16 %v5211
        %v6097 = vunpack.c.h.b16 %v5211
        %v6098 = vunpack.c.l.b16 %v5212
        %v6099 = vunpack.c.h.b16 %v5212
        %v6100 = vunpack.c.l.b16 %v5213
        %v6101 = vunpack.c.h.b16 %v5213
        %v6102 = vunpack.c.l.b16 %v5214
        %v6103 = vunpack.c.h.b16 %v5214
        %v6104 = vunpack.c.l.b16 %v5215
        %v6105 = vunpack.c.h.b16 %v5215
        %v6106 = vunpack.c.l.b16 %v5216
        %v6107 = vunpack.c.h.b16 %v5216
        %v6108 = vunpack.c.l.b16 %v5217
        %v6109 = vunpack.c.h.b16 %v5217
        %v6110 = vunpack.c.l.b16 %v5218
        %v6111 = vunpack.c.h.b16 %v5218
        %v6112 = vunpack.c.l.b16 %v5219
        %v6113 = vunpack.c.h.b16 %v5219
        %v6114 = vunpack.c.l.b16 %v5220
        %v6115 = vunpack.c.h.b16 %v5220
        %v6116 = vunpack.c.l.b16 %v5221
        %v6117 = vunpack.c.h.b16 %v5221
        %v6118 = vunpack.c.l.b16 %v5222
        %v6119 = vunpack.c.h.b16 %v5222
        %v6120 = vunpack.c.l.b16 %v5223
        %v6121 = vunpack.c.h.b16 %v5223
        %v6122 = vunpack.c.l.b16 %v5224
        %v6123 = vunpack.c.h.b16 %v5224
        %v6124 = vunpack.c.l.b16 %v5225
        %v6125 = vunpack.c.h.b16 %v5225
        %v6126 = vunpack.c.l.b16 %v5226
        %v6127 = vunpack.c.h.b16 %v5226
        %v6128 = vunpack.c.l.b16 %v5227
        %v6129 = vunpack.c.h.b16 %v5227
        %v6130 = vunpack.c.l.b16 %v5228
        %v6131 = vunpack.c.h.b16 %v5228
        %v6132 = vunpack.c.l.b16 %v5229
        %v6133 = vunpack.c.h.b16 %v5229
        %v6134 = vunpack.c.l.b16 %v5230
        %v6135 = vunpack.c.h.b16 %v5230
        %v6136 = vunpack.c.l.b16 %v5231
        %v6137 = vunpack.c.h.b16 %v5231
        %v6138 = vunpack.c.l.b16 %v5232
        %v6139 = vunpack.c.h.b16 %v5232
        %v6140 = vunpack.c.l.b16 %v5233
        %v6141 = vunpack.c.h.b16 %v5233
        %v6142 = vunpack.c.l.b16 %v5234
        %v6143 = vunpack.c.h.b16 %v5234
        %v6144 = vunpack.c.l.b16 %v5235
        %v6145 = vunpack.c.h.b16 %v5235
        %v6146 = vunpack.c.l.b16 %v5236
        %v6147 = vunpack.c.h.b16 %v5236
        %v6148 = vunpack.c.l.b16 %v5237
        %v6149 = vunpack.c.h.b16 %v5237
        %v6150 = vunpack.c.l.b16 %v5238
        %v6151 = vunpack.c.h.b16 %v5238
        %v6152 = vunpack.c.l.b16 %v5239
        %v6153 = vunpack.c.h.b16 %v5239
        %v6154 = vunpack.c.l.b16 %v5240
        %v6155 = vunpack.c.h.b16 %v5240
        %v6156 = vunpack.c.l.b16 %v5241
        %v6157 = vunpack.c.h.b16 %v5241
        %v6158 = vunpack.c.l.b16 %v5242
        %v6159 = vunpack.c.h.b16 %v5242
        %v6160 = vunpack.c.l.b16 %v5243
        %v6161 = vunpack.c.h.b16 %v5243
        %v6162 = vunpack.c.l.b16 %v5244
        %v6163 = vunpack.c.h.b16 %v5244
        %v6164 = vunpack.c.l.b16 %v5245
        %v6165 = vunpack.c.h.b16 %v5245
        %v6166 = vunpack.c.l.b16 %v5246
        %v6167 = vunpack.c.h.b16 %v5246
        %v6168 = vunpack.c.l.b16 %v5247
        %v6169 = vunpack.c.h.b16 %v5247
        %v6170 = vunpack.c.l.b16 %v5248
        %v6171 = vunpack.c.h.b16 %v5248
        %v6172 = vunpack.c.l.b16 %v5249
        %v6173 = vunpack.c.h.b16 %v5249
        %v6174 = vunpack.c.l.b16 %v5250
        %v6175 = vunpack.c.h.b16 %v5250
        %v6176 = vunpack.c.l.b16 %v5251
        %v6177 = vunpack.c.h.b16 %v5251
        %v6178 = vunpack.c.l.b16 %v5252
        %v6179 = vunpack.c.h.b16 %v5252
        %v6180 = vunpack.c.l.b16 %v5253
        %v6181 = vunpack.c.h.b16 %v5253
        %v6182 = vunpack.c.l.b16 %v5254
        %v6183 = vunpack.c.h.b16 %v5254
        %v6184 = vunpack.c.l.b16 %v5255
        %v6185 = vunpack.c.h.b16 %v5255
        %v6186 = vunpack.c.l.b16 %v5256
        %v6187 = vunpack.c.h.b16 %v5256
        %v6188 = vunpack.c.l.b16 %v5257
        %v6189 = vunpack.c.h.b16 %v5257
        %v6190 = vunpack.c.l.b16 %v5258
        %v6191 = vunpack.c.h.b16 %v5258
        %v6192 = vunpack.c.l.b16 %v5259
        %v6193 = vunpack.c.h.b16 %v5259
        %v6194 = vunpack.c.l.b16 %v5260
        %v6195 = vunpack.c.h.b16 %v5260
        %v6196 = vunpack.c.l.b16 %v5261
        %v6197 = vunpack.c.h.b16 %v5261
        %v6198 = vunpack.c.l.b16 %v5262
        %v6199 = vunpack.c.h.b16 %v5262
        %v6200 = vunpack.c.l.b16 %v5263
        %v6201 = vunpack.c.h.b16 %v5263
        %v6202 = vunpack.c.l.b16 %v5264
        %v6203 = vunpack.c.h.b16 %v5264
        %v6204 = vunpack.c.l.b16 %v5265
        %v6205 = vunpack.c.h.b16 %v5265
        %v6206 = vunpack.c.l.b16 %v5266
        %v6207 = vunpack.c.h.b16 %v5266
        %v6208 = vunpack.c.l.b16 %v5267
        %v6209 = vunpack.c.h.b16 %v5267
        %v6210 = vunpack.c.l.b16 %v5268
        %v6211 = vunpack.c.h.b16 %v5268
        %v6212 = vunpack.c.l.b16 %v5269
        %v6213 = vunpack.c.h.b16 %v5269
        %v6214 = vunpack.c.l.b16 %v5270
        %v6215 = vunpack.c.h.b16 %v5270
        %v6216 = vunpack.c.l.b16 %v5271
        %v6217 = vunpack.c.h.b16 %v5271
        %v6218 = vunpack.c.l.b16 %v5272
        %v6219 = vunpack.c.h.b16 %v5272
        %v6220 = vunpack.c.l.b16 %v5273
        %v6221 = vunpack.c.h.b16 %v5273
        %v6222 = vunpack.c.l.b16 %v5274
        %v6223 = vunpack.c.h.b16 %v5274
        %v6224 = vunpack.c.l.b16 %v5275
        %v6225 = vunpack.c.h.b16 %v5275
        %v6226 = vunpack.c.l.b16 %v5276
        %v6227 = vunpack.c.h.b16 %v5276
        %v6228 = vunpack.c.l.b16 %v5277
        %v6229 = vunpack.c.h.b16 %v5277
        %v6230 = vunpack.c.l.b16 %v5278
        %v6231 = vunpack.c.h.b16 %v5278
        %v6232 = vunpack.c.l.b16 %v5279
        %v6233 = vunpack.c.h.b16 %v5279
        %v6234 = vunpack.c.l.b16 %v5280
        %v6235 = vunpack.c.h.b16 %v5280
        %v6236 = vunpack.c.l.b16 %v5281
        %v6237 = vunpack.c.h.b16 %v5281
        %v6238 = vunpack.c.l.b16 %v5282
        %v6239 = vunpack.c.h.b16 %v5282
        %v6240 = vunpack.c.l.b16 %v5283
        %v6241 = vunpack.c.h.b16 %v5283
        %v6242 = vunpack.c.l.b16 %v5284
        %v6243 = vunpack.c.h.b16 %v5284
        %v6244 = vunpack.c.l.b16 %v5285
        %v6245 = vunpack.c.h.b16 %v5285
        %v6246 = vunpack.c.l.b16 %v5286
        %v6247 = vunpack.c.h.b16 %v5286
        %v6248 = vunpack.c.l.b16 %v5287
        %v6249 = vunpack.c.h.b16 %v5287
        %v6250 = vunpack.c.l.b16 %v5288
        %v6251 = vunpack.c.h.b16 %v5288
        %v6252 = vunpack.c.l.b16 %v5289
        %v6253 = vunpack.c.h.b16 %v5289
        %v6254 = vunpack.c.l.b16 %v5290
        %v6255 = vunpack.c.h.b16 %v5290
        %v6256 = vunpack.c.l.b16 %v5291
        %v6257 = vunpack.c.h.b16 %v5291
        %v6258 = vunpack.c.l.b16 %v5292
        %v6259 = vunpack.c.h.b16 %v5292
        %v6260 = vunpack.c.l.b16 %v5293
        %v6261 = vunpack.c.h.b16 %v5293
        %v6262 = vunpack.c.l.b16 %v5294
        %v6263 = vunpack.c.h.b16 %v5294
        %v6264 = vunpack.c.l.b16 %v5295
        %v6265 = vunpack.c.h.b16 %v5295
        %v6266 = vunpack.c.l.b16 %v5296
        %v6267 = vunpack.c.h.b16 %v5296
        %v6268 = vunpack.c.l.b16 %v5297
        %v6269 = vunpack.c.h.b16 %v5297
        %v6270 = vunpack.c.l.b16 %v5298
        %v6271 = vunpack.c.h.b16 %v5298
        %v6272 = vunpack.c.l.b16 %v5299
        %v6273 = vunpack.c.h.b16 %v5299
        %v6274 = vunpack.c.l.b16 %v5300
        %v6275 = vunpack.c.h.b16 %v5300
        %v6276 = vunpack.c.l.b16 %v5301
        %v6277 = vunpack.c.h.b16 %v5301
        %v6278 = vunpack.c.l.b16 %v5302
        %v6279 = vunpack.c.h.b16 %v5302
        %v6280 = vunpack.c.l.b16 %v5303
        %v6281 = vunpack.c.h.b16 %v5303
        %v6282 = vunpack.c.l.b16 %v5304
        %v6283 = vunpack.c.h.b16 %v5304
        %v6284 = vunpack.c.l.b16 %v5305
        %v6285 = vunpack.c.h.b16 %v5305
        %v6286 = vunpack.c.l.b16 %v5306
        %v6287 = vunpack.c.h.b16 %v5306
        %v6288 = vunpack.c.l.b16 %v5307
        %v6289 = vunpack.c.h.b16 %v5307
        %v6290 = vunpack.c.l.b16 %v5308
        %v6291 = vunpack.c.h.b16 %v5308
        %v6292 = vunpack.c.l.b16 %v5309
        %v6293 = vunpack.c.h.b16 %v5309
        %v6294 = vunpack.c.l.b16 %v5310
        %v6295 = vunpack.c.h.b16 %v5310
        %v6296 = vunpack.c.l.b16 %v5311
        %v6297 = vunpack.c.h.b16 %v5311
        %v6298 = vunpack.c.l.b16 %v5312
        %v6299 = vunpack.c.h.b16 %v5312
        %v6300 = vunpack.c.l.b16 %v5313
        %v6301 = vunpack.c.h.b16 %v5313
        %v6302 = vunpack.c.l.b16 %v5314
        %v6303 = vunpack.c.h.b16 %v5314
        %v6304 = vunpack.c.l.b16 %v5315
        %v6305 = vunpack.c.h.b16 %v5315
        %v6306 = vunpack.c.l.b16 %v5316
        %v6307 = vunpack.c.h.b16 %v5316
        %v6308 = vunpack.c.l.b16 %v5317
        %v6309 = vunpack.c.h.b16 %v5317
        %v6310 = vunpack.c.l.b16 %v5318
        %v6311 = vunpack.c.h.b16 %v5318
        %v6312 = vunpack.c.l.b16 %v5319
        %v6313 = vunpack.c.h.b16 %v5319
        %v6314 = vunpack.c.l.b16 %v5320
        %v6315 = vunpack.c.h.b16 %v5320
        %v6316 = vunpack.c.l.b16 %v5321
        %v6317 = vunpack.c.h.b16 %v5321
        %v6318 = vunpack.c.l.b16 %v5322
        %v6319 = vunpack.c.h.b16 %v5322
        %v6320 = vunpack.c.l.b16 %v5323
        %v6321 = vunpack.c.h.b16 %v5323
        %v6322 = vunpack.c.l.b16 %v5324
        %v6323 = vunpack.c.h.b16 %v5324
        %v6324 = vunpack.c.l.b16 %v5325
        %v6325 = vunpack.c.h.b16 %v5325
        %v6326 = vunpack.c.l.b16 %v5326
        %v6327 = vunpack.c.h.b16 %v5326
        %v6328 = vunpack.c.l.b16 %v5327
        %v6329 = vunpack.c.h.b16 %v5327
        %v6330 = vunpack.c.l.b16 %v5328
        %v6331 = vunpack.c.h.b16 %v5328
        %v6332 = vunpack.c.l.b16 %v5329
        %v6333 = vunpack.c.h.b16 %v5329
        %v6334 = vunpack.c.l.b16 %v5330
        %v6335 = vunpack.c.h.b16 %v5330
        %v6336 = vunpack.c.l.b16 %v5331
        %v6337 = vunpack.c.h.b16 %v5331
        %v6338 = vunpack.c.l.b16 %v5332
        %v6339 = vunpack.c.h.b16 %v5332
        %v6340 = vunpack.c.l.b16 %v5333
        %v6341 = vunpack.c.h.b16 %v5333
        %v6342 = vunpack.c.l.b16 %v5334
        %v6343 = vunpack.c.h.b16 %v5334
        %v6344 = vunpack.c.l.b16 %v5335
        %v6345 = vunpack.c.h.b16 %v5335
        %v6346 = vunpack.c.l.b16 %v5336
        %v6347 = vunpack.c.h.b16 %v5336
        %v6348 = vunpack.c.l.b16 %v5337
        %v6349 = vunpack.c.h.b16 %v5337
        %v6350 = vunpack.c.l.b16 %v5338
        %v6351 = vunpack.c.h.b16 %v5338
        %v6352 = vunpack.c.l.b16 %v5339
        %v6353 = vunpack.c.h.b16 %v5339
        %v6354 = vunpack.c.l.b16 %v5340
        %v6355 = vunpack.c.h.b16 %v5340
        %v6356 = vunpack.c.l.b16 %v5341
        %v6357 = vunpack.c.h.b16 %v5341
        %v6358 = vunpack.c.l.b16 %v5342
        %v6359 = vunpack.c.h.b16 %v5342
        %v6360 = vunpack.c.l.b16 %v5343
        %v6361 = vunpack.c.h.b16 %v5343
        %v6362 = vunpack.c.l.b16 %v5344
        %v6363 = vunpack.c.h.b16 %v5344
        %v6364 = vunpack.c.l.b16 %v5345
        %v6365 = vunpack.c.h.b16 %v5345
        %v6366 = vunpack.c.l.b16 %v5346
        %v6367 = vunpack.c.h.b16 %v5346
        %v6368 = vunpack.c.l.b16 %v5347
        %v6369 = vunpack.c.h.b16 %v5347
        %v6370 = vunpack.c.l.b16 %v5348
        %v6371 = vunpack.c.h.b16 %v5348
        %v6372 = vunpack.c.l.b16 %v5349
        %v6373 = vunpack.c.h.b16 %v5349
        %v6374 = vunpack.c.l.b16 %v5350
        %v6375 = vunpack.c.h.b16 %v5350
        %v6376 = vunpack.c.l.b16 %v5351
        %v6377 = vunpack.c.h.b16 %v5351
        %v6378 = vunpack.c.l.b16 %v5352
        %v6379 = vunpack.c.h.b16 %v5352
        %v6380 = vunpack.c.l.b16 %v5353
        %v6381 = vunpack.c.h.b16 %v5353
        %v6382 = vunpack.c.l.b16 %v5354
        %v6383 = vunpack.c.h.b16 %v5354
        %v6384 = vunpack.c.l.b16 %v5355
        %v6385 = vunpack.c.h.b16 %v5355
        %v6386 = vunpack.c.l.b16 %v5356
        %v6387 = vunpack.c.h.b16 %v5356
        %v6388 = vunpack.c.l.b16 %v5357
        %v6389 = vunpack.c.h.b16 %v5357
        %v6390 = vpack.c.b16 %v5846, %v5814
        %v6391 = vpack.c.b16 %v5847, %v5815
        %v6392 = vpack.c.b16 %v5848, %v5816
        %v6393 = vpack.c.b16 %v5849, %v5817
        %v6394 = vpack.c.b16 %v5850, %v5818
        %v6395 = vpack.c.b16 %v5851, %v5819
        %v6396 = vpack.c.b16 %v5852, %v5820
        %v6397 = vpack.c.b16 %v5853, %v5821
        %v6398 = vpack.c.b16 %v5854, %v5822
        %v6399 = vpack.c.b16 %v5855, %v5823
        %v6400 = vpack.c.b16 %v5856, %v5824
        %v6401 = vpack.c.b16 %v5857, %v5825
        %v6402 = vpack.c.b16 %v5858, %v5826
        %v6403 = vpack.c.b16 %v5859, %v5827
        %v6404 = vpack.c.b16 %v5860, %v5828
        %v6405 = vpack.c.b16 %v5861, %v5829
        %v6406 = vpack.c.b16 %v5862, %v5830
        %v6407 = vpack.c.b16 %v5863, %v5831
        %v6408 = vpack.c.b16 %v5864, %v5832
        %v6409 = vpack.c.b16 %v5865, %v5833
        %v6410 = vpack.c.b16 %v5866, %v5834
        %v6411 = vpack.c.b16 %v5867, %v5835
        %v6412 = vpack.c.b16 %v5868, %v5836
        %v6413 = vpack.c.b16 %v5869, %v5837
        %v6414 = vpack.c.b16 %v5870, %v5838
        %v6415 = vpack.c.b16 %v5871, %v5839
        %v6416 = vpack.c.b16 %v5872, %v5840
        %v6417 = vpack.c.b16 %v5873, %v5841
        %v6418 = vpack.c.b16 %v5874, %v5842
        %v6419 = vpack.c.b16 %v5875, %v5843
        %v6420 = vpack.c.b16 %v5876, %v5844
        %v6421 = vpack.c.b16 %v5877, %v5845
        %v6422 = vpack.c.b16 %v5910, %v5878
        %v6423 = vpack.c.b16 %v5911, %v5879
        %v6424 = vpack.c.b16 %v5912, %v5880
        %v6425 = vpack.c.b16 %v5913, %v5881
        %v6426 = vpack.c.b16 %v5914, %v5882
        %v6427 = vpack.c.b16 %v5915, %v5883
        %v6428 = vpack.c.b16 %v5916, %v5884
        %v6429 = vpack.c.b16 %v5917, %v5885
        %v6430 = vpack.c.b16 %v5918, %v5886
        %v6431 = vpack.c.b16 %v5919, %v5887
        %v6432 = vpack.c.b16 %v5920, %v5888
        %v6433 = vpack.c.b16 %v5921, %v5889
        %v6434 = vpack.c.b16 %v5922, %v5890
        %v6435 = vpack.c.b16 %v5923, %v5891
        %v6436 = vpack.c.b16 %v5924, %v5892
        %v6437 = vpack.c.b16 %v5925, %v5893
        %v6438 = vpack.c.b16 %v5926, %v5894
        %v6439 = vpack.c.b16 %v5927, %v5895
        %v6440 = vpack.c.b16 %v5928, %v5896
        %v6441 = vpack.c.b16 %v5929, %v5897
        %v6442 = vpack.c.b16 %v5930, %v5898
        %v6443 = vpack.c.b16 %v5931, %v5899
        %v6444 = vpack.c.b16 %v5932, %v5900
        %v6445 = vpack.c.b16 %v5933, %v5901
        %v6446 = vpack.c.b16 %v5934, %v5902
        %v6447 = vpack.c.b16 %v5935, %v5903
        %v6448 = vpack.c.b16 %v5936, %v5904
        %v6449 = vpack.c.b16 %v5937, %v5905
        %v6450 = vpack.c.b16 %v5938, %v5906
        %v6451 = vpack.c.b16 %v5939, %v5907
        %v6452 = vpack.c.b16 %v5940, %v5908
        %v6453 = vpack.c.b16 %v5941, %v5909
        %v6454 = vpack.c.b16 %v5974, %v5942
        %v6455 = vpack.c.b16 %v5975, %v5943
        %v6456 = vpack.c.b16 %v5976, %v5944
        %v6457 = vpack.c.b16 %v5977, %v5945
        %v6458 = vpack.c.b16 %v5978, %v5946
        %v6459 = vpack.c.b16 %v5979, %v5947
        %v6460 = vpack.c.b16 %v5980, %v5948
        %v6461 = vpack.c.b16 %v5981, %v5949
        %v6462 = vpack.c.b16 %v5982, %v5950
        %v6463 = vpack.c.b16 %v5983, %v5951
        %v6464 = vpack.c.b16 %v5984, %v5952
        %v6465 = vpack.c.b16 %v5985, %v5953
        %v6466 = vpack.c.b16 %v5986, %v5954
        %v6467 = vpack.c.b16 %v5987, %v5955
        %v6468 = vpack.c.b16 %v5988, %v5956
        %v6469 = vpack.c.b16 %v5989, %v5957
        %v6470 = vpack.c.b16 %v5990, %v5958
        %v6471 = vpack.c.b16 %v5991, %v5959
        %v6472 = vpack.c.b16 %v5992, %v5960
        %v6473 = vpack.c.b16 %v5993, %v5961
        %v6474 = vpack.c.b16 %v5994, %v5962
        %v6475 = vpack.c.b16 %v5995, %v5963
        %v6476 = vpack.c.b16 %v5996, %v5964
        %v6477 = vpack.c.b16 %v5997, %v5965
        %v6478 = vpack.c.b16 %v5998, %v5966
        %v6479 = vpack.c.b16 %v5999, %v5967
        %v6480 = vpack.c.b16 %v6000, %v5968
        %v6481 = vpack.c.b16 %v6001, %v5969
        %v6482 = vpack.c.b16 %v6002, %v5970
        %v6483 = vpack.c.b16 %v6003, %v5971
        %v6484 = vpack.c.b16 %v6004, %v5972
        %v6485 = vpack.c.b16 %v6005, %v5973
        %v6486 = vpack.c.b16 %v6038, %v6006
        %v6487 = vpack.c.b16 %v6039, %v6007
        %v6488 = vpack.c.b16 %v6040, %v6008
        %v6489 = vpack.c.b16 %v6041, %v6009
        %v6490 = vpack.c.b16 %v6042, %v6010
        %v6491 = vpack.c.b16 %v6043, %v6011
        %v6492 = vpack.c.b16 %v6044, %v6012
        %v6493 = vpack.c.b16 %v6045, %v6013
        %v6494 = vpack.c.b16 %v6046, %v6014
        %v6495 = vpack.c.b16 %v6047, %v6015
        %v6496 = vpack.c.b16 %v6048, %v6016
        %v6497 = vpack.c.b16 %v6049, %v6017
        %v6498 = vpack.c.b16 %v6050, %v6018
        %v6499 = vpack.c.b16 %v6051, %v6019
        %v6500 = vpack.c.b16 %v6052, %v6020
        %v6501 = vpack.c.b16 %v6053, %v6021
        %v6502 = vpack.c.b16 %v6054, %v6022
        %v6503 = vpack.c.b16 %v6055, %v6023
        %v6504 = vpack.c.b16 %v6056, %v6024
        %v6505 = vpack.c.b16 %v6057, %v6025
        %v6506 = vpack.c.b16 %v6058, %v6026
        %v6507 = vpack.c.b16 %v6059, %v6027
        %v6508 = vpack.c.b16 %v6060, %v6028
        %v6509 = vpack.c.b16 %v6061, %v6029
        %v6510 = vpack.c.b16 %v6062, %v6030
        %v6511 = vpack.c.b16 %v6063, %v6031
        %v6512 = vpack.c.b16 %v6064, %v6032
        %v6513 = vpack.c.b16 %v6065, %v6033
        %v6514 = vpack.c.b16 %v6066, %v6034
        %v6515 = vpack.c.b16 %v6067, %v6035
        %v6516 = vpack.c.b16 %v6068, %v6036
        %v6517 = vpack.c.b16 %v6069, %v6037
        %v6518 = vpack.c.b16 %v6102, %v6070
        %v6519 = vpack.c.b16 %v6103, %v6071
        %v6520 = vpack.c.b16 %v6104, %v6072
        %v6521 = vpack.c.b16 %v6105, %v6073
        %v6522 = vpack.c.b16 %v6106, %v6074
        %v6523 = vpack.c.b16 %v6107, %v6075
        %v6524 = vpack.c.b16 %v6108, %v6076
        %v6525 = vpack.c.b16 %v6109, %v6077
        %v6526 = vpack.c.b16 %v6110, %v6078
        %v6527 = vpack.c.b16 %v6111, %v6079
        %v6528 = vpack.c.b16 %v6112, %v6080
        %v6529 = vpack.c.b16 %v6113, %v6081
        %v6530 = vpack.c.b16 %v6114, %v6082
        %v6531 = vpack.c.b16 %v6115, %v6083
        %v6532 = vpack.c.b16 %v6116, %v6084
        %v6533 = vpack.c.b16 %v6117, %v6085
        %v6534 = vpack.c.b16 %v6118, %v6086
        %v6535 = vpack.c.b16 %v6119, %v6087
        %v6536 = vpack.c.b16 %v6120, %v6088
        %v6537 = vpack.c.b16 %v6121, %v6089
        %v6538 = vpack.c.b16 %v6122, %v6090
        %v6539 = vpack.c.b16 %v6123, %v6091
        %v6540 = vpack.c.b16 %v6124, %v6092
        %v6541 = vpack.c.b16 %v6125, %v6093
        %v6542 = vpack.c.b16 %v6126, %v6094
        %v6543 = vpack.c.b16 %v6127, %v6095
        %v6544 = vpack.c.b16 %v6128, %v6096
        %v6545 = vpack.c.b16 %v6129, %v6097
        %v6546 = vpack.c.b16 %v6130, %v6098
        %v6547 = vpack.c.b16 %v6131, %v6099
        %v6548 = vpack.c.b16 %v6132, %v6100
        %v6549 = vpack.c.b16 %v6133, %v6101
        %v6550 = vpack.c.b16 %v6166, %v6134
        %v6551 = vpack.c.b16 %v6167, %v6135
        %v6552 = vpack.c.b16 %v6168, %v6136
        %v6553 = vpack.c.b16 %v6169, %v6137
        %v6554 = vpack.c.b16 %v6170, %v6138
        %v6555 = vpack.c.b16 %v6171, %v6139
        %v6556 = vpack.c.b16 %v6172, %v6140
        %v6557 = vpack.c.b16 %v6173, %v6141
        %v6558 = vpack.c.b16 %v6174, %v6142
        %v6559 = vpack.c.b16 %v6175, %v6143
        %v6560 = vpack.c.b16 %v6176, %v6144
        %v6561 = vpack.c.b16 %v6177, %v6145
        %v6562 = vpack.c.b16 %v6178, %v6146
        %v6563 = vpack.c.b16 %v6179, %v6147
        %v6564 = vpack.c.b16 %v6180, %v6148
        %v6565 = vpack.c.b16 %v6181, %v6149
        %v6566 = vpack.c.b16 %v6182, %v6150
        %v6567 = vpack.c.b16 %v6183, %v6151
        %v6568 = vpack.c.b16 %v6184, %v6152
        %v6569 = vpack.c.b16 %v6185, %v6153
        %v6570 = vpack.c.b16 %v6186, %v6154
        %v6571 = vpack.c.b16 %v6187, %v6155
        %v6572 = vpack.c.b16 %v6188, %v6156
        %v6573 = vpack.c.b16 %v6189, %v6157
        %v6574 = vpack.c.b16 %v6190, %v6158
        %v6575 = vpack.c.b16 %v6191, %v6159
        %v6576 = vpack.c.b16 %v6192, %v6160
        %v6577 = vpack.c.b16 %v6193, %v6161
        %v6578 = vpack.c.b16 %v6194, %v6162
        %v6579 = vpack.c.b16 %v6195, %v6163
        %v6580 = vpack.c.b16 %v6196, %v6164
        %v6581 = vpack.c.b16 %v6197, %v6165
        %v6582 = vpack.c.b16 %v6230, %v6198
        %v6583 = vpack.c.b16 %v6231, %v6199
        %v6584 = vpack.c.b16 %v6232, %v6200
        %v6585 = vpack.c.b16 %v6233, %v6201
        %v6586 = vpack.c.b16 %v6234, %v6202
        %v6587 = vpack.c.b16 %v6235, %v6203
        %v6588 = vpack.c.b16 %v6236, %v6204
        %v6589 = vpack.c.b16 %v6237, %v6205
        %v6590 = vpack.c.b16 %v6238, %v6206
        %v6591 = vpack.c.b16 %v6239, %v6207
        %v6592 = vpack.c.b16 %v6240, %v6208
        %v6593 = vpack.c.b16 %v6241, %v6209
        %v6594 = vpack.c.b16 %v6242, %v6210
        %v6595 = vpack.c.b16 %v6243, %v6211
        %v6596 = vpack.c.b16 %v6244, %v6212
        %v6597 = vpack.c.b16 %v6245, %v6213
        %v6598 = vpack.c.b16 %v6246, %v6214
        %v6599 = vpack.c.b16 %v6247, %v6215
        %v6600 = vpack.c.b16 %v6248, %v6216
        %v6601 = vpack.c.b16 %v6249, %v6217
        %v6602 = vpack.c.b16 %v6250, %v6218
        %v6603 = vpack.c.b16 %v6251, %v6219
        %v6604 = vpack.c.b16 %v6252, %v6220
        %v6605 = vpack.c.b16 %v6253, %v6221
        %v6606 = vpack.c.b16 %v6254, %v6222
        %v6607 = vpack.c.b16 %v6255, %v6223
        %v6608 = vpack.c.b16 %v6256, %v6224
        %v6609 = vpack.c.b16 %v6257, %v6225
        %v6610 = vpack.c.b16 %v6258, %v6226
        %v6611 = vpack.c.b16 %v6259, %v6227
        %v6612 = vpack.c.b16 %v6260, %v6228
        %v6613 = vpack.c.b16 %v6261, %v6229
        %v6614 = vpack.c.b16 %v6294, %v6262
        %v6615 = vpack.c.b16 %v6295, %v6263
        %v6616 = vpack.c.b16 %v6296, %v6264
        %v6617 = vpack.c.b16 %v6297, %v6265
        %v6618 = vpack.c.b16 %v6298, %v6266
        %v6619 = vpack.c.b16 %v6299, %v6267
        %v6620 = vpack.c.b16 %v6300, %v6268
        %v6621 = vpack.c.b16 %v6301, %v6269
        %v6622 = vpack.c.b16 %v6302, %v6270
        %v6623 = vpack.c.b16 %v6303, %v6271
        %v6624 = vpack.c.b16 %v6304, %v6272
        %v6625 = vpack.c.b16 %v6305, %v6273
        %v6626 = vpack.c.b16 %v6306, %v6274
        %v6627 = vpack.c.b16 %v6307, %v6275
        %v6628 = vpack.c.b16 %v6308, %v6276
        %v6629 = vpack.c.b16 %v6309, %v6277
        %v6630 = vpack.c.b16 %v6310, %v6278
        %v6631 = vpack.c.b16 %v6311, %v6279
        %v6632 = vpack.c.b16 %v6312, %v6280
        %v6633 = vpack.c.b16 %v6313, %v6281
        %v6634 = vpack.c.b16 %v6314, %v6282
        %v6635 = vpack.c.b16 %v6315, %v6283
        %v6636 = vpack.c.b16 %v6316, %v6284
        %v6637 = vpack.c.b16 %v6317, %v6285
        %v6638 = vpack.c.b16 %v6318, %v6286
        %v6639 = vpack.c.b16 %v6319, %v6287
        %v6640 = vpack.c.b16 %v6320, %v6288
        %v6641 = vpack.c.b16 %v6321, %v6289
        %v6642 = vpack.c.b16 %v6322, %v6290
        %v6643 = vpack.c.b16 %v6323, %v6291
        %v6644 = vpack.c.b16 %v6324, %v6292
        %v6645 = vpack.c.b16 %v6325, %v6293
        %v6646 = vpack.c.b16 %v6358, %v6326
        %v6647 = vpack.c.b16 %v6359, %v6327
        %v6648 = vpack.c.b16 %v6360, %v6328
        %v6649 = vpack.c.b16 %v6361, %v6329
        %v6650 = vpack.c.b16 %v6362, %v6330
        %v6651 = vpack.c.b16 %v6363, %v6331
        %v6652 = vpack.c.b16 %v6364, %v6332
        %v6653 = vpack.c.b16 %v6365, %v6333
        %v6654 = vpack.c.b16 %v6366, %v6334
        %v6655 = vpack.c.b16 %v6367, %v6335
        %v6656 = vpack.c.b16 %v6368, %v6336
        %v6657 = vpack.c.b16 %v6369, %v6337
        %v6658 = vpack.c.b16 %v6370, %v6338
        %v6659 = vpack.c.b16 %v6371, %v6339
        %v6660 = vpack.c.b16 %v6372, %v6340
        %v6661 = vpack.c.b16 %v6373, %v6341
        %v6662 = vpack.c.b16 %v6374, %v6342
        %v6663 = vpack.c.b16 %v6375, %v6343
        %v6664 = vpack.c.b16 %v6376, %v6344
        %v6665 = vpack.c.b16 %v6377, %v6345
        %v6666 = vpack.c.b16 %v6378, %v6346
        %v6667 = vpack.c.b16 %v6379, %v6347
        %v6668 = vpack.c.b16 %v6380, %v6348
        %v6669 = vpack.c.b16 %v6381, %v6349
        %v6670 = vpack.c.b16 %v6382, %v6350
        %v6671 = vpack.c.b16 %v6383, %v6351
        %v6672 = vpack.c.b16 %v6384, %v6352
        %v6673 = vpack.c.b16 %v6385, %v6353
        %v6674 = vpack.c.b16 %v6386, %v6354
        %v6675 = vpack.c.b16 %v6387, %v6355
        %v6676 = vpack.c.b16 %v6388, %v6356
        %v6677 = vpack.c.b16 %v6389, %v6357
        %v6935 = vsel %vm543, %v5069, 0
        %v6938 = vsel %vm1862, %v6646, 0
        %v6941 = vsel %vm1862, %v6647, 0
        %v6944 = vsel %vm1862, %v6648, 0
        %v6947 = vsel %vm1862, %v6649, 0
        %v6950 = vsel %vm1862, %v6650, 0
        %v6953 = vsel %vm1862, %v6651, 0
        %v6956 = vsel %vm1862, %v6652, 0
        %v6959 = vsel %vm1862, %v6653, 0
        %v6962 = vsel %vm1862, %v6654, 0
        %v6965 = vsel %vm1862, %v6655, 0
        %v6968 = vsel %vm1862, %v6656, 0
        %v6971 = vsel %vm1862, %v6657, 0
        %v6974 = vsel %vm1862, %v6658, 0
        %v6977 = vsel %vm1862, %v6659, 0
        %v6980 = vsel %vm1862, %v6660, 0
        %v6983 = vsel %vm1862, %v6661, 0
        %v6986 = vsel %vm1862, %v6662, 0
        %v6989 = vsel %vm1862, %v6663, 0
        %v6992 = vsel %vm1862, %v6664, 0
        %v6995 = vsel %vm1862, %v6665, 0
        %v6998 = vsel %vm1862, %v6666, 0
        %v7001 = vsel %vm1862, %v6667, 0
        %v7004 = vsel %vm1862, %v6668, 0
        %v7007 = vsel %vm1862, %v6669, 0
        %v7010 = vsel %vm1862, %v6670, 0
        %v7013 = vsel %vm1862, %v6671, 0
        %v7016 = vsel %vm1862, %v6672, 0
        %v7019 = vsel %vm1862, %v6673, 0
        %v7022 = vsel %vm1862, %v6674, 0
        %v7025 = vsel %vm1862, %v6675, 0
        %v7028 = vsel %vm1862, %v6676, 0
        %v7031 = vsel %vm1862, %v6677, 0
        %7033 = vmatprep.subr.bf16.mxu0 %v6391
        %7034 = vmatpush1.bf16.msra.mxu0 %v6390
        %7035 = vmatprep.subr.bf16.mxu0 %v6423
        %7036 = vmatpush1.bf16.msra.mxu0 %v6422
        %7037 = vmatprep.subr.bf16.mxu0 %v6455
        %7038 = vmatpush1.bf16.msra.mxu0 %v6454
        %7039 = vmatprep.subr.bf16.mxu0 %v6487
        %7040 = vmatpush1.bf16.msra.mxu0 %v6486
        %7041 = vmatprep.subr.bf16.mxu0 %v6519
        %7042 = vmatpush1.bf16.msra.mxu0 %v6518
        %7043 = vmatprep.subr.bf16.mxu0 %v6551
        %7044 = vmatpush1.bf16.msra.mxu0 %v6550
        %7045 = vmatprep.subr.bf16.mxu0 %v6583
        %7046 = vmatpush1.bf16.msra.mxu0 %v6582
        %7047 = vmatprep.subr.bf16.mxu0 %v6615
        %7048 = vmatpush1.bf16.msra.mxu0 %v6614
        %7049 = vmatprep.subr.bf16.mxu0 %v6941
        %7050 = vmatpush1.bf16.msra.mxu0 %v6938
        %7051 = vmatprep.subr.bf16.mxu0 0
        %7052 = vmatpush1.bf16.msra.mxu0 0
        %7053 = vmatprep.subr.bf16.mxu0 0
        %7054 = vmatpush1.bf16.msra.mxu0 0
        %7055 = vmatprep.subr.bf16.mxu0 0
        %7056 = vmatpush1.bf16.msra.mxu0 0
        %7057 = vmatprep.subr.bf16.mxu0 0
        %7058 = vmatpush1.bf16.msra.mxu0 0
        %7059 = vmatprep.subr.bf16.mxu0 0
        %7060 = vmatpush1.bf16.msra.mxu0 0
        %7061 = vmatprep.subr.bf16.mxu0 0
        %7062 = vmatpush1.bf16.msra.mxu0 0
        %7063 = vmatprep.subr.bf16.mxu0 0
        %7064 = vmatpush1.bf16.msra.mxu0 0
        %7065 = vmatprep.mubr.bf16.mxu0 %v6935
        %7066 = vmatmul.mubr.bf16.gmra.mrb[0].mxu0 %v5068
        %v7067 = vpop.f32.mrb[0].mxu0
        %v7068 = vadd.f32 %v5369, %v7067
        %v7069 = vpop.f32.mrb[0].mxu0
        %v7070 = vadd.f32 %v5373, %v7069
        %v7071 = vpop.f32.mrb[0].mxu0
        %v7072 = vpop.f32.mrb[0].mxu0
        %7073 = vdwg.mxu0
        %7074 = vmatprep.subr.bf16.mxu0 %v6393
        %7075 = vmatpush1.bf16.msra.mxu0 %v6392
        %7076 = vmatprep.subr.bf16.mxu0 %v6425
        %7077 = vmatpush1.bf16.msra.mxu0 %v6424
        %7078 = vmatprep.subr.bf16.mxu0 %v6457
        %7079 = vmatpush1.bf16.msra.mxu0 %v6456
        %7080 = vmatprep.subr.bf16.mxu0 %v6489
        %7081 = vmatpush1.bf16.msra.mxu0 %v6488
        %7082 = vmatprep.subr.bf16.mxu0 %v6521
        %7083 = vmatpush1.bf16.msra.mxu0 %v6520
        %7084 = vmatprep.subr.bf16.mxu0 %v6553
        %7085 = vmatpush1.bf16.msra.mxu0 %v6552
        %7086 = vmatprep.subr.bf16.mxu0 %v6585
        %7087 = vmatpush1.bf16.msra.mxu0 %v6584
        %7088 = vmatprep.subr.bf16.mxu0 %v6617
        %7089 = vmatpush1.bf16.msra.mxu0 %v6616
        %7090 = vmatprep.subr.bf16.mxu0 %v6947
        %7091 = vmatpush1.bf16.msra.mxu0 %v6944
        %7092 = vmatprep.subr.bf16.mxu0 0
        %7093 = vmatpush1.bf16.msra.mxu0 0
        %7094 = vmatprep.subr.bf16.mxu0 0
        %7095 = vmatpush1.bf16.msra.mxu0 0
        %7096 = vmatprep.subr.bf16.mxu0 0
        %7097 = vmatpush1.bf16.msra.mxu0 0
        %7098 = vmatprep.subr.bf16.mxu0 0
        %7099 = vmatpush1.bf16.msra.mxu0 0
        %7100 = vmatprep.subr.bf16.mxu0 0
        %7101 = vmatpush1.bf16.msra.mxu0 0
        %7102 = vmatprep.subr.bf16.mxu0 0
        %7103 = vmatpush1.bf16.msra.mxu0 0
        %7104 = vmatprep.subr.bf16.mxu0 0
        %7105 = vmatpush1.bf16.msra.mxu0 0
        %7106 = vmatprep.mubr.bf16.mxu0 %v6935
        %7107 = vmatmul.mubr.bf16.gmra.mrb[0].mxu0 %v5068
        %v7108 = vpop.f32.mrb[0].mxu0
        %v7109 = vadd.f32 %v5377, %v7108
        %v7110 = vpop.f32.mrb[0].mxu0
        %v7111 = vadd.f32 %v5381, %v7110
        %v7112 = vpop.f32.mrb[0].mxu0
        %v7113 = vpop.f32.mrb[0].mxu0
        %7114 = vdwg.mxu0
        %7115 = vmatprep.subr.bf16.mxu0 %v6395
        %7116 = vmatpush1.bf16.msra.mxu0 %v6394
        %7117 = vmatprep.subr.bf16.mxu0 %v6427
        %7118 = vmatpush1.bf16.msra.mxu0 %v6426
        %7119 = vmatprep.subr.bf16.mxu0 %v6459
        %7120 = vmatpush1.bf16.msra.mxu0 %v6458
        %7121 = vmatprep.subr.bf16.mxu0 %v6491
        %7122 = vmatpush1.bf16.msra.mxu0 %v6490
        %7123 = vmatprep.subr.bf16.mxu0 %v6523
        %7124 = vmatpush1.bf16.msra.mxu0 %v6522
        %7125 = vmatprep.subr.bf16.mxu0 %v6555
        %7126 = vmatpush1.bf16.msra.mxu0 %v6554
        %7127 = vmatprep.subr.bf16.mxu0 %v6587
        %7128 = vmatpush1.bf16.msra.mxu0 %v6586
        %7129 = vmatprep.subr.bf16.mxu0 %v6619
        %7130 = vmatpush1.bf16.msra.mxu0 %v6618
        %7131 = vmatprep.subr.bf16.mxu0 %v6953
        %7132 = vmatpush1.bf16.msra.mxu0 %v6950
        %7133 = vmatprep.subr.bf16.mxu0 0
        %7134 = vmatpush1.bf16.msra.mxu0 0
        %7135 = vmatprep.subr.bf16.mxu0 0
        %7136 = vmatpush1.bf16.msra.mxu0 0
        %7137 = vmatprep.subr.bf16.mxu0 0
        %7138 = vmatpush1.bf16.msra.mxu0 0
        %7139 = vmatprep.subr.bf16.mxu0 0
        %7140 = vmatpush1.bf16.msra.mxu0 0
        %7141 = vmatprep.subr.bf16.mxu0 0
        %7142 = vmatpush1.bf16.msra.mxu0 0
        %7143 = vmatprep.subr.bf16.mxu0 0
        %7144 = vmatpush1.bf16.msra.mxu0 0
        %7145 = vmatprep.subr.bf16.mxu0 0
        %7146 = vmatpush1.bf16.msra.mxu0 0
        %7147 = vmatprep.mubr.bf16.mxu0 %v6935
        %7148 = vmatmul.mubr.bf16.gmra.mrb[0].mxu0 %v5068
        %v7149 = vpop.f32.mrb[0].mxu0
        %v7150 = vadd.f32 %v5385, %v7149
        %v7151 = vpop.f32.mrb[0].mxu0
        %v7152 = vadd.f32 %v5389, %v7151
        %v7153 = vpop.f32.mrb[0].mxu0
        %v7154 = vpop.f32.mrb[0].mxu0
        %7155 = vdwg.mxu0
        %7156 = vmatprep.subr.bf16.mxu0 %v6397
        %7157 = vmatpush1.bf16.msra.mxu0 %v6396
        %7158 = vmatprep.subr.bf16.mxu0 %v6429
        %7159 = vmatpush1.bf16.msra.mxu0 %v6428
        %7160 = vmatprep.subr.bf16.mxu0 %v6461
        %7161 = vmatpush1.bf16.msra.mxu0 %v6460
        %7162 = vmatprep.subr.bf16.mxu0 %v6493
        %7163 = vmatpush1.bf16.msra.mxu0 %v6492
        %7164 = vmatprep.subr.bf16.mxu0 %v6525
        %7165 = vmatpush1.bf16.msra.mxu0 %v6524
        %7166 = vmatprep.subr.bf16.mxu0 %v6557
        %7167 = vmatpush1.bf16.msra.mxu0 %v6556
        %7168 = vmatprep.subr.bf16.mxu0 %v6589
        %7169 = vmatpush1.bf16.msra.mxu0 %v6588
        %7170 = vmatprep.subr.bf16.mxu0 %v6621
        %7171 = vmatpush1.bf16.msra.mxu0 %v6620
        %7172 = vmatprep.subr.bf16.mxu0 %v6959
        %7173 = vmatpush1.bf16.msra.mxu0 %v6956
        %7174 = vmatprep.subr.bf16.mxu0 0
        %7175 = vmatpush1.bf16.msra.mxu0 0
        %7176 = vmatprep.subr.bf16.mxu0 0
        %7177 = vmatpush1.bf16.msra.mxu0 0
        %7178 = vmatprep.subr.bf16.mxu0 0
        %7179 = vmatpush1.bf16.msra.mxu0 0
        %7180 = vmatprep.subr.bf16.mxu0 0
        %7181 = vmatpush1.bf16.msra.mxu0 0
        %7182 = vmatprep.subr.bf16.mxu0 0
        %7183 = vmatpush1.bf16.msra.mxu0 0
        %7184 = vmatprep.subr.bf16.mxu0 0
        %7185 = vmatpush1.bf16.msra.mxu0 0
        %7186 = vmatprep.subr.bf16.mxu0 0
        %7187 = vmatpush1.bf16.msra.mxu0 0
        %7188 = vmatprep.mubr.bf16.mxu0 %v6935
        %7189 = vmatmul.mubr.bf16.gmra.mrb[0].mxu0 %v5068
        %v7190 = vpop.f32.mrb[0].mxu0
        %v7191 = vadd.f32 %v5393, %v7190
        %v7192 = vpop.f32.mrb[0].mxu0
        %v7193 = vadd.f32 %v5397, %v7192
        %v7194 = vpop.f32.mrb[0].mxu0
        %v7195 = vpop.f32.mrb[0].mxu0
        %7196 = vdwg.mxu0
        %7197 = vmatprep.subr.bf16.mxu0 %v6399
        %7198 = vmatpush1.bf16.msra.mxu0 %v6398
        %7199 = vmatprep.subr.bf16.mxu0 %v6431
        %7200 = vmatpush1.bf16.msra.mxu0 %v6430
        %7201 = vmatprep.subr.bf16.mxu0 %v6463
        %7202 = vmatpush1.bf16.msra.mxu0 %v6462
        %7203 = vmatprep.subr.bf16.mxu0 %v6495
        %7204 = vmatpush1.bf16.msra.mxu0 %v6494
        %7205 = vmatprep.subr.bf16.mxu0 %v6527
        %7206 = vmatpush1.bf16.msra.mxu0 %v6526
        %7207 = vmatprep.subr.bf16.mxu0 %v6559
        %7208 = vmatpush1.bf16.msra.mxu0 %v6558
        %7209 = vmatprep.subr.bf16.mxu0 %v6591
        %7210 = vmatpush1.bf16.msra.mxu0 %v6590
        %7211 = vmatprep.subr.bf16.mxu0 %v6623
        %7212 = vmatpush1.bf16.msra.mxu0 %v6622
        %7213 = vmatprep.subr.bf16.mxu0 %v6965
        %7214 = vmatpush1.bf16.msra.mxu0 %v6962
        %7215 = vmatprep.subr.bf16.mxu0 0
        %7216 = vmatpush1.bf16.msra.mxu0 0
        %7217 = vmatprep.subr.bf16.mxu0 0
        %7218 = vmatpush1.bf16.msra.mxu0 0
        %7219 = vmatprep.subr.bf16.mxu0 0
        %7220 = vmatpush1.bf16.msra.mxu0 0
        %7221 = vmatprep.subr.bf16.mxu0 0
        %7222 = vmatpush1.bf16.msra.mxu0 0
        %7223 = vmatprep.subr.bf16.mxu0 0
        %7224 = vmatpush1.bf16.msra.mxu0 0
        %7225 = vmatprep.subr.bf16.mxu0 0
        %7226 = vmatpush1.bf16.msra.mxu0 0
        %7227 = vmatprep.subr.bf16.mxu0 0
        %7228 = vmatpush1.bf16.msra.mxu0 0
        %7229 = vmatprep.mubr.bf16.mxu0 %v6935
        %7230 = vmatmul.mubr.bf16.gmra.mrb[0].mxu0 %v5068
        %v7231 = vpop.f32.mrb[0].mxu0
        %v7232 = vadd.f32 %v5401, %v7231
        %v7233 = vpop.f32.mrb[0].mxu0
        %v7234 = vadd.f32 %v5405, %v7233
        %v7235 = vpop.f32.mrb[0].mxu0
        %v7236 = vpop.f32.mrb[0].mxu0
        %7237 = vdwg.mxu0
        %7238 = vmatprep.subr.bf16.mxu0 %v6401
        %7239 = vmatpush1.bf16.msra.mxu0 %v6400
        %7240 = vmatprep.subr.bf16.mxu0 %v6433
        %7241 = vmatpush1.bf16.msra.mxu0 %v6432
        %7242 = vmatprep.subr.bf16.mxu0 %v6465
        %7243 = vmatpush1.bf16.msra.mxu0 %v6464
        %7244 = vmatprep.subr.bf16.mxu0 %v6497
        %7245 = vmatpush1.bf16.msra.mxu0 %v6496
        %7246 = vmatprep.subr.bf16.mxu0 %v6529
        %7247 = vmatpush1.bf16.msra.mxu0 %v6528
        %7248 = vmatprep.subr.bf16.mxu0 %v6561
        %7249 = vmatpush1.bf16.msra.mxu0 %v6560
        %7250 = vmatprep.subr.bf16.mxu0 %v6593
        %7251 = vmatpush1.bf16.msra.mxu0 %v6592
        %7252 = vmatprep.subr.bf16.mxu0 %v6625
        %7253 = vmatpush1.bf16.msra.mxu0 %v6624
        %7254 = vmatprep.subr.bf16.mxu0 %v6971
        %7255 = vmatpush1.bf16.msra.mxu0 %v6968
        %7256 = vmatprep.subr.bf16.mxu0 0
        %7257 = vmatpush1.bf16.msra.mxu0 0
        %7258 = vmatprep.subr.bf16.mxu0 0
        %7259 = vmatpush1.bf16.msra.mxu0 0
        %7260 = vmatprep.subr.bf16.mxu0 0
        %7261 = vmatpush1.bf16.msra.mxu0 0
        %7262 = vmatprep.subr.bf16.mxu0 0
        %7263 = vmatpush1.bf16.msra.mxu0 0
        %7264 = vmatprep.subr.bf16.mxu0 0
        %7265 = vmatpush1.bf16.msra.mxu0 0
        %7266 = vmatprep.subr.bf16.mxu0 0
        %7267 = vmatpush1.bf16.msra.mxu0 0
        %7268 = vmatprep.subr.bf16.mxu0 0
        %7269 = vmatpush1.bf16.msra.mxu0 0
        %7270 = vmatprep.mubr.bf16.mxu0 %v6935
        %7271 = vmatmul.mubr.bf16.gmra.mrb[0].mxu0 %v5068
        %v7272 = vpop.f32.mrb[0].mxu0
        %v7273 = vadd.f32 %v5409, %v7272
        %v7274 = vpop.f32.mrb[0].mxu0
        %v7275 = vadd.f32 %v5413, %v7274
        %v7276 = vpop.f32.mrb[0].mxu0
        %v7277 = vpop.f32.mrb[0].mxu0
        %7278 = vdwg.mxu0
        %7279 = vmatprep.subr.bf16.mxu0 %v6403
        %7280 = vmatpush1.bf16.msra.mxu0 %v6402
        %7281 = vmatprep.subr.bf16.mxu0 %v6435
        %7282 = vmatpush1.bf16.msra.mxu0 %v6434
        %7283 = vmatprep.subr.bf16.mxu0 %v6467
        %7284 = vmatpush1.bf16.msra.mxu0 %v6466
        %7285 = vmatprep.subr.bf16.mxu0 %v6499
        %7286 = vmatpush1.bf16.msra.mxu0 %v6498
        %7287 = vmatprep.subr.bf16.mxu0 %v6531
        %7288 = vmatpush1.bf16.msra.mxu0 %v6530
        %7289 = vmatprep.subr.bf16.mxu0 %v6563
        %7290 = vmatpush1.bf16.msra.mxu0 %v6562
        %7291 = vmatprep.subr.bf16.mxu0 %v6595
        %7292 = vmatpush1.bf16.msra.mxu0 %v6594
        %7293 = vmatprep.subr.bf16.mxu0 %v6627
        %7294 = vmatpush1.bf16.msra.mxu0 %v6626
        %7295 = vmatprep.subr.bf16.mxu0 %v6977
        %7296 = vmatpush1.bf16.msra.mxu0 %v6974
        %7297 = vmatprep.subr.bf16.mxu0 0
        %7298 = vmatpush1.bf16.msra.mxu0 0
        %7299 = vmatprep.subr.bf16.mxu0 0
        %7300 = vmatpush1.bf16.msra.mxu0 0
        %7301 = vmatprep.subr.bf16.mxu0 0
        %7302 = vmatpush1.bf16.msra.mxu0 0
        %7303 = vmatprep.subr.bf16.mxu0 0
        %7304 = vmatpush1.bf16.msra.mxu0 0
        %7305 = vmatprep.subr.bf16.mxu0 0
        %7306 = vmatpush1.bf16.msra.mxu0 0
        %7307 = vmatprep.subr.bf16.mxu0 0
        %7308 = vmatpush1.bf16.msra.mxu0 0
        %7309 = vmatprep.subr.bf16.mxu0 0
        %7310 = vmatpush1.bf16.msra.mxu0 0
        %7311 = vmatprep.mubr.bf16.mxu0 %v6935
        %7312 = vmatmul.mubr.bf16.gmra.mrb[0].mxu0 %v5068
        %v7313 = vpop.f32.mrb[0].mxu0
        %v7314 = vadd.f32 %v5417, %v7313
        %v7315 = vpop.f32.mrb[0].mxu0
        %v7316 = vadd.f32 %v5421, %v7315
        %v7317 = vpop.f32.mrb[0].mxu0
        %v7318 = vpop.f32.mrb[0].mxu0
        %7319 = vdwg.mxu0
        %7320 = vmatprep.subr.bf16.mxu0 %v6405
        %7321 = vmatpush1.bf16.msra.mxu0 %v6404
        %7322 = vmatprep.subr.bf16.mxu0 %v6437
        %7323 = vmatpush1.bf16.msra.mxu0 %v6436
        %7324 = vmatprep.subr.bf16.mxu0 %v6469
        %7325 = vmatpush1.bf16.msra.mxu0 %v6468
        %7326 = vmatprep.subr.bf16.mxu0 %v6501
        %7327 = vmatpush1.bf16.msra.mxu0 %v6500
        %7328 = vmatprep.subr.bf16.mxu0 %v6533
        %7329 = vmatpush1.bf16.msra.mxu0 %v6532
        %7330 = vmatprep.subr.bf16.mxu0 %v6565
        %7331 = vmatpush1.bf16.msra.mxu0 %v6564
        %7332 = vmatprep.subr.bf16.mxu0 %v6597
        %7333 = vmatpush1.bf16.msra.mxu0 %v6596
        %7334 = vmatprep.subr.bf16.mxu0 %v6629
        %7335 = vmatpush1.bf16.msra.mxu0 %v6628
        %7336 = vmatprep.subr.bf16.mxu0 %v6983
        %7337 = vmatpush1.bf16.msra.mxu0 %v6980
        %7338 = vmatprep.subr.bf16.mxu0 0
        %7339 = vmatpush1.bf16.msra.mxu0 0
        %7340 = vmatprep.subr.bf16.mxu0 0
        %7341 = vmatpush1.bf16.msra.mxu0 0
        %7342 = vmatprep.subr.bf16.mxu0 0
        %7343 = vmatpush1.bf16.msra.mxu0 0
        %7344 = vmatprep.subr.bf16.mxu0 0
        %7345 = vmatpush1.bf16.msra.mxu0 0
        %7346 = vmatprep.subr.bf16.mxu0 0
        %7347 = vmatpush1.bf16.msra.mxu0 0
        %7348 = vmatprep.subr.bf16.mxu0 0
        %7349 = vmatpush1.bf16.msra.mxu0 0
        %7350 = vmatprep.subr.bf16.mxu0 0
        %7351 = vmatpush1.bf16.msra.mxu0 0
        %7352 = vmatprep.mubr.bf16.mxu0 %v6935
        %7353 = vmatmul.mubr.bf16.gmra.mrb[0].mxu0 %v5068
        %v7354 = vpop.f32.mrb[0].mxu0
        %v7355 = vadd.f32 %v5425, %v7354
        %v7356 = vpop.f32.mrb[0].mxu0
        %v7357 = vadd.f32 %v5429, %v7356
        %v7358 = vpop.f32.mrb[0].mxu0
        %v7359 = vpop.f32.mrb[0].mxu0
        %7360 = vdwg.mxu0
        %7361 = vmatprep.subr.bf16.mxu0 %v6407
        %7362 = vmatpush1.bf16.msra.mxu0 %v6406
        %7363 = vmatprep.subr.bf16.mxu0 %v6439
        %7364 = vmatpush1.bf16.msra.mxu0 %v6438
        %7365 = vmatprep.subr.bf16.mxu0 %v6471
        %7366 = vmatpush1.bf16.msra.mxu0 %v6470
        %7367 = vmatprep.subr.bf16.mxu0 %v6503
        %7368 = vmatpush1.bf16.msra.mxu0 %v6502
        %7369 = vmatprep.subr.bf16.mxu0 %v6535
        %7370 = vmatpush1.bf16.msra.mxu0 %v6534
        %7371 = vmatprep.subr.bf16.mxu0 %v6567
        %7372 = vmatpush1.bf16.msra.mxu0 %v6566
        %7373 = vmatprep.subr.bf16.mxu0 %v6599
        %7374 = vmatpush1.bf16.msra.mxu0 %v6598
        %7375 = vmatprep.subr.bf16.mxu0 %v6631
        %7376 = vmatpush1.bf16.msra.mxu0 %v6630
        %7377 = vmatprep.subr.bf16.mxu0 %v6989
        %7378 = vmatpush1.bf16.msra.mxu0 %v6986
        %7379 = vmatprep.subr.bf16.mxu0 0
        %7380 = vmatpush1.bf16.msra.mxu0 0
        %7381 = vmatprep.subr.bf16.mxu0 0
        %7382 = vmatpush1.bf16.msra.mxu0 0
        %7383 = vmatprep.subr.bf16.mxu0 0
        %7384 = vmatpush1.bf16.msra.mxu0 0
        %7385 = vmatprep.subr.bf16.mxu0 0
        %7386 = vmatpush1.bf16.msra.mxu0 0
        %7387 = vmatprep.subr.bf16.mxu0 0
        %7388 = vmatpush1.bf16.msra.mxu0 0
        %7389 = vmatprep.subr.bf16.mxu0 0
        %7390 = vmatpush1.bf16.msra.mxu0 0
        %7391 = vmatprep.subr.bf16.mxu0 0
        %7392 = vmatpush1.bf16.msra.mxu0 0
        %7393 = vmatprep.mubr.bf16.mxu0 %v6935
        %7394 = vmatmul.mubr.bf16.gmra.mrb[0].mxu0 %v5068
        %v7395 = vpop.f32.mrb[0].mxu0
        %v7396 = vadd.f32 %v5433, %v7395
        %v7397 = vpop.f32.mrb[0].mxu0
        %v7398 = vadd.f32 %v5437, %v7397
        %v7399 = vpop.f32.mrb[0].mxu0
        %v7400 = vpop.f32.mrb[0].mxu0
        %7401 = vdwg.mxu0
        %7402 = vmatprep.subr.bf16.mxu0 %v6409
        %7403 = vmatpush1.bf16.msra.mxu0 %v6408
        %7404 = vmatprep.subr.bf16.mxu0 %v6441
        %7405 = vmatpush1.bf16.msra.mxu0 %v6440
        %7406 = vmatprep.subr.bf16.mxu0 %v6473
        %7407 = vmatpush1.bf16.msra.mxu0 %v6472
        %7408 = vmatprep.subr.bf16.mxu0 %v6505
        %7409 = vmatpush1.bf16.msra.mxu0 %v6504
        %7410 = vmatprep.subr.bf16.mxu0 %v6537
        %7411 = vmatpush1.bf16.msra.mxu0 %v6536
        %7412 = vmatprep.subr.bf16.mxu0 %v6569
        %7413 = vmatpush1.bf16.msra.mxu0 %v6568
        %7414 = vmatprep.subr.bf16.mxu0 %v6601
        %7415 = vmatpush1.bf16.msra.mxu0 %v6600
        %7416 = vmatprep.subr.bf16.mxu0 %v6633
        %7417 = vmatpush1.bf16.msra.mxu0 %v6632
        %7418 = vmatprep.subr.bf16.mxu0 %v6995
        %7419 = vmatpush1.bf16.msra.mxu0 %v6992
        %7420 = vmatprep.subr.bf16.mxu0 0
        %7421 = vmatpush1.bf16.msra.mxu0 0
        %7422 = vmatprep.subr.bf16.mxu0 0
        %7423 = vmatpush1.bf16.msra.mxu0 0
        %7424 = vmatprep.subr.bf16.mxu0 0
        %7425 = vmatpush1.bf16.msra.mxu0 0
        %7426 = vmatprep.subr.bf16.mxu0 0
        %7427 = vmatpush1.bf16.msra.mxu0 0
        %7428 = vmatprep.subr.bf16.mxu0 0
        %7429 = vmatpush1.bf16.msra.mxu0 0
        %7430 = vmatprep.subr.bf16.mxu0 0
        %7431 = vmatpush1.bf16.msra.mxu0 0
        %7432 = vmatprep.subr.bf16.mxu0 0
        %7433 = vmatpush1.bf16.msra.mxu0 0
        %7434 = vmatprep.mubr.bf16.mxu0 %v6935
        %7435 = vmatmul.mubr.bf16.gmra.mrb[0].mxu0 %v5068
        %v7436 = vpop.f32.mrb[0].mxu0
        %v7437 = vadd.f32 %v5441, %v7436
        %v7438 = vpop.f32.mrb[0].mxu0
        %v7439 = vadd.f32 %v5445, %v7438
        %v7440 = vpop.f32.mrb[0].mxu0
        %v7441 = vpop.f32.mrb[0].mxu0
        %7442 = vdwg.mxu0
        %7443 = vmatprep.subr.bf16.mxu0 %v6411
        %7444 = vmatpush1.bf16.msra.mxu0 %v6410
        %7445 = vmatprep.subr.bf16.mxu0 %v6443
        %7446 = vmatpush1.bf16.msra.mxu0 %v6442
        %7447 = vmatprep.subr.bf16.mxu0 %v6475
        %7448 = vmatpush1.bf16.msra.mxu0 %v6474
        %7449 = vmatprep.subr.bf16.mxu0 %v6507
        %7450 = vmatpush1.bf16.msra.mxu0 %v6506
        %7451 = vmatprep.subr.bf16.mxu0 %v6539
        %7452 = vmatpush1.bf16.msra.mxu0 %v6538
        %7453 = vmatprep.subr.bf16.mxu0 %v6571
        %7454 = vmatpush1.bf16.msra.mxu0 %v6570
        %7455 = vmatprep.subr.bf16.mxu0 %v6603
        %7456 = vmatpush1.bf16.msra.mxu0 %v6602
        %7457 = vmatprep.subr.bf16.mxu0 %v6635
        %7458 = vmatpush1.bf16.msra.mxu0 %v6634
        %7459 = vmatprep.subr.bf16.mxu0 %v7001
        %7460 = vmatpush1.bf16.msra.mxu0 %v6998
        %7461 = vmatprep.subr.bf16.mxu0 0
        %7462 = vmatpush1.bf16.msra.mxu0 0
        %7463 = vmatprep.subr.bf16.mxu0 0
        %7464 = vmatpush1.bf16.msra.mxu0 0
        %7465 = vmatprep.subr.bf16.mxu0 0
        %7466 = vmatpush1.bf16.msra.mxu0 0
        %7467 = vmatprep.subr.bf16.mxu0 0
        %7468 = vmatpush1.bf16.msra.mxu0 0
        %7469 = vmatprep.subr.bf16.mxu0 0
        %7470 = vmatpush1.bf16.msra.mxu0 0
        %7471 = vmatprep.subr.bf16.mxu0 0
        %7472 = vmatpush1.bf16.msra.mxu0 0
        %7473 = vmatprep.subr.bf16.mxu0 0
        %7474 = vmatpush1.bf16.msra.mxu0 0
        %7475 = vmatprep.mubr.bf16.mxu0 %v6935
        %7476 = vmatmul.mubr.bf16.gmra.mrb[0].mxu0 %v5068
        %v7477 = vpop.f32.mrb[0].mxu0
        %v7478 = vadd.f32 %v5449, %v7477
        %v7479 = vpop.f32.mrb[0].mxu0
        %v7480 = vadd.f32 %v5453, %v7479
        %v7481 = vpop.f32.mrb[0].mxu0
        %v7482 = vpop.f32.mrb[0].mxu0
        %7483 = vdwg.mxu0
        %7484 = vmatprep.subr.bf16.mxu0 %v6413
        %7485 = vmatpush1.bf16.msra.mxu0 %v6412
        %7486 = vmatprep.subr.bf16.mxu0 %v6445
        %7487 = vmatpush1.bf16.msra.mxu0 %v6444
        %7488 = vmatprep.subr.bf16.mxu0 %v6477
        %7489 = vmatpush1.bf16.msra.mxu0 %v6476
        %7490 = vmatprep.subr.bf16.mxu0 %v6509
        %7491 = vmatpush1.bf16.msra.mxu0 %v6508
        %7492 = vmatprep.subr.bf16.mxu0 %v6541
        %7493 = vmatpush1.bf16.msra.mxu0 %v6540
        %7494 = vmatprep.subr.bf16.mxu0 %v6573
        %7495 = vmatpush1.bf16.msra.mxu0 %v6572
        %7496 = vmatprep.subr.bf16.mxu0 %v6605
        %7497 = vmatpush1.bf16.msra.mxu0 %v6604
        %7498 = vmatprep.subr.bf16.mxu0 %v6637
        %7499 = vmatpush1.bf16.msra.mxu0 %v6636
        %7500 = vmatprep.subr.bf16.mxu0 %v7007
        %7501 = vmatpush1.bf16.msra.mxu0 %v7004
        %7502 = vmatprep.subr.bf16.mxu0 0
        %7503 = vmatpush1.bf16.msra.mxu0 0
        %7504 = vmatprep.subr.bf16.mxu0 0
        %7505 = vmatpush1.bf16.msra.mxu0 0
        %7506 = vmatprep.subr.bf16.mxu0 0
        %7507 = vmatpush1.bf16.msra.mxu0 0
        %7508 = vmatprep.subr.bf16.mxu0 0
        %7509 = vmatpush1.bf16.msra.mxu0 0
        %7510 = vmatprep.subr.bf16.mxu0 0
        %7511 = vmatpush1.bf16.msra.mxu0 0
        %7512 = vmatprep.subr.bf16.mxu0 0
        %7513 = vmatpush1.bf16.msra.mxu0 0
        %7514 = vmatprep.subr.bf16.mxu0 0
        %7515 = vmatpush1.bf16.msra.mxu0 0
        %7516 = vmatprep.mubr.bf16.mxu0 %v6935
        %7517 = vmatmul.mubr.bf16.gmra.mrb[0].mxu0 %v5068
        %v7518 = vpop.f32.mrb[0].mxu0
        %v7519 = vadd.f32 %v5457, %v7518
        %v7520 = vpop.f32.mrb[0].mxu0
        %v7521 = vadd.f32 %v5461, %v7520
        %v7522 = vpop.f32.mrb[0].mxu0
        %v7523 = vpop.f32.mrb[0].mxu0
        %7524 = vdwg.mxu0
        %7525 = vmatprep.subr.bf16.mxu0 %v6415
        %7526 = vmatpush1.bf16.msra.mxu0 %v6414
        %7527 = vmatprep.subr.bf16.mxu0 %v6447
        %7528 = vmatpush1.bf16.msra.mxu0 %v6446
        %7529 = vmatprep.subr.bf16.mxu0 %v6479
        %7530 = vmatpush1.bf16.msra.mxu0 %v6478
        %7531 = vmatprep.subr.bf16.mxu0 %v6511
        %7532 = vmatpush1.bf16.msra.mxu0 %v6510
        %7533 = vmatprep.subr.bf16.mxu0 %v6543
        %7534 = vmatpush1.bf16.msra.mxu0 %v6542
        %7535 = vmatprep.subr.bf16.mxu0 %v6575
        %7536 = vmatpush1.bf16.msra.mxu0 %v6574
        %7537 = vmatprep.subr.bf16.mxu0 %v6607
        %7538 = vmatpush1.bf16.msra.mxu0 %v6606
        %7539 = vmatprep.subr.bf16.mxu0 %v6639
        %7540 = vmatpush1.bf16.msra.mxu0 %v6638
        %7541 = vmatprep.subr.bf16.mxu0 %v7013
        %7542 = vmatpush1.bf16.msra.mxu0 %v7010
        %7543 = vmatprep.subr.bf16.mxu0 0
        %7544 = vmatpush1.bf16.msra.mxu0 0
        %7545 = vmatprep.subr.bf16.mxu0 0
        %7546 = vmatpush1.bf16.msra.mxu0 0
        %7547 = vmatprep.subr.bf16.mxu0 0
        %7548 = vmatpush1.bf16.msra.mxu0 0
        %7549 = vmatprep.subr.bf16.mxu0 0
        %7550 = vmatpush1.bf16.msra.mxu0 0
        %7551 = vmatprep.subr.bf16.mxu0 0
        %7552 = vmatpush1.bf16.msra.mxu0 0
        %7553 = vmatprep.subr.bf16.mxu0 0
        %7554 = vmatpush1.bf16.msra.mxu0 0
        %7555 = vmatprep.subr.bf16.mxu0 0
        %7556 = vmatpush1.bf16.msra.mxu0 0
        %7557 = vmatprep.mubr.bf16.mxu0 %v6935
        %7558 = vmatmul.mubr.bf16.gmra.mrb[0].mxu0 %v5068
        %v7559 = vpop.f32.mrb[0].mxu0
        %v7560 = vadd.f32 %v5465, %v7559
        %v7561 = vpop.f32.mrb[0].mxu0
        %v7562 = vadd.f32 %v5469, %v7561
        %v7563 = vpop.f32.mrb[0].mxu0
        %v7564 = vpop.f32.mrb[0].mxu0
        %7565 = vdwg.mxu0
        %7566 = vmatprep.subr.bf16.mxu0 %v6417
        %7567 = vmatpush1.bf16.msra.mxu0 %v6416
        %7568 = vmatprep.subr.bf16.mxu0 %v6449
        %7569 = vmatpush1.bf16.msra.mxu0 %v6448
        %7570 = vmatprep.subr.bf16.mxu0 %v6481
        %7571 = vmatpush1.bf16.msra.mxu0 %v6480
        %7572 = vmatprep.subr.bf16.mxu0 %v6513
        %7573 = vmatpush1.bf16.msra.mxu0 %v6512
        %7574 = vmatprep.subr.bf16.mxu0 %v6545
        %7575 = vmatpush1.bf16.msra.mxu0 %v6544
        %7576 = vmatprep.subr.bf16.mxu0 %v6577
        %7577 = vmatpush1.bf16.msra.mxu0 %v6576
        %7578 = vmatprep.subr.bf16.mxu0 %v6609
        %7579 = vmatpush1.bf16.msra.mxu0 %v6608
        %7580 = vmatprep.subr.bf16.mxu0 %v6641
        %7581 = vmatpush1.bf16.msra.mxu0 %v6640
        %7582 = vmatprep.subr.bf16.mxu0 %v7019
        %7583 = vmatpush1.bf16.msra.mxu0 %v7016
        %7584 = vmatprep.subr.bf16.mxu0 0
        %7585 = vmatpush1.bf16.msra.mxu0 0
        %7586 = vmatprep.subr.bf16.mxu0 0
        %7587 = vmatpush1.bf16.msra.mxu0 0
        %7588 = vmatprep.subr.bf16.mxu0 0
        %7589 = vmatpush1.bf16.msra.mxu0 0
        %7590 = vmatprep.subr.bf16.mxu0 0
        %7591 = vmatpush1.bf16.msra.mxu0 0
        %7592 = vmatprep.subr.bf16.mxu0 0
        %7593 = vmatpush1.bf16.msra.mxu0 0
        %7594 = vmatprep.subr.bf16.mxu0 0
        %7595 = vmatpush1.bf16.msra.mxu0 0
        %7596 = vmatprep.subr.bf16.mxu0 0
        %7597 = vmatpush1.bf16.msra.mxu0 0
        %7598 = vmatprep.mubr.bf16.mxu0 %v6935
        %7599 = vmatmul.mubr.bf16.gmra.mrb[0].mxu0 %v5068
        %v7600 = vpop.f32.mrb[0].mxu0
        %v7601 = vadd.f32 %v5473, %v7600
        %v7602 = vpop.f32.mrb[0].mxu0
        %v7603 = vadd.f32 %v5477, %v7602
        %v7604 = vpop.f32.mrb[0].mxu0
        %v7605 = vpop.f32.mrb[0].mxu0
        %7606 = vdwg.mxu0
        %7607 = vmatprep.subr.bf16.mxu0 %v6419
        %7608 = vmatpush1.bf16.msra.mxu0 %v6418
        %7609 = vmatprep.subr.bf16.mxu0 %v6451
        %7610 = vmatpush1.bf16.msra.mxu0 %v6450
        %7611 = vmatprep.subr.bf16.mxu0 %v6483
        %7612 = vmatpush1.bf16.msra.mxu0 %v6482
        %7613 = vmatprep.subr.bf16.mxu0 %v6515
        %7614 = vmatpush1.bf16.msra.mxu0 %v6514
        %7615 = vmatprep.subr.bf16.mxu0 %v6547
        %7616 = vmatpush1.bf16.msra.mxu0 %v6546
        %7617 = vmatprep.subr.bf16.mxu0 %v6579
        %7618 = vmatpush1.bf16.msra.mxu0 %v6578
        %7619 = vmatprep.subr.bf16.mxu0 %v6611
        %7620 = vmatpush1.bf16.msra.mxu0 %v6610
        %7621 = vmatprep.subr.bf16.mxu0 %v6643
        %7622 = vmatpush1.bf16.msra.mxu0 %v6642
        %7623 = vmatprep.subr.bf16.mxu0 %v7025
        %7624 = vmatpush1.bf16.msra.mxu0 %v7022
        %7625 = vmatprep.subr.bf16.mxu0 0
        %7626 = vmatpush1.bf16.msra.mxu0 0
        %7627 = vmatprep.subr.bf16.mxu0 0
        %7628 = vmatpush1.bf16.msra.mxu0 0
        %7629 = vmatprep.subr.bf16.mxu0 0
        %7630 = vmatpush1.bf16.msra.mxu0 0
        %7631 = vmatprep.subr.bf16.mxu0 0
        %7632 = vmatpush1.bf16.msra.mxu0 0
        %7633 = vmatprep.subr.bf16.mxu0 0
        %7634 = vmatpush1.bf16.msra.mxu0 0
        %7635 = vmatprep.subr.bf16.mxu0 0
        %7636 = vmatpush1.bf16.msra.mxu0 0
        %7637 = vmatprep.subr.bf16.mxu0 0
        %7638 = vmatpush1.bf16.msra.mxu0 0
        %7639 = vmatprep.mubr.bf16.mxu0 %v6935
        %7640 = vmatmul.mubr.bf16.gmra.mrb[0].mxu0 %v5068
        %v7641 = vpop.f32.mrb[0].mxu0
        %v7642 = vadd.f32 %v5481, %v7641
        %v7643 = vpop.f32.mrb[0].mxu0
        %v7644 = vadd.f32 %v5485, %v7643
        %v7645 = vpop.f32.mrb[0].mxu0
        %v7646 = vpop.f32.mrb[0].mxu0
        %7647 = vdwg.mxu0
        %7648 = vmatprep.subr.bf16.mxu0 %v6421
        %7649 = vmatpush1.bf16.msra.mxu0 %v6420
        %7650 = vmatprep.subr.bf16.mxu0 %v6453
        %7651 = vmatpush1.bf16.msra.mxu0 %v6452
        %7652 = vmatprep.subr.bf16.mxu0 %v6485
        %7653 = vmatpush1.bf16.msra.mxu0 %v6484
        %7654 = vmatprep.subr.bf16.mxu0 %v6517
        %7655 = vmatpush1.bf16.msra.mxu0 %v6516
        %7656 = vmatprep.subr.bf16.mxu0 %v6549
        %7657 = vmatpush1.bf16.msra.mxu0 %v6548
        %7658 = vmatprep.subr.bf16.mxu0 %v6581
        %7659 = vmatpush1.bf16.msra.mxu0 %v6580
        %7660 = vmatprep.subr.bf16.mxu0 %v6613
        %7661 = vmatpush1.bf16.msra.mxu0 %v6612
        %7662 = vmatprep.subr.bf16.mxu0 %v6645
        %7663 = vmatpush1.bf16.msra.mxu0 %v6644
        %7664 = vmatprep.subr.bf16.mxu0 %v7031
        %7665 = vmatpush1.bf16.msra.mxu0 %v7028
        %7666 = vmatprep.subr.bf16.mxu0 0
        %7667 = vmatpush1.bf16.msra.mxu0 0
        %7668 = vmatprep.subr.bf16.mxu0 0
        %7669 = vmatpush1.bf16.msra.mxu0 0
        %7670 = vmatprep.subr.bf16.mxu0 0
        %7671 = vmatpush1.bf16.msra.mxu0 0
        %7672 = vmatprep.subr.bf16.mxu0 0
        %7673 = vmatpush1.bf16.msra.mxu0 0
        %7674 = vmatprep.subr.bf16.mxu0 0
        %7675 = vmatpush1.bf16.msra.mxu0 0
        %7676 = vmatprep.subr.bf16.mxu0 0
        %7677 = vmatpush1.bf16.msra.mxu0 0
        %7678 = vmatprep.subr.bf16.mxu0 0
        %7679 = vmatpush1.bf16.msra.mxu0 0
        %7680 = vmatprep.mubr.bf16.mxu0 %v6935
        %7681 = vmatmul.mubr.bf16.gmra.mrb[0].mxu0 %v5068
        %v7682 = vpop.f32.mrb[0].mxu0
        %v7683 = vadd.f32 %v5489, %v7682
        %v7684 = vpop.f32.mrb[0].mxu0
        %v7685 = vadd.f32 %v5493, %v7684
        %v7686 = vpop.f32.mrb[0].mxu0
        %v7687 = vpop.f32.mrb[0].mxu0
        %7688 = vdwg.mxu0
        %v7689 = vmax.f32 %v7068, 0.0
        %v7690 = vmax.f32 %v7070, 0.0
        %v7691 = vmax.f32 %v7109, 0.0
        %v7692 = vmax.f32 %v7111, 0.0
        %v7693 = vmax.f32 %v7150, 0.0
        %v7694 = vmax.f32 %v7152, 0.0
        %v7695 = vmax.f32 %v7191, 0.0
        %v7696 = vmax.f32 %v7193, 0.0
        %v7697 = vmax.f32 %v7232, 0.0
        %v7698 = vmax.f32 %v7234, 0.0
        %v7699 = vmax.f32 %v7273, 0.0
        %v7700 = vmax.f32 %v7275, 0.0
        %v7701 = vmax.f32 %v7314, 0.0
        %v7702 = vmax.f32 %v7316, 0.0
        %v7703 = vmax.f32 %v7355, 0.0
        %v7704 = vmax.f32 %v7357, 0.0
        %v7705 = vmax.f32 %v7396, 0.0
        %v7706 = vmax.f32 %v7398, 0.0
        %v7707 = vmax.f32 %v7437, 0.0
        %v7708 = vmax.f32 %v7439, 0.0
        %v7709 = vmax.f32 %v7478, 0.0
        %v7710 = vmax.f32 %v7480, 0.0
        %v7711 = vmax.f32 %v7519, 0.0
        %v7712 = vmax.f32 %v7521, 0.0
        %v7713 = vmax.f32 %v7560, 0.0
        %v7714 = vmax.f32 %v7562, 0.0
        %v7715 = vmax.f32 %v7601, 0.0
        %v7716 = vmax.f32 %v7603, 0.0
        %v7717 = vmax.f32 %v7642, 0.0
        %v7718 = vmax.f32 %v7644, 0.0
        %v7719 = vmax.f32 %v7683, 0.0
        %v7720 = vmax.f32 %v7685, 0.0
        %v7721 = vpack.c.bf16 %v7689, %v7689
        %v7722 = vpack.c.bf16 %v7690, %v7690
        %v7723 = vpack.c.bf16 %v7691, %v7691
        %v7724 = vpack.c.bf16 %v7692, %v7692
        %v7725 = vpack.c.bf16 %v7693, %v7693
        %v7726 = vpack.c.bf16 %v7694, %v7694
        %v7727 = vpack.c.bf16 %v7695, %v7695
        %v7728 = vpack.c.bf16 %v7696, %v7696
        %v7729 = vpack.c.bf16 %v7697, %v7697
        %v7730 = vpack.c.bf16 %v7698, %v7698
        %v7731 = vpack.c.bf16 %v7699, %v7699
        %v7732 = vpack.c.bf16 %v7700, %v7700
        %v7733 = vpack.c.bf16 %v7701, %v7701
        %v7734 = vpack.c.bf16 %v7702, %v7702
        %v7735 = vpack.c.bf16 %v7703, %v7703
        %v7736 = vpack.c.bf16 %v7704, %v7704
        %v7737 = vpack.c.bf16 %v7705, %v7705
        %v7738 = vpack.c.bf16 %v7706, %v7706
        %v7739 = vpack.c.bf16 %v7707, %v7707
        %v7740 = vpack.c.bf16 %v7708, %v7708
        %v7741 = vpack.c.bf16 %v7709, %v7709
        %v7742 = vpack.c.bf16 %v7710, %v7710
        %v7743 = vpack.c.bf16 %v7711, %v7711
        %v7744 = vpack.c.bf16 %v7712, %v7712
        %v7745 = vpack.c.bf16 %v7713, %v7713
        %v7746 = vpack.c.bf16 %v7714, %v7714
        %v7747 = vpack.c.bf16 %v7715, %v7715
        %v7748 = vpack.c.bf16 %v7716, %v7716
        %v7749 = vpack.c.bf16 %v7717, %v7717
        %v7750 = vpack.c.bf16 %v7718, %v7718
        %v7751 = vpack.c.bf16 %v7719, %v7719
        %v7752 = vpack.c.bf16 %v7720, %v7720
        %v7753 = vld [vmem:[%s6] sm:$0xf]
        %v7754 = vld [vmem:[%s6 + $0x4] sm:$0xf]
        %v7755 = vld [vmem:[%s6 + $0x8] sm:$0xf]
        %v7756 = vld [vmem:[%s6 + $0xc] sm:$0xf]
        %v7757 = vld [vmem:[%s6 + $0x10] sm:$0xf]
        %v7758 = vld [vmem:[%s6 + $0x14] sm:$0xf]
        %v7759 = vld [vmem:[%s6 + $0x18] sm:$0xf]
        %v7760 = vld [vmem:[%s6 + $0x1c] sm:$0xf]
        %v7761 = vld [vmem:[%s6 + $0x20] sm:$0xf]
        %v7762 = vld [vmem:[%s6 + $0x24] sm:$0xf]
        %v7763 = vld [vmem:[%s6 + $0x28] sm:$0xf]
        %v7764 = vld [vmem:[%s6 + $0x2c] sm:$0xf]
        %v7765 = vld [vmem:[%s6 + $0x30] sm:$0xf]
        %v7766 = vld [vmem:[%s6 + $0x34] sm:$0xf]
        %v7767 = vld [vmem:[%s6 + $0x38] sm:$0xf]
        %v7768 = vld [vmem:[%s6 + $0x3c] sm:$0xf]
        %v7769 = vld [vmem:[%s6 + $0x40] sm:$0xf]
        %v7770 = vld [vmem:[%s6 + $0x44] sm:$0xf]
        %v7771 = vld [vmem:[%s6 + $0x48] sm:$0xf]
        %v7772 = vld [vmem:[%s6 + $0x4c] sm:$0xf]
        %v7773 = vld [vmem:[%s6 + $0x50] sm:$0xf]
        %v7774 = vld [vmem:[%s6 + $0x54] sm:$0xf]
        %v7775 = vld [vmem:[%s6 + $0x58] sm:$0xf]
        %v7776 = vld [vmem:[%s6 + $0x5c] sm:$0xf]
        %v7777 = vld [vmem:[%s6 + $0x60] sm:$0xf]
        %v7778 = vld [vmem:[%s6 + $0x64] sm:$0xf]
        %v7779 = vld [vmem:[%s6 + $0x68] sm:$0xf]
        %v7780 = vld [vmem:[%s6 + $0x6c] sm:$0xf]
        %v7781 = vld [vmem:[%s6 + $0x70] sm:$0xf]
        %v7782 = vld [vmem:[%s6 + $0x74] sm:$0xf]
        %v7783 = vld [vmem:[%s6 + $0x78] sm:$0xf]
        %v7784 = vld [vmem:[%s6 + $0x7c] sm:$0xf]
        %v7785 = vld [vmem:[%s6 + $0x80] sm:$0xf]
        %v7786 = vld [vmem:[%s6 + $0x84] sm:$0xf]
        %v7787 = vld [vmem:[%s6 + $0x88] sm:$0xf]
        %v7788 = vld [vmem:[%s6 + $0x8c] sm:$0xf]
        %v7789 = vld [vmem:[%s6 + $0x90] sm:$0xf]
        %v7790 = vld [vmem:[%s6 + $0x94] sm:$0xf]
        %v7791 = vld [vmem:[%s6 + $0x98] sm:$0xf]
        %v7792 = vld [vmem:[%s6 + $0x9c] sm:$0xf]
        %v7793 = vld [vmem:[%s6 + $0xa0] sm:$0xf]
        %v7794 = vld [vmem:[%s6 + $0xa4] sm:$0xf]
        %v7795 = vld [vmem:[%s6 + $0xa8] sm:$0xf]
        %v7796 = vld [vmem:[%s6 + $0xac] sm:$0xf]
        %v7797 = vld [vmem:[%s6 + $0xb0] sm:$0xf]
        %v7798 = vld [vmem:[%s6 + $0xb4] sm:$0xf]
        %v7799 = vld [vmem:[%s6 + $0xb8] sm:$0xf]
        %v7800 = vld [vmem:[%s6 + $0xbc] sm:$0xf]
        %v7801 = vld [vmem:[%s6 + $0xc0] sm:$0xf]
        %v7802 = vld [vmem:[%s6 + $0xc4] sm:$0xf]
        %v7803 = vld [vmem:[%s6 + $0xc8] sm:$0xf]
        %v7804 = vld [vmem:[%s6 + $0xcc] sm:$0xf]
        %v7805 = vld [vmem:[%s6 + $0xd0] sm:$0xf]
        %v7806 = vld [vmem:[%s6 + $0xd4] sm:$0xf]
        %v7807 = vld [vmem:[%s6 + $0xd8] sm:$0xf]
        %v7808 = vld [vmem:[%s6 + $0xdc] sm:$0xf]
        %v7809 = vld [vmem:[%s6 + $0xe0] sm:$0xf]
        %v7810 = vld [vmem:[%s6 + $0xe4] sm:$0xf]
        %v7811 = vld [vmem:[%s6 + $0xe8] sm:$0xf]
        %v7812 = vld [vmem:[%s6 + $0xec] sm:$0xf]
        %v7813 = vld [vmem:[%s6 + $0xf0] sm:$0xf]
        %v7814 = vld [vmem:[%s6 + $0xf4] sm:$0xf]
        %v7815 = vld [vmem:[%s6 + $0xf8] sm:$0xf]
        %v7816 = vld [vmem:[%s6 + $0xfc] sm:$0xf]
        %v7817 = vld [vmem:[%s6 + $0x100] sm:$0xf]
        %v7818 = vld [vmem:[%s6 + $0x104] sm:$0xf]
        %v7819 = vld [vmem:[%s6 + $0x108] sm:$0xf]
        %v7820 = vld [vmem:[%s6 + $0x10c] sm:$0xf]
        %v7821 = vld [vmem:[%s6 + $0x110] sm:$0xf]
        %v7822 = vld [vmem:[%s6 + $0x114] sm:$0xf]
        %v7823 = vld [vmem:[%s6 + $0x118] sm:$0xf]
        %v7824 = vld [vmem:[%s6 + $0x11c] sm:$0xf]
        %v7825 = vld [vmem:[%s6 + $0x120] sm:$0xf]
        %v7826 = vld [vmem:[%s6 + $0x124] sm:$0xf]
        %v7827 = vld [vmem:[%s6 + $0x128] sm:$0xf]
        %v7828 = vld [vmem:[%s6 + $0x12c] sm:$0xf]
        %v7829 = vld [vmem:[%s6 + $0x130] sm:$0xf]
        %v7830 = vld [vmem:[%s6 + $0x134] sm:$0xf]
        %v7831 = vld [vmem:[%s6 + $0x138] sm:$0xf]
        %v7832 = vld [vmem:[%s6 + $0x13c] sm:$0xf]
        %v7833 = vld [vmem:[%s6 + $0x140] sm:$0xf]
        %v7834 = vld [vmem:[%s6 + $0x144] sm:$0xf]
        %v7835 = vld [vmem:[%s6 + $0x148] sm:$0xf]
        %v7836 = vld [vmem:[%s6 + $0x14c] sm:$0xf]
        %v7837 = vld [vmem:[%s6 + $0x150] sm:$0xf]
        %v7838 = vld [vmem:[%s6 + $0x154] sm:$0xf]
        %v7839 = vld [vmem:[%s6 + $0x158] sm:$0xf]
        %v7840 = vld [vmem:[%s6 + $0x15c] sm:$0xf]
        %v7841 = vld [vmem:[%s6 + $0x160] sm:$0xf]
        %v7842 = vld [vmem:[%s6 + $0x164] sm:$0xf]
        %v7843 = vld [vmem:[%s6 + $0x168] sm:$0xf]
        %v7844 = vld [vmem:[%s6 + $0x16c] sm:$0xf]
        %v7845 = vld [vmem:[%s6 + $0x170] sm:$0xf]
        %v7846 = vld [vmem:[%s6 + $0x174] sm:$0xf]
        %v7847 = vld [vmem:[%s6 + $0x178] sm:$0xf]
        %v7848 = vld [vmem:[%s6 + $0x17c] sm:$0xf]
        %v7849 = vld [vmem:[%s6 + $0x180] sm:$0xf]
        %v7850 = vld [vmem:[%s6 + $0x184] sm:$0xf]
        %v7851 = vld [vmem:[%s6 + $0x188] sm:$0xf]
        %v7852 = vld [vmem:[%s6 + $0x18c] sm:$0xf]
        %v7853 = vld [vmem:[%s6 + $0x190] sm:$0xf]
        %v7854 = vld [vmem:[%s6 + $0x194] sm:$0xf]
        %v7855 = vld [vmem:[%s6 + $0x198] sm:$0xf]
        %v7856 = vld [vmem:[%s6 + $0x19c] sm:$0xf]
        %v7857 = vld [vmem:[%s6 + $0x1a0] sm:$0xf]
        %v7858 = vld [vmem:[%s6 + $0x1a4] sm:$0xf]
        %v7859 = vld [vmem:[%s6 + $0x1a8] sm:$0xf]
        %v7860 = vld [vmem:[%s6 + $0x1ac] sm:$0xf]
        %v7861 = vld [vmem:[%s6 + $0x1b0] sm:$0xf]
        %v7862 = vld [vmem:[%s6 + $0x1b4] sm:$0xf]
        %v7863 = vld [vmem:[%s6 + $0x1b8] sm:$0xf]
        %v7864 = vld [vmem:[%s6 + $0x1bc] sm:$0xf]
        %v7865 = vld [vmem:[%s6 + $0x1c0] sm:$0xf]
        %v7866 = vld [vmem:[%s6 + $0x1c4] sm:$0xf]
        %v7867 = vld [vmem:[%s6 + $0x1c8] sm:$0xf]
        %v7868 = vld [vmem:[%s6 + $0x1cc] sm:$0xf]
        %v7869 = vld [vmem:[%s6 + $0x1d0] sm:$0xf]
        %v7870 = vld [vmem:[%s6 + $0x1d4] sm:$0xf]
        %v7871 = vld [vmem:[%s6 + $0x1d8] sm:$0xf]
        %v7872 = vld [vmem:[%s6 + $0x1dc] sm:$0xf]
        %v7873 = vld [vmem:[%s6 + $0x1e0] sm:$0xf]
        %v7874 = vld [vmem:[%s6 + $0x1e4] sm:$0xf]
        %v7875 = vld [vmem:[%s6 + $0x1e8] sm:$0xf]
        %v7876 = vld [vmem:[%s6 + $0x1ec] sm:$0xf]
        %v7877 = vld [vmem:[%s6 + $0x1f0] sm:$0xf]
        %v7878 = vld [vmem:[%s6 + $0x1f4] sm:$0xf]
        %v7879 = vld [vmem:[%s6 + $0x1f8] sm:$0xf]
        %v7880 = vld [vmem:[%s6 + $0x1fc] sm:$0xf]
        %v7881 = vld [vmem:[%s6 + $0x200] sm:$0xf]
        %v7882 = vld [vmem:[%s6 + $0x204] sm:$0xf]
        %v7883 = vld [vmem:[%s6 + $0x208] sm:$0xf]
        %v7884 = vld [vmem:[%s6 + $0x20c] sm:$0xf]
        %v7885 = vld [vmem:[%s6 + $0x210] sm:$0xf]
        %v7886 = vld [vmem:[%s6 + $0x214] sm:$0xf]
        %v7887 = vld [vmem:[%s6 + $0x218] sm:$0xf]
        %v7888 = vld [vmem:[%s6 + $0x21c] sm:$0xf]
        %v7889 = vld [vmem:[%s6 + $0x220] sm:$0xf]
        %v7890 = vld [vmem:[%s6 + $0x224] sm:$0xf]
        %v7891 = vld [vmem:[%s6 + $0x228] sm:$0xf]
        %v7892 = vld [vmem:[%s6 + $0x22c] sm:$0xf]
        %v7893 = vld [vmem:[%s6 + $0x230] sm:$0xf]
        %v7894 = vld [vmem:[%s6 + $0x234] sm:$0xf]
        %v7895 = vld [vmem:[%s6 + $0x238] sm:$0xf]
        %v7896 = vld [vmem:[%s6 + $0x23c] sm:$0xf]
        %v7897 = vld [vmem:[%s6 + $0x240] sm:$0xf]
        %v7898 = vld [vmem:[%s6 + $0x244] sm:$0xf]
        %v7899 = vld [vmem:[%s6 + $0x248] sm:$0xf]
        %v7900 = vld [vmem:[%s6 + $0x24c] sm:$0xf]
        %v7901 = vld [vmem:[%s6 + $0x250] sm:$0xf]
        %v7902 = vld [vmem:[%s6 + $0x254] sm:$0xf]
        %v7903 = vld [vmem:[%s6 + $0x258] sm:$0xf]
        %v7904 = vld [vmem:[%s6 + $0x25c] sm:$0xf]
        %v7905 = vld [vmem:[%s6 + $0x260] sm:$0xf]
        %v7906 = vld [vmem:[%s6 + $0x264] sm:$0xf]
        %v7907 = vld [vmem:[%s6 + $0x268] sm:$0xf]
        %v7908 = vld [vmem:[%s6 + $0x26c] sm:$0xf]
        %v7909 = vld [vmem:[%s6 + $0x270] sm:$0xf]
        %v7910 = vld [vmem:[%s6 + $0x274] sm:$0xf]
        %v7911 = vld [vmem:[%s6 + $0x278] sm:$0xf]
        %v7912 = vld [vmem:[%s6 + $0x27c] sm:$0xf]
        %v7913 = vld [vmem:[%s6 + $0x280] sm:$0xf]
        %v7914 = vld [vmem:[%s6 + $0x284] sm:$0xf]
        %v7915 = vld [vmem:[%s6 + $0x288] sm:$0xf]
        %v7916 = vld [vmem:[%s6 + $0x28c] sm:$0xf]
        %v7917 = vld [vmem:[%s6 + $0x290] sm:$0xf]
        %v7918 = vld [vmem:[%s6 + $0x294] sm:$0xf]
        %v7919 = vld [vmem:[%s6 + $0x298] sm:$0xf]
        %v7920 = vld [vmem:[%s6 + $0x29c] sm:$0xf]
        %v7921 = vld [vmem:[%s6 + $0x2a0] sm:$0xf]
        %v7922 = vld [vmem:[%s6 + $0x2a4] sm:$0xf]
        %v7923 = vld [vmem:[%s6 + $0x2a8] sm:$0xf]
        %v7924 = vld [vmem:[%s6 + $0x2ac] sm:$0xf]
        %v7925 = vld [vmem:[%s6 + $0x2b0] sm:$0xf]
        %v7926 = vld [vmem:[%s6 + $0x2b4] sm:$0xf]
        %v7927 = vld [vmem:[%s6 + $0x2b8] sm:$0xf]
        %v7928 = vld [vmem:[%s6 + $0x2bc] sm:$0xf]
        %v7929 = vld [vmem:[%s6 + $0x2c0] sm:$0xf]
        %v7930 = vld [vmem:[%s6 + $0x2c4] sm:$0xf]
        %v7931 = vld [vmem:[%s6 + $0x2c8] sm:$0xf]
        %v7932 = vld [vmem:[%s6 + $0x2cc] sm:$0xf]
        %v7933 = vld [vmem:[%s6 + $0x2d0] sm:$0xf]
        %v7934 = vld [vmem:[%s6 + $0x2d4] sm:$0xf]
        %v7935 = vld [vmem:[%s6 + $0x2d8] sm:$0xf]
        %v7936 = vld [vmem:[%s6 + $0x2dc] sm:$0xf]
        %v7937 = vld [vmem:[%s6 + $0x2e0] sm:$0xf]
        %v7938 = vld [vmem:[%s6 + $0x2e4] sm:$0xf]
        %v7939 = vld [vmem:[%s6 + $0x2e8] sm:$0xf]
        %v7940 = vld [vmem:[%s6 + $0x2ec] sm:$0xf]
        %v7941 = vld [vmem:[%s6 + $0x2f0] sm:$0xf]
        %v7942 = vld [vmem:[%s6 + $0x2f4] sm:$0xf]
        %v7943 = vld [vmem:[%s6 + $0x2f8] sm:$0xf]
        %v7944 = vld [vmem:[%s6 + $0x2fc] sm:$0xf]
        %v7945 = vld [vmem:[%s6 + $0x300] sm:$0xf]
        %v7946 = vld [vmem:[%s6 + $0x304] sm:$0xf]
        %v7947 = vld [vmem:[%s6 + $0x308] sm:$0xf]
        %v7948 = vld [vmem:[%s6 + $0x30c] sm:$0xf]
        %v7949 = vld [vmem:[%s6 + $0x310] sm:$0xf]
        %v7950 = vld [vmem:[%s6 + $0x314] sm:$0xf]
        %v7951 = vld [vmem:[%s6 + $0x318] sm:$0xf]
        %v7952 = vld [vmem:[%s6 + $0x31c] sm:$0xf]
        %v7953 = vld [vmem:[%s6 + $0x320] sm:$0xf]
        %v7954 = vld [vmem:[%s6 + $0x324] sm:$0xf]
        %v7955 = vld [vmem:[%s6 + $0x328] sm:$0xf]
        %v7956 = vld [vmem:[%s6 + $0x32c] sm:$0xf]
        %v7957 = vld [vmem:[%s6 + $0x330] sm:$0xf]
        %v7958 = vld [vmem:[%s6 + $0x334] sm:$0xf]
        %v7959 = vld [vmem:[%s6 + $0x338] sm:$0xf]
        %v7960 = vld [vmem:[%s6 + $0x33c] sm:$0xf]
        %v7961 = vld [vmem:[%s6 + $0x340] sm:$0xf]
        %v7962 = vld [vmem:[%s6 + $0x344] sm:$0xf]
        %v7963 = vld [vmem:[%s6 + $0x348] sm:$0xf]
        %v7964 = vld [vmem:[%s6 + $0x34c] sm:$0xf]
        %v7965 = vld [vmem:[%s6 + $0x350] sm:$0xf]
        %v7966 = vld [vmem:[%s6 + $0x354] sm:$0xf]
        %v7967 = vld [vmem:[%s6 + $0x358] sm:$0xf]
        %v7968 = vld [vmem:[%s6 + $0x35c] sm:$0xf]
        %v7969 = vld [vmem:[%s6 + $0x360] sm:$0xf]
        %v7970 = vld [vmem:[%s6 + $0x364] sm:$0xf]
        %v7971 = vld [vmem:[%s6 + $0x368] sm:$0xf]
        %v7972 = vld [vmem:[%s6 + $0x36c] sm:$0xf]
        %v7973 = vld [vmem:[%s6 + $0x370] sm:$0xf]
        %v7974 = vld [vmem:[%s6 + $0x374] sm:$0xf]
        %v7975 = vld [vmem:[%s6 + $0x378] sm:$0xf]
        %v7976 = vld [vmem:[%s6 + $0x37c] sm:$0xf]
        %v7977 = vld [vmem:[%s6 + $0x380] sm:$0xf]
        %v7978 = vld [vmem:[%s6 + $0x384] sm:$0xf]
        %v7979 = vld [vmem:[%s6 + $0x388] sm:$0xf]
        %v7980 = vld [vmem:[%s6 + $0x38c] sm:$0xf]
        %v7981 = vld [vmem:[%s6 + $0x390] sm:$0xf]
        %v7982 = vld [vmem:[%s6 + $0x394] sm:$0xf]
        %v7983 = vld [vmem:[%s6 + $0x398] sm:$0xf]
        %v7984 = vld [vmem:[%s6 + $0x39c] sm:$0xf]
        %v7985 = vld [vmem:[%s6 + $0x3a0] sm:$0xf]
        %v7986 = vld [vmem:[%s6 + $0x3a4] sm:$0xf]
        %v7987 = vld [vmem:[%s6 + $0x3a8] sm:$0xf]
        %v7988 = vld [vmem:[%s6 + $0x3ac] sm:$0xf]
        %v7989 = vld [vmem:[%s6 + $0x3b0] sm:$0xf]
        %v7990 = vld [vmem:[%s6 + $0x3b4] sm:$0xf]
        %v7991 = vld [vmem:[%s6 + $0x3b8] sm:$0xf]
        %v7992 = vld [vmem:[%s6 + $0x3bc] sm:$0xf]
        %v7993 = vld [vmem:[%s6 + $0x3c0] sm:$0xf]
        %v7994 = vld [vmem:[%s6 + $0x3c4] sm:$0xf]
        %v7995 = vld [vmem:[%s6 + $0x3c8] sm:$0xf]
        %v7996 = vld [vmem:[%s6 + $0x3cc] sm:$0xf]
        %v7997 = vld [vmem:[%s6 + $0x3d0] sm:$0xf]
        %v7998 = vld [vmem:[%s6 + $0x3d4] sm:$0xf]
        %v7999 = vld [vmem:[%s6 + $0x3d8] sm:$0xf]
        %v8000 = vld [vmem:[%s6 + $0x3dc] sm:$0xf]
        %v8001 = vld [vmem:[%s6 + $0x3e0] sm:$0xf]
        %v8002 = vld [vmem:[%s6 + $0x3e4] sm:$0xf]
        %v8003 = vld [vmem:[%s6 + $0x3e8] sm:$0xf]
        %v8004 = vld [vmem:[%s6 + $0x3ec] sm:$0xf]
        %v8005 = vld [vmem:[%s6 + $0x3f0] sm:$0xf]
        %v8006 = vld [vmem:[%s6 + $0x3f4] sm:$0xf]
        %v8007 = vld [vmem:[%s6 + $0x3f8] sm:$0xf]
        %v8008 = vld [vmem:[%s6 + $0x3fc] sm:$0xf]
        %v8009 = vld [vmem:[%s6 + $0x400] sm:$0xf]
        %v8010 = vld [vmem:[%s6 + $0x404] sm:$0xf]
        %v8011 = vld [vmem:[%s6 + $0x408] sm:$0xf]
        %v8012 = vld [vmem:[%s6 + $0x40c] sm:$0xf]
        %v8013 = vld [vmem:[%s6 + $0x410] sm:$0xf]
        %v8014 = vld [vmem:[%s6 + $0x414] sm:$0xf]
        %v8015 = vld [vmem:[%s6 + $0x418] sm:$0xf]
        %v8016 = vld [vmem:[%s6 + $0x41c] sm:$0xf]
        %v8017 = vld [vmem:[%s6 + $0x420] sm:$0xf]
        %v8018 = vld [vmem:[%s6 + $0x424] sm:$0xf]
        %v8019 = vld [vmem:[%s6 + $0x428] sm:$0xf]
        %v8020 = vld [vmem:[%s6 + $0x42c] sm:$0xf]
        %v8021 = vld [vmem:[%s6 + $0x430] sm:$0xf]
        %v8022 = vld [vmem:[%s6 + $0x434] sm:$0xf]
        %v8023 = vld [vmem:[%s6 + $0x438] sm:$0xf]
        %v8024 = vld [vmem:[%s6 + $0x43c] sm:$0xf]
        %v8025 = vld [vmem:[%s6 + $0x440] sm:$0xf]
        %v8026 = vld [vmem:[%s6 + $0x444] sm:$0xf]
        %v8027 = vld [vmem:[%s6 + $0x448] sm:$0xf]
        %v8028 = vld [vmem:[%s6 + $0x44c] sm:$0xf]
        %v8029 = vld [vmem:[%s6 + $0x450] sm:$0xf]
        %v8030 = vld [vmem:[%s6 + $0x454] sm:$0xf]
        %v8031 = vld [vmem:[%s6 + $0x458] sm:$0xf]
        %v8032 = vld [vmem:[%s6 + $0x45c] sm:$0xf]
        %v8033 = vld [vmem:[%s6 + $0x460] sm:$0xf]
        %v8034 = vld [vmem:[%s6 + $0x464] sm:$0xf]
        %v8035 = vld [vmem:[%s6 + $0x468] sm:$0xf]
        %v8036 = vld [vmem:[%s6 + $0x46c] sm:$0xf]
        %v8037 = vld [vmem:[%s6 + $0x470] sm:$0xf]
        %v8038 = vld [vmem:[%s6 + $0x474] sm:$0xf]
        %v8039 = vld [vmem:[%s6 + $0x478] sm:$0xf]
        %v8040 = vld [vmem:[%s6 + $0x47c] sm:$0xf]
        %v8041 = vld [vmem:[%s6 + $0x480] sm:$0xf]
        %v8042 = vld [vmem:[%s6 + $0x484] sm:$0xf]
        %v8043 = vld [vmem:[%s6 + $0x488] sm:$0xf]
        %v8044 = vld [vmem:[%s6 + $0x48c] sm:$0xf]
        %v8045 = vld [vmem:[%s6 + $0x490] sm:$0xf]
        %v8046 = vld [vmem:[%s6 + $0x494] sm:$0xf]
        %v8047 = vld [vmem:[%s6 + $0x498] sm:$0xf]
        %v8048 = vld [vmem:[%s6 + $0x49c] sm:$0xf]
        %v8049 = vld [vmem:[%s6 + $0x4a0] sm:$0xf]
        %v8050 = vld [vmem:[%s6 + $0x4a4] sm:$0xf]
        %v8051 = vld [vmem:[%s6 + $0x4a8] sm:$0xf]
        %v8052 = vld [vmem:[%s6 + $0x4ac] sm:$0xf]
        %v8053 = vld [vmem:[%s6 + $0x4b0] sm:$0xf]
        %v8054 = vld [vmem:[%s6 + $0x4b4] sm:$0xf]
        %v8055 = vld [vmem:[%s6 + $0x4b8] sm:$0xf]
        %v8056 = vld [vmem:[%s6 + $0x4bc] sm:$0xf]
        %v8057 = vld [vmem:[%s6 + $0x4c0] sm:$0xf]
        %v8058 = vld [vmem:[%s6 + $0x4c4] sm:$0xf]
        %v8059 = vld [vmem:[%s6 + $0x4c8] sm:$0xf]
        %v8060 = vld [vmem:[%s6 + $0x4cc] sm:$0xf]
        %v8061 = vld [vmem:[%s6 + $0x4d0] sm:$0xf]
        %v8062 = vld [vmem:[%s6 + $0x4d4] sm:$0xf]
        %v8063 = vld [vmem:[%s6 + $0x4d8] sm:$0xf]
        %v8064 = vld [vmem:[%s6 + $0x4dc] sm:$0xf]
        %v8065 = vld [vmem:[%s6 + $0x4e0] sm:$0xf]
        %v8066 = vld [vmem:[%s6 + $0x4e4] sm:$0xf]
        %v8067 = vld [vmem:[%s6 + $0x4e8] sm:$0xf]
        %v8068 = vld [vmem:[%s6 + $0x4ec] sm:$0xf]
        %v8069 = vld [vmem:[%s6 + $0x4f0] sm:$0xf]
        %v8070 = vld [vmem:[%s6 + $0x4f4] sm:$0xf]
        %v8071 = vld [vmem:[%s6 + $0x4f8] sm:$0xf]
        %v8072 = vld [vmem:[%s6 + $0x4fc] sm:$0xf]
        %v8073 = vld [vmem:[%s6 + $0x500] sm:$0xf]
        %v8074 = vld [vmem:[%s6 + $0x504] sm:$0xf]
        %v8075 = vld [vmem:[%s6 + $0x508] sm:$0xf]
        %v8076 = vld [vmem:[%s6 + $0x50c] sm:$0xf]
        %v8077 = vld [vmem:[%s6 + $0x510] sm:$0xf]
        %v8078 = vld [vmem:[%s6 + $0x514] sm:$0xf]
        %v8079 = vld [vmem:[%s6 + $0x518] sm:$0xf]
        %v8080 = vld [vmem:[%s6 + $0x51c] sm:$0xf]
        %v8081 = vld [vmem:[%s6 + $0x520] sm:$0xf]
        %v8082 = vld [vmem:[%s6 + $0x524] sm:$0xf]
        %v8083 = vld [vmem:[%s6 + $0x528] sm:$0xf]
        %v8084 = vld [vmem:[%s6 + $0x52c] sm:$0xf]
        %v8085 = vld [vmem:[%s6 + $0x530] sm:$0xf]
        %v8086 = vld [vmem:[%s6 + $0x534] sm:$0xf]
        %v8087 = vld [vmem:[%s6 + $0x538] sm:$0xf]
        %v8088 = vld [vmem:[%s6 + $0x53c] sm:$0xf]
        %v8089 = vld [vmem:[%s6 + $0x540] sm:$0xf]
        %v8090 = vld [vmem:[%s6 + $0x544] sm:$0xf]
        %v8091 = vld [vmem:[%s6 + $0x548] sm:$0xf]
        %v8092 = vld [vmem:[%s6 + $0x54c] sm:$0xf]
        %v8093 = vld [vmem:[%s6 + $0x550] sm:$0xf]
        %v8094 = vld [vmem:[%s6 + $0x554] sm:$0xf]
        %v8095 = vld [vmem:[%s6 + $0x558] sm:$0xf]
        %v8096 = vld [vmem:[%s6 + $0x55c] sm:$0xf]
        %v8097 = vld [vmem:[%s6 + $0x560] sm:$0xf]
        %v8098 = vld [vmem:[%s6 + $0x564] sm:$0xf]
        %v8099 = vld [vmem:[%s6 + $0x568] sm:$0xf]
        %v8100 = vld [vmem:[%s6 + $0x56c] sm:$0xf]
        %v8101 = vld [vmem:[%s6 + $0x570] sm:$0xf]
        %v8102 = vld [vmem:[%s6 + $0x574] sm:$0xf]
        %v8103 = vld [vmem:[%s6 + $0x578] sm:$0xf]
        %v8104 = vld [vmem:[%s6 + $0x57c] sm:$0xf]
        %v8105 = vld [vmem:[%s6 + $0x580] sm:$0xf]
        %v8106 = vld [vmem:[%s6 + $0x584] sm:$0xf]
        %v8107 = vld [vmem:[%s6 + $0x588] sm:$0xf]
        %v8108 = vld [vmem:[%s6 + $0x58c] sm:$0xf]
        %v8109 = vld [vmem:[%s6 + $0x590] sm:$0xf]
        %v8110 = vld [vmem:[%s6 + $0x594] sm:$0xf]
        %v8111 = vld [vmem:[%s6 + $0x598] sm:$0xf]
        %v8112 = vld [vmem:[%s6 + $0x59c] sm:$0xf]
        %v8113 = vld [vmem:[%s6 + $0x5a0] sm:$0xf]
        %v8114 = vld [vmem:[%s6 + $0x5a4] sm:$0xf]
        %v8115 = vld [vmem:[%s6 + $0x5a8] sm:$0xf]
        %v8116 = vld [vmem:[%s6 + $0x5ac] sm:$0xf]
        %v8117 = vld [vmem:[%s6 + $0x5b0] sm:$0xf]
        %v8118 = vld [vmem:[%s6 + $0x5b4] sm:$0xf]
        %v8119 = vld [vmem:[%s6 + $0x5b8] sm:$0xf]
        %v8120 = vld [vmem:[%s6 + $0x5bc] sm:$0xf]
        %v8121 = vld [vmem:[%s6 + $0x5c0] sm:$0xf]
        %v8122 = vld [vmem:[%s6 + $0x5c4] sm:$0xf]
        %v8123 = vld [vmem:[%s6 + $0x5c8] sm:$0xf]
        %v8124 = vld [vmem:[%s6 + $0x5cc] sm:$0xf]
        %v8125 = vld [vmem:[%s6 + $0x5d0] sm:$0xf]
        %v8126 = vld [vmem:[%s6 + $0x5d4] sm:$0xf]
        %v8127 = vld [vmem:[%s6 + $0x5d8] sm:$0xf]
        %v8128 = vld [vmem:[%s6 + $0x5dc] sm:$0xf]
        %v8129 = vld [vmem:[%s6 + $0x5e0] sm:$0xf]
        %v8130 = vld [vmem:[%s6 + $0x5e4] sm:$0xf]
        %v8131 = vld [vmem:[%s6 + $0x5e8] sm:$0xf]
        %v8132 = vld [vmem:[%s6 + $0x5ec] sm:$0xf]
        %v8133 = vld [vmem:[%s6 + $0x5f0] sm:$0xf]
        %v8134 = vld [vmem:[%s6 + $0x5f4] sm:$0xf]
        %v8135 = vld [vmem:[%s6 + $0x5f8] sm:$0xf]
        %v8136 = vld [vmem:[%s6 + $0x5fc] sm:$0xf]
        %v8137 = vld [vmem:[%s6 + $0x600] sm:$0xf]
        %v8138 = vld [vmem:[%s6 + $0x604] sm:$0xf]
        %v8139 = vld [vmem:[%s6 + $0x608] sm:$0xf]
        %v8140 = vld [vmem:[%s6 + $0x60c] sm:$0xf]
        %v8141 = vld [vmem:[%s6 + $0x610] sm:$0xf]
        %v8142 = vld [vmem:[%s6 + $0x614] sm:$0xf]
        %v8143 = vld [vmem:[%s6 + $0x618] sm:$0xf]
        %v8144 = vld [vmem:[%s6 + $0x61c] sm:$0xf]
        %v8145 = vld [vmem:[%s6 + $0x620] sm:$0xf]
        %v8146 = vld [vmem:[%s6 + $0x624] sm:$0xf]
        %v8147 = vld [vmem:[%s6 + $0x628] sm:$0xf]
        %v8148 = vld [vmem:[%s6 + $0x62c] sm:$0xf]
        %v8149 = vld [vmem:[%s6 + $0x630] sm:$0xf]
        %v8150 = vld [vmem:[%s6 + $0x634] sm:$0xf]
        %v8151 = vld [vmem:[%s6 + $0x638] sm:$0xf]
        %v8152 = vld [vmem:[%s6 + $0x63c] sm:$0xf]
        %v8153 = vld [vmem:[%s6 + $0x640] sm:$0xf]
        %v8154 = vld [vmem:[%s6 + $0x644] sm:$0xf]
        %v8155 = vld [vmem:[%s6 + $0x648] sm:$0xf]
        %v8156 = vld [vmem:[%s6 + $0x64c] sm:$0xf]
        %v8157 = vld [vmem:[%s6 + $0x650] sm:$0xf]
        %v8158 = vld [vmem:[%s6 + $0x654] sm:$0xf]
        %v8159 = vld [vmem:[%s6 + $0x658] sm:$0xf]
        %v8160 = vld [vmem:[%s6 + $0x65c] sm:$0xf]
        %v8161 = vld [vmem:[%s6 + $0x660] sm:$0xf]
        %v8162 = vld [vmem:[%s6 + $0x664] sm:$0xf]
        %v8163 = vld [vmem:[%s6 + $0x668] sm:$0xf]
        %v8164 = vld [vmem:[%s6 + $0x66c] sm:$0xf]
        %v8165 = vld [vmem:[%s6 + $0x670] sm:$0xf]
        %v8166 = vld [vmem:[%s6 + $0x674] sm:$0xf]
        %v8167 = vld [vmem:[%s6 + $0x678] sm:$0xf]
        %v8168 = vld [vmem:[%s6 + $0x67c] sm:$0xf]
        %v8169 = vld [vmem:[%s6 + $0x680] sm:$0xf]
        %v8170 = vld [vmem:[%s6 + $0x684] sm:$0xf]
        %v8171 = vld [vmem:[%s6 + $0x688] sm:$0xf]
        %v8172 = vld [vmem:[%s6 + $0x68c] sm:$0xf]
        %v8173 = vld [vmem:[%s6 + $0x690] sm:$0xf]
        %v8174 = vld [vmem:[%s6 + $0x694] sm:$0xf]
        %v8175 = vld [vmem:[%s6 + $0x698] sm:$0xf]
        %v8176 = vld [vmem:[%s6 + $0x69c] sm:$0xf]
        %v8177 = vld [vmem:[%s6 + $0x6a0] sm:$0xf]
        %v8178 = vld [vmem:[%s6 + $0x6a4] sm:$0xf]
        %v8179 = vld [vmem:[%s6 + $0x6a8] sm:$0xf]
        %v8180 = vld [vmem:[%s6 + $0x6ac] sm:$0xf]
        %v8181 = vld [vmem:[%s6 + $0x6b0] sm:$0xf]
        %v8182 = vld [vmem:[%s6 + $0x6b4] sm:$0xf]
        %v8183 = vld [vmem:[%s6 + $0x6b8] sm:$0xf]
        %v8184 = vld [vmem:[%s6 + $0x6bc] sm:$0xf]
        %v8185 = vld [vmem:[%s6 + $0x6c0] sm:$0xf]
        %v8186 = vld [vmem:[%s6 + $0x6c4] sm:$0xf]
        %v8187 = vld [vmem:[%s6 + $0x6c8] sm:$0xf]
        %v8188 = vld [vmem:[%s6 + $0x6cc] sm:$0xf]
        %v8189 = vld [vmem:[%s6 + $0x6d0] sm:$0xf]
        %v8190 = vld [vmem:[%s6 + $0x6d4] sm:$0xf]
        %v8191 = vld [vmem:[%s6 + $0x6d8] sm:$0xf]
        %v8192 = vld [vmem:[%s6 + $0x6dc] sm:$0xf]
        %v8193 = vld [vmem:[%s6 + $0x6e0] sm:$0xf]
        %v8194 = vld [vmem:[%s6 + $0x6e4] sm:$0xf]
        %v8195 = vld [vmem:[%s6 + $0x6e8] sm:$0xf]
        %v8196 = vld [vmem:[%s6 + $0x6ec] sm:$0xf]
        %v8197 = vld [vmem:[%s6 + $0x6f0] sm:$0xf]
        %v8198 = vld [vmem:[%s6 + $0x6f4] sm:$0xf]
        %v8199 = vld [vmem:[%s6 + $0x6f8] sm:$0xf]
        %v8200 = vld [vmem:[%s6 + $0x6fc] sm:$0xf]
        %v8201 = vld [vmem:[%s6 + $0x700] sm:$0xf]
        %v8202 = vld [vmem:[%s6 + $0x704] sm:$0xf]
        %v8203 = vld [vmem:[%s6 + $0x708] sm:$0xf]
        %v8204 = vld [vmem:[%s6 + $0x70c] sm:$0xf]
        %v8205 = vld [vmem:[%s6 + $0x710] sm:$0xf]
        %v8206 = vld [vmem:[%s6 + $0x714] sm:$0xf]
        %v8207 = vld [vmem:[%s6 + $0x718] sm:$0xf]
        %v8208 = vld [vmem:[%s6 + $0x71c] sm:$0xf]
        %v8209 = vld [vmem:[%s6 + $0x720] sm:$0xf]
        %v8210 = vld [vmem:[%s6 + $0x724] sm:$0xf]
        %v8211 = vld [vmem:[%s6 + $0x728] sm:$0xf]
        %v8212 = vld [vmem:[%s6 + $0x72c] sm:$0xf]
        %v8213 = vld [vmem:[%s6 + $0x730] sm:$0xf]
        %v8214 = vld [vmem:[%s6 + $0x734] sm:$0xf]
        %v8215 = vld [vmem:[%s6 + $0x738] sm:$0xf]
        %v8216 = vld [vmem:[%s6 + $0x73c] sm:$0xf]
        %v8217 = vld [vmem:[%s6 + $0x740] sm:$0xf]
        %v8218 = vld [vmem:[%s6 + $0x744] sm:$0xf]
        %v8219 = vld [vmem:[%s6 + $0x748] sm:$0xf]
        %v8220 = vld [vmem:[%s6 + $0x74c] sm:$0xf]
        %v8221 = vld [vmem:[%s6 + $0x750] sm:$0xf]
        %v8222 = vld [vmem:[%s6 + $0x754] sm:$0xf]
        %v8223 = vld [vmem:[%s6 + $0x758] sm:$0xf]
        %v8224 = vld [vmem:[%s6 + $0x75c] sm:$0xf]
        %v8225 = vld [vmem:[%s6 + $0x760] sm:$0xf]
        %v8226 = vld [vmem:[%s6 + $0x764] sm:$0xf]
        %v8227 = vld [vmem:[%s6 + $0x768] sm:$0xf]
        %v8228 = vld [vmem:[%s6 + $0x76c] sm:$0xf]
        %v8229 = vld [vmem:[%s6 + $0x770] sm:$0xf]
        %v8230 = vld [vmem:[%s6 + $0x774] sm:$0xf]
        %v8231 = vld [vmem:[%s6 + $0x778] sm:$0xf]
        %v8232 = vld [vmem:[%s6 + $0x77c] sm:$0xf]
        %v8233 = vld [vmem:[%s6 + $0x780] sm:$0xf]
        %v8234 = vld [vmem:[%s6 + $0x784] sm:$0xf]
        %v8235 = vld [vmem:[%s6 + $0x788] sm:$0xf]
        %v8236 = vld [vmem:[%s6 + $0x78c] sm:$0xf]
        %v8237 = vld [vmem:[%s6 + $0x790] sm:$0xf]
        %v8238 = vld [vmem:[%s6 + $0x794] sm:$0xf]
        %v8239 = vld [vmem:[%s6 + $0x798] sm:$0xf]
        %v8240 = vld [vmem:[%s6 + $0x79c] sm:$0xf]
        %v8241 = vld [vmem:[%s6 + $0x7a0] sm:$0xf]
        %v8242 = vld [vmem:[%s6 + $0x7a4] sm:$0xf]
        %v8243 = vld [vmem:[%s6 + $0x7a8] sm:$0xf]
        %v8244 = vld [vmem:[%s6 + $0x7ac] sm:$0xf]
        %v8245 = vld [vmem:[%s6 + $0x7b0] sm:$0xf]
        %v8246 = vld [vmem:[%s6 + $0x7b4] sm:$0xf]
        %v8247 = vld [vmem:[%s6 + $0x7b8] sm:$0xf]
        %v8248 = vld [vmem:[%s6 + $0x7bc] sm:$0xf]
        %v8249 = vld [vmem:[%s6 + $0x7c0] sm:$0xf]
        %v8250 = vld [vmem:[%s6 + $0x7c4] sm:$0xf]
        %v8251 = vld [vmem:[%s6 + $0x7c8] sm:$0xf]
        %v8252 = vld [vmem:[%s6 + $0x7cc] sm:$0xf]
        %v8253 = vld [vmem:[%s6 + $0x7d0] sm:$0xf]
        %v8254 = vld [vmem:[%s6 + $0x7d4] sm:$0xf]
        %v8255 = vld [vmem:[%s6 + $0x7d8] sm:$0xf]
        %v8256 = vld [vmem:[%s6 + $0x7dc] sm:$0xf]
        %v8257 = vld [vmem:[%s6 + $0x7e0] sm:$0xf]
        %v8258 = vld [vmem:[%s6 + $0x7e4] sm:$0xf]
        %v8259 = vld [vmem:[%s6 + $0x7e8] sm:$0xf]
        %v8260 = vld [vmem:[%s6 + $0x7ec] sm:$0xf]
        %v8261 = vld [vmem:[%s6 + $0x7f0] sm:$0xf]
        %v8262 = vld [vmem:[%s6 + $0x7f4] sm:$0xf]
        %v8263 = vld [vmem:[%s6 + $0x7f8] sm:$0xf]
        %v8264 = vld [vmem:[%s6 + $0x7fc] sm:$0xf]
        %v8777 = vunpack.c.l.b16 %v7753
        %v8778 = vunpack.c.l.b16 %v7754
        %v8779 = vunpack.c.l.b16 %v7755
        %v8780 = vunpack.c.l.b16 %v7756
        %v8781 = vunpack.c.l.b16 %v7757
        %v8782 = vunpack.c.l.b16 %v7758
        %v8783 = vunpack.c.l.b16 %v7759
        %v8784 = vunpack.c.l.b16 %v7760
        %v8785 = vunpack.c.l.b16 %v7761
        %v8786 = vunpack.c.l.b16 %v7762
        %v8787 = vunpack.c.l.b16 %v7763
        %v8788 = vunpack.c.l.b16 %v7764
        %v8789 = vunpack.c.l.b16 %v7765
        %v8790 = vunpack.c.l.b16 %v7766
        %v8791 = vunpack.c.l.b16 %v7767
        %v8792 = vunpack.c.l.b16 %v7768
        %v8793 = vunpack.c.l.b16 %v7769
        %v8794 = vunpack.c.l.b16 %v7770
        %v8795 = vunpack.c.l.b16 %v7771
        %v8796 = vunpack.c.l.b16 %v7772
        %v8797 = vunpack.c.l.b16 %v7773
        %v8798 = vunpack.c.l.b16 %v7774
        %v8799 = vunpack.c.l.b16 %v7775
        %v8800 = vunpack.c.l.b16 %v7776
        %v8801 = vunpack.c.l.b16 %v7777
        %v8802 = vunpack.c.l.b16 %v7778
        %v8803 = vunpack.c.l.b16 %v7779
        %v8804 = vunpack.c.l.b16 %v7780
        %v8805 = vunpack.c.l.b16 %v7781
        %v8806 = vunpack.c.l.b16 %v7782
        %v8807 = vunpack.c.l.b16 %v7783
        %v8808 = vunpack.c.l.b16 %v7784
        %v8809 = vunpack.c.l.b16 %v7785
        %v8810 = vunpack.c.l.b16 %v7786
        %v8811 = vunpack.c.l.b16 %v7787
        %v8812 = vunpack.c.l.b16 %v7788
        %v8813 = vunpack.c.l.b16 %v7789
        %v8814 = vunpack.c.l.b16 %v7790
        %v8815 = vunpack.c.l.b16 %v7791
        %v8816 = vunpack.c.l.b16 %v7792
        %v8817 = vunpack.c.l.b16 %v7793
        %v8818 = vunpack.c.l.b16 %v7794
        %v8819 = vunpack.c.l.b16 %v7795
        %v8820 = vunpack.c.l.b16 %v7796
        %v8821 = vunpack.c.l.b16 %v7797
        %v8822 = vunpack.c.l.b16 %v7798
        %v8823 = vunpack.c.l.b16 %v7799
        %v8824 = vunpack.c.l.b16 %v7800
        %v8825 = vunpack.c.l.b16 %v7801
        %v8826 = vunpack.c.l.b16 %v7802
        %v8827 = vunpack.c.l.b16 %v7803
        %v8828 = vunpack.c.l.b16 %v7804
        %v8829 = vunpack.c.l.b16 %v7805
        %v8830 = vunpack.c.l.b16 %v7806
        %v8831 = vunpack.c.l.b16 %v7807
        %v8832 = vunpack.c.l.b16 %v7808
        %v8833 = vunpack.c.l.b16 %v7809
        %v8834 = vunpack.c.l.b16 %v7810
        %v8835 = vunpack.c.l.b16 %v7811
        %v8836 = vunpack.c.l.b16 %v7812
        %v8837 = vunpack.c.l.b16 %v7813
        %v8838 = vunpack.c.l.b16 %v7814
        %v8839 = vunpack.c.l.b16 %v7815
        %v8840 = vunpack.c.l.b16 %v7816
        %v8841 = vunpack.c.l.b16 %v7817
        %v8842 = vunpack.c.l.b16 %v7818
        %v8843 = vunpack.c.l.b16 %v7819
        %v8844 = vunpack.c.l.b16 %v7820
        %v8845 = vunpack.c.l.b16 %v7821
        %v8846 = vunpack.c.l.b16 %v7822
        %v8847 = vunpack.c.l.b16 %v7823
        %v8848 = vunpack.c.l.b16 %v7824
        %v8849 = vunpack.c.l.b16 %v7825
        %v8850 = vunpack.c.l.b16 %v7826
        %v8851 = vunpack.c.l.b16 %v7827
        %v8852 = vunpack.c.l.b16 %v7828
        %v8853 = vunpack.c.l.b16 %v7829
        %v8854 = vunpack.c.l.b16 %v7830
        %v8855 = vunpack.c.l.b16 %v7831
        %v8856 = vunpack.c.l.b16 %v7832
        %v8857 = vunpack.c.l.b16 %v7833
        %v8858 = vunpack.c.l.b16 %v7834
        %v8859 = vunpack.c.l.b16 %v7835
        %v8860 = vunpack.c.l.b16 %v7836
        %v8861 = vunpack.c.l.b16 %v7837
        %v8862 = vunpack.c.l.b16 %v7838
        %v8863 = vunpack.c.l.b16 %v7839
        %v8864 = vunpack.c.l.b16 %v7840
        %v8865 = vunpack.c.l.b16 %v7841
        %v8866 = vunpack.c.l.b16 %v7842
        %v8867 = vunpack.c.l.b16 %v7843
        %v8868 = vunpack.c.l.b16 %v7844
        %v8869 = vunpack.c.l.b16 %v7845
        %v8870 = vunpack.c.l.b16 %v7846
        %v8871 = vunpack.c.l.b16 %v7847
        %v8872 = vunpack.c.l.b16 %v7848
        %v8873 = vunpack.c.l.b16 %v7849
        %v8874 = vunpack.c.l.b16 %v7850
        %v8875 = vunpack.c.l.b16 %v7851
        %v8876 = vunpack.c.l.b16 %v7852
        %v8877 = vunpack.c.l.b16 %v7853
        %v8878 = vunpack.c.l.b16 %v7854
        %v8879 = vunpack.c.l.b16 %v7855
        %v8880 = vunpack.c.l.b16 %v7856
        %v8881 = vunpack.c.l.b16 %v7857
        %v8882 = vunpack.c.l.b16 %v7858
        %v8883 = vunpack.c.l.b16 %v7859
        %v8884 = vunpack.c.l.b16 %v7860
        %v8885 = vunpack.c.l.b16 %v7861
        %v8886 = vunpack.c.l.b16 %v7862
        %v8887 = vunpack.c.l.b16 %v7863
        %v8888 = vunpack.c.l.b16 %v7864
        %v8889 = vunpack.c.l.b16 %v7865
        %v8890 = vunpack.c.l.b16 %v7866
        %v8891 = vunpack.c.l.b16 %v7867
        %v8892 = vunpack.c.l.b16 %v7868
        %v8893 = vunpack.c.l.b16 %v7869
        %v8894 = vunpack.c.l.b16 %v7870
        %v8895 = vunpack.c.l.b16 %v7871
        %v8896 = vunpack.c.l.b16 %v7872
        %v8897 = vunpack.c.l.b16 %v7873
        %v8898 = vunpack.c.l.b16 %v7874
        %v8899 = vunpack.c.l.b16 %v7875
        %v8900 = vunpack.c.l.b16 %v7876
        %v8901 = vunpack.c.l.b16 %v7877
        %v8902 = vunpack.c.l.b16 %v7878
        %v8903 = vunpack.c.l.b16 %v7879
        %v8904 = vunpack.c.l.b16 %v7880
        %v8905 = vunpack.c.l.b16 %v7881
        %v8906 = vunpack.c.l.b16 %v7882
        %v8907 = vunpack.c.l.b16 %v7883
        %v8908 = vunpack.c.l.b16 %v7884
        %v8909 = vunpack.c.l.b16 %v7885
        %v8910 = vunpack.c.l.b16 %v7886
        %v8911 = vunpack.c.l.b16 %v7887
        %v8912 = vunpack.c.l.b16 %v7888
        %v8913 = vunpack.c.l.b16 %v7889
        %v8914 = vunpack.c.l.b16 %v7890
        %v8915 = vunpack.c.l.b16 %v7891
        %v8916 = vunpack.c.l.b16 %v7892
        %v8917 = vunpack.c.l.b16 %v7893
        %v8918 = vunpack.c.l.b16 %v7894
        %v8919 = vunpack.c.l.b16 %v7895
        %v8920 = vunpack.c.l.b16 %v7896
        %v8921 = vunpack.c.l.b16 %v7897
        %v8922 = vunpack.c.l.b16 %v7898
        %v8923 = vunpack.c.l.b16 %v7899
        %v8924 = vunpack.c.l.b16 %v7900
        %v8925 = vunpack.c.l.b16 %v7901
        %v8926 = vunpack.c.l.b16 %v7902
        %v8927 = vunpack.c.l.b16 %v7903
        %v8928 = vunpack.c.l.b16 %v7904
        %v8929 = vunpack.c.l.b16 %v7905
        %v8930 = vunpack.c.l.b16 %v7906
        %v8931 = vunpack.c.l.b16 %v7907
        %v8932 = vunpack.c.l.b16 %v7908
        %v8933 = vunpack.c.l.b16 %v7909
        %v8934 = vunpack.c.l.b16 %v7910
        %v8935 = vunpack.c.l.b16 %v7911
        %v8936 = vunpack.c.l.b16 %v7912
        %v8937 = vunpack.c.l.b16 %v7913
        %v8938 = vunpack.c.l.b16 %v7914
        %v8939 = vunpack.c.l.b16 %v7915
        %v8940 = vunpack.c.l.b16 %v7916
        %v8941 = vunpack.c.l.b16 %v7917
        %v8942 = vunpack.c.l.b16 %v7918
        %v8943 = vunpack.c.l.b16 %v7919
        %v8944 = vunpack.c.l.b16 %v7920
        %v8945 = vunpack.c.l.b16 %v7921
        %v8946 = vunpack.c.l.b16 %v7922
        %v8947 = vunpack.c.l.b16 %v7923
        %v8948 = vunpack.c.l.b16 %v7924
        %v8949 = vunpack.c.l.b16 %v7925
        %v8950 = vunpack.c.l.b16 %v7926
        %v8951 = vunpack.c.l.b16 %v7927
        %v8952 = vunpack.c.l.b16 %v7928
        %v8953 = vunpack.c.l.b16 %v7929
        %v8954 = vunpack.c.l.b16 %v7930
        %v8955 = vunpack.c.l.b16 %v7931
        %v8956 = vunpack.c.l.b16 %v7932
        %v8957 = vunpack.c.l.b16 %v7933
        %v8958 = vunpack.c.l.b16 %v7934
        %v8959 = vunpack.c.l.b16 %v7935
        %v8960 = vunpack.c.l.b16 %v7936
        %v8961 = vunpack.c.l.b16 %v7937
        %v8962 = vunpack.c.l.b16 %v7938
        %v8963 = vunpack.c.l.b16 %v7939
        %v8964 = vunpack.c.l.b16 %v7940
        %v8965 = vunpack.c.l.b16 %v7941
        %v8966 = vunpack.c.l.b16 %v7942
        %v8967 = vunpack.c.l.b16 %v7943
        %v8968 = vunpack.c.l.b16 %v7944
        %v8969 = vunpack.c.l.b16 %v7945
        %v8970 = vunpack.c.l.b16 %v7946
        %v8971 = vunpack.c.l.b16 %v7947
        %v8972 = vunpack.c.l.b16 %v7948
        %v8973 = vunpack.c.l.b16 %v7949
        %v8974 = vunpack.c.l.b16 %v7950
        %v8975 = vunpack.c.l.b16 %v7951
        %v8976 = vunpack.c.l.b16 %v7952
        %v8977 = vunpack.c.l.b16 %v7953
        %v8978 = vunpack.c.l.b16 %v7954
        %v8979 = vunpack.c.l.b16 %v7955
        %v8980 = vunpack.c.l.b16 %v7956
        %v8981 = vunpack.c.l.b16 %v7957
        %v8982 = vunpack.c.l.b16 %v7958
        %v8983 = vunpack.c.l.b16 %v7959
        %v8984 = vunpack.c.l.b16 %v7960
        %v8985 = vunpack.c.l.b16 %v7961
        %v8986 = vunpack.c.l.b16 %v7962
        %v8987 = vunpack.c.l.b16 %v7963
        %v8988 = vunpack.c.l.b16 %v7964
        %v8989 = vunpack.c.l.b16 %v7965
        %v8990 = vunpack.c.l.b16 %v7966
        %v8991 = vunpack.c.l.b16 %v7967
        %v8992 = vunpack.c.l.b16 %v7968
        %v8993 = vunpack.c.l.b16 %v7969
        %v8994 = vunpack.c.l.b16 %v7970
        %v8995 = vunpack.c.l.b16 %v7971
        %v8996 = vunpack.c.l.b16 %v7972
        %v8997 = vunpack.c.l.b16 %v7973
        %v8998 = vunpack.c.l.b16 %v7974
        %v8999 = vunpack.c.l.b16 %v7975
        %v9000 = vunpack.c.l.b16 %v7976
        %v9001 = vunpack.c.l.b16 %v7977
        %v9002 = vunpack.c.l.b16 %v7978
        %v9003 = vunpack.c.l.b16 %v7979
        %v9004 = vunpack.c.l.b16 %v7980
        %v9005 = vunpack.c.l.b16 %v7981
        %v9006 = vunpack.c.l.b16 %v7982
        %v9007 = vunpack.c.l.b16 %v7983
        %v9008 = vunpack.c.l.b16 %v7984
        %v9009 = vunpack.c.l.b16 %v7985
        %v9010 = vunpack.c.l.b16 %v7986
        %v9011 = vunpack.c.l.b16 %v7987
        %v9012 = vunpack.c.l.b16 %v7988
        %v9013 = vunpack.c.l.b16 %v7989
        %v9014 = vunpack.c.l.b16 %v7990
        %v9015 = vunpack.c.l.b16 %v7991
        %v9016 = vunpack.c.l.b16 %v7992
        %v9017 = vunpack.c.l.b16 %v7993
        %v9018 = vunpack.c.l.b16 %v7994
        %v9019 = vunpack.c.l.b16 %v7995
        %v9020 = vunpack.c.l.b16 %v7996
        %v9021 = vunpack.c.l.b16 %v7997
        %v9022 = vunpack.c.l.b16 %v7998
        %v9023 = vunpack.c.l.b16 %v7999
        %v9024 = vunpack.c.l.b16 %v8000
        %v9025 = vunpack.c.l.b16 %v8001
        %v9026 = vunpack.c.l.b16 %v8002
        %v9027 = vunpack.c.l.b16 %v8003
        %v9028 = vunpack.c.l.b16 %v8004
        %v9029 = vunpack.c.l.b16 %v8005
        %v9030 = vunpack.c.l.b16 %v8006
        %v9031 = vunpack.c.l.b16 %v8007
        %v9032 = vunpack.c.l.b16 %v8008
        %v9033 = vunpack.c.l.b16 %v8009
        %v9034 = vunpack.c.l.b16 %v8010
        %v9035 = vunpack.c.l.b16 %v8011
        %v9036 = vunpack.c.l.b16 %v8012
        %v9037 = vunpack.c.l.b16 %v8013
        %v9038 = vunpack.c.l.b16 %v8014
        %v9039 = vunpack.c.l.b16 %v8015
        %v9040 = vunpack.c.l.b16 %v8016
        %v9041 = vunpack.c.l.b16 %v8017
        %v9042 = vunpack.c.l.b16 %v8018
        %v9043 = vunpack.c.l.b16 %v8019
        %v9044 = vunpack.c.l.b16 %v8020
        %v9045 = vunpack.c.l.b16 %v8021
        %v9046 = vunpack.c.l.b16 %v8022
        %v9047 = vunpack.c.l.b16 %v8023
        %v9048 = vunpack.c.l.b16 %v8024
        %v9049 = vunpack.c.l.b16 %v8025
        %v9050 = vunpack.c.l.b16 %v8026
        %v9051 = vunpack.c.l.b16 %v8027
        %v9052 = vunpack.c.l.b16 %v8028
        %v9053 = vunpack.c.l.b16 %v8029
        %v9054 = vunpack.c.l.b16 %v8030
        %v9055 = vunpack.c.l.b16 %v8031
        %v9056 = vunpack.c.l.b16 %v8032
        %v9057 = vunpack.c.l.b16 %v8033
        %v9058 = vunpack.c.l.b16 %v8034
        %v9059 = vunpack.c.l.b16 %v8035
        %v9060 = vunpack.c.l.b16 %v8036
        %v9061 = vunpack.c.l.b16 %v8037
        %v9062 = vunpack.c.l.b16 %v8038
        %v9063 = vunpack.c.l.b16 %v8039
        %v9064 = vunpack.c.l.b16 %v8040
        %v9065 = vunpack.c.l.b16 %v8041
        %v9066 = vunpack.c.l.b16 %v8042
        %v9067 = vunpack.c.l.b16 %v8043
        %v9068 = vunpack.c.l.b16 %v8044
        %v9069 = vunpack.c.l.b16 %v8045
        %v9070 = vunpack.c.l.b16 %v8046
        %v9071 = vunpack.c.l.b16 %v8047
        %v9072 = vunpack.c.l.b16 %v8048
        %v9073 = vunpack.c.l.b16 %v8049
        %v9074 = vunpack.c.l.b16 %v8050
        %v9075 = vunpack.c.l.b16 %v8051
        %v9076 = vunpack.c.l.b16 %v8052
        %v9077 = vunpack.c.l.b16 %v8053
        %v9078 = vunpack.c.l.b16 %v8054
        %v9079 = vunpack.c.l.b16 %v8055
        %v9080 = vunpack.c.l.b16 %v8056
        %v9081 = vunpack.c.l.b16 %v8057
        %v9082 = vunpack.c.l.b16 %v8058
        %v9083 = vunpack.c.l.b16 %v8059
        %v9084 = vunpack.c.l.b16 %v8060
        %v9085 = vunpack.c.l.b16 %v8061
        %v9086 = vunpack.c.l.b16 %v8062
        %v9087 = vunpack.c.l.b16 %v8063
        %v9088 = vunpack.c.l.b16 %v8064
        %v9089 = vunpack.c.l.b16 %v8065
        %v9090 = vunpack.c.l.b16 %v8066
        %v9091 = vunpack.c.l.b16 %v8067
        %v9092 = vunpack.c.l.b16 %v8068
        %v9093 = vunpack.c.l.b16 %v8069
        %v9094 = vunpack.c.l.b16 %v8070
        %v9095 = vunpack.c.l.b16 %v8071
        %v9096 = vunpack.c.l.b16 %v8072
        %v9097 = vunpack.c.l.b16 %v8073
        %v9098 = vunpack.c.l.b16 %v8074
        %v9099 = vunpack.c.l.b16 %v8075
        %v9100 = vunpack.c.l.b16 %v8076
        %v9101 = vunpack.c.l.b16 %v8077
        %v9102 = vunpack.c.l.b16 %v8078
        %v9103 = vunpack.c.l.b16 %v8079
        %v9104 = vunpack.c.l.b16 %v8080
        %v9105 = vunpack.c.l.b16 %v8081
        %v9106 = vunpack.c.l.b16 %v8082
        %v9107 = vunpack.c.l.b16 %v8083
        %v9108 = vunpack.c.l.b16 %v8084
        %v9109 = vunpack.c.l.b16 %v8085
        %v9110 = vunpack.c.l.b16 %v8086
        %v9111 = vunpack.c.l.b16 %v8087
        %v9112 = vunpack.c.l.b16 %v8088
        %v9113 = vunpack.c.l.b16 %v8089
        %v9114 = vunpack.c.l.b16 %v8090
        %v9115 = vunpack.c.l.b16 %v8091
        %v9116 = vunpack.c.l.b16 %v8092
        %v9117 = vunpack.c.l.b16 %v8093
        %v9118 = vunpack.c.l.b16 %v8094
        %v9119 = vunpack.c.l.b16 %v8095
        %v9120 = vunpack.c.l.b16 %v8096
        %v9121 = vunpack.c.l.b16 %v8097
        %v9122 = vunpack.c.l.b16 %v8098
        %v9123 = vunpack.c.l.b16 %v8099
        %v9124 = vunpack.c.l.b16 %v8100
        %v9125 = vunpack.c.l.b16 %v8101
        %v9126 = vunpack.c.l.b16 %v8102
        %v9127 = vunpack.c.l.b16 %v8103
        %v9128 = vunpack.c.l.b16 %v8104
        %v9129 = vunpack.c.l.b16 %v8105
        %v9130 = vunpack.c.l.b16 %v8106
        %v9131 = vunpack.c.l.b16 %v8107
        %v9132 = vunpack.c.l.b16 %v8108
        %v9133 = vunpack.c.l.b16 %v8109
        %v9134 = vunpack.c.l.b16 %v8110
        %v9135 = vunpack.c.l.b16 %v8111
        %v9136 = vunpack.c.l.b16 %v8112
        %v9137 = vunpack.c.l.b16 %v8113
        %v9138 = vunpack.c.l.b16 %v8114
        %v9139 = vunpack.c.l.b16 %v8115
        %v9140 = vunpack.c.l.b16 %v8116
        %v9141 = vunpack.c.l.b16 %v8117
        %v9142 = vunpack.c.l.b16 %v8118
        %v9143 = vunpack.c.l.b16 %v8119
        %v9144 = vunpack.c.l.b16 %v8120
        %v9145 = vunpack.c.l.b16 %v8121
        %v9146 = vunpack.c.l.b16 %v8122
        %v9147 = vunpack.c.l.b16 %v8123
        %v9148 = vunpack.c.l.b16 %v8124
        %v9149 = vunpack.c.l.b16 %v8125
        %v9150 = vunpack.c.l.b16 %v8126
        %v9151 = vunpack.c.l.b16 %v8127
        %v9152 = vunpack.c.l.b16 %v8128
        %v9153 = vunpack.c.l.b16 %v8129
        %v9154 = vunpack.c.l.b16 %v8130
        %v9155 = vunpack.c.l.b16 %v8131
        %v9156 = vunpack.c.l.b16 %v8132
        %v9157 = vunpack.c.l.b16 %v8133
        %v9158 = vunpack.c.l.b16 %v8134
        %v9159 = vunpack.c.l.b16 %v8135
        %v9160 = vunpack.c.l.b16 %v8136
        %v9161 = vunpack.c.l.b16 %v8137
        %v9162 = vunpack.c.l.b16 %v8138
        %v9163 = vunpack.c.l.b16 %v8139
        %v9164 = vunpack.c.l.b16 %v8140
        %v9165 = vunpack.c.l.b16 %v8141
        %v9166 = vunpack.c.l.b16 %v8142
        %v9167 = vunpack.c.l.b16 %v8143
        %v9168 = vunpack.c.l.b16 %v8144
        %v9169 = vunpack.c.l.b16 %v8145
        %v9170 = vunpack.c.l.b16 %v8146
        %v9171 = vunpack.c.l.b16 %v8147
        %v9172 = vunpack.c.l.b16 %v8148
        %v9173 = vunpack.c.l.b16 %v8149
        %v9174 = vunpack.c.l.b16 %v8150
        %v9175 = vunpack.c.l.b16 %v8151
        %v9176 = vunpack.c.l.b16 %v8152
        %v9177 = vunpack.c.l.b16 %v8153
        %v9178 = vunpack.c.l.b16 %v8154
        %v9179 = vunpack.c.l.b16 %v8155
        %v9180 = vunpack.c.l.b16 %v8156
        %v9181 = vunpack.c.l.b16 %v8157
        %v9182 = vunpack.c.l.b16 %v8158
        %v9183 = vunpack.c.l.b16 %v8159
        %v9184 = vunpack.c.l.b16 %v8160
        %v9185 = vunpack.c.l.b16 %v8161
        %v9186 = vunpack.c.l.b16 %v8162
        %v9187 = vunpack.c.l.b16 %v8163
        %v9188 = vunpack.c.l.b16 %v8164
        %v9189 = vunpack.c.l.b16 %v8165
        %v9190 = vunpack.c.l.b16 %v8166
        %v9191 = vunpack.c.l.b16 %v8167
        %v9192 = vunpack.c.l.b16 %v8168
        %v9193 = vunpack.c.l.b16 %v8169
        %v9194 = vunpack.c.l.b16 %v8170
        %v9195 = vunpack.c.l.b16 %v8171
        %v9196 = vunpack.c.l.b16 %v8172
        %v9197 = vunpack.c.l.b16 %v8173
        %v9198 = vunpack.c.l.b16 %v8174
        %v9199 = vunpack.c.l.b16 %v8175
        %v9200 = vunpack.c.l.b16 %v8176
        %v9201 = vunpack.c.l.b16 %v8177
        %v9202 = vunpack.c.l.b16 %v8178
        %v9203 = vunpack.c.l.b16 %v8179
        %v9204 = vunpack.c.l.b16 %v8180
        %v9205 = vunpack.c.l.b16 %v8181
        %v9206 = vunpack.c.l.b16 %v8182
        %v9207 = vunpack.c.l.b16 %v8183
        %v9208 = vunpack.c.l.b16 %v8184
        %v9209 = vunpack.c.l.b16 %v8185
        %v9210 = vunpack.c.l.b16 %v8186
        %v9211 = vunpack.c.l.b16 %v8187
        %v9212 = vunpack.c.l.b16 %v8188
        %v9213 = vunpack.c.l.b16 %v8189
        %v9214 = vunpack.c.l.b16 %v8190
        %v9215 = vunpack.c.l.b16 %v8191
        %v9216 = vunpack.c.l.b16 %v8192
        %v9217 = vunpack.c.l.b16 %v8193
        %v9218 = vunpack.c.l.b16 %v8194
        %v9219 = vunpack.c.l.b16 %v8195
        %v9220 = vunpack.c.l.b16 %v8196
        %v9221 = vunpack.c.l.b16 %v8197
        %v9222 = vunpack.c.l.b16 %v8198
        %v9223 = vunpack.c.l.b16 %v8199
        %v9224 = vunpack.c.l.b16 %v8200
        %v9225 = vunpack.c.l.b16 %v8201
        %v9226 = vunpack.c.l.b16 %v8202
        %v9227 = vunpack.c.l.b16 %v8203
        %v9228 = vunpack.c.l.b16 %v8204
        %v9229 = vunpack.c.l.b16 %v8205
        %v9230 = vunpack.c.l.b16 %v8206
        %v9231 = vunpack.c.l.b16 %v8207
        %v9232 = vunpack.c.l.b16 %v8208
        %v9233 = vunpack.c.l.b16 %v8209
        %v9234 = vunpack.c.l.b16 %v8210
        %v9235 = vunpack.c.l.b16 %v8211
        %v9236 = vunpack.c.l.b16 %v8212
        %v9237 = vunpack.c.l.b16 %v8213
        %v9238 = vunpack.c.l.b16 %v8214
        %v9239 = vunpack.c.l.b16 %v8215
        %v9240 = vunpack.c.l.b16 %v8216
        %v9241 = vunpack.c.l.b16 %v8217
        %v9242 = vunpack.c.l.b16 %v8218
        %v9243 = vunpack.c.l.b16 %v8219
        %v9244 = vunpack.c.l.b16 %v8220
        %v9245 = vunpack.c.l.b16 %v8221
        %v9246 = vunpack.c.l.b16 %v8222
        %v9247 = vunpack.c.l.b16 %v8223
        %v9248 = vunpack.c.l.b16 %v8224
        %v9249 = vunpack.c.l.b16 %v8225
        %v9250 = vunpack.c.l.b16 %v8226
        %v9251 = vunpack.c.l.b16 %v8227
        %v9252 = vunpack.c.l.b16 %v8228
        %v9253 = vunpack.c.l.b16 %v8229
        %v9254 = vunpack.c.l.b16 %v8230
        %v9255 = vunpack.c.l.b16 %v8231
        %v9256 = vunpack.c.l.b16 %v8232
        %v9257 = vunpack.c.l.b16 %v8233
        %v9258 = vunpack.c.l.b16 %v8234
        %v9259 = vunpack.c.l.b16 %v8235
        %v9260 = vunpack.c.l.b16 %v8236
        %v9261 = vunpack.c.l.b16 %v8237
        %v9262 = vunpack.c.l.b16 %v8238
        %v9263 = vunpack.c.l.b16 %v8239
        %v9264 = vunpack.c.l.b16 %v8240
        %v9265 = vunpack.c.l.b16 %v8241
        %v9266 = vunpack.c.l.b16 %v8242
        %v9267 = vunpack.c.l.b16 %v8243
        %v9268 = vunpack.c.l.b16 %v8244
        %v9269 = vunpack.c.l.b16 %v8245
        %v9270 = vunpack.c.l.b16 %v8246
        %v9271 = vunpack.c.l.b16 %v8247
        %v9272 = vunpack.c.l.b16 %v8248
        %v9273 = vunpack.c.l.b16 %v8249
        %v9274 = vunpack.c.l.b16 %v8250
        %v9275 = vunpack.c.l.b16 %v8251
        %v9276 = vunpack.c.l.b16 %v8252
        %v9277 = vunpack.c.l.b16 %v8253
        %v9278 = vunpack.c.l.b16 %v8254
        %v9279 = vunpack.c.l.b16 %v8255
        %v9280 = vunpack.c.l.b16 %v8256
        %v9281 = vunpack.c.l.b16 %v8257
        %v9282 = vunpack.c.l.b16 %v8258
        %v9283 = vunpack.c.l.b16 %v8259
        %v9284 = vunpack.c.l.b16 %v8260
        %v9285 = vunpack.c.l.b16 %v8261
        %v9286 = vunpack.c.l.b16 %v8262
        %v9287 = vunpack.c.l.b16 %v8263
        %v9288 = vunpack.c.l.b16 %v8264
        %v9289 = vpack.c.b16 %v8778, %v8777
        %v9290 = vpack.c.b16 %v8780, %v8779
        %v9291 = vpack.c.b16 %v8782, %v8781
        %v9292 = vpack.c.b16 %v8784, %v8783
        %v9293 = vpack.c.b16 %v8786, %v8785
        %v9294 = vpack.c.b16 %v8788, %v8787
        %v9295 = vpack.c.b16 %v8790, %v8789
        %v9296 = vpack.c.b16 %v8792, %v8791
        %v9297 = vpack.c.b16 %v8794, %v8793
        %v9298 = vpack.c.b16 %v8796, %v8795
        %v9299 = vpack.c.b16 %v8798, %v8797
        %v9300 = vpack.c.b16 %v8800, %v8799
        %v9301 = vpack.c.b16 %v8802, %v8801
        %v9302 = vpack.c.b16 %v8804, %v8803
        %v9303 = vpack.c.b16 %v8806, %v8805
        %v9304 = vpack.c.b16 %v8808, %v8807
        %v9305 = vpack.c.b16 %v8810, %v8809
        %v9306 = vpack.c.b16 %v8812, %v8811
        %v9307 = vpack.c.b16 %v8814, %v8813
        %v9308 = vpack.c.b16 %v8816, %v8815
        %v9309 = vpack.c.b16 %v8818, %v8817
        %v9310 = vpack.c.b16 %v8820, %v8819
        %v9311 = vpack.c.b16 %v8822, %v8821
        %v9312 = vpack.c.b16 %v8824, %v8823
        %v9313 = vpack.c.b16 %v8826, %v8825
        %v9314 = vpack.c.b16 %v8828, %v8827
        %v9315 = vpack.c.b16 %v8830, %v8829
        %v9316 = vpack.c.b16 %v8832, %v8831
        %v9317 = vpack.c.b16 %v8834, %v8833
        %v9318 = vpack.c.b16 %v8836, %v8835
        %v9319 = vpack.c.b16 %v8838, %v8837
        %v9320 = vpack.c.b16 %v8840, %v8839
        %v9321 = vpack.c.b16 %v8842, %v8841
        %v9322 = vpack.c.b16 %v8844, %v8843
        %v9323 = vpack.c.b16 %v8846, %v8845
        %v9324 = vpack.c.b16 %v8848, %v8847
        %v9325 = vpack.c.b16 %v8850, %v8849
        %v9326 = vpack.c.b16 %v8852, %v8851
        %v9327 = vpack.c.b16 %v8854, %v8853
        %v9328 = vpack.c.b16 %v8856, %v8855
        %v9329 = vpack.c.b16 %v8858, %v8857
        %v9330 = vpack.c.b16 %v8860, %v8859
        %v9331 = vpack.c.b16 %v8862, %v8861
        %v9332 = vpack.c.b16 %v8864, %v8863
        %v9333 = vpack.c.b16 %v8866, %v8865
        %v9334 = vpack.c.b16 %v8868, %v8867
        %v9335 = vpack.c.b16 %v8870, %v8869
        %v9336 = vpack.c.b16 %v8872, %v8871
        %v9337 = vpack.c.b16 %v8874, %v8873
        %v9338 = vpack.c.b16 %v8876, %v8875
        %v9339 = vpack.c.b16 %v8878, %v8877
        %v9340 = vpack.c.b16 %v8880, %v8879
        %v9341 = vpack.c.b16 %v8882, %v8881
        %v9342 = vpack.c.b16 %v8884, %v8883
        %v9343 = vpack.c.b16 %v8886, %v8885
        %v9344 = vpack.c.b16 %v8888, %v8887
        %v9345 = vpack.c.b16 %v8890, %v8889
        %v9346 = vpack.c.b16 %v8892, %v8891
        %v9347 = vpack.c.b16 %v8894, %v8893
        %v9348 = vpack.c.b16 %v8896, %v8895
        %v9349 = vpack.c.b16 %v8898, %v8897
        %v9350 = vpack.c.b16 %v8900, %v8899
        %v9351 = vpack.c.b16 %v8902, %v8901
        %v9352 = vpack.c.b16 %v8904, %v8903
        %v9353 = vpack.c.b16 %v8906, %v8905
        %v9354 = vpack.c.b16 %v8908, %v8907
        %v9355 = vpack.c.b16 %v8910, %v8909
        %v9356 = vpack.c.b16 %v8912, %v8911
        %v9357 = vpack.c.b16 %v8914, %v8913
        %v9358 = vpack.c.b16 %v8916, %v8915
        %v9359 = vpack.c.b16 %v8918, %v8917
        %v9360 = vpack.c.b16 %v8920, %v8919
        %v9361 = vpack.c.b16 %v8922, %v8921
        %v9362 = vpack.c.b16 %v8924, %v8923
        %v9363 = vpack.c.b16 %v8926, %v8925
        %v9364 = vpack.c.b16 %v8928, %v8927
        %v9365 = vpack.c.b16 %v8930, %v8929
        %v9366 = vpack.c.b16 %v8932, %v8931
        %v9367 = vpack.c.b16 %v8934, %v8933
        %v9368 = vpack.c.b16 %v8936, %v8935
        %v9369 = vpack.c.b16 %v8938, %v8937
        %v9370 = vpack.c.b16 %v8940, %v8939
        %v9371 = vpack.c.b16 %v8942, %v8941
        %v9372 = vpack.c.b16 %v8944, %v8943
        %v9373 = vpack.c.b16 %v8946, %v8945
        %v9374 = vpack.c.b16 %v8948, %v8947
        %v9375 = vpack.c.b16 %v8950, %v8949
        %v9376 = vpack.c.b16 %v8952, %v8951
        %v9377 = vpack.c.b16 %v8954, %v8953
        %v9378 = vpack.c.b16 %v8956, %v8955
        %v9379 = vpack.c.b16 %v8958, %v8957
        %v9380 = vpack.c.b16 %v8960, %v8959
        %v9381 = vpack.c.b16 %v8962, %v8961
        %v9382 = vpack.c.b16 %v8964, %v8963
        %v9383 = vpack.c.b16 %v8966, %v8965
        %v9384 = vpack.c.b16 %v8968, %v8967
        %v9385 = vpack.c.b16 %v8970, %v8969
        %v9386 = vpack.c.b16 %v8972, %v8971
        %v9387 = vpack.c.b16 %v8974, %v8973
        %v9388 = vpack.c.b16 %v8976, %v8975
        %v9389 = vpack.c.b16 %v8978, %v8977
        %v9390 = vpack.c.b16 %v8980, %v8979
        %v9391 = vpack.c.b16 %v8982, %v8981
        %v9392 = vpack.c.b16 %v8984, %v8983
        %v9393 = vpack.c.b16 %v8986, %v8985
        %v9394 = vpack.c.b16 %v8988, %v8987
        %v9395 = vpack.c.b16 %v8990, %v8989
        %v9396 = vpack.c.b16 %v8992, %v8991
        %v9397 = vpack.c.b16 %v8994, %v8993
        %v9398 = vpack.c.b16 %v8996, %v8995
        %v9399 = vpack.c.b16 %v8998, %v8997
        %v9400 = vpack.c.b16 %v9000, %v8999
        %v9401 = vpack.c.b16 %v9002, %v9001
        %v9402 = vpack.c.b16 %v9004, %v9003
        %v9403 = vpack.c.b16 %v9006, %v9005
        %v9404 = vpack.c.b16 %v9008, %v9007
        %v9405 = vpack.c.b16 %v9010, %v9009
        %v9406 = vpack.c.b16 %v9012, %v9011
        %v9407 = vpack.c.b16 %v9014, %v9013
        %v9408 = vpack.c.b16 %v9016, %v9015
        %v9409 = vpack.c.b16 %v9018, %v9017
        %v9410 = vpack.c.b16 %v9020, %v9019
        %v9411 = vpack.c.b16 %v9022, %v9021
        %v9412 = vpack.c.b16 %v9024, %v9023
        %v9413 = vpack.c.b16 %v9026, %v9025
        %v9414 = vpack.c.b16 %v9028, %v9027
        %v9415 = vpack.c.b16 %v9030, %v9029
        %v9416 = vpack.c.b16 %v9032, %v9031
        %v9417 = vpack.c.b16 %v9034, %v9033
        %v9418 = vpack.c.b16 %v9036, %v9035
        %v9419 = vpack.c.b16 %v9038, %v9037
        %v9420 = vpack.c.b16 %v9040, %v9039
        %v9421 = vpack.c.b16 %v9042, %v9041
        %v9422 = vpack.c.b16 %v9044, %v9043
        %v9423 = vpack.c.b16 %v9046, %v9045
        %v9424 = vpack.c.b16 %v9048, %v9047
        %v9425 = vpack.c.b16 %v9050, %v9049
        %v9426 = vpack.c.b16 %v9052, %v9051
        %v9427 = vpack.c.b16 %v9054, %v9053
        %v9428 = vpack.c.b16 %v9056, %v9055
        %v9429 = vpack.c.b16 %v9058, %v9057
        %v9430 = vpack.c.b16 %v9060, %v9059
        %v9431 = vpack.c.b16 %v9062, %v9061
        %v9432 = vpack.c.b16 %v9064, %v9063
        %v9433 = vpack.c.b16 %v9066, %v9065
        %v9434 = vpack.c.b16 %v9068, %v9067
        %v9435 = vpack.c.b16 %v9070, %v9069
        %v9436 = vpack.c.b16 %v9072, %v9071
        %v9437 = vpack.c.b16 %v9074, %v9073
        %v9438 = vpack.c.b16 %v9076, %v9075
        %v9439 = vpack.c.b16 %v9078, %v9077
        %v9440 = vpack.c.b16 %v9080, %v9079
        %v9441 = vpack.c.b16 %v9082, %v9081
        %v9442 = vpack.c.b16 %v9084, %v9083
        %v9443 = vpack.c.b16 %v9086, %v9085
        %v9444 = vpack.c.b16 %v9088, %v9087
        %v9445 = vpack.c.b16 %v9090, %v9089
        %v9446 = vpack.c.b16 %v9092, %v9091
        %v9447 = vpack.c.b16 %v9094, %v9093
        %v9448 = vpack.c.b16 %v9096, %v9095
        %v9449 = vpack.c.b16 %v9098, %v9097
        %v9450 = vpack.c.b16 %v9100, %v9099
        %v9451 = vpack.c.b16 %v9102, %v9101
        %v9452 = vpack.c.b16 %v9104, %v9103
        %v9453 = vpack.c.b16 %v9106, %v9105
        %v9454 = vpack.c.b16 %v9108, %v9107
        %v9455 = vpack.c.b16 %v9110, %v9109
        %v9456 = vpack.c.b16 %v9112, %v9111
        %v9457 = vpack.c.b16 %v9114, %v9113
        %v9458 = vpack.c.b16 %v9116, %v9115
        %v9459 = vpack.c.b16 %v9118, %v9117
        %v9460 = vpack.c.b16 %v9120, %v9119
        %v9461 = vpack.c.b16 %v9122, %v9121
        %v9462 = vpack.c.b16 %v9124, %v9123
        %v9463 = vpack.c.b16 %v9126, %v9125
        %v9464 = vpack.c.b16 %v9128, %v9127
        %v9465 = vpack.c.b16 %v9130, %v9129
        %v9466 = vpack.c.b16 %v9132, %v9131
        %v9467 = vpack.c.b16 %v9134, %v9133
        %v9468 = vpack.c.b16 %v9136, %v9135
        %v9469 = vpack.c.b16 %v9138, %v9137
        %v9470 = vpack.c.b16 %v9140, %v9139
        %v9471 = vpack.c.b16 %v9142, %v9141
        %v9472 = vpack.c.b16 %v9144, %v9143
        %v9473 = vpack.c.b16 %v9146, %v9145
        %v9474 = vpack.c.b16 %v9148, %v9147
        %v9475 = vpack.c.b16 %v9150, %v9149
        %v9476 = vpack.c.b16 %v9152, %v9151
        %v9477 = vpack.c.b16 %v9154, %v9153
        %v9478 = vpack.c.b16 %v9156, %v9155
        %v9479 = vpack.c.b16 %v9158, %v9157
        %v9480 = vpack.c.b16 %v9160, %v9159
        %v9481 = vpack.c.b16 %v9162, %v9161
        %v9482 = vpack.c.b16 %v9164, %v9163
        %v9483 = vpack.c.b16 %v9166, %v9165
        %v9484 = vpack.c.b16 %v9168, %v9167
        %v9485 = vpack.c.b16 %v9170, %v9169
        %v9486 = vpack.c.b16 %v9172, %v9171
        %v9487 = vpack.c.b16 %v9174, %v9173
        %v9488 = vpack.c.b16 %v9176, %v9175
        %v9489 = vpack.c.b16 %v9178, %v9177
        %v9490 = vpack.c.b16 %v9180, %v9179
        %v9491 = vpack.c.b16 %v9182, %v9181
        %v9492 = vpack.c.b16 %v9184, %v9183
        %v9493 = vpack.c.b16 %v9186, %v9185
        %v9494 = vpack.c.b16 %v9188, %v9187
        %v9495 = vpack.c.b16 %v9190, %v9189
        %v9496 = vpack.c.b16 %v9192, %v9191
        %v9497 = vpack.c.b16 %v9194, %v9193
        %v9498 = vpack.c.b16 %v9196, %v9195
        %v9499 = vpack.c.b16 %v9198, %v9197
        %v9500 = vpack.c.b16 %v9200, %v9199
        %v9501 = vpack.c.b16 %v9202, %v9201
        %v9502 = vpack.c.b16 %v9204, %v9203
        %v9503 = vpack.c.b16 %v9206, %v9205
        %v9504 = vpack.c.b16 %v9208, %v9207
        %v9505 = vpack.c.b16 %v9210, %v9209
        %v9506 = vpack.c.b16 %v9212, %v9211
        %v9507 = vpack.c.b16 %v9214, %v9213
        %v9508 = vpack.c.b16 %v9216, %v9215
        %v9509 = vpack.c.b16 %v9218, %v9217
        %v9510 = vpack.c.b16 %v9220, %v9219
        %v9511 = vpack.c.b16 %v9222, %v9221
        %v9512 = vpack.c.b16 %v9224, %v9223
        %v9513 = vpack.c.b16 %v9226, %v9225
        %v9514 = vpack.c.b16 %v9228, %v9227
        %v9515 = vpack.c.b16 %v9230, %v9229
        %v9516 = vpack.c.b16 %v9232, %v9231
        %v9517 = vpack.c.b16 %v9234, %v9233
        %v9518 = vpack.c.b16 %v9236, %v9235
        %v9519 = vpack.c.b16 %v9238, %v9237
        %v9520 = vpack.c.b16 %v9240, %v9239
        %v9521 = vpack.c.b16 %v9242, %v9241
        %v9522 = vpack.c.b16 %v9244, %v9243
        %v9523 = vpack.c.b16 %v9246, %v9245
        %v9524 = vpack.c.b16 %v9248, %v9247
        %v9525 = vpack.c.b16 %v9250, %v9249
        %v9526 = vpack.c.b16 %v9252, %v9251
        %v9527 = vpack.c.b16 %v9254, %v9253
        %v9528 = vpack.c.b16 %v9256, %v9255
        %v9529 = vpack.c.b16 %v9258, %v9257
        %v9530 = vpack.c.b16 %v9260, %v9259
        %v9531 = vpack.c.b16 %v9262, %v9261
        %v9532 = vpack.c.b16 %v9264, %v9263
        %v9533 = vpack.c.b16 %v9266, %v9265
        %v9534 = vpack.c.b16 %v9268, %v9267
        %v9535 = vpack.c.b16 %v9270, %v9269
        %v9536 = vpack.c.b16 %v9272, %v9271
        %v9537 = vpack.c.b16 %v9274, %v9273
        %v9538 = vpack.c.b16 %v9276, %v9275
        %v9539 = vpack.c.b16 %v9278, %v9277
        %v9540 = vpack.c.b16 %v9280, %v9279
        %v9541 = vpack.c.b16 %v9282, %v9281
        %v9542 = vpack.c.b16 %v9284, %v9283
        %v9543 = vpack.c.b16 %v9286, %v9285
        %v9544 = vpack.c.b16 %v9288, %v9287
        %9801 = vmatprep.subr.bf16.mxu0 0
        %9802 = vmatpush1.bf16.msra.mxu0 %v9289
        %9803 = vmatprep.subr.bf16.mxu0 0
        %9804 = vmatpush1.bf16.msra.mxu0 %v9290
        %9805 = vmatprep.subr.bf16.mxu0 0
        %9806 = vmatpush1.bf16.msra.mxu0 %v9291
        %9807 = vmatprep.subr.bf16.mxu0 0
        %9808 = vmatpush1.bf16.msra.mxu0 %v9292
        %9809 = vmatprep.subr.bf16.mxu0 0
        %9810 = vmatpush1.bf16.msra.mxu0 %v9293
        %9811 = vmatprep.subr.bf16.mxu0 0
        %9812 = vmatpush1.bf16.msra.mxu0 %v9294
        %9813 = vmatprep.subr.bf16.mxu0 0
        %9814 = vmatpush1.bf16.msra.mxu0 %v9295
        %9815 = vmatprep.subr.bf16.mxu0 0
        %9816 = vmatpush1.bf16.msra.mxu0 %v9296
        %9817 = vmatprep.subr.bf16.mxu0 0
        %9818 = vmatpush1.bf16.msra.mxu0 %v9297
        %9819 = vmatprep.subr.bf16.mxu0 0
        %9820 = vmatpush1.bf16.msra.mxu0 %v9298
        %9821 = vmatprep.subr.bf16.mxu0 0
        %9822 = vmatpush1.bf16.msra.mxu0 %v9299
        %9823 = vmatprep.subr.bf16.mxu0 0
        %9824 = vmatpush1.bf16.msra.mxu0 %v9300
        %9825 = vmatprep.subr.bf16.mxu0 0
        %9826 = vmatpush1.bf16.msra.mxu0 %v9301
        %9827 = vmatprep.subr.bf16.mxu0 0
        %9828 = vmatpush1.bf16.msra.mxu0 %v9302
        %9829 = vmatprep.subr.bf16.mxu0 0
        %9830 = vmatpush1.bf16.msra.mxu0 %v9303
        %9831 = vmatprep.subr.bf16.mxu0 0
        %9832 = vmatpush1.bf16.msra.mxu0 %v9304
        %9833 = vmatprep.mubr.bf16.mxu0 %v7722
        %9834 = vmatmul.mubr.bf16.gmra.mrb[0].mxu0 %v7721
        %v9835 = vpop.f32.mrb[0].mxu0
        %v9836 = vadd.f32 %v384, %v9835
        %v9837 = vpop.f32.mrb[0].mxu0
        %v9838 = vpop.f32.mrb[0].mxu0
        %v9839 = vpop.f32.mrb[0].mxu0
        %9840 = vdwg.mxu0
        %9841 = vmatprep.subr.bf16.mxu0 0
        %9842 = vmatpush1.bf16.msra.mxu0 %v9305
        %9843 = vmatprep.subr.bf16.mxu0 0
        %9844 = vmatpush1.bf16.msra.mxu0 %v9306
        %9845 = vmatprep.subr.bf16.mxu0 0
        %9846 = vmatpush1.bf16.msra.mxu0 %v9307
        %9847 = vmatprep.subr.bf16.mxu0 0
        %9848 = vmatpush1.bf16.msra.mxu0 %v9308
        %9849 = vmatprep.subr.bf16.mxu0 0
        %9850 = vmatpush1.bf16.msra.mxu0 %v9309
        %9851 = vmatprep.subr.bf16.mxu0 0
        %9852 = vmatpush1.bf16.msra.mxu0 %v9310
        %9853 = vmatprep.subr.bf16.mxu0 0
        %9854 = vmatpush1.bf16.msra.mxu0 %v9311
        %9855 = vmatprep.subr.bf16.mxu0 0
        %9856 = vmatpush1.bf16.msra.mxu0 %v9312
        %9857 = vmatprep.subr.bf16.mxu0 0
        %9858 = vmatpush1.bf16.msra.mxu0 %v9313
        %9859 = vmatprep.subr.bf16.mxu0 0
        %9860 = vmatpush1.bf16.msra.mxu0 %v9314
        %9861 = vmatprep.subr.bf16.mxu0 0
        %9862 = vmatpush1.bf16.msra.mxu0 %v9315
        %9863 = vmatprep.subr.bf16.mxu0 0
        %9864 = vmatpush1.bf16.msra.mxu0 %v9316
        %9865 = vmatprep.subr.bf16.mxu0 0
        %9866 = vmatpush1.bf16.msra.mxu0 %v9317
        %9867 = vmatprep.subr.bf16.mxu0 0
        %9868 = vmatpush1.bf16.msra.mxu0 %v9318
        %9869 = vmatprep.subr.bf16.mxu0 0
        %9870 = vmatpush1.bf16.msra.mxu0 %v9319
        %9871 = vmatprep.subr.bf16.mxu0 0
        %9872 = vmatpush1.bf16.msra.mxu0 %v9320
        %9873 = vmatprep.mubr.bf16.mxu0 %v7724
        %9874 = vmatmul.mubr.bf16.gmra.mrb[0].mxu0 %v7723
        %v9875 = vpop.f32.mrb[0].mxu0
        %v9876 = vadd.f32 %v9836, %v9875
        %v9877 = vpop.f32.mrb[0].mxu0
        %v9878 = vpop.f32.mrb[0].mxu0
        %v9879 = vpop.f32.mrb[0].mxu0
        %9880 = vdwg.mxu0
        %9881 = vmatprep.subr.bf16.mxu0 0
        %9882 = vmatpush1.bf16.msra.mxu0 %v9321
        %9883 = vmatprep.subr.bf16.mxu0 0
        %9884 = vmatpush1.bf16.msra.mxu0 %v9322
        %9885 = vmatprep.subr.bf16.mxu0 0
        %9886 = vmatpush1.bf16.msra.mxu0 %v9323
        %9887 = vmatprep.subr.bf16.mxu0 0
        %9888 = vmatpush1.bf16.msra.mxu0 %v9324
        %9889 = vmatprep.subr.bf16.mxu0 0
        %9890 = vmatpush1.bf16.msra.mxu0 %v9325
        %9891 = vmatprep.subr.bf16.mxu0 0
        %9892 = vmatpush1.bf16.msra.mxu0 %v9326
        %9893 = vmatprep.subr.bf16.mxu0 0
        %9894 = vmatpush1.bf16.msra.mxu0 %v9327
        %9895 = vmatprep.subr.bf16.mxu0 0
        %9896 = vmatpush1.bf16.msra.mxu0 %v9328
        %9897 = vmatprep.subr.bf16.mxu0 0
        %9898 = vmatpush1.bf16.msra.mxu0 %v9329
        %9899 = vmatprep.subr.bf16.mxu0 0
        %9900 = vmatpush1.bf16.msra.mxu0 %v9330
        %9901 = vmatprep.subr.bf16.mxu0 0
        %9902 = vmatpush1.bf16.msra.mxu0 %v9331
        %9903 = vmatprep.subr.bf16.mxu0 0
        %9904 = vmatpush1.bf16.msra.mxu0 %v9332
        %9905 = vmatprep.subr.bf16.mxu0 0
        %9906 = vmatpush1.bf16.msra.mxu0 %v9333
        %9907 = vmatprep.subr.bf16.mxu0 0
        %9908 = vmatpush1.bf16.msra.mxu0 %v9334
        %9909 = vmatprep.subr.bf16.mxu0 0
        %9910 = vmatpush1.bf16.msra.mxu0 %v9335
        %9911 = vmatprep.subr.bf16.mxu0 0
        %9912 = vmatpush1.bf16.msra.mxu0 %v9336
        %9913 = vmatprep.mubr.bf16.mxu0 %v7726
        %9914 = vmatmul.mubr.bf16.gmra.mrb[0].mxu0 %v7725
        %v9915 = vpop.f32.mrb[0].mxu0
        %v9916 = vadd.f32 %v9876, %v9915
        %v9917 = vpop.f32.mrb[0].mxu0
        %v9918 = vpop.f32.mrb[0].mxu0
        %v9919 = vpop.f32.mrb[0].mxu0
        %9920 = vdwg.mxu0
        %9921 = vmatprep.subr.bf16.mxu0 0
        %9922 = vmatpush1.bf16.msra.mxu0 %v9337
        %9923 = vmatprep.subr.bf16.mxu0 0
        %9924 = vmatpush1.bf16.msra.mxu0 %v9338
        %9925 = vmatprep.subr.bf16.mxu0 0
        %9926 = vmatpush1.bf16.msra.mxu0 %v9339
        %9927 = vmatprep.subr.bf16.mxu0 0
        %9928 = vmatpush1.bf16.msra.mxu0 %v9340
        %9929 = vmatprep.subr.bf16.mxu0 0
        %9930 = vmatpush1.bf16.msra.mxu0 %v9341
        %9931 = vmatprep.subr.bf16.mxu0 0
        %9932 = vmatpush1.bf16.msra.mxu0 %v9342
        %9933 = vmatprep.subr.bf16.mxu0 0
        %9934 = vmatpush1.bf16.msra.mxu0 %v9343
        %9935 = vmatprep.subr.bf16.mxu0 0
        %9936 = vmatpush1.bf16.msra.mxu0 %v9344
        %9937 = vmatprep.subr.bf16.mxu0 0
        %9938 = vmatpush1.bf16.msra.mxu0 %v9345
        %9939 = vmatprep.subr.bf16.mxu0 0
        %9940 = vmatpush1.bf16.msra.mxu0 %v9346
        %9941 = vmatprep.subr.bf16.mxu0 0
        %9942 = vmatpush1.bf16.msra.mxu0 %v9347
        %9943 = vmatprep.subr.bf16.mxu0 0
        %9944 = vmatpush1.bf16.msra.mxu0 %v9348
        %9945 = vmatprep.subr.bf16.mxu0 0
        %9946 = vmatpush1.bf16.msra.mxu0 %v9349
        %9947 = vmatprep.subr.bf16.mxu0 0
        %9948 = vmatpush1.bf16.msra.mxu0 %v9350
        %9949 = vmatprep.subr.bf16.mxu0 0
        %9950 = vmatpush1.bf16.msra.mxu0 %v9351
        %9951 = vmatprep.subr.bf16.mxu0 0
        %9952 = vmatpush1.bf16.msra.mxu0 %v9352
        %9953 = vmatprep.mubr.bf16.mxu0 %v7728
        %9954 = vmatmul.mubr.bf16.gmra.mrb[0].mxu0 %v7727
        %v9955 = vpop.f32.mrb[0].mxu0
        %v9956 = vadd.f32 %v9916, %v9955
        %v9957 = vpop.f32.mrb[0].mxu0
        %v9958 = vpop.f32.mrb[0].mxu0
        %v9959 = vpop.f32.mrb[0].mxu0
        %9960 = vdwg.mxu0
        %9961 = vmatprep.subr.bf16.mxu0 0
        %9962 = vmatpush1.bf16.msra.mxu0 %v9353
        %9963 = vmatprep.subr.bf16.mxu0 0
        %9964 = vmatpush1.bf16.msra.mxu0 %v9354
        %9965 = vmatprep.subr.bf16.mxu0 0
        %9966 = vmatpush1.bf16.msra.mxu0 %v9355
        %9967 = vmatprep.subr.bf16.mxu0 0
        %9968 = vmatpush1.bf16.msra.mxu0 %v9356
        %9969 = vmatprep.subr.bf16.mxu0 0
        %9970 = vmatpush1.bf16.msra.mxu0 %v9357
        %9971 = vmatprep.subr.bf16.mxu0 0
        %9972 = vmatpush1.bf16.msra.mxu0 %v9358
        %9973 = vmatprep.subr.bf16.mxu0 0
        %9974 = vmatpush1.bf16.msra.mxu0 %v9359
        %9975 = vmatprep.subr.bf16.mxu0 0
        %9976 = vmatpush1.bf16.msra.mxu0 %v9360
        %9977 = vmatprep.subr.bf16.mxu0 0
        %9978 = vmatpush1.bf16.msra.mxu0 %v9361
        %9979 = vmatprep.subr.bf16.mxu0 0
        %9980 = vmatpush1.bf16.msra.mxu0 %v9362
        %9981 = vmatprep.subr.bf16.mxu0 0
        %9982 = vmatpush1.bf16.msra.mxu0 %v9363
        %9983 = vmatprep.subr.bf16.mxu0 0
        %9984 = vmatpush1.bf16.msra.mxu0 %v9364
        %9985 = vmatprep.subr.bf16.mxu0 0
        %9986 = vmatpush1.bf16.msra.mxu0 %v9365
        %9987 = vmatprep.subr.bf16.mxu0 0
        %9988 = vmatpush1.bf16.msra.mxu0 %v9366
        %9989 = vmatprep.subr.bf16.mxu0 0
        %9990 = vmatpush1.bf16.msra.mxu0 %v9367
        %9991 = vmatprep.subr.bf16.mxu0 0
        %9992 = vmatpush1.bf16.msra.mxu0 %v9368
        %9993 = vmatprep.mubr.bf16.mxu0 %v7730
        %9994 = vmatmul.mubr.bf16.gmra.mrb[0].mxu0 %v7729
        %v9995 = vpop.f32.mrb[0].mxu0
        %v9996 = vadd.f32 %v9956, %v9995
        %v9997 = vpop.f32.mrb[0].mxu0
        %v9998 = vpop.f32.mrb[0].mxu0
        %v9999 = vpop.f32.mrb[0].mxu0
        %10000 = vdwg.mxu0
        %10001 = vmatprep.subr.bf16.mxu0 0
        %10002 = vmatpush1.bf16.msra.mxu0 %v9369
        %10003 = vmatprep.subr.bf16.mxu0 0
        %10004 = vmatpush1.bf16.msra.mxu0 %v9370
        %10005 = vmatprep.subr.bf16.mxu0 0
        %10006 = vmatpush1.bf16.msra.mxu0 %v9371
        %10007 = vmatprep.subr.bf16.mxu0 0
        %10008 = vmatpush1.bf16.msra.mxu0 %v9372
        %10009 = vmatprep.subr.bf16.mxu0 0
        %10010 = vmatpush1.bf16.msra.mxu0 %v9373
        %10011 = vmatprep.subr.bf16.mxu0 0
        %10012 = vmatpush1.bf16.msra.mxu0 %v9374
        %10013 = vmatprep.subr.bf16.mxu0 0
        %10014 = vmatpush1.bf16.msra.mxu0 %v9375
        %10015 = vmatprep.subr.bf16.mxu0 0
        %10016 = vmatpush1.bf16.msra.mxu0 %v9376
        %10017 = vmatprep.subr.bf16.mxu0 0
        %10018 = vmatpush1.bf16.msra.mxu0 %v9377
        %10019 = vmatprep.subr.bf16.mxu0 0
        %10020 = vmatpush1.bf16.msra.mxu0 %v9378
        %10021 = vmatprep.subr.bf16.mxu0 0
        %10022 = vmatpush1.bf16.msra.mxu0 %v9379
        %10023 = vmatprep.subr.bf16.mxu0 0
        %10024 = vmatpush1.bf16.msra.mxu0 %v9380
        %10025 = vmatprep.subr.bf16.mxu0 0
        %10026 = vmatpush1.bf16.msra.mxu0 %v9381
        %10027 = vmatprep.subr.bf16.mxu0 0
        %10028 = vmatpush1.bf16.msra.mxu0 %v9382
        %10029 = vmatprep.subr.bf16.mxu0 0
        %10030 = vmatpush1.bf16.msra.mxu0 %v9383
        %10031 = vmatprep.subr.bf16.mxu0 0
        %10032 = vmatpush1.bf16.msra.mxu0 %v9384
        %10033 = vmatprep.mubr.bf16.mxu0 %v7732
        %10034 = vmatmul.mubr.bf16.gmra.mrb[0].mxu0 %v7731
        %v10035 = vpop.f32.mrb[0].mxu0
        %v10036 = vadd.f32 %v9996, %v10035
        %v10037 = vpop.f32.mrb[0].mxu0
        %v10038 = vpop.f32.mrb[0].mxu0
        %v10039 = vpop.f32.mrb[0].mxu0
        %10040 = vdwg.mxu0
        %10041 = vmatprep.subr.bf16.mxu0 0
        %10042 = vmatpush1.bf16.msra.mxu0 %v9385
        %10043 = vmatprep.subr.bf16.mxu0 0
        %10044 = vmatpush1.bf16.msra.mxu0 %v9386
        %10045 = vmatprep.subr.bf16.mxu0 0
        %10046 = vmatpush1.bf16.msra.mxu0 %v9387
        %10047 = vmatprep.subr.bf16.mxu0 0
        %10048 = vmatpush1.bf16.msra.mxu0 %v9388
        %10049 = vmatprep.subr.bf16.mxu0 0
        %10050 = vmatpush1.bf16.msra.mxu0 %v9389
        %10051 = vmatprep.subr.bf16.mxu0 0
        %10052 = vmatpush1.bf16.msra.mxu0 %v9390
        %10053 = vmatprep.subr.bf16.mxu0 0
        %10054 = vmatpush1.bf16.msra.mxu0 %v9391
        %10055 = vmatprep.subr.bf16.mxu0 0
        %10056 = vmatpush1.bf16.msra.mxu0 %v9392
        %10057 = vmatprep.subr.bf16.mxu0 0
        %10058 = vmatpush1.bf16.msra.mxu0 %v9393
        %10059 = vmatprep.subr.bf16.mxu0 0
        %10060 = vmatpush1.bf16.msra.mxu0 %v9394
        %10061 = vmatprep.subr.bf16.mxu0 0
        %10062 = vmatpush1.bf16.msra.mxu0 %v9395
        %10063 = vmatprep.subr.bf16.mxu0 0
        %10064 = vmatpush1.bf16.msra.mxu0 %v9396
        %10065 = vmatprep.subr.bf16.mxu0 0
        %10066 = vmatpush1.bf16.msra.mxu0 %v9397
        %10067 = vmatprep.subr.bf16.mxu0 0
        %10068 = vmatpush1.bf16.msra.mxu0 %v9398
        %10069 = vmatprep.subr.bf16.mxu0 0
        %10070 = vmatpush1.bf16.msra.mxu0 %v9399
        %10071 = vmatprep.subr.bf16.mxu0 0
        %10072 = vmatpush1.bf16.msra.mxu0 %v9400
        %10073 = vmatprep.mubr.bf16.mxu0 %v7734
        %10074 = vmatmul.mubr.bf16.gmra.mrb[0].mxu0 %v7733
        %v10075 = vpop.f32.mrb[0].mxu0
        %v10076 = vadd.f32 %v10036, %v10075
        %v10077 = vpop.f32.mrb[0].mxu0
        %v10078 = vpop.f32.mrb[0].mxu0
        %v10079 = vpop.f32.mrb[0].mxu0
        %10080 = vdwg.mxu0
        %10081 = vmatprep.subr.bf16.mxu0 0
        %10082 = vmatpush1.bf16.msra.mxu0 %v9401
        %10083 = vmatprep.subr.bf16.mxu0 0
        %10084 = vmatpush1.bf16.msra.mxu0 %v9402
        %10085 = vmatprep.subr.bf16.mxu0 0
        %10086 = vmatpush1.bf16.msra.mxu0 %v9403
        %10087 = vmatprep.subr.bf16.mxu0 0
        %10088 = vmatpush1.bf16.msra.mxu0 %v9404
        %10089 = vmatprep.subr.bf16.mxu0 0
        %10090 = vmatpush1.bf16.msra.mxu0 %v9405
        %10091 = vmatprep.subr.bf16.mxu0 0
        %10092 = vmatpush1.bf16.msra.mxu0 %v9406
        %10093 = vmatprep.subr.bf16.mxu0 0
        %10094 = vmatpush1.bf16.msra.mxu0 %v9407
        %10095 = vmatprep.subr.bf16.mxu0 0
        %10096 = vmatpush1.bf16.msra.mxu0 %v9408
        %10097 = vmatprep.subr.bf16.mxu0 0
        %10098 = vmatpush1.bf16.msra.mxu0 %v9409
        %10099 = vmatprep.subr.bf16.mxu0 0
        %10100 = vmatpush1.bf16.msra.mxu0 %v9410
        %10101 = vmatprep.subr.bf16.mxu0 0
        %10102 = vmatpush1.bf16.msra.mxu0 %v9411
        %10103 = vmatprep.subr.bf16.mxu0 0
        %10104 = vmatpush1.bf16.msra.mxu0 %v9412
        %10105 = vmatprep.subr.bf16.mxu0 0
        %10106 = vmatpush1.bf16.msra.mxu0 %v9413
        %10107 = vmatprep.subr.bf16.mxu0 0
        %10108 = vmatpush1.bf16.msra.mxu0 %v9414
        %10109 = vmatprep.subr.bf16.mxu0 0
        %10110 = vmatpush1.bf16.msra.mxu0 %v9415
        %10111 = vmatprep.subr.bf16.mxu0 0
        %10112 = vmatpush1.bf16.msra.mxu0 %v9416
        %10113 = vmatprep.mubr.bf16.mxu0 %v7736
        %10114 = vmatmul.mubr.bf16.gmra.mrb[0].mxu0 %v7735
        %v10115 = vpop.f32.mrb[0].mxu0
        %v10116 = vadd.f32 %v10076, %v10115
        %v10117 = vpop.f32.mrb[0].mxu0
        %v10118 = vpop.f32.mrb[0].mxu0
        %v10119 = vpop.f32.mrb[0].mxu0
        %10120 = vdwg.mxu0
        %10121 = vmatprep.subr.bf16.mxu0 0
        %10122 = vmatpush1.bf16.msra.mxu0 %v9417
        %10123 = vmatprep.subr.bf16.mxu0 0
        %10124 = vmatpush1.bf16.msra.mxu0 %v9418
        %10125 = vmatprep.subr.bf16.mxu0 0
        %10126 = vmatpush1.bf16.msra.mxu0 %v9419
        %10127 = vmatprep.subr.bf16.mxu0 0
        %10128 = vmatpush1.bf16.msra.mxu0 %v9420
        %10129 = vmatprep.subr.bf16.mxu0 0
        %10130 = vmatpush1.bf16.msra.mxu0 %v9421
        %10131 = vmatprep.subr.bf16.mxu0 0
        %10132 = vmatpush1.bf16.msra.mxu0 %v9422
        %10133 = vmatprep.subr.bf16.mxu0 0
        %10134 = vmatpush1.bf16.msra.mxu0 %v9423
        %10135 = vmatprep.subr.bf16.mxu0 0
        %10136 = vmatpush1.bf16.msra.mxu0 %v9424
        %10137 = vmatprep.subr.bf16.mxu0 0
        %10138 = vmatpush1.bf16.msra.mxu0 %v9425
        %10139 = vmatprep.subr.bf16.mxu0 0
        %10140 = vmatpush1.bf16.msra.mxu0 %v9426
        %10141 = vmatprep.subr.bf16.mxu0 0
        %10142 = vmatpush1.bf16.msra.mxu0 %v9427
        %10143 = vmatprep.subr.bf16.mxu0 0
        %10144 = vmatpush1.bf16.msra.mxu0 %v9428
        %10145 = vmatprep.subr.bf16.mxu0 0
        %10146 = vmatpush1.bf16.msra.mxu0 %v9429
        %10147 = vmatprep.subr.bf16.mxu0 0
        %10148 = vmatpush1.bf16.msra.mxu0 %v9430
        %10149 = vmatprep.subr.bf16.mxu0 0
        %10150 = vmatpush1.bf16.msra.mxu0 %v9431
        %10151 = vmatprep.subr.bf16.mxu0 0
        %10152 = vmatpush1.bf16.msra.mxu0 %v9432
        %10153 = vmatprep.mubr.bf16.mxu0 %v7738
        %10154 = vmatmul.mubr.bf16.gmra.mrb[0].mxu0 %v7737
        %v10155 = vpop.f32.mrb[0].mxu0
        %v10156 = vadd.f32 %v10116, %v10155
        %v10157 = vpop.f32.mrb[0].mxu0
        %v10158 = vpop.f32.mrb[0].mxu0
        %v10159 = vpop.f32.mrb[0].mxu0
        %10160 = vdwg.mxu0
        %10161 = vmatprep.subr.bf16.mxu0 0
        %10162 = vmatpush1.bf16.msra.mxu0 %v9433
        %10163 = vmatprep.subr.bf16.mxu0 0
        %10164 = vmatpush1.bf16.msra.mxu0 %v9434
        %10165 = vmatprep.subr.bf16.mxu0 0
        %10166 = vmatpush1.bf16.msra.mxu0 %v9435
        %10167 = vmatprep.subr.bf16.mxu0 0
        %10168 = vmatpush1.bf16.msra.mxu0 %v9436
        %10169 = vmatprep.subr.bf16.mxu0 0
        %10170 = vmatpush1.bf16.msra.mxu0 %v9437
        %10171 = vmatprep.subr.bf16.mxu0 0
        %10172 = vmatpush1.bf16.msra.mxu0 %v9438
        %10173 = vmatprep.subr.bf16.mxu0 0
        %10174 = vmatpush1.bf16.msra.mxu0 %v9439
        %10175 = vmatprep.subr.bf16.mxu0 0
        %10176 = vmatpush1.bf16.msra.mxu0 %v9440
        %10177 = vmatprep.subr.bf16.mxu0 0
        %10178 = vmatpush1.bf16.msra.mxu0 %v9441
        %10179 = vmatprep.subr.bf16.mxu0 0
        %10180 = vmatpush1.bf16.msra.mxu0 %v9442
        %10181 = vmatprep.subr.bf16.mxu0 0
        %10182 = vmatpush1.bf16.msra.mxu0 %v9443
        %10183 = vmatprep.subr.bf16.mxu0 0
        %10184 = vmatpush1.bf16.msra.mxu0 %v9444
        %10185 = vmatprep.subr.bf16.mxu0 0
        %10186 = vmatpush1.bf16.msra.mxu0 %v9445
        %10187 = vmatprep.subr.bf16.mxu0 0
        %10188 = vmatpush1.bf16.msra.mxu0 %v9446
        %10189 = vmatprep.subr.bf16.mxu0 0
        %10190 = vmatpush1.bf16.msra.mxu0 %v9447
        %10191 = vmatprep.subr.bf16.mxu0 0
        %10192 = vmatpush1.bf16.msra.mxu0 %v9448
        %10193 = vmatprep.mubr.bf16.mxu0 %v7740
        %10194 = vmatmul.mubr.bf16.gmra.mrb[0].mxu0 %v7739
        %v10195 = vpop.f32.mrb[0].mxu0
        %v10196 = vadd.f32 %v10156, %v10195
        %v10197 = vpop.f32.mrb[0].mxu0
        %v10198 = vpop.f32.mrb[0].mxu0
        %v10199 = vpop.f32.mrb[0].mxu0
        %10200 = vdwg.mxu0
        %10201 = vmatprep.subr.bf16.mxu0 0
        %10202 = vmatpush1.bf16.msra.mxu0 %v9449
        %10203 = vmatprep.subr.bf16.mxu0 0
        %10204 = vmatpush1.bf16.msra.mxu0 %v9450
        %10205 = vmatprep.subr.bf16.mxu0 0
        %10206 = vmatpush1.bf16.msra.mxu0 %v9451
        %10207 = vmatprep.subr.bf16.mxu0 0
        %10208 = vmatpush1.bf16.msra.mxu0 %v9452
        %10209 = vmatprep.subr.bf16.mxu0 0
        %10210 = vmatpush1.bf16.msra.mxu0 %v9453
        %10211 = vmatprep.subr.bf16.mxu0 0
        %10212 = vmatpush1.bf16.msra.mxu0 %v9454
        %10213 = vmatprep.subr.bf16.mxu0 0
        %10214 = vmatpush1.bf16.msra.mxu0 %v9455
        %10215 = vmatprep.subr.bf16.mxu0 0
        %10216 = vmatpush1.bf16.msra.mxu0 %v9456
        %10217 = vmatprep.subr.bf16.mxu0 0
        %10218 = vmatpush1.bf16.msra.mxu0 %v9457
        %10219 = vmatprep.subr.bf16.mxu0 0
        %10220 = vmatpush1.bf16.msra.mxu0 %v9458
        %10221 = vmatprep.subr.bf16.mxu0 0
        %10222 = vmatpush1.bf16.msra.mxu0 %v9459
        %10223 = vmatprep.subr.bf16.mxu0 0
        %10224 = vmatpush1.bf16.msra.mxu0 %v9460
        %10225 = vmatprep.subr.bf16.mxu0 0
        %10226 = vmatpush1.bf16.msra.mxu0 %v9461
        %10227 = vmatprep.subr.bf16.mxu0 0
        %10228 = vmatpush1.bf16.msra.mxu0 %v9462
        %10229 = vmatprep.subr.bf16.mxu0 0
        %10230 = vmatpush1.bf16.msra.mxu0 %v9463
        %10231 = vmatprep.subr.bf16.mxu0 0
        %10232 = vmatpush1.bf16.msra.mxu0 %v9464
        %10233 = vmatprep.mubr.bf16.mxu0 %v7742
        %10234 = vmatmul.mubr.bf16.gmra.mrb[0].mxu0 %v7741
        %v10235 = vpop.f32.mrb[0].mxu0
        %v10236 = vadd.f32 %v10196, %v10235
        %v10237 = vpop.f32.mrb[0].mxu0
        %v10238 = vpop.f32.mrb[0].mxu0
        %v10239 = vpop.f32.mrb[0].mxu0
        %10240 = vdwg.mxu0
        %10241 = vmatprep.subr.bf16.mxu0 0
        %10242 = vmatpush1.bf16.msra.mxu0 %v9465
        %10243 = vmatprep.subr.bf16.mxu0 0
        %10244 = vmatpush1.bf16.msra.mxu0 %v9466
        %10245 = vmatprep.subr.bf16.mxu0 0
        %10246 = vmatpush1.bf16.msra.mxu0 %v9467
        %10247 = vmatprep.subr.bf16.mxu0 0
        %10248 = vmatpush1.bf16.msra.mxu0 %v9468
        %10249 = vmatprep.subr.bf16.mxu0 0
        %10250 = vmatpush1.bf16.msra.mxu0 %v9469
        %10251 = vmatprep.subr.bf16.mxu0 0
        %10252 = vmatpush1.bf16.msra.mxu0 %v9470
        %10253 = vmatprep.subr.bf16.mxu0 0
        %10254 = vmatpush1.bf16.msra.mxu0 %v9471
        %10255 = vmatprep.subr.bf16.mxu0 0
        %10256 = vmatpush1.bf16.msra.mxu0 %v9472
        %10257 = vmatprep.subr.bf16.mxu0 0
        %10258 = vmatpush1.bf16.msra.mxu0 %v9473
        %10259 = vmatprep.subr.bf16.mxu0 0
        %10260 = vmatpush1.bf16.msra.mxu0 %v9474
        %10261 = vmatprep.subr.bf16.mxu0 0
        %10262 = vmatpush1.bf16.msra.mxu0 %v9475
        %10263 = vmatprep.subr.bf16.mxu0 0
        %10264 = vmatpush1.bf16.msra.mxu0 %v9476
        %10265 = vmatprep.subr.bf16.mxu0 0
        %10266 = vmatpush1.bf16.msra.mxu0 %v9477
        %10267 = vmatprep.subr.bf16.mxu0 0
        %10268 = vmatpush1.bf16.msra.mxu0 %v9478
        %10269 = vmatprep.subr.bf16.mxu0 0
        %10270 = vmatpush1.bf16.msra.mxu0 %v9479
        %10271 = vmatprep.subr.bf16.mxu0 0
        %10272 = vmatpush1.bf16.msra.mxu0 %v9480
        %10273 = vmatprep.mubr.bf16.mxu0 %v7744
        %10274 = vmatmul.mubr.bf16.gmra.mrb[0].mxu0 %v7743
        %v10275 = vpop.f32.mrb[0].mxu0
        %v10276 = vadd.f32 %v10236, %v10275
        %v10277 = vpop.f32.mrb[0].mxu0
        %v10278 = vpop.f32.mrb[0].mxu0
        %v10279 = vpop.f32.mrb[0].mxu0
        %10280 = vdwg.mxu0
        %10281 = vmatprep.subr.bf16.mxu0 0
        %10282 = vmatpush1.bf16.msra.mxu0 %v9481
        %10283 = vmatprep.subr.bf16.mxu0 0
        %10284 = vmatpush1.bf16.msra.mxu0 %v9482
        %10285 = vmatprep.subr.bf16.mxu0 0
        %10286 = vmatpush1.bf16.msra.mxu0 %v9483
        %10287 = vmatprep.subr.bf16.mxu0 0
        %10288 = vmatpush1.bf16.msra.mxu0 %v9484
        %10289 = vmatprep.subr.bf16.mxu0 0
        %10290 = vmatpush1.bf16.msra.mxu0 %v9485
        %10291 = vmatprep.subr.bf16.mxu0 0
        %10292 = vmatpush1.bf16.msra.mxu0 %v9486
        %10293 = vmatprep.subr.bf16.mxu0 0
        %10294 = vmatpush1.bf16.msra.mxu0 %v9487
        %10295 = vmatprep.subr.bf16.mxu0 0
        %10296 = vmatpush1.bf16.msra.mxu0 %v9488
        %10297 = vmatprep.subr.bf16.mxu0 0
        %10298 = vmatpush1.bf16.msra.mxu0 %v9489
        %10299 = vmatprep.subr.bf16.mxu0 0
        %10300 = vmatpush1.bf16.msra.mxu0 %v9490
        %10301 = vmatprep.subr.bf16.mxu0 0
        %10302 = vmatpush1.bf16.msra.mxu0 %v9491
        %10303 = vmatprep.subr.bf16.mxu0 0
        %10304 = vmatpush1.bf16.msra.mxu0 %v9492
        %10305 = vmatprep.subr.bf16.mxu0 0
        %10306 = vmatpush1.bf16.msra.mxu0 %v9493
        %10307 = vmatprep.subr.bf16.mxu0 0
        %10308 = vmatpush1.bf16.msra.mxu0 %v9494
        %10309 = vmatprep.subr.bf16.mxu0 0
        %10310 = vmatpush1.bf16.msra.mxu0 %v9495
        %10311 = vmatprep.subr.bf16.mxu0 0
        %10312 = vmatpush1.bf16.msra.mxu0 %v9496
        %10313 = vmatprep.mubr.bf16.mxu0 %v7746
        %10314 = vmatmul.mubr.bf16.gmra.mrb[0].mxu0 %v7745
        %v10315 = vpop.f32.mrb[0].mxu0
        %v10316 = vadd.f32 %v10276, %v10315
        %v10317 = vpop.f32.mrb[0].mxu0
        %v10318 = vpop.f32.mrb[0].mxu0
        %v10319 = vpop.f32.mrb[0].mxu0
        %10320 = vdwg.mxu0
        %10321 = vmatprep.subr.bf16.mxu0 0
        %10322 = vmatpush1.bf16.msra.mxu0 %v9497
        %10323 = vmatprep.subr.bf16.mxu0 0
        %10324 = vmatpush1.bf16.msra.mxu0 %v9498
        %10325 = vmatprep.subr.bf16.mxu0 0
        %10326 = vmatpush1.bf16.msra.mxu0 %v9499
        %10327 = vmatprep.subr.bf16.mxu0 0
        %10328 = vmatpush1.bf16.msra.mxu0 %v9500
        %10329 = vmatprep.subr.bf16.mxu0 0
        %10330 = vmatpush1.bf16.msra.mxu0 %v9501
        %10331 = vmatprep.subr.bf16.mxu0 0
        %10332 = vmatpush1.bf16.msra.mxu0 %v9502
        %10333 = vmatprep.subr.bf16.mxu0 0
        %10334 = vmatpush1.bf16.msra.mxu0 %v9503
        %10335 = vmatprep.subr.bf16.mxu0 0
        %10336 = vmatpush1.bf16.msra.mxu0 %v9504
        %10337 = vmatprep.subr.bf16.mxu0 0
        %10338 = vmatpush1.bf16.msra.mxu0 %v9505
        %10339 = vmatprep.subr.bf16.mxu0 0
        %10340 = vmatpush1.bf16.msra.mxu0 %v9506
        %10341 = vmatprep.subr.bf16.mxu0 0
        %10342 = vmatpush1.bf16.msra.mxu0 %v9507
        %10343 = vmatprep.subr.bf16.mxu0 0
        %10344 = vmatpush1.bf16.msra.mxu0 %v9508
        %10345 = vmatprep.subr.bf16.mxu0 0
        %10346 = vmatpush1.bf16.msra.mxu0 %v9509
        %10347 = vmatprep.subr.bf16.mxu0 0
        %10348 = vmatpush1.bf16.msra.mxu0 %v9510
        %10349 = vmatprep.subr.bf16.mxu0 0
        %10350 = vmatpush1.bf16.msra.mxu0 %v9511
        %10351 = vmatprep.subr.bf16.mxu0 0
        %10352 = vmatpush1.bf16.msra.mxu0 %v9512
        %10353 = vmatprep.mubr.bf16.mxu0 %v7748
        %10354 = vmatmul.mubr.bf16.gmra.mrb[0].mxu0 %v7747
        %v10355 = vpop.f32.mrb[0].mxu0
        %v10356 = vadd.f32 %v10316, %v10355
        %v10357 = vpop.f32.mrb[0].mxu0
        %v10358 = vpop.f32.mrb[0].mxu0
        %v10359 = vpop.f32.mrb[0].mxu0
        %10360 = vdwg.mxu0
        %10361 = vmatprep.subr.bf16.mxu0 0
        %10362 = vmatpush1.bf16.msra.mxu0 %v9513
        %10363 = vmatprep.subr.bf16.mxu0 0
        %10364 = vmatpush1.bf16.msra.mxu0 %v9514
        %10365 = vmatprep.subr.bf16.mxu0 0
        %10366 = vmatpush1.bf16.msra.mxu0 %v9515
        %10367 = vmatprep.subr.bf16.mxu0 0
        %10368 = vmatpush1.bf16.msra.mxu0 %v9516
        %10369 = vmatprep.subr.bf16.mxu0 0
        %10370 = vmatpush1.bf16.msra.mxu0 %v9517
        %10371 = vmatprep.subr.bf16.mxu0 0
        %10372 = vmatpush1.bf16.msra.mxu0 %v9518
        %10373 = vmatprep.subr.bf16.mxu0 0
        %10374 = vmatpush1.bf16.msra.mxu0 %v9519
        %10375 = vmatprep.subr.bf16.mxu0 0
        %10376 = vmatpush1.bf16.msra.mxu0 %v9520
        %10377 = vmatprep.subr.bf16.mxu0 0
        %10378 = vmatpush1.bf16.msra.mxu0 %v9521
        %10379 = vmatprep.subr.bf16.mxu0 0
        %10380 = vmatpush1.bf16.msra.mxu0 %v9522
        %10381 = vmatprep.subr.bf16.mxu0 0
        %10382 = vmatpush1.bf16.msra.mxu0 %v9523
        %10383 = vmatprep.subr.bf16.mxu0 0
        %10384 = vmatpush1.bf16.msra.mxu0 %v9524
        %10385 = vmatprep.subr.bf16.mxu0 0
        %10386 = vmatpush1.bf16.msra.mxu0 %v9525
        %10387 = vmatprep.subr.bf16.mxu0 0
        %10388 = vmatpush1.bf16.msra.mxu0 %v9526
        %10389 = vmatprep.subr.bf16.mxu0 0
        %10390 = vmatpush1.bf16.msra.mxu0 %v9527
        %10391 = vmatprep.subr.bf16.mxu0 0
        %10392 = vmatpush1.bf16.msra.mxu0 %v9528
        %10393 = vmatprep.mubr.bf16.mxu0 %v7750
        %10394 = vmatmul.mubr.bf16.gmra.mrb[0].mxu0 %v7749
        %v10395 = vpop.f32.mrb[0].mxu0
        %v10396 = vadd.f32 %v10356, %v10395
        %v10397 = vpop.f32.mrb[0].mxu0
        %v10398 = vpop.f32.mrb[0].mxu0
        %v10399 = vpop.f32.mrb[0].mxu0
        %10400 = vdwg.mxu0
        %10401 = vmatprep.subr.bf16.mxu0 0
        %10402 = vmatpush1.bf16.msra.mxu0 %v9529
        %10403 = vmatprep.subr.bf16.mxu0 0
        %10404 = vmatpush1.bf16.msra.mxu0 %v9530
        %10405 = vmatprep.subr.bf16.mxu0 0
        %10406 = vmatpush1.bf16.msra.mxu0 %v9531
        %10407 = vmatprep.subr.bf16.mxu0 0
        %10408 = vmatpush1.bf16.msra.mxu0 %v9532
        %10409 = vmatprep.subr.bf16.mxu0 0
        %10410 = vmatpush1.bf16.msra.mxu0 %v9533
        %10411 = vmatprep.subr.bf16.mxu0 0
        %10412 = vmatpush1.bf16.msra.mxu0 %v9534
        %10413 = vmatprep.subr.bf16.mxu0 0
        %10414 = vmatpush1.bf16.msra.mxu0 %v9535
        %10415 = vmatprep.subr.bf16.mxu0 0
        %10416 = vmatpush1.bf16.msra.mxu0 %v9536
        %10417 = vmatprep.subr.bf16.mxu0 0
        %10418 = vmatpush1.bf16.msra.mxu0 %v9537
        %10419 = vmatprep.subr.bf16.mxu0 0
        %10420 = vmatpush1.bf16.msra.mxu0 %v9538
        %10421 = vmatprep.subr.bf16.mxu0 0
        %10422 = vmatpush1.bf16.msra.mxu0 %v9539
        %10423 = vmatprep.subr.bf16.mxu0 0
        %10424 = vmatpush1.bf16.msra.mxu0 %v9540
        %10425 = vmatprep.subr.bf16.mxu0 0
        %10426 = vmatpush1.bf16.msra.mxu0 %v9541
        %10427 = vmatprep.subr.bf16.mxu0 0
        %10428 = vmatpush1.bf16.msra.mxu0 %v9542
        %10429 = vmatprep.subr.bf16.mxu0 0
        %10430 = vmatpush1.bf16.msra.mxu0 %v9543
        %10431 = vmatprep.subr.bf16.mxu0 0
        %10432 = vmatpush1.bf16.msra.mxu0 %v9544
        %10433 = vmatprep.mubr.bf16.mxu0 %v7752
        %10434 = vmatmul.mubr.bf16.gmra.mrb[0].mxu0 %v7751
        %v10435 = vpop.f32.mrb[0].mxu0
        %v10436 = vadd.f32 %v10396, %v10435
        %v10437 = vpop.f32.mrb[0].mxu0
        %v10438 = vpop.f32.mrb[0].mxu0
        %v10439 = vpop.f32.mrb[0].mxu0
        %10440 = vdwg.mxu0
        %vm10441 = vcmask 58368
        %10442 = vst.msk [vmem:[%s369] sm:$0x3] %vm10441, %v10436
        %s10443 = sand.u32 %s248, 1
        %s10444 = scalar_lea.sflag [#allocation4], %s10443
        %s10445 = sand.u32 %s248, 1
        %s10446 = smul.addr %s10445, 2
        %s10447 = scalar_lea.vmem [#allocation6], %s10446
        // Predicated region
        $region65: #{_lambda_.1} parent=59 // pred_check
          %p10448 = pneg %p258
        $region66: #{_lambda_.1} parent=59 // pred_check_branch
          %10450 = sbr.rel (%p10448) target = $region68
        $region67: #{_lambda_.1} parent=59 // pred_region
          %s10452 = ssub.s32 32, 32
          %10453 = vsyncadd %s10444, %s10452
          %s10454 = smul.addr %s25, 32
          %s10455 = scalar_lea.hbm %s10, %s10454
          %s10457 = sshll.u32 %s10447, 4
          %s10458 = int_to_ptr.vmem [resolvable:$true] %s10457
          %10460 = dma.vmem_to_hbm [thread:$0]  %s10458, 32, %s10455, %s10444
        $region68: #{_lambda_.1} parent=59 // pred_fallthru
          _
      $region60: #{_lambda_.1} parent=5 // pred_fallthru
        _
      %p10461 = scmp.le.s32.totalorder 2, %s20
      // Predicated region
      $region69: #{_lambda_.1} parent=5 // pred_check
        %p10462 = pneg %p10461
      $region70: #{_lambda_.1} parent=5 // pred_check_branch
        %10464 = sbr.rel (%p10462) target = $region72
      $region71: #{_lambda_.1} parent=5 // pred_region
        %s10465 = ssub.s32 %s20, 2
        // Predicated region
        $region73: #{_lambda_.1} parent=71 // pred_check
          %p10466 = pneg %p264
        $region74: #{_lambda_.1} parent=71 // pred_check_branch
          %10468 = sbr.rel (%p10466) target = $region76
        $region75: #{_lambda_.1} parent=71 // pred_region
          %s10469 = sand.u32 %s249, 1
          %s10470 = scalar_lea.sflag [#allocation4], %s10469
          %s10471 = sand.u32 %s249, 1
          %s10472 = smul.addr %s10471, 2
          %s10473 = scalar_lea.vmem [#allocation6], %s10472
          %10474 = dma.done %s10470, 32
        $region76: #{_lambda_.1} parent=71 // pred_fallthru
          _
      $region72: #{_lambda_.1} parent=5 // pred_fallthru
        _
    $region6: #{_lambda_.1} parent=1 // loop_footer
      %s24 = sadd.s32 1, %s20
    $region7: #{_lambda_.1} parent=1 // loop_footer_branch
      %19 = sbr.rel target = $region3
    $region8: #{_lambda_.1} parent=1 // loop_exit
      _
    %10475 = vsyncpa [#allocation4], 1
    %s10476 = scalar_lea.sflag [#allocation4], 1
    %10477 = vsyncpa %s10476, 1
    %10478 = vsyncpa [#allocation5], 1
    %s10479 = scalar_lea.sflag [#allocation5], 1
    %10480 = vsyncpa %s10479, 1

</llo_original>
